<compile_context>
chip_gen: v7x
topology: tpu7x:2x2x1
jax: 0.10.0
libtpu: 0.0.40
codegen_flags: <defaults>
</compile_context>

<pallas_src>
import jax
import jax.numpy as jnp
from jax.experimental import pallas as pl
from jax.experimental.pallas import tpu as pltpu


def _double_conv_kernel(x_ref, w1_ref, b1_ref, w2_ref, b2_ref, o_ref,
                        xp1_ref, xp2_ref):
    """Fused (conv3x3 pad=1 -> folded-BN bias -> ReLU) * 2 for one batch block.

    Refs (one batch block of Nb images per grid step):
      x_ref:   (Nb, H, W*Cin)        f32   lane-dense unpadded NHWC input block
      w1_ref:  (9, Cin,  Cmid_p)     bf16  conv1 weights, BN1 scale pre-folded, taps on axis 0
      b1_ref:  (1, Cmid_p)           f32   folded BN1 bias (beta + (conv_bias - mean) * scale)
      w2_ref:  (9, Cmid_p, Cout_p)   bf16  conv2 weights, BN2 scale pre-folded
      b2_ref:  (1, Cout_p)           f32
      o_ref:   (Nb, H*W, Cout_p)     f32   lane-dense output (matmul rows stored directly)
      xp1_ref: (Nb, H+2, W+2, Cin)   f32   VMEM scratch: zero-padded input
      xp2_ref: (Nb, H+2, W+2, Cmid_p) bf16 VMEM scratch: zero-padded intermediate activation
    """
    Nb, Hp2, Wp2, Cin = xp1_ref.shape
    H, W = Hp2 - 2, Wp2 - 2
    Cmid = xp2_ref.shape[-1]
    M = Nb * H * W

    def zero_halo(xp_ref):
        # Only the 1-pixel ring: the interior is fully overwritten below.  Must
        # be (re)zeroed every step: scratch persists across grid steps and each
        # megacore TensorCore runs its own subset of steps on its own scratch.
        nb, hp, wp, c = xp_ref.shape
        xp_ref[:, 0:1, :, :] = jnp.zeros((nb, 1, wp, c), xp_ref.dtype)
        xp_ref[:, hp - 1:hp, :, :] = jnp.zeros((nb, 1, wp, c), xp_ref.dtype)
        xp_ref[:, :, 0:1, :] = jnp.zeros((nb, hp, 1, c), xp_ref.dtype)
        xp_ref[:, :, wp - 1:wp, :] = jnp.zeros((nb, hp, 1, c), xp_ref.dtype)

    zero_halo(xp1_ref)
    zero_halo(xp2_ref)

    # Padding=1 realized in VMEM: write the interior, halo stays zero.
    xp1_ref[:, 1:H + 1, 1:W + 1, :] = x_ref[...].reshape(Nb, H, W, Cin)

    def conv3x3_bias_relu(xp_ref, w_ref, b_ref):
        """3x3 conv as 9 accumulating bf16 MXU dots + bias + ReLU (f32 acc)."""
        c_in = xp_ref.shape[-1]
        c_out = w_ref.shape[-1]
        acc = jnp.zeros((M, c_out), jnp.float32)
        for tap in range(9):
            dy, dx = divmod(tap, 3)
            lhs = xp_ref[:, dy:dy + H, dx:dx + W, :].reshape(M, c_in)
            acc = acc + jnp.dot(lhs.astype(jnp.bfloat16), w_ref[tap],
                                preferred_element_type=jnp.float32)
        return jnp.maximum(acc + b_ref[...], 0.0)

    # Stage 1; intermediate activation never leaves VMEM (stored bf16).
    y1 = conv3x3_bias_relu(xp1_ref, w1_ref, b1_ref)                 # (M, Cmid_p) f32
    xp2_ref[:, 1:H + 1, 1:W + 1, :] = y1.reshape(Nb, H, W, Cmid).astype(xp2_ref.dtype)

    # Stage 2; matmul rows (M, Cout_p=128 lanes) stored directly -> lane-dense.
    y2 = conv3x3_bias_relu(xp2_ref, w2_ref, b2_ref)                 # (M, Cout_p) f32
    o_ref[...] = y2.reshape(Nb, H * W, o_ref.shape[-1]).astype(o_ref.dtype)


def double_conv_pallas(x_nhwc, params):
    """x_nhwc: (N, H, W, Cin). Returns (N, H, W, Cout). NHWC is the preferred entry."""
    N, H, W, Cin = x_nhwc.shape
    Cmid = params["w1"].shape[-1]
    Cout = params["w2"].shape[-1]

    LANES = 128
    Cmid_p = ((Cmid + LANES - 1) // LANES) * LANES   # pad out-channels to MXU width
    Cout_p = ((Cout + LANES - 1) // LANES) * LANES

    # Fold BN scale into conv weights (before the bf16 cast), pad channels to
    # the MXU lane width, flatten taps onto the leading axis.
    # (Production code would pre-fold these once; done per call here for clarity.)
    w1 = params["w1"] * params["scale1"][None, None, None, :]
    w1 = jnp.pad(w1, ((0, 0), (0, 0), (0, 0), (0, Cmid_p - Cmid)))
    w1 = w1.reshape(9, Cin, Cmid_p).astype(jnp.bfloat16)

    w2 = params["w2"] * params["scale2"][None, None, None, :]
    w2 = jnp.pad(w2, ((0, 0), (0, 0), (0, Cmid_p - Cmid), (0, Cout_p - Cout)))
    w2 = w2.reshape(9, Cmid_p, Cout_p).astype(jnp.bfloat16)

    b1 = jnp.pad(params["bias1"], (0, Cmid_p - Cmid)).reshape(1, Cmid_p).astype(jnp.float32)
    b2 = jnp.pad(params["bias2"], (0, Cout_p - Cout)).reshape(1, Cout_p).astype(jnp.float32)

    # Batch folded into the matmul M dim: at most 2 coarse grid steps.  Use 2
    # when N is even so both v7x TensorCores get work; otherwise a single step.
    nb_blocks = 2 if (N >= 2 and N % 2 == 0) else 1
    Nb = N // nb_blocks

    # Lane-dense kernel-facing input layout (last dim = W*Cin instead of Cin).
    x3d = x_nhwc.reshape(N, H, W * Cin)

    y = pl.pallas_call(
        _double_conv_kernel,
        out_shape=jax.ShapeDtypeStruct((N, H * W, Cout_p), jnp.float32),
        grid=(nb_blocks,),
        in_specs=[
            pl.BlockSpec((Nb, H, W * Cin), lambda n: (n, 0, 0)),
            pl.BlockSpec((9, Cin, Cmid_p), lambda n: (0, 0, 0)),
            pl.BlockSpec((1, Cmid_p), lambda n: (0, 0)),
            pl.BlockSpec((9, Cmid_p, Cout_p), lambda n: (0, 0, 0)),
            pl.BlockSpec((1, Cout_p), lambda n: (0, 0)),
        ],
        out_specs=pl.BlockSpec((Nb, H * W, Cout_p), lambda n: (n, 0, 0)),
        scratch_shapes=[
            pltpu.VMEM((Nb, H + 2, W + 2, Cin), jnp.float32),
            pltpu.VMEM((Nb, H + 2, W + 2, Cmid_p), jnp.bfloat16),
        ],
        compiler_params=pltpu.CompilerParams(
            dimension_semantics=("parallel",),
            # No vmem_limit_bytes override: the blocks here need ~1 MiB, well
            # under every generation's default scoped limit.  Re-derive per
            # generation (e.g. pltpu.get_tpu_info()) only when tiling real
            # UNet shapes.
        ),
    )(x3d, w1, b1, w2, b2)

    # Split matmul rows back to spatial and drop the channel padding.
    return y.reshape(N, H, W, Cout_p)[..., :Cout]


def _fold_bn(conv_bias, gamma, beta, running_mean, running_var, eps=1e-5):
    """Fold conv bias + eval-mode BatchNorm into per-channel (scale, bias)."""
    scale = gamma / jnp.sqrt(running_var + eps)
    bias = beta + (conv_bias - running_mean) * scale
    return scale, bias


def double_conv_forward(x_nchw, params):
    # NCHW -> NHWC at the PyTorch-facing boundary.
    # TODO(synk): if the surrounding model is NHWC these transposes (an extra
    # HBM round trip of the activation) should be dropped; use double_conv_pallas directly.
    x = jnp.transpose(x_nchw, (0, 2, 3, 1))
    y = double_conv_pallas(x, params)
    return jnp.transpose(y, (0, 3, 1, 2))


def init_params(key, in_ch, out_ch, dtype=jnp.float32):
    ks = jax.random.split(key, 12)
    # Conv weights in HWIO layout (PyTorch OIHW transposed).
    w1 = jax.random.normal(ks[0], (3, 3, in_ch, out_ch), dtype) * 0.1
    b1 = jax.random.normal(ks[1], (out_ch,), dtype) * 0.1
    g1 = 1.0 + 0.1 * jax.random.normal(ks[2], (out_ch,), dtype)
    be1 = 0.1 * jax.random.normal(ks[3], (out_ch,), dtype)
    rm1 = 0.1 * jax.random.normal(ks[4], (out_ch,), dtype)
    rv1 = jnp.abs(1.0 + 0.1 * jax.random.normal(ks[5], (out_ch,), dtype))

    w2 = jax.random.normal(ks[6], (3, 3, out_ch, out_ch), dtype) * 0.1
    b2 = jax.random.normal(ks[7], (out_ch,), dtype) * 0.1
    g2 = 1.0 + 0.1 * jax.random.normal(ks[8], (out_ch,), dtype)
    be2 = 0.1 * jax.random.normal(ks[9], (out_ch,), dtype)
    rm2 = 0.1 * jax.random.normal(ks[10], (out_ch,), dtype)
    rv2 = jnp.abs(1.0 + 0.1 * jax.random.normal(ks[11], (out_ch,), dtype))

    s1, bb1 = _fold_bn(b1, g1, be1, rm1, rv1)
    s2, bb2 = _fold_bn(b2, g2, be2, rm2, rv2)
    return {"w1": w1, "scale1": s1, "bias1": bb1,
            "w2": w2, "scale2": s2, "bias2": bb2}


def _reference_forward(x_nchw, params):
    """Pure-JAX reference (lax conv). Mirrors the kernel numerics: BN scale
    folded into the weight before the bf16 cast, f32 accumulation."""
    def step(x, w, scale, bias):
        wf = (w * scale[None, None, None, :]).astype(jnp.bfloat16)
        y = jax.lax.conv_general_dilated(
            x.astype(jnp.bfloat16), wf,
            window_strides=(1, 1), padding="SAME",
            dimension_numbers=("NHWC", "HWIO", "NHWC"),
            preferred_element_type=jnp.float32)
        return jnp.maximum(y + bias.reshape(1, 1, 1, -1), 0.0)

    x = jnp.transpose(x_nchw, (0, 2, 3, 1))
    y = step(x, params["w1"], params["scale1"], params["bias1"])
    y = step(y, params["w2"], params["scale2"], params["bias2"])
    return jnp.transpose(y, (0, 3, 1, 2))


if __name__ == "__main__":
    key = jax.random.PRNGKey(0)
    k_x, k_p = jax.random.split(key)

    N, C_in, H, W = 2, 4, 16, 16
    C_out = 8

    x = jax.random.normal(k_x, (N, C_in, H, W), jnp.float32)
    params = init_params(k_p, C_in, C_out)

    out = jax.block_until_ready(double_conv_forward(x, params))
    ref = jax.block_until_ready(_reference_forward(x, params))

    assert out.shape == (N, C_out, H, W)
    # bf16 matmul inputs => slightly looser tolerance than a pure-f32 version.
    assert jnp.allclose(out, ref, atol=1e-2, rtol=1e-2), "mismatch vs JAX reference"

    print("KERNEL_OK")
</pallas_src>

<mosaic_0001>
module attributes {stable_mosaic.version = 11 : i64} {
  func.func @_double_conv_kernel(%arg0: i32, %arg1: memref<1x16x64xf32, #tpu.memory_space<vmem>>, %arg2: memref<9x4x128xbf16, #tpu.memory_space<vmem>>, %arg3: memref<1x128xf32, #tpu.memory_space<vmem>>, %arg4: memref<9x128x128xbf16, #tpu.memory_space<vmem>>, %arg5: memref<1x128xf32, #tpu.memory_space<vmem>>, %arg6: memref<1x256x128xf32, #tpu.memory_space<vmem>>, %arg7: memref<1x18x18x4xf32, #tpu.memory_space<vmem>>, %arg8: memref<1x18x18x128xbf16, #tpu.memory_space<vmem>>) attributes {dimension_semantics = [#tpu.dimension_semantics<parallel>], iteration_bounds = array<i64: 2>, scalar_prefetch = 0 : i64, scratch_operands = 2 : i64, tpu.core_type = #tpu.core_type<tc>, window_params = [{transform_indices = @transform_0, window_bounds = array<i64: 1, 16, 64>}, {pipeline_mode = #tpu.pipeline_mode<synchronous>, transform_indices = @transform_1, window_bounds = array<i64: 9, 4, 128>}, {pipeline_mode = #tpu.pipeline_mode<synchronous>, transform_indices = @transform_2, window_bounds = array<i64: 1, 128>}, {pipeline_mode = #tpu.pipeline_mode<synchronous>, transform_indices = @transform_3, window_bounds = array<i64: 9, 128, 128>}, {pipeline_mode = #tpu.pipeline_mode<synchronous>, transform_indices = @transform_4, window_bounds = array<i64: 1, 128>}, {transform_indices = @transform_5, window_bounds = array<i64: 1, 256, 128>}]} {
    %cst = arith.constant 0.000000e+00 : f32
    %0 = vector.broadcast %cst : f32 to vector<1x1x18x4xf32>
    %c0 = arith.constant 0 : index
    %c0_0 = arith.constant 0 : index
    %c0_1 = arith.constant 0 : index
    %c0_2 = arith.constant 0 : index
    %1 = vector.load %arg7[%c0, %c0_0, %c0_1, %c0_2] : memref<1x18x18x4xf32, #tpu.memory_space<vmem>>, vector<1x1x18x4xf32>
    tpu.vector_store %arg7[%c0, %c0_0, %c0_1, %c0_2], %0 {strides = array<i32>} : memref<1x18x18x4xf32, #tpu.memory_space<vmem>>, vector<1x1x18x4xf32>,
    %cst_3 = arith.constant 0.000000e+00 : f32
    %2 = vector.broadcast %cst_3 : f32 to vector<1x1x18x4xf32>
    %c0_4 = arith.constant 0 : index
    %c17 = arith.constant 17 : index
    %c0_5 = arith.constant 0 : index
    %c0_6 = arith.constant 0 : index
    %3 = vector.load %arg7[%c0_4, %c17, %c0_5, %c0_6] : memref<1x18x18x4xf32, #tpu.memory_space<vmem>>, vector<1x1x18x4xf32>
    tpu.vector_store %arg7[%c0_4, %c17, %c0_5, %c0_6], %2 {strides = array<i32>} : memref<1x18x18x4xf32, #tpu.memory_space<vmem>>, vector<1x1x18x4xf32>,
    %cst_7 = arith.constant 0.000000e+00 : f32
    %4 = vector.broadcast %cst_7 : f32 to vector<1x18x1x4xf32>
    %c0_8 = arith.constant 0 : index
    %c0_9 = arith.constant 0 : index
    %c0_10 = arith.constant 0 : index
    %c0_11 = arith.constant 0 : index
    %5 = vector.load %arg7[%c0_8, %c0_9, %c0_10, %c0_11] : memref<1x18x18x4xf32, #tpu.memory_space<vmem>>, vector<1x18x1x4xf32>
    tpu.vector_store %arg7[%c0_8, %c0_9, %c0_10, %c0_11], %4 {strides = array<i32>} : memref<1x18x18x4xf32, #tpu.memory_space<vmem>>, vector<1x18x1x4xf32>,
    %cst_12 = arith.constant 0.000000e+00 : f32
    %6 = vector.broadcast %cst_12 : f32 to vector<1x18x1x4xf32>
    %c0_13 = arith.constant 0 : index
    %c0_14 = arith.constant 0 : index
    %c17_15 = arith.constant 17 : index
    %c0_16 = arith.constant 0 : index
    %7 = vector.load %arg7[%c0_13, %c0_14, %c17_15, %c0_16] : memref<1x18x18x4xf32, #tpu.memory_space<vmem>>, vector<1x18x1x4xf32>
    tpu.vector_store %arg7[%c0_13, %c0_14, %c17_15, %c0_16], %6 {strides = array<i32>} : memref<1x18x18x4xf32, #tpu.memory_space<vmem>>, vector<1x18x1x4xf32>,
    %cst_17 = arith.constant 0.000000e+00 : bf16
    %8 = vector.broadcast %cst_17 : bf16 to vector<1x1x18x128xbf16>
    %c0_18 = arith.constant 0 : index
    %c0_19 = arith.constant 0 : index
    %c0_20 = arith.constant 0 : index
    %c0_21 = arith.constant 0 : index
    %9 = vector.load %arg8[%c0_18, %c0_19, %c0_20, %c0_21] : memref<1x18x18x128xbf16, #tpu.memory_space<vmem>>, vector<1x1x18x128xbf16>
    tpu.vector_store %arg8[%c0_18, %c0_19, %c0_20, %c0_21], %8 {strides = array<i32>} : memref<1x18x18x128xbf16, #tpu.memory_space<vmem>>, vector<1x1x18x128xbf16>,
    %cst_22 = arith.constant 0.000000e+00 : bf16
    %10 = vector.broadcast %cst_22 : bf16 to vector<1x1x18x128xbf16>
    %c0_23 = arith.constant 0 : index
    %c17_24 = arith.constant 17 : index
    %c0_25 = arith.constant 0 : index
    %c0_26 = arith.constant 0 : index
    %11 = vector.load %arg8[%c0_23, %c17_24, %c0_25, %c0_26] : memref<1x18x18x128xbf16, #tpu.memory_space<vmem>>, vector<1x1x18x128xbf16>
    tpu.vector_store %arg8[%c0_23, %c17_24, %c0_25, %c0_26], %10 {strides = array<i32>} : memref<1x18x18x128xbf16, #tpu.memory_space<vmem>>, vector<1x1x18x128xbf16>,
    %cst_27 = arith.constant 0.000000e+00 : bf16
    %12 = vector.broadcast %cst_27 : bf16 to vector<1x18x1x128xbf16>
    %c0_28 = arith.constant 0 : index
    %c0_29 = arith.constant 0 : index
    %c0_30 = arith.constant 0 : index
    %c0_31 = arith.constant 0 : index
    %13 = vector.load %arg8[%c0_28, %c0_29, %c0_30, %c0_31] : memref<1x18x18x128xbf16, #tpu.memory_space<vmem>>, vector<1x18x1x128xbf16>
    tpu.vector_store %arg8[%c0_28, %c0_29, %c0_30, %c0_31], %12 {strides = array<i32>} : memref<1x18x18x128xbf16, #tpu.memory_space<vmem>>, vector<1x18x1x128xbf16>,
    %cst_32 = arith.constant 0.000000e+00 : bf16
    %14 = vector.broadcast %cst_32 : bf16 to vector<1x18x1x128xbf16>
    %c0_33 = arith.constant 0 : index
    %c0_34 = arith.constant 0 : index
    %c17_35 = arith.constant 17 : index
    %c0_36 = arith.constant 0 : index
    %15 = vector.load %arg8[%c0_33, %c0_34, %c17_35, %c0_36] : memref<1x18x18x128xbf16, #tpu.memory_space<vmem>>, vector<1x18x1x128xbf16>
    tpu.vector_store %arg8[%c0_33, %c0_34, %c17_35, %c0_36], %14 {strides = array<i32>} : memref<1x18x18x128xbf16, #tpu.memory_space<vmem>>, vector<1x18x1x128xbf16>,
    %c0_37 = arith.constant 0 : index
    %c0_38 = arith.constant 0 : index
    %c0_39 = arith.constant 0 : index
    %16 = vector.load %arg1[%c0_37, %c0_38, %c0_39] : memref<1x16x64xf32, #tpu.memory_space<vmem>>, vector<1x16x64xf32>
    %17 = vector.shape_cast %16 : vector<1x16x64xf32> to vector<1x16x16x4xf32>
    %c0_40 = arith.constant 0 : index
    %c1 = arith.constant 1 : index
    %c1_41 = arith.constant 1 : index
    %c0_42 = arith.constant 0 : index
    %18 = vector.load %arg7[%c0_40, %c1, %c1_41, %c0_42] : memref<1x18x18x4xf32, #tpu.memory_space<vmem>>, vector<1x16x16x4xf32>
    tpu.vector_store %arg7[%c0_40, %c1, %c1_41, %c0_42], %17 {strides = array<i32>} : memref<1x18x18x4xf32, #tpu.memory_space<vmem>>, vector<1x16x16x4xf32>,
    %cst_43 = arith.constant 0.000000e+00 : f32
    %19 = vector.broadcast %cst_43 : f32 to vector<256x128xf32>
    %c0_44 = arith.constant 0 : index
    %c0_45 = arith.constant 0 : index
    %c0_46 = arith.constant 0 : index
    %c0_47 = arith.constant 0 : index
    %20 = vector.load %arg7[%c0_44, %c0_45, %c0_46, %c0_47] : memref<1x18x18x4xf32, #tpu.memory_space<vmem>>, vector<1x16x16x4xf32>
    %21 = vector.shape_cast %20 : vector<1x16x16x4xf32> to vector<256x4xf32>
    %22 = arith.truncf %21 : vector<256x4xf32> to vector<256x4xbf16>
    %c0_48 = arith.constant 0 : index
    %c0_49 = arith.constant 0 : index
    %c0_50 = arith.constant 0 : index
    %23 = vector.load %arg2[%c0_48, %c0_49, %c0_50] : memref<9x4x128xbf16, #tpu.memory_space<vmem>>, vector<1x4x128xbf16>
    %24 = vector.shape_cast %23 : vector<1x4x128xbf16> to vector<4x128xbf16>
    %cst_51 = arith.constant dense<0.000000e+00> : vector<256x128xf32>
    %25 = tpu.matmul %22, %24, %cst_51 {dimension_numbers = #tpu.dot_dimension_numbers<[1], [0], [0], [1], [0, 0, 1, 1], [], []>} : vector<256x4xbf16>, vector<4x128xbf16>, vector<256x128xf32> -> vector<256x128xf32>
    %26 = arith.addf %19, %25 : vector<256x128xf32>
    %c0_52 = arith.constant 0 : index
    %c0_53 = arith.constant 0 : index
    %c1_54 = arith.constant 1 : index
    %c0_55 = arith.constant 0 : index
    %27 = vector.load %arg7[%c0_52, %c0_53, %c1_54, %c0_55] : memref<1x18x18x4xf32, #tpu.memory_space<vmem>>, vector<1x16x16x4xf32>
    %28 = vector.shape_cast %27 : vector<1x16x16x4xf32> to vector<256x4xf32>
    %29 = arith.truncf %28 : vector<256x4xf32> to vector<256x4xbf16>
    %c1_56 = arith.constant 1 : index
    %c0_57 = arith.constant 0 : index
    %c0_58 = arith.constant 0 : index
    %30 = vector.load %arg2[%c1_56, %c0_57, %c0_58] : memref<9x4x128xbf16, #tpu.memory_space<vmem>>, vector<1x4x128xbf16>
    %31 = vector.shape_cast %30 : vector<1x4x128xbf16> to vector<4x128xbf16>
    %cst_59 = arith.constant dense<0.000000e+00> : vector<256x128xf32>
    %32 = tpu.matmul %29, %31, %cst_59 {dimension_numbers = #tpu.dot_dimension_numbers<[1], [0], [0], [1], [0, 0, 1, 1], [], []>} : vector<256x4xbf16>, vector<4x128xbf16>, vector<256x128xf32> -> vector<256x128xf32>
    %33 = arith.addf %26, %32 : vector<256x128xf32>
    %c0_60 = arith.constant 0 : index
    %c0_61 = arith.constant 0 : index
    %c2 = arith.constant 2 : index
    %c0_62 = arith.constant 0 : index
    %34 = vector.load %arg7[%c0_60, %c0_61, %c2, %c0_62] : memref<1x18x18x4xf32, #tpu.memory_space<vmem>>, vector<1x16x16x4xf32>
    %35 = vector.shape_cast %34 : vector<1x16x16x4xf32> to vector<256x4xf32>
    %36 = arith.truncf %35 : vector<256x4xf32> to vector<256x4xbf16>
    %c2_63 = arith.constant 2 : index
    %c0_64 = arith.constant 0 : index
    %c0_65 = arith.constant 0 : index
    %37 = vector.load %arg2[%c2_63, %c0_64, %c0_65] : memref<9x4x128xbf16, #tpu.memory_space<vmem>>, vector<1x4x128xbf16>
    %38 = vector.shape_cast %37 : vector<1x4x128xbf16> to vector<4x128xbf16>
    %cst_66 = arith.constant dense<0.000000e+00> : vector<256x128xf32>
    %39 = tpu.matmul %36, %38, %cst_66 {dimension_numbers = #tpu.dot_dimension_numbers<[1], [0], [0], [1], [0, 0, 1, 1], [], []>} : vector<256x4xbf16>, vector<4x128xbf16>, vector<256x128xf32> -> vector<256x128xf32>
    %40 = arith.addf %33, %39 : vector<256x128xf32>
    %c0_67 = arith.constant 0 : index
    %c1_68 = arith.constant 1 : index
    %c0_69 = arith.constant 0 : index
    %c0_70 = arith.constant 0 : index
    %41 = vector.load %arg7[%c0_67, %c1_68, %c0_69, %c0_70] : memref<1x18x18x4xf32, #tpu.memory_space<vmem>>, vector<1x16x16x4xf32>
    %42 = vector.shape_cast %41 : vector<1x16x16x4xf32> to vector<256x4xf32>
    %43 = arith.truncf %42 : vector<256x4xf32> to vector<256x4xbf16>
    %c3 = arith.constant 3 : index
    %c0_71 = arith.constant 0 : index
    %c0_72 = arith.constant 0 : index
    %44 = vector.load %arg2[%c3, %c0_71, %c0_72] : memref<9x4x128xbf16, #tpu.memory_space<vmem>>, vector<1x4x128xbf16>
    %45 = vector.shape_cast %44 : vector<1x4x128xbf16> to vector<4x128xbf16>
    %cst_73 = arith.constant dense<0.000000e+00> : vector<256x128xf32>
    %46 = tpu.matmul %43, %45, %cst_73 {dimension_numbers = #tpu.dot_dimension_numbers<[1], [0], [0], [1], [0, 0, 1, 1], [], []>} : vector<256x4xbf16>, vector<4x128xbf16>, vector<256x128xf32> -> vector<256x128xf32>
    %47 = arith.addf %40, %46 : vector<256x128xf32>
    %c0_74 = arith.constant 0 : index
    %c1_75 = arith.constant 1 : index
    %c1_76 = arith.constant 1 : index
    %c0_77 = arith.constant 0 : index
    %48 = vector.load %arg7[%c0_74, %c1_75, %c1_76, %c0_77] : memref<1x18x18x4xf32, #tpu.memory_space<vmem>>, vector<1x16x16x4xf32>
    %49 = vector.shape_cast %48 : vector<1x16x16x4xf32> to vector<256x4xf32>
    %50 = arith.truncf %49 : vector<256x4xf32> to vector<256x4xbf16>
    %c4 = arith.constant 4 : index
    %c0_78 = arith.constant 0 : index
    %c0_79 = arith.constant 0 : index
    %51 = vector.load %arg2[%c4, %c0_78, %c0_79] : memref<9x4x128xbf16, #tpu.memory_space<vmem>>, vector<1x4x128xbf16>
    %52 = vector.shape_cast %51 : vector<1x4x128xbf16> to vector<4x128xbf16>
    %cst_80 = arith.constant dense<0.000000e+00> : vector<256x128xf32>
    %53 = tpu.matmul %50, %52, %cst_80 {dimension_numbers = #tpu.dot_dimension_numbers<[1], [0], [0], [1], [0, 0, 1, 1], [], []>} : vector<256x4xbf16>, vector<4x128xbf16>, vector<256x128xf32> -> vector<256x128xf32>
    %54 = arith.addf %47, %53 : vector<256x128xf32>
    %c0_81 = arith.constant 0 : index
    %c1_82 = arith.constant 1 : index
    %c2_83 = arith.constant 2 : index
    %c0_84 = arith.constant 0 : index
    %55 = vector.load %arg7[%c0_81, %c1_82, %c2_83, %c0_84] : memref<1x18x18x4xf32, #tpu.memory_space<vmem>>, vector<1x16x16x4xf32>
    %56 = vector.shape_cast %55 : vector<1x16x16x4xf32> to vector<256x4xf32>
    %57 = arith.truncf %56 : vector<256x4xf32> to vector<256x4xbf16>
    %c5 = arith.constant 5 : index
    %c0_85 = arith.constant 0 : index
    %c0_86 = arith.constant 0 : index
    %58 = vector.load %arg2[%c5, %c0_85, %c0_86] : memref<9x4x128xbf16, #tpu.memory_space<vmem>>, vector<1x4x128xbf16>
    %59 = vector.shape_cast %58 : vector<1x4x128xbf16> to vector<4x128xbf16>
    %cst_87 = arith.constant dense<0.000000e+00> : vector<256x128xf32>
    %60 = tpu.matmul %57, %59, %cst_87 {dimension_numbers = #tpu.dot_dimension_numbers<[1], [0], [0], [1], [0, 0, 1, 1], [], []>} : vector<256x4xbf16>, vector<4x128xbf16>, vector<256x128xf32> -> vector<256x128xf32>
    %61 = arith.addf %54, %60 : vector<256x128xf32>
    %c0_88 = arith.constant 0 : index
    %c2_89 = arith.constant 2 : index
    %c0_90 = arith.constant 0 : index
    %c0_91 = arith.constant 0 : index
    %62 = vector.load %arg7[%c0_88, %c2_89, %c0_90, %c0_91] : memref<1x18x18x4xf32, #tpu.memory_space<vmem>>, vector<1x16x16x4xf32>
    %63 = vector.shape_cast %62 : vector<1x16x16x4xf32> to vector<256x4xf32>
    %64 = arith.truncf %63 : vector<256x4xf32> to vector<256x4xbf16>
    %c6 = arith.constant 6 : index
    %c0_92 = arith.constant 0 : index
    %c0_93 = arith.constant 0 : index
    %65 = vector.load %arg2[%c6, %c0_92, %c0_93] : memref<9x4x128xbf16, #tpu.memory_space<vmem>>, vector<1x4x128xbf16>
    %66 = vector.shape_cast %65 : vector<1x4x128xbf16> to vector<4x128xbf16>
    %cst_94 = arith.constant dense<0.000000e+00> : vector<256x128xf32>
    %67 = tpu.matmul %64, %66, %cst_94 {dimension_numbers = #tpu.dot_dimension_numbers<[1], [0], [0], [1], [0, 0, 1, 1], [], []>} : vector<256x4xbf16>, vector<4x128xbf16>, vector<256x128xf32> -> vector<256x128xf32>
    %68 = arith.addf %61, %67 : vector<256x128xf32>
    %c0_95 = arith.constant 0 : index
    %c2_96 = arith.constant 2 : index
    %c1_97 = arith.constant 1 : index
    %c0_98 = arith.constant 0 : index
    %69 = vector.load %arg7[%c0_95, %c2_96, %c1_97, %c0_98] : memref<1x18x18x4xf32, #tpu.memory_space<vmem>>, vector<1x16x16x4xf32>
    %70 = vector.shape_cast %69 : vector<1x16x16x4xf32> to vector<256x4xf32>
    %71 = arith.truncf %70 : vector<256x4xf32> to vector<256x4xbf16>
    %c7 = arith.constant 7 : index
    %c0_99 = arith.constant 0 : index
    %c0_100 = arith.constant 0 : index
    %72 = vector.load %arg2[%c7, %c0_99, %c0_100] : memref<9x4x128xbf16, #tpu.memory_space<vmem>>, vector<1x4x128xbf16>
    %73 = vector.shape_cast %72 : vector<1x4x128xbf16> to vector<4x128xbf16>
    %cst_101 = arith.constant dense<0.000000e+00> : vector<256x128xf32>
    %74 = tpu.matmul %71, %73, %cst_101 {dimension_numbers = #tpu.dot_dimension_numbers<[1], [0], [0], [1], [0, 0, 1, 1], [], []>} : vector<256x4xbf16>, vector<4x128xbf16>, vector<256x128xf32> -> vector<256x128xf32>
    %75 = arith.addf %68, %74 : vector<256x128xf32>
    %c0_102 = arith.constant 0 : index
    %c2_103 = arith.constant 2 : index
    %c2_104 = arith.constant 2 : index
    %c0_105 = arith.constant 0 : index
    %76 = vector.load %arg7[%c0_102, %c2_103, %c2_104, %c0_105] : memref<1x18x18x4xf32, #tpu.memory_space<vmem>>, vector<1x16x16x4xf32>
    %77 = vector.shape_cast %76 : vector<1x16x16x4xf32> to vector<256x4xf32>
    %78 = arith.truncf %77 : vector<256x4xf32> to vector<256x4xbf16>
    %c8 = arith.constant 8 : index
    %c0_106 = arith.constant 0 : index
    %c0_107 = arith.constant 0 : index
    %79 = vector.load %arg2[%c8, %c0_106, %c0_107] : memref<9x4x128xbf16, #tpu.memory_space<vmem>>, vector<1x4x128xbf16>
    %80 = vector.shape_cast %79 : vector<1x4x128xbf16> to vector<4x128xbf16>
    %cst_108 = arith.constant dense<0.000000e+00> : vector<256x128xf32>
    %81 = tpu.matmul %78, %80, %cst_108 {dimension_numbers = #tpu.dot_dimension_numbers<[1], [0], [0], [1], [0, 0, 1, 1], [], []>} : vector<256x4xbf16>, vector<4x128xbf16>, vector<256x128xf32> -> vector<256x128xf32>
    %82 = arith.addf %75, %81 : vector<256x128xf32>
    %c0_109 = arith.constant 0 : index
    %c0_110 = arith.constant 0 : index
    %83 = vector.load %arg3[%c0_109, %c0_110] : memref<1x128xf32, #tpu.memory_space<vmem>>, vector<1x128xf32>
    %84 = vector.broadcast %83 : vector<1x128xf32> to vector<256x128xf32>
    %85 = arith.addf %82, %84 : vector<256x128xf32>
    %cst_111 = arith.constant 0.000000e+00 : f32
    %86 = vector.broadcast %cst_111 : f32 to vector<256x128xf32>
    %87 = arith.maximumf %85, %86 : vector<256x128xf32>
    %88 = vector.shape_cast %87 : vector<256x128xf32> to vector<1x16x16x128xf32>
    %89 = arith.truncf %88 : vector<1x16x16x128xf32> to vector<1x16x16x128xbf16>
    %c0_112 = arith.constant 0 : index
    %c1_113 = arith.constant 1 : index
    %c1_114 = arith.constant 1 : index
    %c0_115 = arith.constant 0 : index
    %90 = vector.load %arg8[%c0_112, %c1_113, %c1_114, %c0_115] : memref<1x18x18x128xbf16, #tpu.memory_space<vmem>>, vector<1x16x16x128xbf16>
    tpu.vector_store %arg8[%c0_112, %c1_113, %c1_114, %c0_115], %89 {strides = array<i32>} : memref<1x18x18x128xbf16, #tpu.memory_space<vmem>>, vector<1x16x16x128xbf16>,
    %cst_116 = arith.constant 0.000000e+00 : f32
    %91 = vector.broadcast %cst_116 : f32 to vector<256x128xf32>
    %c0_117 = arith.constant 0 : index
    %c0_118 = arith.constant 0 : index
    %c0_119 = arith.constant 0 : index
    %c0_120 = arith.constant 0 : index
    %92 = vector.load %arg8[%c0_117, %c0_118, %c0_119, %c0_120] : memref<1x18x18x128xbf16, #tpu.memory_space<vmem>>, vector<1x16x16x128xbf16>
    %93 = vector.shape_cast %92 : vector<1x16x16x128xbf16> to vector<256x128xbf16>
    %c0_121 = arith.constant 0 : index
    %c0_122 = arith.constant 0 : index
    %c0_123 = arith.constant 0 : index
    %94 = vector.load %arg4[%c0_121, %c0_122, %c0_123] : memref<9x128x128xbf16, #tpu.memory_space<vmem>>, vector<1x128x128xbf16>
    %95 = vector.shape_cast %94 : vector<1x128x128xbf16> to vector<128x128xbf16>
    %cst_124 = arith.constant dense<0.000000e+00> : vector<256x128xf32>
    %96 = tpu.matmul %93, %95, %cst_124 {dimension_numbers = #tpu.dot_dimension_numbers<[1], [0], [0], [1], [0, 0, 1, 1], [], []>} : vector<256x128xbf16>, vector<128x128xbf16>, vector<256x128xf32> -> vector<256x128xf32>
    %97 = arith.addf %91, %96 : vector<256x128xf32>
    %c0_125 = arith.constant 0 : index
    %c0_126 = arith.constant 0 : index
    %c1_127 = arith.constant 1 : index
    %c0_128 = arith.constant 0 : index
    %98 = vector.load %arg8[%c0_125, %c0_126, %c1_127, %c0_128] : memref<1x18x18x128xbf16, #tpu.memory_space<vmem>>, vector<1x16x16x128xbf16>
    %99 = vector.shape_cast %98 : vector<1x16x16x128xbf16> to vector<256x128xbf16>
    %c1_129 = arith.constant 1 : index
    %c0_130 = arith.constant 0 : index
    %c0_131 = arith.constant 0 : index
    %100 = vector.load %arg4[%c1_129, %c0_130, %c0_131] : memref<9x128x128xbf16, #tpu.memory_space<vmem>>, vector<1x128x128xbf16>
    %101 = vector.shape_cast %100 : vector<1x128x128xbf16> to vector<128x128xbf16>
    %cst_132 = arith.constant dense<0.000000e+00> : vector<256x128xf32>
    %102 = tpu.matmul %99, %101, %cst_132 {dimension_numbers = #tpu.dot_dimension_numbers<[1], [0], [0], [1], [0, 0, 1, 1], [], []>} : vector<256x128xbf16>, vector<128x128xbf16>, vector<256x128xf32> -> vector<256x128xf32>
    %103 = arith.addf %97, %102 : vector<256x128xf32>
    %c0_133 = arith.constant 0 : index
    %c0_134 = arith.constant 0 : index
    %c2_135 = arith.constant 2 : index
    %c0_136 = arith.constant 0 : index
    %104 = vector.load %arg8[%c0_133, %c0_134, %c2_135, %c0_136] : memref<1x18x18x128xbf16, #tpu.memory_space<vmem>>, vector<1x16x16x128xbf16>
    %105 = vector.shape_cast %104 : vector<1x16x16x128xbf16> to vector<256x128xbf16>
    %c2_137 = arith.constant 2 : index
    %c0_138 = arith.constant 0 : index
    %c0_139 = arith.constant 0 : index
    %106 = vector.load %arg4[%c2_137, %c0_138, %c0_139] : memref<9x128x128xbf16, #tpu.memory_space<vmem>>, vector<1x128x128xbf16>
    %107 = vector.shape_cast %106 : vector<1x128x128xbf16> to vector<128x128xbf16>
    %cst_140 = arith.constant dense<0.000000e+00> : vector<256x128xf32>
    %108 = tpu.matmul %105, %107, %cst_140 {dimension_numbers = #tpu.dot_dimension_numbers<[1], [0], [0], [1], [0, 0, 1, 1], [], []>} : vector<256x128xbf16>, vector<128x128xbf16>, vector<256x128xf32> -> vector<256x128xf32>
    %109 = arith.addf %103, %108 : vector<256x128xf32>
    %c0_141 = arith.constant 0 : index
    %c1_142 = arith.constant 1 : index
    %c0_143 = arith.constant 0 : index
    %c0_144 = arith.constant 0 : index
    %110 = vector.load %arg8[%c0_141, %c1_142, %c0_143, %c0_144] : memref<1x18x18x128xbf16, #tpu.memory_space<vmem>>, vector<1x16x16x128xbf16>
    %111 = vector.shape_cast %110 : vector<1x16x16x128xbf16> to vector<256x128xbf16>
    %c3_145 = arith.constant 3 : index
    %c0_146 = arith.constant 0 : index
    %c0_147 = arith.constant 0 : index
    %112 = vector.load %arg4[%c3_145, %c0_146, %c0_147] : memref<9x128x128xbf16, #tpu.memory_space<vmem>>, vector<1x128x128xbf16>
    %113 = vector.shape_cast %112 : vector<1x128x128xbf16> to vector<128x128xbf16>
    %cst_148 = arith.constant dense<0.000000e+00> : vector<256x128xf32>
    %114 = tpu.matmul %111, %113, %cst_148 {dimension_numbers = #tpu.dot_dimension_numbers<[1], [0], [0], [1], [0, 0, 1, 1], [], []>} : vector<256x128xbf16>, vector<128x128xbf16>, vector<256x128xf32> -> vector<256x128xf32>
    %115 = arith.addf %109, %114 : vector<256x128xf32>
    %c0_149 = arith.constant 0 : index
    %c1_150 = arith.constant 1 : index
    %c1_151 = arith.constant 1 : index
    %c0_152 = arith.constant 0 : index
    %116 = vector.load %arg8[%c0_149, %c1_150, %c1_151, %c0_152] : memref<1x18x18x128xbf16, #tpu.memory_space<vmem>>, vector<1x16x16x128xbf16>
    %117 = vector.shape_cast %116 : vector<1x16x16x128xbf16> to vector<256x128xbf16>
    %c4_153 = arith.constant 4 : index
    %c0_154 = arith.constant 0 : index
    %c0_155 = arith.constant 0 : index
    %118 = vector.load %arg4[%c4_153, %c0_154, %c0_155] : memref<9x128x128xbf16, #tpu.memory_space<vmem>>, vector<1x128x128xbf16>
    %119 = vector.shape_cast %118 : vector<1x128x128xbf16> to vector<128x128xbf16>
    %cst_156 = arith.constant dense<0.000000e+00> : vector<256x128xf32>
    %120 = tpu.matmul %117, %119, %cst_156 {dimension_numbers = #tpu.dot_dimension_numbers<[1], [0], [0], [1], [0, 0, 1, 1], [], []>} : vector<256x128xbf16>, vector<128x128xbf16>, vector<256x128xf32> -> vector<256x128xf32>
    %121 = arith.addf %115, %120 : vector<256x128xf32>
    %c0_157 = arith.constant 0 : index
    %c1_158 = arith.constant 1 : index
    %c2_159 = arith.constant 2 : index
    %c0_160 = arith.constant 0 : index
    %122 = vector.load %arg8[%c0_157, %c1_158, %c2_159, %c0_160] : memref<1x18x18x128xbf16, #tpu.memory_space<vmem>>, vector<1x16x16x128xbf16>
    %123 = vector.shape_cast %122 : vector<1x16x16x128xbf16> to vector<256x128xbf16>
    %c5_161 = arith.constant 5 : index
    %c0_162 = arith.constant 0 : index
    %c0_163 = arith.constant 0 : index
    %124 = vector.load %arg4[%c5_161, %c0_162, %c0_163] : memref<9x128x128xbf16, #tpu.memory_space<vmem>>, vector<1x128x128xbf16>
    %125 = vector.shape_cast %124 : vector<1x128x128xbf16> to vector<128x128xbf16>
    %cst_164 = arith.constant dense<0.000000e+00> : vector<256x128xf32>
    %126 = tpu.matmul %123, %125, %cst_164 {dimension_numbers = #tpu.dot_dimension_numbers<[1], [0], [0], [1], [0, 0, 1, 1], [], []>} : vector<256x128xbf16>, vector<128x128xbf16>, vector<256x128xf32> -> vector<256x128xf32>
    %127 = arith.addf %121, %126 : vector<256x128xf32>
    %c0_165 = arith.constant 0 : index
    %c2_166 = arith.constant 2 : index
    %c0_167 = arith.constant 0 : index
    %c0_168 = arith.constant 0 : index
    %128 = vector.load %arg8[%c0_165, %c2_166, %c0_167, %c0_168] : memref<1x18x18x128xbf16, #tpu.memory_space<vmem>>, vector<1x16x16x128xbf16>
    %129 = vector.shape_cast %128 : vector<1x16x16x128xbf16> to vector<256x128xbf16>
    %c6_169 = arith.constant 6 : index
    %c0_170 = arith.constant 0 : index
    %c0_171 = arith.constant 0 : index
    %130 = vector.load %arg4[%c6_169, %c0_170, %c0_171] : memref<9x128x128xbf16, #tpu.memory_space<vmem>>, vector<1x128x128xbf16>
    %131 = vector.shape_cast %130 : vector<1x128x128xbf16> to vector<128x128xbf16>
    %cst_172 = arith.constant dense<0.000000e+00> : vector<256x128xf32>
    %132 = tpu.matmul %129, %131, %cst_172 {dimension_numbers = #tpu.dot_dimension_numbers<[1], [0], [0], [1], [0, 0, 1, 1], [], []>} : vector<256x128xbf16>, vector<128x128xbf16>, vector<256x128xf32> -> vector<256x128xf32>
    %133 = arith.addf %127, %132 : vector<256x128xf32>
    %c0_173 = arith.constant 0 : index
    %c2_174 = arith.constant 2 : index
    %c1_175 = arith.constant 1 : index
    %c0_176 = arith.constant 0 : index
    %134 = vector.load %arg8[%c0_173, %c2_174, %c1_175, %c0_176] : memref<1x18x18x128xbf16, #tpu.memory_space<vmem>>, vector<1x16x16x128xbf16>
    %135 = vector.shape_cast %134 : vector<1x16x16x128xbf16> to vector<256x128xbf16>
    %c7_177 = arith.constant 7 : index
    %c0_178 = arith.constant 0 : index
    %c0_179 = arith.constant 0 : index
    %136 = vector.load %arg4[%c7_177, %c0_178, %c0_179] : memref<9x128x128xbf16, #tpu.memory_space<vmem>>, vector<1x128x128xbf16>
    %137 = vector.shape_cast %136 : vector<1x128x128xbf16> to vector<128x128xbf16>
    %cst_180 = arith.constant dense<0.000000e+00> : vector<256x128xf32>
    %138 = tpu.matmul %135, %137, %cst_180 {dimension_numbers = #tpu.dot_dimension_numbers<[1], [0], [0], [1], [0, 0, 1, 1], [], []>} : vector<256x128xbf16>, vector<128x128xbf16>, vector<256x128xf32> -> vector<256x128xf32>
    %139 = arith.addf %133, %138 : vector<256x128xf32>
    %c0_181 = arith.constant 0 : index
    %c2_182 = arith.constant 2 : index
    %c2_183 = arith.constant 2 : index
    %c0_184 = arith.constant 0 : index
    %140 = vector.load %arg8[%c0_181, %c2_182, %c2_183, %c0_184] : memref<1x18x18x128xbf16, #tpu.memory_space<vmem>>, vector<1x16x16x128xbf16>
    %141 = vector.shape_cast %140 : vector<1x16x16x128xbf16> to vector<256x128xbf16>
    %c8_185 = arith.constant 8 : index
    %c0_186 = arith.constant 0 : index
    %c0_187 = arith.constant 0 : index
    %142 = vector.load %arg4[%c8_185, %c0_186, %c0_187] : memref<9x128x128xbf16, #tpu.memory_space<vmem>>, vector<1x128x128xbf16>
    %143 = vector.shape_cast %142 : vector<1x128x128xbf16> to vector<128x128xbf16>
    %cst_188 = arith.constant dense<0.000000e+00> : vector<256x128xf32>
    %144 = tpu.matmul %141, %143, %cst_188 {dimension_numbers = #tpu.dot_dimension_numbers<[1], [0], [0], [1], [0, 0, 1, 1], [], []>} : vector<256x128xbf16>, vector<128x128xbf16>, vector<256x128xf32> -> vector<256x128xf32>
    %145 = arith.addf %139, %144 : vector<256x128xf32>
    %c0_189 = arith.constant 0 : index
    %c0_190 = arith.constant 0 : index
    %146 = vector.load %arg5[%c0_189, %c0_190] : memref<1x128xf32, #tpu.memory_space<vmem>>, vector<1x128xf32>
    %147 = vector.broadcast %146 : vector<1x128xf32> to vector<256x128xf32>
    %148 = arith.addf %145, %147 : vector<256x128xf32>
    %cst_191 = arith.constant 0.000000e+00 : f32
    %149 = vector.broadcast %cst_191 : f32 to vector<256x128xf32>
    %150 = arith.maximumf %148, %149 : vector<256x128xf32>
    %151 = vector.shape_cast %150 : vector<256x128xf32> to vector<1x256x128xf32>
    %c0_192 = arith.constant 0 : index
    %c0_193 = arith.constant 0 : index
    %c0_194 = arith.constant 0 : index
    %152 = vector.load %arg6[%c0_192, %c0_193, %c0_194] : memref<1x256x128xf32, #tpu.memory_space<vmem>>, vector<1x256x128xf32>
    tpu.vector_store %arg6[%c0_192, %c0_193, %c0_194], %151 {strides = array<i32>} : memref<1x256x128xf32, #tpu.memory_space<vmem>>, vector<1x256x128xf32>,
    return
  }
  func.func @transform_0(%arg0: i32) -> (i32, i32, i32) {
    %c0_i32 = arith.constant 0 : i32
    %c0_i32_0 = arith.constant 0 : i32
    %c0_i32_1 = arith.constant 0 : i32
    return %arg0, %c0_i32, %c0_i32_0 : i32, i32, i32
  }
  func.func @transform_1(%arg0: i32) -> (i32, i32, i32) {
    %c0_i32 = arith.constant 0 : i32
    %c0_i32_0 = arith.constant 0 : i32
    %c0_i32_1 = arith.constant 0 : i32
    %c0_i32_2 = arith.constant 0 : i32
    return %c0_i32, %c0_i32_0, %c0_i32_1 : i32, i32, i32
  }
  func.func @transform_2(%arg0: i32) -> (i32, i32) {
    %c0_i32 = arith.constant 0 : i32
    %c0_i32_0 = arith.constant 0 : i32
    %c0_i32_1 = arith.constant 0 : i32
    return %c0_i32, %c0_i32_0 : i32, i32
  }
  func.func @transform_3(%arg0: i32) -> (i32, i32, i32) {
    %c0_i32 = arith.constant 0 : i32
    %c0_i32_0 = arith.constant 0 : i32
    %c0_i32_1 = arith.constant 0 : i32
    %c0_i32_2 = arith.constant 0 : i32
    return %c0_i32, %c0_i32_0, %c0_i32_1 : i32, i32, i32
  }
  func.func @transform_4(%arg0: i32) -> (i32, i32) {
    %c0_i32 = arith.constant 0 : i32
    %c0_i32_0 = arith.constant 0 : i32
    %c0_i32_1 = arith.constant 0 : i32
    return %c0_i32, %c0_i32_0 : i32, i32
  }
  func.func @transform_5(%arg0: i32) -> (i32, i32, i32) {
    %c0_i32 = arith.constant 0 : i32
    %c0_i32_0 = arith.constant 0 : i32
    %c0_i32_1 = arith.constant 0 : i32
    return %arg0, %c0_i32, %c0_i32_0 : i32, i32, i32
  }
}

</mosaic_0001>

<llo_original>
// kernel: tpu_custom_call.1
$region0: #{tpu_custom_call.1}
  #allocation0 [shape = 'u32[]', space=smem, size = 0x4, offset = 0x4, fixed_abs, tag = 'smem constant byte address 0x4 - core index']
  #allocation1 [shape = 'u32[144,128]{1,0:T(1,128)}', space=vmem, size = 0x12000, scoped, tag = 'internal scratch']
  #allocation2 [shape = 'f32[1,18,18,4]{3,2,1,0:T(8,128)}', space=vmem, size = 0x36000, scoped, tag = 'scratch operand']
  #allocation3 [shape = 'bf16[1,18,18,128]{3,2,1,0:T(8,128)(2,1)}', space=vmem, size = 0x1b000, scoped, tag = 'scratch operand']
  %s0 = inlined_call_operand.hbm [shape: f32[2,16,64], index: 0, kind: input, shape index: {}]
  %s1 = inlined_call_operand.hbm [shape: bf16[9,4,128], index: 1, kind: input, shape index: {}]
  %s2 = inlined_call_operand.vmem [shape: f32[1,128], index: 2, kind: input, shape index: {}]
  %s3 = inlined_call_operand.hbm [shape: bf16[9,128,128], index: 3, kind: input, shape index: {}]
  %s4 = inlined_call_operand.vmem [shape: f32[1,128], index: 4, kind: input, shape index: {}]
  %s5 = inlined_call_operand.hbm [shape: f32[2,256,128], index: 5, kind: output, shape index: {}]
  %s6 = sld [smem:[#allocation0]]
  $region65: #{tpu_custom_call.1} parent=0
    _
  %s8 = ssub.s32 1, %s6
  %s9 = scalar_select 0, %s8, %s6
  $region1: #{tpu_custom_call.1} parent=0
    #allocation4 [shape = 'u8[16384]{0}', space=vmem, size = 0x4000, scoped, tag = 'input window, operand 0']
    #allocation5 [shape = 's32[2]{0}', space=sflag, size = 0x8, scoped, tag = 'scoped memory for tpu_custom_call.1']
    #allocation6 [shape = 's32[2]{0}', space=sflag, size = 0x8, scoped, tag = 'scoped memory for tpu_custom_call.1']
    #allocation7 [shape = 'u8[9216]{0}', space=vmem, size = 0x2400, scoped, tag = 'input window, operand 1, single buffered']
    #allocation8 [shape = 's32[1]{0}', space=sflag, size = 0x4, scoped, tag = 'scoped memory for tpu_custom_call.1']
    #allocation9 [shape = 'u8[294912]{0}', space=vmem, size = 0x48000, scoped, tag = 'input window, operand 3, single buffered']
    #allocation10 [shape = 'u8[262144]{0}', space=vmem, size = 0x40000, scoped, tag = 'output window, operand 0']
    %10 = vsyncpa [#allocation5], 0
    %s11 = scalar_lea.sflag [#allocation5], 1
    %12 = vsyncpa %s11, 0
    %13 = vsyncpa [#allocation8], 0
    %14 = vsyncpa [#allocation6], 0
    %s15 = scalar_lea.sflag [#allocation6], 1
    %16 = vsyncpa %s15, 0
    loop: start=0, step=1, limit=4
    $region2: #{tpu_custom_call.1} parent=1 // loop_pre_header
      _
    $region3: #{tpu_custom_call.1} parent=1 // loop_header
      %s18 = sphi 0, %s22
      %p19 = scmp.ge.s32.totalorder %s18, 4
      %s28 = sphi 0, %s30
      %s31 = sphi 0, %s28
      %s32 = sphi 0, %s31
      %s48 = sphi 0, %s32
      %s52 = sphi 0, %s52
      %s54 = sphi 0, %s52
      %s55 = sphi 0, %s54
      %s69 = sphi 0, %s55
      %s73 = sphi 0, %s73
      %s75 = sphi 0, %s73
      %s76 = sphi 0, %s75
      %s90 = sphi 0, %s76
      %s94 = sphi 0, %s94
      %s96 = sphi 0, %s94
      %s97 = sphi 0, %s96
      %s111 = sphi 0, %s97
      %s115 = sphi 0, %s115
      %s117 = sphi 0, %s115
      %s118 = sphi 0, %s117
      %s132 = sphi 0, %s118
      %s138 = sphi 0, %s140
      %s141 = sphi 0, %s138
      %s142 = sphi 0, %s141
      %s158 = sphi 0, %s142
    $region4: #{tpu_custom_call.1} parent=1 // loop_header_branch
      %21 = sbr.rel (%p19) target = $region8
    $region5: #{tpu_custom_call.1} parent=1 // loop_body
      %s23 = ssub.s32 %s18, 1
      %s24 = ssub.s32 %s18, 2
      %s25 = sadd.s32 %s18, 1
      %s26 = ssub.s32 %s18, %s25
      %p27 = scmp.eq.s32.totalorder %s26, 0
      %s29 = sadd.s32 %s28, 1
      %s30 = scalar_select %p27, %s28, %s29
      %p33 = pneg %p27
      %p34 = scmp.eq.s32.totalorder %s18, 1
      %p35 = por %p33, %p34
      %p36 = scmp.ne.s32.totalorder %s28, %s31
      %p37 = scmp.eq.s32.totalorder %s18, 0
      %p38 = por %p36, %p37
      %p39 = scmp.ne.s32.totalorder %s28, %s31
      %p40 = scmp.eq.s32.totalorder %s23, 1
      %p41 = por %p39, %p40
      %p42 = scmp.ne.s32.totalorder %s31, %s32
      %p43 = scmp.eq.s32.totalorder %s23, 0
      %p44 = por %p42, %p43
      %p45 = scmp.ne.s32.totalorder %s31, %s32
      %p46 = scmp.eq.s32.totalorder %s24, 1
      %p47 = por %p45, %p46
      %p49 = scmp.ne.s32.totalorder %s32, %s48
      %p50 = scmp.eq.s32.totalorder %s24, 0
      %p51 = por %p49, %p50
      %s53 = sadd.s32 %s52, 1
      %p56 = scmp.eq.s32.totalorder %s18, 1
      %p57 = scmp.ne.s32.totalorder %s52, %s54
      %p58 = scmp.eq.s32.totalorder %s18, 0
      %p59 = por %p57, %p58
      %p60 = scmp.ne.s32.totalorder %s52, %s54
      %p61 = scmp.eq.s32.totalorder %s23, 1
      %p62 = por %p60, %p61
      %p63 = scmp.ne.s32.totalorder %s54, %s55
      %p64 = scmp.eq.s32.totalorder %s23, 0
      %p65 = por %p63, %p64
      %p66 = scmp.ne.s32.totalorder %s54, %s55
      %p67 = scmp.eq.s32.totalorder %s24, 1
      %p68 = por %p66, %p67
      %p70 = scmp.ne.s32.totalorder %s55, %s69
      %p71 = scmp.eq.s32.totalorder %s24, 0
      %p72 = por %p70, %p71
      %s74 = sadd.s32 %s73, 1
      %p77 = scmp.eq.s32.totalorder %s18, 1
      %p78 = scmp.ne.s32.totalorder %s73, %s75
      %p79 = scmp.eq.s32.totalorder %s18, 0
      %p80 = por %p78, %p79
      %p81 = scmp.ne.s32.totalorder %s73, %s75
      %p82 = scmp.eq.s32.totalorder %s23, 1
      %p83 = por %p81, %p82
      %p84 = scmp.ne.s32.totalorder %s75, %s76
      %p85 = scmp.eq.s32.totalorder %s23, 0
      %p86 = por %p84, %p85
      %p87 = scmp.ne.s32.totalorder %s75, %s76
      %p88 = scmp.eq.s32.totalorder %s24, 1
      %p89 = por %p87, %p88
      %p91 = scmp.ne.s32.totalorder %s76, %s90
      %p92 = scmp.eq.s32.totalorder %s24, 0
      %p93 = por %p91, %p92
      %s95 = sadd.s32 %s94, 1
      %p98 = scmp.eq.s32.totalorder %s18, 1
      %p99 = scmp.ne.s32.totalorder %s94, %s96
      %p100 = scmp.eq.s32.totalorder %s18, 0
      %p101 = por %p99, %p100
      %p102 = scmp.ne.s32.totalorder %s94, %s96
      %p103 = scmp.eq.s32.totalorder %s23, 1
      %p104 = por %p102, %p103
      %p105 = scmp.ne.s32.totalorder %s96, %s97
      %p106 = scmp.eq.s32.totalorder %s23, 0
      %p107 = por %p105, %p106
      %p108 = scmp.ne.s32.totalorder %s96, %s97
      %p109 = scmp.eq.s32.totalorder %s24, 1
      %p110 = por %p108, %p109
      %p112 = scmp.ne.s32.totalorder %s97, %s111
      %p113 = scmp.eq.s32.totalorder %s24, 0
      %p114 = por %p112, %p113
      %s116 = sadd.s32 %s115, 1
      %p119 = scmp.eq.s32.totalorder %s18, 1
      %p120 = scmp.ne.s32.totalorder %s115, %s117
      %p121 = scmp.eq.s32.totalorder %s18, 0
      %p122 = por %p120, %p121
      %p123 = scmp.ne.s32.totalorder %s115, %s117
      %p124 = scmp.eq.s32.totalorder %s23, 1
      %p125 = por %p123, %p124
      %p126 = scmp.ne.s32.totalorder %s117, %s118
      %p127 = scmp.eq.s32.totalorder %s23, 0
      %p128 = por %p126, %p127
      %p129 = scmp.ne.s32.totalorder %s117, %s118
      %p130 = scmp.eq.s32.totalorder %s24, 1
      %p131 = por %p129, %p130
      %p133 = scmp.ne.s32.totalorder %s118, %s132
      %p134 = scmp.eq.s32.totalorder %s24, 0
      %p135 = por %p133, %p134
      %s136 = ssub.s32 %s18, %s25
      %p137 = scmp.eq.s32.totalorder %s136, 0
      %s139 = sadd.s32 %s138, 1
      %s140 = scalar_select %p137, %s138, %s139
      %p143 = pneg %p137
      %p144 = scmp.eq.s32.totalorder %s18, 1
      %p145 = por %p143, %p144
      %p146 = scmp.ne.s32.totalorder %s138, %s141
      %p147 = scmp.eq.s32.totalorder %s18, 0
      %p148 = por %p146, %p147
      %p149 = scmp.ne.s32.totalorder %s138, %s141
      %p150 = scmp.eq.s32.totalorder %s23, 1
      %p151 = por %p149, %p150
      %p152 = scmp.ne.s32.totalorder %s141, %s142
      %p153 = scmp.eq.s32.totalorder %s23, 0
      %p154 = por %p152, %p153
      %p155 = scmp.ne.s32.totalorder %s141, %s142
      %p156 = scmp.eq.s32.totalorder %s24, 1
      %p157 = por %p155, %p156
      %p159 = scmp.ne.s32.totalorder %s142, %s158
      %p160 = scmp.eq.s32.totalorder %s24, 0
      %p161 = por %p159, %p160
      %p162 = scmp.le.s32.totalorder 1, %s18
      %p163 = scmp.lt.s32.totalorder %s18, 3
      %p164 = pnand %p162, %p163
      %p165 = pneg %p164
      // Predicated region
      $region9: #{tpu_custom_call.1} parent=5 // pred_check
        _
      $region10: #{tpu_custom_call.1} parent=5 // pred_check_branch
        %167 = sbr.rel (%p164) target = $region12
      $region11: #{tpu_custom_call.1} parent=5 // pred_region
        %s168 = ssub.s32 %s18, 1
        // Predicated region
        $region13: #{tpu_custom_call.1} parent=11 // pred_check
          %p169 = pneg %p65
        $region14: #{tpu_custom_call.1} parent=11 // pred_check_branch
          %171 = sbr.rel (%p169) target = $region16
        $region15: #{tpu_custom_call.1} parent=11 // pred_region
          %s173 = ssub.s32 288, 288
          %174 = vsyncadd [#allocation8], %s173
          %s175 = sshll.u32 [#allocation7], 4
          %s176 = int_to_ptr.vmem [resolvable:$true] %s175
          %181 = dma.hbm_to_vmem [thread:$0]  %s1, 288, %s176, [#allocation8], 32, 32, 2
        $region16: #{tpu_custom_call.1} parent=11 // pred_fallthru
          _
        // Predicated region
        $region17: #{tpu_custom_call.1} parent=11 // pred_check
          %p182 = pneg %p86
        $region18: #{tpu_custom_call.1} parent=11 // pred_check_branch
          %184 = sbr.rel (%p182) target = $region20
        $region19: #{tpu_custom_call.1} parent=11 // pred_region
          _
        $region20: #{tpu_custom_call.1} parent=11 // pred_fallthru
          _
        // Predicated region
        $region21: #{tpu_custom_call.1} parent=11 // pred_check
          %p185 = pneg %p107
        $region22: #{tpu_custom_call.1} parent=11 // pred_check_branch
          %187 = sbr.rel (%p185) target = $region24
        $region23: #{tpu_custom_call.1} parent=11 // pred_region
          %s189 = ssub.s32 9216, 9216
          %190 = vsyncadd [#allocation8], %s189
          %s191 = sshll.u32 [#allocation9], 4
          %s192 = int_to_ptr.vmem [resolvable:$true] %s191
          %197 = dma.hbm_to_vmem [thread:$0]  %s3, 9216, %s192, [#allocation8], 64, 64, 4
        $region24: #{tpu_custom_call.1} parent=11 // pred_fallthru
          _
        // Predicated region
        $region25: #{tpu_custom_call.1} parent=11 // pred_check
          %p198 = pneg %p128
        $region26: #{tpu_custom_call.1} parent=11 // pred_check_branch
          %200 = sbr.rel (%p198) target = $region28
        $region27: #{tpu_custom_call.1} parent=11 // pred_region
          _
        $region28: #{tpu_custom_call.1} parent=11 // pred_fallthru
          _
      $region12: #{tpu_custom_call.1} parent=5 // pred_fallthru
        _
      %p201 = scmp.lt.s32.totalorder %s18, 2
      // Predicated region
      $region29: #{tpu_custom_call.1} parent=5 // pred_check
        %p202 = pneg %p201
      $region30: #{tpu_custom_call.1} parent=5 // pred_check_branch
        %204 = sbr.rel (%p202) target = $region32
      $region31: #{tpu_custom_call.1} parent=5 // pred_region
        // Predicated region
        $region33: #{tpu_custom_call.1} parent=31 // pred_check
          %p205 = pneg %p38
        $region34: #{tpu_custom_call.1} parent=31 // pred_check_branch
          %207 = sbr.rel (%p205) target = $region36
        $region35: #{tpu_custom_call.1} parent=31 // pred_region
          %s208 = sand.u32 %s28, 1
          %s209 = scalar_lea.sflag [#allocation5], %s208
          %s210 = sand.u32 %s28, 1
          %s211 = smul.addr %s210, 16
          %s212 = scalar_lea.vmem [#allocation4], %s211
          %s214 = ssub.s32 256, 256
          %215 = vsyncadd %s209, %s214
          %s216 = smul.addr %s18, 2
          %s217 = smul.addr %s216, 128
          %s218 = scalar_lea.hbm %s0, %s217
          %s219 = sshll.u32 %s212, 4
          %s220 = int_to_ptr.vmem [resolvable:$true] %s219
          %225 = dma.hbm_to_vmem [thread:$0]  %s218, 256, %s220, %s209, 128, 128, 8
        $region36: #{tpu_custom_call.1} parent=31 // pred_fallthru
          _
      $region32: #{tpu_custom_call.1} parent=5 // pred_fallthru
        _
      %p226 = scmp.le.s32.totalorder 1, %s18
      %p227 = scmp.lt.s32.totalorder %s18, 3
      %p228 = pnand %p226, %p227
      %p229 = pneg %p228
      // Predicated region
      $region37: #{tpu_custom_call.1} parent=5 // pred_check
        _
      $region38: #{tpu_custom_call.1} parent=5 // pred_check_branch
        %231 = sbr.rel (%p228) target = $region40
      $region39: #{tpu_custom_call.1} parent=5 // pred_region
        %s232 = ssub.s32 %s18, 1
        %s233 = sand.u32 %s31, 1
        %s234 = scalar_lea.sflag [#allocation5], %s233
        %s235 = sand.u32 %s31, 1
        %s236 = smul.addr %s235, 16
        %s237 = scalar_lea.vmem [#allocation4], %s236
        // Predicated region
        $region41: #{tpu_custom_call.1} parent=39 // pred_check
          %p238 = pneg %p44
        $region42: #{tpu_custom_call.1} parent=39 // pred_check_branch
          %240 = sbr.rel (%p238) target = $region44
        $region43: #{tpu_custom_call.1} parent=39 // pred_region
          %241 = dma.done %s234, 256
        $region44: #{tpu_custom_call.1} parent=39 // pred_fallthru
          _
        // Predicated region
        $region45: #{tpu_custom_call.1} parent=39 // pred_check
          %p242 = pneg %p65
        $region46: #{tpu_custom_call.1} parent=39 // pred_check_branch
          %244 = sbr.rel (%p242) target = $region48
        $region47: #{tpu_custom_call.1} parent=39 // pred_region
          %245 = dma.done [#allocation8], 288
        $region48: #{tpu_custom_call.1} parent=39 // pred_fallthru
          _
        // Predicated region
        $region49: #{tpu_custom_call.1} parent=39 // pred_check
          %p246 = pneg %p107
        $region50: #{tpu_custom_call.1} parent=39 // pred_check_branch
          %248 = sbr.rel (%p246) target = $region52
        $region51: #{tpu_custom_call.1} parent=39 // pred_region
          %249 = dma.done [#allocation8], 9216
        $region52: #{tpu_custom_call.1} parent=39 // pred_fallthru
          _
        %s250 = sand.u32 %s31, 1
        %s251 = scalar_lea.sflag [#allocation5], %s250
        %s252 = sand.u32 %s31, 1
        %s253 = smul.addr %s252, 16
        %s254 = scalar_lea.vmem [#allocation4], %s253
        %p255 = pneg %p44
        %p256 = pneg %p41
        %p257 = pneg %p65
        %p258 = pneg %p62
        %p259 = pneg %p86
        %p260 = pneg %p83
        %p261 = pneg %p107
        %p262 = pneg %p104
        %p263 = pneg %p128
        %p264 = pneg %p125
        %p265 = pneg %p154
        %p266 = pneg %p151
        %s267 = sand.u32 %s141, 1
        %s268 = scalar_lea.sflag [#allocation6], %s267
        %s269 = sand.u32 %s141, 1
        %s270 = smul.addr %s269, 256
        %s271 = scalar_lea.vmem [#allocation10], %s270
        %vm273 = vcmask 31744
        %274 = vst.msk [vmem:[#allocation2] sm:$0xff] %vm273, 0.0
        %275 = vst.msk [vmem:[#allocation2 + $0x8] sm:$0xff] %vm273, 0.0
        %vm276 = vcmask 25600
        %277 = vst.msk [vmem:[#allocation2 + $0x10] sm:$0x3] %vm276, 0.0
        %s278 = scalar_lea.vmem [#allocation2], 408
        %279 = vst.msk [vmem:[%s278] sm:$0xff] %vm273, 0.0
        %280 = vst.msk [vmem:[%s278 + $0x8] sm:$0xff] %vm273, 0.0
        %281 = vst.msk [vmem:[%s278 + $0x10] sm:$0x3] %vm276, 0.0
        %vm282 = vcmask 24576
        %283 = vst.msk [vmem:[#allocation2] sm:$0x1] %vm282, 0.0
        %284 = vst.msk [vmem:[#allocation2 + $0x18] sm:$0x1] %vm282, 0.0
        %285 = vst.msk [vmem:[#allocation2 + $0x30] sm:$0x1] %vm282, 0.0
        %286 = vst.msk [vmem:[#allocation2 + $0x48] sm:$0x1] %vm282, 0.0
        %287 = vst.msk [vmem:[#allocation2 + $0x60] sm:$0x1] %vm282, 0.0
        %288 = vst.msk [vmem:[#allocation2 + $0x78] sm:$0x1] %vm282, 0.0
        %289 = vst.msk [vmem:[#allocation2 + $0x90] sm:$0x1] %vm282, 0.0
        %290 = vst.msk [vmem:[#allocation2 + $0xa8] sm:$0x1] %vm282, 0.0
        %291 = vst.msk [vmem:[#allocation2 + $0xc0] sm:$0x1] %vm282, 0.0
        %292 = vst.msk [vmem:[#allocation2 + $0xd8] sm:$0x1] %vm282, 0.0
        %293 = vst.msk [vmem:[#allocation2 + $0xf0] sm:$0x1] %vm282, 0.0
        %294 = vst.msk [vmem:[#allocation2 + $0x108] sm:$0x1] %vm282, 0.0
        %295 = vst.msk [vmem:[#allocation2 + $0x120] sm:$0x1] %vm282, 0.0
        %296 = vst.msk [vmem:[#allocation2 + $0x138] sm:$0x1] %vm282, 0.0
        %297 = vst.msk [vmem:[#allocation2 + $0x150] sm:$0x1] %vm282, 0.0
        %298 = vst.msk [vmem:[#allocation2 + $0x168] sm:$0x1] %vm282, 0.0
        %299 = vst.msk [vmem:[#allocation2 + $0x180] sm:$0x1] %vm282, 0.0
        %300 = vst.msk [vmem:[#allocation2 + $0x198] sm:$0x1] %vm282, 0.0
        %301 = vst.msk [vmem:[#allocation2 + $0x11] sm:$0x1] %vm282, 0.0
        %302 = vst.msk [vmem:[#allocation2 + $0x29] sm:$0x1] %vm282, 0.0
        %303 = vst.msk [vmem:[#allocation2 + $0x41] sm:$0x1] %vm282, 0.0
        %304 = vst.msk [vmem:[#allocation2 + $0x59] sm:$0x1] %vm282, 0.0
        %305 = vst.msk [vmem:[#allocation2 + $0x71] sm:$0x1] %vm282, 0.0
        %306 = vst.msk [vmem:[#allocation2 + $0x89] sm:$0x1] %vm282, 0.0
        %307 = vst.msk [vmem:[#allocation2 + $0xa1] sm:$0x1] %vm282, 0.0
        %308 = vst.msk [vmem:[#allocation2 + $0xb9] sm:$0x1] %vm282, 0.0
        %309 = vst.msk [vmem:[#allocation2 + $0xd1] sm:$0x1] %vm282, 0.0
        %310 = vst.msk [vmem:[#allocation2 + $0xe9] sm:$0x1] %vm282, 0.0
        %311 = vst.msk [vmem:[#allocation2 + $0x101] sm:$0x1] %vm282, 0.0
        %312 = vst.msk [vmem:[#allocation2 + $0x119] sm:$0x1] %vm282, 0.0
        %313 = vst.msk [vmem:[#allocation2 + $0x131] sm:$0x1] %vm282, 0.0
        %314 = vst.msk [vmem:[#allocation2 + $0x149] sm:$0x1] %vm282, 0.0
        %315 = vst.msk [vmem:[#allocation2 + $0x161] sm:$0x1] %vm282, 0.0
        %316 = vst.msk [vmem:[#allocation2 + $0x179] sm:$0x1] %vm282, 0.0
        %317 = vst.msk [vmem:[#allocation2 + $0x191] sm:$0x1] %vm282, 0.0
        %318 = vst.msk [vmem:[#allocation2 + $0x1a9] sm:$0x1] %vm282, 0.0
        %319 = vst [vmem:[#allocation3] sm:$0xf] 0
        %320 = vst [vmem:[#allocation3 + $0x4] sm:$0xf] 0
        %321 = vst [vmem:[#allocation3 + $0x8] sm:$0x1] 0
        %s322 = scalar_lea.vmem [#allocation3], 204
        %323 = vst [vmem:[%s322] sm:$0xf] 0
        %324 = vst [vmem:[%s322 + $0x4] sm:$0xf] 0
        %325 = vst [vmem:[%s322 + $0x8] sm:$0x1] 0
        %vm326 = vcmask 1040384
        %vm327 = vsmask.f32 256
        %vm328 = vmand %vm326, %vm327
        %v329 = vld [vmem:[#allocation3] sm:$0x1]
        %v330 = vsel %vm328, 0, %v329
        %331 = vst [vmem:[#allocation3] sm:$0x1] %v330
        %v332 = vld [vmem:[#allocation3 + $0xc] sm:$0x1]
        %v333 = vsel %vm328, 0, %v332
        %334 = vst [vmem:[#allocation3 + $0xc] sm:$0x1] %v333
        %v335 = vld [vmem:[#allocation3 + $0x18] sm:$0x1]
        %v336 = vsel %vm328, 0, %v335
        %337 = vst [vmem:[#allocation3 + $0x18] sm:$0x1] %v336
        %v338 = vld [vmem:[#allocation3 + $0x24] sm:$0x1]
        %v339 = vsel %vm328, 0, %v338
        %340 = vst [vmem:[#allocation3 + $0x24] sm:$0x1] %v339
        %v341 = vld [vmem:[#allocation3 + $0x30] sm:$0x1]
        %v342 = vsel %vm328, 0, %v341
        %343 = vst [vmem:[#allocation3 + $0x30] sm:$0x1] %v342
        %v344 = vld [vmem:[#allocation3 + $0x3c] sm:$0x1]
        %v345 = vsel %vm328, 0, %v344
        %346 = vst [vmem:[#allocation3 + $0x3c] sm:$0x1] %v345
        %v347 = vld [vmem:[#allocation3 + $0x48] sm:$0x1]
        %v348 = vsel %vm328, 0, %v347
        %349 = vst [vmem:[#allocation3 + $0x48] sm:$0x1] %v348
        %v350 = vld [vmem:[#allocation3 + $0x54] sm:$0x1]
        %v351 = vsel %vm328, 0, %v350
        %352 = vst [vmem:[#allocation3 + $0x54] sm:$0x1] %v351
        %v353 = vld [vmem:[#allocation3 + $0x60] sm:$0x1]
        %v354 = vsel %vm328, 0, %v353
        %355 = vst [vmem:[#allocation3 + $0x60] sm:$0x1] %v354
        %v356 = vld [vmem:[#allocation3 + $0x6c] sm:$0x1]
        %v357 = vsel %vm328, 0, %v356
        %358 = vst [vmem:[#allocation3 + $0x6c] sm:$0x1] %v357
        %v359 = vld [vmem:[#allocation3 + $0x78] sm:$0x1]
        %v360 = vsel %vm328, 0, %v359
        %361 = vst [vmem:[#allocation3 + $0x78] sm:$0x1] %v360
        %v362 = vld [vmem:[#allocation3 + $0x84] sm:$0x1]
        %v363 = vsel %vm328, 0, %v362
        %364 = vst [vmem:[#allocation3 + $0x84] sm:$0x1] %v363
        %v365 = vld [vmem:[#allocation3 + $0x90] sm:$0x1]
        %v366 = vsel %vm328, 0, %v365
        %367 = vst [vmem:[#allocation3 + $0x90] sm:$0x1] %v366
        %v368 = vld [vmem:[#allocation3 + $0x9c] sm:$0x1]
        %v369 = vsel %vm328, 0, %v368
        %370 = vst [vmem:[#allocation3 + $0x9c] sm:$0x1] %v369
        %v371 = vld [vmem:[#allocation3 + $0xa8] sm:$0x1]
        %v372 = vsel %vm328, 0, %v371
        %373 = vst [vmem:[#allocation3 + $0xa8] sm:$0x1] %v372
        %v374 = vld [vmem:[#allocation3 + $0xb4] sm:$0x1]
        %v375 = vsel %vm328, 0, %v374
        %376 = vst [vmem:[#allocation3 + $0xb4] sm:$0x1] %v375
        %v377 = vld [vmem:[#allocation3 + $0xc0] sm:$0x1]
        %v378 = vsel %vm328, 0, %v377
        %379 = vst [vmem:[#allocation3 + $0xc0] sm:$0x1] %v378
        %v380 = vld [vmem:[#allocation3 + $0xcc] sm:$0x1]
        %v381 = vsel %vm328, 0, %v380
        %382 = vst [vmem:[#allocation3 + $0xcc] sm:$0x1] %v381
        %vm383 = vsmask.f32 7938
        %vm384 = vmand %vm326, %vm383
        %v385 = vld [vmem:[#allocation3 + $0x8] sm:$0x1]
        %v386 = vsel %vm384, 0, %v385
        %387 = vst [vmem:[#allocation3 + $0x8] sm:$0x1] %v386
        %v388 = vld [vmem:[#allocation3 + $0x14] sm:$0x1]
        %v389 = vsel %vm384, 0, %v388
        %390 = vst [vmem:[#allocation3 + $0x14] sm:$0x1] %v389
        %v391 = vld [vmem:[#allocation3 + $0x20] sm:$0x1]
        %v392 = vsel %vm384, 0, %v391
        %393 = vst [vmem:[#allocation3 + $0x20] sm:$0x1] %v392
        %v394 = vld [vmem:[#allocation3 + $0x2c] sm:$0x1]
        %v395 = vsel %vm384, 0, %v394
        %396 = vst [vmem:[#allocation3 + $0x2c] sm:$0x1] %v395
        %v397 = vld [vmem:[#allocation3 + $0x38] sm:$0x1]
        %v398 = vsel %vm384, 0, %v397
        %399 = vst [vmem:[#allocation3 + $0x38] sm:$0x1] %v398
        %v400 = vld [vmem:[#allocation3 + $0x44] sm:$0x1]
        %v401 = vsel %vm384, 0, %v400
        %402 = vst [vmem:[#allocation3 + $0x44] sm:$0x1] %v401
        %v403 = vld [vmem:[#allocation3 + $0x50] sm:$0x1]
        %v404 = vsel %vm384, 0, %v403
        %405 = vst [vmem:[#allocation3 + $0x50] sm:$0x1] %v404
        %v406 = vld [vmem:[#allocation3 + $0x5c] sm:$0x1]
        %v407 = vsel %vm384, 0, %v406
        %408 = vst [vmem:[#allocation3 + $0x5c] sm:$0x1] %v407
        %v409 = vld [vmem:[#allocation3 + $0x68] sm:$0x1]
        %v410 = vsel %vm384, 0, %v409
        %411 = vst [vmem:[#allocation3 + $0x68] sm:$0x1] %v410
        %v412 = vld [vmem:[#allocation3 + $0x74] sm:$0x1]
        %v413 = vsel %vm384, 0, %v412
        %414 = vst [vmem:[#allocation3 + $0x74] sm:$0x1] %v413
        %v415 = vld [vmem:[#allocation3 + $0x80] sm:$0x1]
        %v416 = vsel %vm384, 0, %v415
        %417 = vst [vmem:[#allocation3 + $0x80] sm:$0x1] %v416
        %v418 = vld [vmem:[#allocation3 + $0x8c] sm:$0x1]
        %v419 = vsel %vm384, 0, %v418
        %420 = vst [vmem:[#allocation3 + $0x8c] sm:$0x1] %v419
        %v421 = vld [vmem:[#allocation3 + $0x98] sm:$0x1]
        %v422 = vsel %vm384, 0, %v421
        %423 = vst [vmem:[#allocation3 + $0x98] sm:$0x1] %v422
        %v424 = vld [vmem:[#allocation3 + $0xa4] sm:$0x1]
        %v425 = vsel %vm384, 0, %v424
        %426 = vst [vmem:[#allocation3 + $0xa4] sm:$0x1] %v425
        %v427 = vld [vmem:[#allocation3 + $0xb0] sm:$0x1]
        %v428 = vsel %vm384, 0, %v427
        %429 = vst [vmem:[#allocation3 + $0xb0] sm:$0x1] %v428
        %v430 = vld [vmem:[#allocation3 + $0xbc] sm:$0x1]
        %v431 = vsel %vm384, 0, %v430
        %432 = vst [vmem:[#allocation3 + $0xbc] sm:$0x1] %v431
        %v433 = vld [vmem:[#allocation3 + $0xc8] sm:$0x1]
        %v434 = vsel %vm384, 0, %v433
        %435 = vst [vmem:[#allocation3 + $0xc8] sm:$0x1] %v434
        %v436 = vld [vmem:[#allocation3 + $0xd4] sm:$0x1]
        %v437 = vsel %vm384, 0, %v436
        %438 = vst [vmem:[#allocation3 + $0xd4] sm:$0x1] %v437
        %v439 = vld [vmem:[%s237] sm:$0xff]
        %v440 = vld [vmem:[%s237 + $0x8] sm:$0xff]
        %443 = vrot.lane.b32.xlu0 %v439, 124
        %v444 = vpop.permute.xlu0 %443
        %445 = vrot.lane.b32.xlu0 %v440, 124
        %v446 = vpop.permute.xlu0 %445
        %449 = vrot.lane.b32.xlu0 %v439, 120
        %v450 = vpop.permute.xlu0 %449
        %451 = vrot.lane.b32.xlu0 %v440, 120
        %v452 = vpop.permute.xlu0 %451
        %455 = vrot.lane.b32.xlu0 %v439, 116
        %v456 = vpop.permute.xlu0 %455
        %457 = vrot.lane.b32.xlu0 %v440, 116
        %v458 = vpop.permute.xlu0 %457
        %461 = vrot.lane.b32.xlu0 %v439, 112
        %v462 = vpop.permute.xlu0 %461
        %463 = vrot.lane.b32.xlu0 %v440, 112
        %v464 = vpop.permute.xlu0 %463
        %467 = vrot.lane.b32.xlu0 %v439, 108
        %v468 = vpop.permute.xlu0 %467
        %469 = vrot.lane.b32.xlu0 %v440, 108
        %v470 = vpop.permute.xlu0 %469
        %473 = vrot.lane.b32.xlu0 %v439, 104
        %v474 = vpop.permute.xlu0 %473
        %475 = vrot.lane.b32.xlu0 %v440, 104
        %v476 = vpop.permute.xlu0 %475
        %479 = vrot.lane.b32.xlu0 %v439, 100
        %v480 = vpop.permute.xlu0 %479
        %481 = vrot.lane.b32.xlu0 %v440, 100
        %v482 = vpop.permute.xlu0 %481
        %485 = vrot.lane.b32.xlu0 %v439, 96
        %v486 = vpop.permute.xlu0 %485
        %487 = vrot.lane.b32.xlu0 %v440, 96
        %v488 = vpop.permute.xlu0 %487
        %491 = vrot.lane.b32.xlu0 %v439, 92
        %v492 = vpop.permute.xlu0 %491
        %493 = vrot.lane.b32.xlu0 %v440, 92
        %v494 = vpop.permute.xlu0 %493
        %497 = vrot.lane.b32.xlu0 %v439, 88
        %v498 = vpop.permute.xlu0 %497
        %499 = vrot.lane.b32.xlu0 %v440, 88
        %v500 = vpop.permute.xlu0 %499
        %503 = vrot.lane.b32.xlu0 %v439, 84
        %v504 = vpop.permute.xlu0 %503
        %505 = vrot.lane.b32.xlu0 %v440, 84
        %v506 = vpop.permute.xlu0 %505
        %509 = vrot.lane.b32.xlu0 %v439, 80
        %v510 = vpop.permute.xlu0 %509
        %511 = vrot.lane.b32.xlu0 %v440, 80
        %v512 = vpop.permute.xlu0 %511
        %515 = vrot.lane.b32.xlu0 %v439, 76
        %v516 = vpop.permute.xlu0 %515
        %517 = vrot.lane.b32.xlu0 %v440, 76
        %v518 = vpop.permute.xlu0 %517
        %521 = vrot.lane.b32.xlu0 %v439, 72
        %v522 = vpop.permute.xlu0 %521
        %523 = vrot.lane.b32.xlu0 %v440, 72
        %v524 = vpop.permute.xlu0 %523
        %527 = vrot.lane.b32.xlu0 %v439, 68
        %v528 = vpop.permute.xlu0 %527
        %529 = vrot.lane.b32.xlu0 %v440, 68
        %v530 = vpop.permute.xlu0 %529
        %v533 = vcombine.low %v439, %v450
        %v534 = vcombine.high %v439, %v450
        %v536 = vunpack.c.l.s4 1983009808
        %v537 = vunpack.c.0.s8 %v536
        %v538 = vlaneseq
        %v539 = vshrl.u32 %v538, 7
        %v540 = vsub.s32 %v537, %v539
        %v541 = vrot.slane %v533, %v540
        %v543 = vunpack.c.l.s4 1983009808
        %v544 = vunpack.c.0.s8 %v543
        %v545 = vlaneseq
        %v546 = vshrl.u32 %v545, 7
        %v547 = vsub.s32 %v544, %v546
        %v548 = vrot.slane %v534, %v547
        %v549 = vcombine.low %v444, %v456
        %v550 = vcombine.high %v444, %v456
        %v552 = vunpack.c.l.s4 1983009808
        %v553 = vunpack.c.0.s8 %v552
        %v554 = vlaneseq
        %v555 = vshrl.u32 %v554, 7
        %v556 = vsub.s32 %v553, %v555
        %v557 = vrot.slane %v549, %v556
        %v559 = vunpack.c.l.s4 1983009808
        %v560 = vunpack.c.0.s8 %v559
        %v561 = vlaneseq
        %v562 = vshrl.u32 %v561, 7
        %v563 = vsub.s32 %v560, %v562
        %v564 = vrot.slane %v550, %v563
        %v565 = vcombine.low %v462, %v474
        %v566 = vcombine.high %v462, %v474
        %v568 = vunpack.c.l.s4 1983009808
        %v569 = vunpack.c.0.s8 %v568
        %v570 = vlaneseq
        %v571 = vshrl.u32 %v570, 7
        %v572 = vsub.s32 %v569, %v571
        %v573 = vrot.slane %v565, %v572
        %v575 = vunpack.c.l.s4 1983009808
        %v576 = vunpack.c.0.s8 %v575
        %v577 = vlaneseq
        %v578 = vshrl.u32 %v577, 7
        %v579 = vsub.s32 %v576, %v578
        %v580 = vrot.slane %v566, %v579
        %v581 = vcombine.low %v468, %v480
        %v582 = vcombine.high %v468, %v480
        %v584 = vunpack.c.l.s4 1983009808
        %v585 = vunpack.c.0.s8 %v584
        %v586 = vlaneseq
        %v587 = vshrl.u32 %v586, 7
        %v588 = vsub.s32 %v585, %v587
        %v589 = vrot.slane %v581, %v588
        %v591 = vunpack.c.l.s4 1983009808
        %v592 = vunpack.c.0.s8 %v591
        %v593 = vlaneseq
        %v594 = vshrl.u32 %v593, 7
        %v595 = vsub.s32 %v592, %v594
        %v596 = vrot.slane %v582, %v595
        %v597 = vcombine.low %v541, %v557
        %v598 = vcombine.high %v541, %v557
        %v600 = vunpack.c.l.s4 1934713408
        %v601 = vunpack.c.0.s8 %v600
        %v602 = vlaneseq
        %v603 = vshrl.u32 %v602, 7
        %v604 = vsub.s32 %v601, %v603
        %v605 = vrot.slane %v597, %v604
        %v607 = vunpack.c.l.s4 1934713408
        %v608 = vunpack.c.0.s8 %v607
        %v609 = vlaneseq
        %v610 = vshrl.u32 %v609, 7
        %v611 = vsub.s32 %v608, %v610
        %v612 = vrot.slane %v598, %v611
        %v613 = vcombine.low %v548, %v564
        %v614 = vcombine.high %v548, %v564
        %v616 = vunpack.c.l.s4 1934713408
        %v617 = vunpack.c.0.s8 %v616
        %v618 = vlaneseq
        %v619 = vshrl.u32 %v618, 7
        %v620 = vsub.s32 %v617, %v619
        %v621 = vrot.slane %v613, %v620
        %v623 = vunpack.c.l.s4 1934713408
        %v624 = vunpack.c.0.s8 %v623
        %v625 = vlaneseq
        %v626 = vshrl.u32 %v625, 7
        %v627 = vsub.s32 %v624, %v626
        %v628 = vrot.slane %v614, %v627
        %v629 = vcombine.low %v573, %v589
        %v630 = vcombine.high %v573, %v589
        %v632 = vunpack.c.l.s4 1934713408
        %v633 = vunpack.c.0.s8 %v632
        %v634 = vlaneseq
        %v635 = vshrl.u32 %v634, 7
        %v636 = vsub.s32 %v633, %v635
        %v637 = vrot.slane %v629, %v636
        %v639 = vunpack.c.l.s4 1934713408
        %v640 = vunpack.c.0.s8 %v639
        %v641 = vlaneseq
        %v642 = vshrl.u32 %v641, 7
        %v643 = vsub.s32 %v640, %v642
        %v644 = vrot.slane %v630, %v643
        %v645 = vcombine.low %v580, %v596
        %v646 = vcombine.high %v580, %v596
        %v648 = vunpack.c.l.s4 1934713408
        %v649 = vunpack.c.0.s8 %v648
        %v650 = vlaneseq
        %v651 = vshrl.u32 %v650, 7
        %v652 = vsub.s32 %v649, %v651
        %v653 = vrot.slane %v645, %v652
        %v655 = vunpack.c.l.s4 1934713408
        %v656 = vunpack.c.0.s8 %v655
        %v657 = vlaneseq
        %v658 = vshrl.u32 %v657, 7
        %v659 = vsub.s32 %v656, %v658
        %v660 = vrot.slane %v646, %v659
        %v661 = vcombine.low %v605, %v637
        %v662 = vcombine.high %v605, %v637
        %v663 = vcombine.low %v612, %v644
        %v664 = vcombine.high %v612, %v644
        %v665 = vcombine.low %v621, %v653
        %v666 = vcombine.high %v621, %v653
        %v667 = vcombine.low %v628, %v660
        %v668 = vcombine.high %v628, %v660
        %v669 = vcombine.low %v486, %v498
        %v670 = vcombine.high %v486, %v498
        %v672 = vunpack.c.l.s4 1983009808
        %v673 = vunpack.c.0.s8 %v672
        %v674 = vlaneseq
        %v675 = vshrl.u32 %v674, 7
        %v676 = vsub.s32 %v673, %v675
        %v677 = vrot.slane %v669, %v676
        %v679 = vunpack.c.l.s4 1983009808
        %v680 = vunpack.c.0.s8 %v679
        %v681 = vlaneseq
        %v682 = vshrl.u32 %v681, 7
        %v683 = vsub.s32 %v680, %v682
        %v684 = vrot.slane %v670, %v683
        %v685 = vcombine.low %v492, %v504
        %v686 = vcombine.high %v492, %v504
        %v688 = vunpack.c.l.s4 1983009808
        %v689 = vunpack.c.0.s8 %v688
        %v690 = vlaneseq
        %v691 = vshrl.u32 %v690, 7
        %v692 = vsub.s32 %v689, %v691
        %v693 = vrot.slane %v685, %v692
        %v695 = vunpack.c.l.s4 1983009808
        %v696 = vunpack.c.0.s8 %v695
        %v697 = vlaneseq
        %v698 = vshrl.u32 %v697, 7
        %v699 = vsub.s32 %v696, %v698
        %v700 = vrot.slane %v686, %v699
        %v701 = vcombine.low %v510, %v522
        %v702 = vcombine.high %v510, %v522
        %v704 = vunpack.c.l.s4 1983009808
        %v705 = vunpack.c.0.s8 %v704
        %v706 = vlaneseq
        %v707 = vshrl.u32 %v706, 7
        %v708 = vsub.s32 %v705, %v707
        %v709 = vrot.slane %v701, %v708
        %v711 = vunpack.c.l.s4 1983009808
        %v712 = vunpack.c.0.s8 %v711
        %v713 = vlaneseq
        %v714 = vshrl.u32 %v713, 7
        %v715 = vsub.s32 %v712, %v714
        %v716 = vrot.slane %v702, %v715
        %v717 = vcombine.low %v516, %v528
        %v718 = vcombine.high %v516, %v528
        %v720 = vunpack.c.l.s4 1983009808
        %v721 = vunpack.c.0.s8 %v720
        %v722 = vlaneseq
        %v723 = vshrl.u32 %v722, 7
        %v724 = vsub.s32 %v721, %v723
        %v725 = vrot.slane %v717, %v724
        %v727 = vunpack.c.l.s4 1983009808
        %v728 = vunpack.c.0.s8 %v727
        %v729 = vlaneseq
        %v730 = vshrl.u32 %v729, 7
        %v731 = vsub.s32 %v728, %v730
        %v732 = vrot.slane %v718, %v731
        %v733 = vcombine.low %v677, %v693
        %v734 = vcombine.high %v677, %v693
        %v736 = vunpack.c.l.s4 1934713408
        %v737 = vunpack.c.0.s8 %v736
        %v738 = vlaneseq
        %v739 = vshrl.u32 %v738, 7
        %v740 = vsub.s32 %v737, %v739
        %v741 = vrot.slane %v733, %v740
        %v743 = vunpack.c.l.s4 1934713408
        %v744 = vunpack.c.0.s8 %v743
        %v745 = vlaneseq
        %v746 = vshrl.u32 %v745, 7
        %v747 = vsub.s32 %v744, %v746
        %v748 = vrot.slane %v734, %v747
        %v749 = vcombine.low %v684, %v700
        %v750 = vcombine.high %v684, %v700
        %v752 = vunpack.c.l.s4 1934713408
        %v753 = vunpack.c.0.s8 %v752
        %v754 = vlaneseq
        %v755 = vshrl.u32 %v754, 7
        %v756 = vsub.s32 %v753, %v755
        %v757 = vrot.slane %v749, %v756
        %v759 = vunpack.c.l.s4 1934713408
        %v760 = vunpack.c.0.s8 %v759
        %v761 = vlaneseq
        %v762 = vshrl.u32 %v761, 7
        %v763 = vsub.s32 %v760, %v762
        %v764 = vrot.slane %v750, %v763
        %v765 = vcombine.low %v709, %v725
        %v766 = vcombine.high %v709, %v725
        %v768 = vunpack.c.l.s4 1934713408
        %v769 = vunpack.c.0.s8 %v768
        %v770 = vlaneseq
        %v771 = vshrl.u32 %v770, 7
        %v772 = vsub.s32 %v769, %v771
        %v773 = vrot.slane %v765, %v772
        %v775 = vunpack.c.l.s4 1934713408
        %v776 = vunpack.c.0.s8 %v775
        %v777 = vlaneseq
        %v778 = vshrl.u32 %v777, 7
        %v779 = vsub.s32 %v776, %v778
        %v780 = vrot.slane %v766, %v779
        %v781 = vcombine.low %v716, %v732
        %v782 = vcombine.high %v716, %v732
        %v784 = vunpack.c.l.s4 1934713408
        %v785 = vunpack.c.0.s8 %v784
        %v786 = vlaneseq
        %v787 = vshrl.u32 %v786, 7
        %v788 = vsub.s32 %v785, %v787
        %v789 = vrot.slane %v781, %v788
        %v791 = vunpack.c.l.s4 1934713408
        %v792 = vunpack.c.0.s8 %v791
        %v793 = vlaneseq
        %v794 = vshrl.u32 %v793, 7
        %v795 = vsub.s32 %v792, %v794
        %v796 = vrot.slane %v782, %v795
        %v797 = vcombine.low %v741, %v773
        %v798 = vcombine.high %v741, %v773
        %v799 = vcombine.low %v748, %v780
        %v800 = vcombine.high %v748, %v780
        %v801 = vcombine.low %v757, %v789
        %v802 = vcombine.high %v757, %v789
        %v803 = vcombine.low %v764, %v796
        %v804 = vcombine.high %v764, %v796
        %v805 = vcombine.low %v440, %v452
        %v806 = vcombine.high %v440, %v452
        %v808 = vunpack.c.l.s4 1983009808
        %v809 = vunpack.c.0.s8 %v808
        %v810 = vlaneseq
        %v811 = vshrl.u32 %v810, 7
        %v812 = vsub.s32 %v809, %v811
        %v813 = vrot.slane %v805, %v812
        %v815 = vunpack.c.l.s4 1983009808
        %v816 = vunpack.c.0.s8 %v815
        %v817 = vlaneseq
        %v818 = vshrl.u32 %v817, 7
        %v819 = vsub.s32 %v816, %v818
        %v820 = vrot.slane %v806, %v819
        %v821 = vcombine.low %v446, %v458
        %v822 = vcombine.high %v446, %v458
        %v824 = vunpack.c.l.s4 1983009808
        %v825 = vunpack.c.0.s8 %v824
        %v826 = vlaneseq
        %v827 = vshrl.u32 %v826, 7
        %v828 = vsub.s32 %v825, %v827
        %v829 = vrot.slane %v821, %v828
        %v831 = vunpack.c.l.s4 1983009808
        %v832 = vunpack.c.0.s8 %v831
        %v833 = vlaneseq
        %v834 = vshrl.u32 %v833, 7
        %v835 = vsub.s32 %v832, %v834
        %v836 = vrot.slane %v822, %v835
        %v837 = vcombine.low %v464, %v476
        %v838 = vcombine.high %v464, %v476
        %v840 = vunpack.c.l.s4 1983009808
        %v841 = vunpack.c.0.s8 %v840
        %v842 = vlaneseq
        %v843 = vshrl.u32 %v842, 7
        %v844 = vsub.s32 %v841, %v843
        %v845 = vrot.slane %v837, %v844
        %v847 = vunpack.c.l.s4 1983009808
        %v848 = vunpack.c.0.s8 %v847
        %v849 = vlaneseq
        %v850 = vshrl.u32 %v849, 7
        %v851 = vsub.s32 %v848, %v850
        %v852 = vrot.slane %v838, %v851
        %v853 = vcombine.low %v470, %v482
        %v854 = vcombine.high %v470, %v482
        %v856 = vunpack.c.l.s4 1983009808
        %v857 = vunpack.c.0.s8 %v856
        %v858 = vlaneseq
        %v859 = vshrl.u32 %v858, 7
        %v860 = vsub.s32 %v857, %v859
        %v861 = vrot.slane %v853, %v860
        %v863 = vunpack.c.l.s4 1983009808
        %v864 = vunpack.c.0.s8 %v863
        %v865 = vlaneseq
        %v866 = vshrl.u32 %v865, 7
        %v867 = vsub.s32 %v864, %v866
        %v868 = vrot.slane %v854, %v867
        %v869 = vcombine.low %v813, %v829
        %v870 = vcombine.high %v813, %v829
        %v872 = vunpack.c.l.s4 1934713408
        %v873 = vunpack.c.0.s8 %v872
        %v874 = vlaneseq
        %v875 = vshrl.u32 %v874, 7
        %v876 = vsub.s32 %v873, %v875
        %v877 = vrot.slane %v869, %v876
        %v879 = vunpack.c.l.s4 1934713408
        %v880 = vunpack.c.0.s8 %v879
        %v881 = vlaneseq
        %v882 = vshrl.u32 %v881, 7
        %v883 = vsub.s32 %v880, %v882
        %v884 = vrot.slane %v870, %v883
        %v885 = vcombine.low %v820, %v836
        %v886 = vcombine.high %v820, %v836
        %v888 = vunpack.c.l.s4 1934713408
        %v889 = vunpack.c.0.s8 %v888
        %v890 = vlaneseq
        %v891 = vshrl.u32 %v890, 7
        %v892 = vsub.s32 %v889, %v891
        %v893 = vrot.slane %v885, %v892
        %v895 = vunpack.c.l.s4 1934713408
        %v896 = vunpack.c.0.s8 %v895
        %v897 = vlaneseq
        %v898 = vshrl.u32 %v897, 7
        %v899 = vsub.s32 %v896, %v898
        %v900 = vrot.slane %v886, %v899
        %v901 = vcombine.low %v845, %v861
        %v902 = vcombine.high %v845, %v861
        %v904 = vunpack.c.l.s4 1934713408
        %v905 = vunpack.c.0.s8 %v904
        %v906 = vlaneseq
        %v907 = vshrl.u32 %v906, 7
        %v908 = vsub.s32 %v905, %v907
        %v909 = vrot.slane %v901, %v908
        %v911 = vunpack.c.l.s4 1934713408
        %v912 = vunpack.c.0.s8 %v911
        %v913 = vlaneseq
        %v914 = vshrl.u32 %v913, 7
        %v915 = vsub.s32 %v912, %v914
        %v916 = vrot.slane %v902, %v915
        %v917 = vcombine.low %v852, %v868
        %v918 = vcombine.high %v852, %v868
        %v920 = vunpack.c.l.s4 1934713408
        %v921 = vunpack.c.0.s8 %v920
        %v922 = vlaneseq
        %v923 = vshrl.u32 %v922, 7
        %v924 = vsub.s32 %v921, %v923
        %v925 = vrot.slane %v917, %v924
        %v927 = vunpack.c.l.s4 1934713408
        %v928 = vunpack.c.0.s8 %v927
        %v929 = vlaneseq
        %v930 = vshrl.u32 %v929, 7
        %v931 = vsub.s32 %v928, %v930
        %v932 = vrot.slane %v918, %v931
        %v933 = vcombine.low %v877, %v909
        %v934 = vcombine.high %v877, %v909
        %v935 = vcombine.low %v884, %v916
        %v936 = vcombine.high %v884, %v916
        %v937 = vcombine.low %v893, %v925
        %v938 = vcombine.high %v893, %v925
        %v939 = vcombine.low %v900, %v932
        %v940 = vcombine.high %v900, %v932
        %v941 = vcombine.low %v488, %v500
        %v942 = vcombine.high %v488, %v500
        %v944 = vunpack.c.l.s4 1983009808
        %v945 = vunpack.c.0.s8 %v944
        %v946 = vlaneseq
        %v947 = vshrl.u32 %v946, 7
        %v948 = vsub.s32 %v945, %v947
        %v949 = vrot.slane %v941, %v948
        %v951 = vunpack.c.l.s4 1983009808
        %v952 = vunpack.c.0.s8 %v951
        %v953 = vlaneseq
        %v954 = vshrl.u32 %v953, 7
        %v955 = vsub.s32 %v952, %v954
        %v956 = vrot.slane %v942, %v955
        %v957 = vcombine.low %v494, %v506
        %v958 = vcombine.high %v494, %v506
        %v960 = vunpack.c.l.s4 1983009808
        %v961 = vunpack.c.0.s8 %v960
        %v962 = vlaneseq
        %v963 = vshrl.u32 %v962, 7
        %v964 = vsub.s32 %v961, %v963
        %v965 = vrot.slane %v957, %v964
        %v967 = vunpack.c.l.s4 1983009808
        %v968 = vunpack.c.0.s8 %v967
        %v969 = vlaneseq
        %v970 = vshrl.u32 %v969, 7
        %v971 = vsub.s32 %v968, %v970
        %v972 = vrot.slane %v958, %v971
        %v973 = vcombine.low %v512, %v524
        %v974 = vcombine.high %v512, %v524
        %v976 = vunpack.c.l.s4 1983009808
        %v977 = vunpack.c.0.s8 %v976
        %v978 = vlaneseq
        %v979 = vshrl.u32 %v978, 7
        %v980 = vsub.s32 %v977, %v979
        %v981 = vrot.slane %v973, %v980
        %v983 = vunpack.c.l.s4 1983009808
        %v984 = vunpack.c.0.s8 %v983
        %v985 = vlaneseq
        %v986 = vshrl.u32 %v985, 7
        %v987 = vsub.s32 %v984, %v986
        %v988 = vrot.slane %v974, %v987
        %v989 = vcombine.low %v518, %v530
        %v990 = vcombine.high %v518, %v530
        %v992 = vunpack.c.l.s4 1983009808
        %v993 = vunpack.c.0.s8 %v992
        %v994 = vlaneseq
        %v995 = vshrl.u32 %v994, 7
        %v996 = vsub.s32 %v993, %v995
        %v997 = vrot.slane %v989, %v996
        %v999 = vunpack.c.l.s4 1983009808
        %v1000 = vunpack.c.0.s8 %v999
        %v1001 = vlaneseq
        %v1002 = vshrl.u32 %v1001, 7
        %v1003 = vsub.s32 %v1000, %v1002
        %v1004 = vrot.slane %v990, %v1003
        %v1005 = vcombine.low %v949, %v965
        %v1006 = vcombine.high %v949, %v965
        %v1008 = vunpack.c.l.s4 1934713408
        %v1009 = vunpack.c.0.s8 %v1008
        %v1010 = vlaneseq
        %v1011 = vshrl.u32 %v1010, 7
        %v1012 = vsub.s32 %v1009, %v1011
        %v1013 = vrot.slane %v1005, %v1012
        %v1015 = vunpack.c.l.s4 1934713408
        %v1016 = vunpack.c.0.s8 %v1015
        %v1017 = vlaneseq
        %v1018 = vshrl.u32 %v1017, 7
        %v1019 = vsub.s32 %v1016, %v1018
        %v1020 = vrot.slane %v1006, %v1019
        %v1021 = vcombine.low %v956, %v972
        %v1022 = vcombine.high %v956, %v972
        %v1024 = vunpack.c.l.s4 1934713408
        %v1025 = vunpack.c.0.s8 %v1024
        %v1026 = vlaneseq
        %v1027 = vshrl.u32 %v1026, 7
        %v1028 = vsub.s32 %v1025, %v1027
        %v1029 = vrot.slane %v1021, %v1028
        %v1031 = vunpack.c.l.s4 1934713408
        %v1032 = vunpack.c.0.s8 %v1031
        %v1033 = vlaneseq
        %v1034 = vshrl.u32 %v1033, 7
        %v1035 = vsub.s32 %v1032, %v1034
        %v1036 = vrot.slane %v1022, %v1035
        %v1037 = vcombine.low %v981, %v997
        %v1038 = vcombine.high %v981, %v997
        %v1040 = vunpack.c.l.s4 1934713408
        %v1041 = vunpack.c.0.s8 %v1040
        %v1042 = vlaneseq
        %v1043 = vshrl.u32 %v1042, 7
        %v1044 = vsub.s32 %v1041, %v1043
        %v1045 = vrot.slane %v1037, %v1044
        %v1047 = vunpack.c.l.s4 1934713408
        %v1048 = vunpack.c.0.s8 %v1047
        %v1049 = vlaneseq
        %v1050 = vshrl.u32 %v1049, 7
        %v1051 = vsub.s32 %v1048, %v1050
        %v1052 = vrot.slane %v1038, %v1051
        %v1053 = vcombine.low %v988, %v1004
        %v1054 = vcombine.high %v988, %v1004
        %v1056 = vunpack.c.l.s4 1934713408
        %v1057 = vunpack.c.0.s8 %v1056
        %v1058 = vlaneseq
        %v1059 = vshrl.u32 %v1058, 7
        %v1060 = vsub.s32 %v1057, %v1059
        %v1061 = vrot.slane %v1053, %v1060
        %v1063 = vunpack.c.l.s4 1934713408
        %v1064 = vunpack.c.0.s8 %v1063
        %v1065 = vlaneseq
        %v1066 = vshrl.u32 %v1065, 7
        %v1067 = vsub.s32 %v1064, %v1066
        %v1068 = vrot.slane %v1054, %v1067
        %v1069 = vcombine.low %v1013, %v1045
        %v1070 = vcombine.high %v1013, %v1045
        %v1071 = vcombine.low %v1020, %v1052
        %v1072 = vcombine.high %v1020, %v1052
        %v1073 = vcombine.low %v1029, %v1061
        %v1074 = vcombine.high %v1029, %v1061
        %v1075 = vcombine.low %v1036, %v1068
        %v1076 = vcombine.high %v1036, %v1068
        %s1077 = scalar_lea.vmem [#allocation2], 24
        %1078 = vst.msk [vmem:[%s1077 + $0x1] sm:$0xff] %vm273, %v661
        %1079 = vst.msk [vmem:[%s1077 + $0x9] sm:$0xff] %vm273, %v797
        %1080 = vst.msk [vmem:[%s1077 + $0x19] sm:$0xff] %vm273, %v662
        %1081 = vst.msk [vmem:[%s1077 + $0x21] sm:$0xff] %vm273, %v798
        %1082 = vst.msk [vmem:[%s1077 + $0x31] sm:$0xff] %vm273, %v663
        %1083 = vst.msk [vmem:[%s1077 + $0x39] sm:$0xff] %vm273, %v799
        %1084 = vst.msk [vmem:[%s1077 + $0x49] sm:$0xff] %vm273, %v664
        %1085 = vst.msk [vmem:[%s1077 + $0x51] sm:$0xff] %vm273, %v800
        %1086 = vst.msk [vmem:[%s1077 + $0x61] sm:$0xff] %vm273, %v665
        %1087 = vst.msk [vmem:[%s1077 + $0x69] sm:$0xff] %vm273, %v801
        %1088 = vst.msk [vmem:[%s1077 + $0x79] sm:$0xff] %vm273, %v666
        %1089 = vst.msk [vmem:[%s1077 + $0x81] sm:$0xff] %vm273, %v802
        %1090 = vst.msk [vmem:[%s1077 + $0x91] sm:$0xff] %vm273, %v667
        %1091 = vst.msk [vmem:[%s1077 + $0x99] sm:$0xff] %vm273, %v803
        %1092 = vst.msk [vmem:[%s1077 + $0xa9] sm:$0xff] %vm273, %v668
        %1093 = vst.msk [vmem:[%s1077 + $0xb1] sm:$0xff] %vm273, %v804
        %1094 = vst.msk [vmem:[%s1077 + $0xc1] sm:$0xff] %vm273, %v933
        %1095 = vst.msk [vmem:[%s1077 + $0xc9] sm:$0xff] %vm273, %v1069
        %1096 = vst.msk [vmem:[%s1077 + $0xd9] sm:$0xff] %vm273, %v934
        %1097 = vst.msk [vmem:[%s1077 + $0xe1] sm:$0xff] %vm273, %v1070
        %1098 = vst.msk [vmem:[%s1077 + $0xf1] sm:$0xff] %vm273, %v935
        %1099 = vst.msk [vmem:[%s1077 + $0xf9] sm:$0xff] %vm273, %v1071
        %1100 = vst.msk [vmem:[%s1077 + $0x109] sm:$0xff] %vm273, %v936
        %1101 = vst.msk [vmem:[%s1077 + $0x111] sm:$0xff] %vm273, %v1072
        %1102 = vst.msk [vmem:[%s1077 + $0x121] sm:$0xff] %vm273, %v937
        %1103 = vst.msk [vmem:[%s1077 + $0x129] sm:$0xff] %vm273, %v1073
        %1104 = vst.msk [vmem:[%s1077 + $0x139] sm:$0xff] %vm273, %v938
        %1105 = vst.msk [vmem:[%s1077 + $0x141] sm:$0xff] %vm273, %v1074
        %1106 = vst.msk [vmem:[%s1077 + $0x151] sm:$0xff] %vm273, %v939
        %1107 = vst.msk [vmem:[%s1077 + $0x159] sm:$0xff] %vm273, %v1075
        %1108 = vst.msk [vmem:[%s1077 + $0x169] sm:$0xff] %vm273, %v940
        %1109 = vst.msk [vmem:[%s1077 + $0x171] sm:$0xff] %vm273, %v1076
        %v1110 = vld [vmem:[#allocation2] sm:$0xff]
        %v1111 = vld [vmem:[#allocation2 + $0x8] sm:$0xff]
        %v1112 = vld [vmem:[#allocation2 + $0x18] sm:$0xff]
        %v1113 = vld [vmem:[#allocation2 + $0x20] sm:$0xff]
        %v1114 = vld [vmem:[#allocation2 + $0x30] sm:$0xff]
        %v1115 = vld [vmem:[#allocation2 + $0x38] sm:$0xff]
        %v1116 = vld [vmem:[#allocation2 + $0x48] sm:$0xff]
        %v1117 = vld [vmem:[#allocation2 + $0x50] sm:$0xff]
        %v1118 = vld [vmem:[#allocation2 + $0x60] sm:$0xff]
        %v1119 = vld [vmem:[#allocation2 + $0x68] sm:$0xff]
        %v1120 = vld [vmem:[#allocation2 + $0x78] sm:$0xff]
        %v1121 = vld [vmem:[#allocation2 + $0x80] sm:$0xff]
        %v1122 = vld [vmem:[#allocation2 + $0x90] sm:$0xff]
        %v1123 = vld [vmem:[#allocation2 + $0x98] sm:$0xff]
        %v1124 = vld [vmem:[#allocation2 + $0xa8] sm:$0xff]
        %v1125 = vld [vmem:[#allocation2 + $0xb0] sm:$0xff]
        %v1126 = vld [vmem:[#allocation2 + $0xc0] sm:$0xff]
        %v1127 = vld [vmem:[#allocation2 + $0xc8] sm:$0xff]
        %v1128 = vld [vmem:[#allocation2 + $0xd8] sm:$0xff]
        %v1129 = vld [vmem:[#allocation2 + $0xe0] sm:$0xff]
        %v1130 = vld [vmem:[#allocation2 + $0xf0] sm:$0xff]
        %v1131 = vld [vmem:[#allocation2 + $0xf8] sm:$0xff]
        %v1132 = vld [vmem:[#allocation2 + $0x108] sm:$0xff]
        %v1133 = vld [vmem:[#allocation2 + $0x110] sm:$0xff]
        %v1134 = vld [vmem:[#allocation2 + $0x120] sm:$0xff]
        %v1135 = vld [vmem:[#allocation2 + $0x128] sm:$0xff]
        %v1136 = vld [vmem:[#allocation2 + $0x138] sm:$0xff]
        %v1137 = vld [vmem:[#allocation2 + $0x140] sm:$0xff]
        %v1138 = vld [vmem:[#allocation2 + $0x150] sm:$0xff]
        %v1139 = vld [vmem:[#allocation2 + $0x158] sm:$0xff]
        %v1140 = vld [vmem:[#allocation2 + $0x168] sm:$0xff]
        %v1141 = vld [vmem:[#allocation2 + $0x170] sm:$0xff]
        %v1142 = vpack.c.bf16 %v1111, %v1110
        %v1143 = vpack.c.bf16 %v1113, %v1112
        %v1144 = vpack.c.bf16 %v1115, %v1114
        %v1145 = vpack.c.bf16 %v1117, %v1116
        %v1146 = vpack.c.bf16 %v1119, %v1118
        %v1147 = vpack.c.bf16 %v1121, %v1120
        %v1148 = vpack.c.bf16 %v1123, %v1122
        %v1149 = vpack.c.bf16 %v1125, %v1124
        %v1150 = vpack.c.bf16 %v1127, %v1126
        %v1151 = vpack.c.bf16 %v1129, %v1128
        %v1152 = vpack.c.bf16 %v1131, %v1130
        %v1153 = vpack.c.bf16 %v1133, %v1132
        %v1154 = vpack.c.bf16 %v1135, %v1134
        %v1155 = vpack.c.bf16 %v1137, %v1136
        %v1156 = vpack.c.bf16 %v1139, %v1138
        %v1157 = vpack.c.bf16 %v1141, %v1140
        %v1158 = vld [vmem:[#allocation7] sm:$0x3]
        %v1159 = vld [vmem:[#allocation2 + $0x1] sm:$0xff]
        %v1160 = vld [vmem:[#allocation2 + $0x9] sm:$0xff]
        %v1161 = vld [vmem:[#allocation2 + $0x19] sm:$0xff]
        %v1162 = vld [vmem:[#allocation2 + $0x21] sm:$0xff]
        %v1163 = vld [vmem:[#allocation2 + $0x31] sm:$0xff]
        %v1164 = vld [vmem:[#allocation2 + $0x39] sm:$0xff]
        %v1165 = vld [vmem:[#allocation2 + $0x49] sm:$0xff]
        %v1166 = vld [vmem:[#allocation2 + $0x51] sm:$0xff]
        %v1167 = vld [vmem:[#allocation2 + $0x61] sm:$0xff]
        %v1168 = vld [vmem:[#allocation2 + $0x69] sm:$0xff]
        %v1169 = vld [vmem:[#allocation2 + $0x79] sm:$0xff]
        %v1170 = vld [vmem:[#allocation2 + $0x81] sm:$0xff]
        %v1171 = vld [vmem:[#allocation2 + $0x91] sm:$0xff]
        %v1172 = vld [vmem:[#allocation2 + $0x99] sm:$0xff]
        %v1173 = vld [vmem:[#allocation2 + $0xa9] sm:$0xff]
        %v1174 = vld [vmem:[#allocation2 + $0xb1] sm:$0xff]
        %v1175 = vld [vmem:[#allocation2 + $0xc1] sm:$0xff]
        %v1176 = vld [vmem:[#allocation2 + $0xc9] sm:$0xff]
        %v1177 = vld [vmem:[#allocation2 + $0xd9] sm:$0xff]
        %v1178 = vld [vmem:[#allocation2 + $0xe1] sm:$0xff]
        %v1179 = vld [vmem:[#allocation2 + $0xf1] sm:$0xff]
        %v1180 = vld [vmem:[#allocation2 + $0xf9] sm:$0xff]
        %v1181 = vld [vmem:[#allocation2 + $0x109] sm:$0xff]
        %v1182 = vld [vmem:[#allocation2 + $0x111] sm:$0xff]
        %v1183 = vld [vmem:[#allocation2 + $0x121] sm:$0xff]
        %v1184 = vld [vmem:[#allocation2 + $0x129] sm:$0xff]
        %v1185 = vld [vmem:[#allocation2 + $0x139] sm:$0xff]
        %v1186 = vld [vmem:[#allocation2 + $0x141] sm:$0xff]
        %v1187 = vld [vmem:[#allocation2 + $0x151] sm:$0xff]
        %v1188 = vld [vmem:[#allocation2 + $0x159] sm:$0xff]
        %v1189 = vld [vmem:[#allocation2 + $0x169] sm:$0xff]
        %v1190 = vld [vmem:[#allocation2 + $0x171] sm:$0xff]
        %v1191 = vpack.c.bf16 %v1160, %v1159
        %v1192 = vpack.c.bf16 %v1162, %v1161
        %v1193 = vpack.c.bf16 %v1164, %v1163
        %v1194 = vpack.c.bf16 %v1166, %v1165
        %v1195 = vpack.c.bf16 %v1168, %v1167
        %v1196 = vpack.c.bf16 %v1170, %v1169
        %v1197 = vpack.c.bf16 %v1172, %v1171
        %v1198 = vpack.c.bf16 %v1174, %v1173
        %v1199 = vpack.c.bf16 %v1176, %v1175
        %v1200 = vpack.c.bf16 %v1178, %v1177
        %v1201 = vpack.c.bf16 %v1180, %v1179
        %v1202 = vpack.c.bf16 %v1182, %v1181
        %v1203 = vpack.c.bf16 %v1184, %v1183
        %v1204 = vpack.c.bf16 %v1186, %v1185
        %v1205 = vpack.c.bf16 %v1188, %v1187
        %v1206 = vpack.c.bf16 %v1190, %v1189
        %s1207 = scalar_lea.vmem [#allocation7], 2
        %v1208 = vld [vmem:[%s1207] sm:$0x3]
        %v1210 = vsel %vm273, %v1191, 0
        %v1213 = vsel %vm273, %v1192, 0
        %v1216 = vsel %vm273, %v1193, 0
        %v1219 = vsel %vm273, %v1194, 0
        %v1222 = vsel %vm273, %v1195, 0
        %v1225 = vsel %vm273, %v1196, 0
        %v1228 = vsel %vm273, %v1197, 0
        %v1231 = vsel %vm273, %v1198, 0
        %v1234 = vsel %vm273, %v1199, 0
        %v1237 = vsel %vm273, %v1200, 0
        %v1240 = vsel %vm273, %v1201, 0
        %v1243 = vsel %vm273, %v1202, 0
        %v1246 = vsel %vm273, %v1203, 0
        %v1249 = vsel %vm273, %v1204, 0
        %v1252 = vsel %vm273, %v1205, 0
        %v1255 = vsel %vm273, %v1206, 0
        %vm1257 = vcmask 1041408
        %v1259 = vsel %vm1257, %v1208, 0
        %1261 = vmatprep.subr.bf16.mxu0 0
        %1262 = vmatpush1.bf16.msra.mxu0 %v1259
        %1263 = vmatprep.subr.bf16.mxu0 0
        %1264 = vmatpush1.bf16.msra.mxu0 0
        %1265 = vmatprep.subr.bf16.mxu0 0
        %1266 = vmatpush1.bf16.msra.mxu0 0
        %1267 = vmatprep.subr.bf16.mxu0 0
        %1268 = vmatpush1.bf16.msra.mxu0 0
        %1269 = vmatprep.subr.bf16.mxu0 0
        %1270 = vmatpush1.bf16.msra.mxu0 0
        %1271 = vmatprep.subr.bf16.mxu0 0
        %1272 = vmatpush1.bf16.msra.mxu0 0
        %1273 = vmatprep.subr.bf16.mxu0 0
        %1274 = vmatpush1.bf16.msra.mxu0 0
        %1275 = vmatprep.subr.bf16.mxu0 0
        %1276 = vmatpush1.bf16.msra.mxu0 0
        %1277 = vmatprep.subr.bf16.mxu0 0
        %1278 = vmatpush1.bf16.msra.mxu0 0
        %1279 = vmatprep.subr.bf16.mxu0 0
        %1280 = vmatpush1.bf16.msra.mxu0 0
        %1281 = vmatprep.subr.bf16.mxu0 0
        %1282 = vmatpush1.bf16.msra.mxu0 0
        %1283 = vmatprep.subr.bf16.mxu0 0
        %1284 = vmatpush1.bf16.msra.mxu0 0
        %1285 = vmatprep.subr.bf16.mxu0 0
        %1286 = vmatpush1.bf16.msra.mxu0 0
        %1287 = vmatprep.subr.bf16.mxu0 0
        %1288 = vmatpush1.bf16.msra.mxu0 0
        %1289 = vmatprep.subr.bf16.mxu0 0
        %1290 = vmatpush1.bf16.msra.mxu0 0
        %1291 = vmatprep.subr.bf16.mxu0 0
        %1292 = vmatpush1.bf16.msra.mxu0 0
        %1293 = vmatprep.mubr.bf16.mxu0 0
        %1294 = vmatmul.mubr.bf16.gmra.mrb[0].mxu0 %v1210
        %v1295 = vpop.f32.mrb[0].mxu0
        %v1296 = vadd.f32 0.0, %v1295
        %v1297 = vpop.f32.mrb[0].mxu0
        %v1298 = vpop.f32.mrb[0].mxu0
        %v1299 = vadd.f32 0.0, %v1298
        %v1300 = vpop.f32.mrb[0].mxu0
        %1301 = vmatprep.mubr.bf16.mxu0 0
        %1302 = vmatmul.mubr.bf16.gmra.mrb[0].mxu0 %v1213
        %v1303 = vpop.f32.mrb[0].mxu0
        %v1304 = vadd.f32 0.0, %v1303
        %v1305 = vpop.f32.mrb[0].mxu0
        %v1306 = vpop.f32.mrb[0].mxu0
        %v1307 = vadd.f32 0.0, %v1306
        %v1308 = vpop.f32.mrb[0].mxu0
        %1309 = vmatprep.mubr.bf16.mxu0 0
        %1310 = vmatmul.mubr.bf16.gmra.mrb[0].mxu0 %v1216
        %v1311 = vpop.f32.mrb[0].mxu0
        %v1312 = vadd.f32 0.0, %v1311
        %v1313 = vpop.f32.mrb[0].mxu0
        %v1314 = vpop.f32.mrb[0].mxu0
        %v1315 = vadd.f32 0.0, %v1314
        %v1316 = vpop.f32.mrb[0].mxu0
        %1317 = vmatprep.mubr.bf16.mxu0 0
        %1318 = vmatmul.mubr.bf16.gmra.mrb[0].mxu0 %v1219
        %v1319 = vpop.f32.mrb[0].mxu0
        %v1320 = vadd.f32 0.0, %v1319
        %v1321 = vpop.f32.mrb[0].mxu0
        %v1322 = vpop.f32.mrb[0].mxu0
        %v1323 = vadd.f32 0.0, %v1322
        %v1324 = vpop.f32.mrb[0].mxu0
        %1325 = vmatprep.mubr.bf16.mxu0 0
        %1326 = vmatmul.mubr.bf16.gmra.mrb[0].mxu0 %v1222
        %v1327 = vpop.f32.mrb[0].mxu0
        %v1328 = vadd.f32 0.0, %v1327
        %v1329 = vpop.f32.mrb[0].mxu0
        %v1330 = vpop.f32.mrb[0].mxu0
        %v1331 = vadd.f32 0.0, %v1330
        %v1332 = vpop.f32.mrb[0].mxu0
        %1333 = vmatprep.mubr.bf16.mxu0 0
        %1334 = vmatmul.mubr.bf16.gmra.mrb[0].mxu0 %v1225
        %v1335 = vpop.f32.mrb[0].mxu0
        %v1336 = vadd.f32 0.0, %v1335
        %v1337 = vpop.f32.mrb[0].mxu0
        %v1338 = vpop.f32.mrb[0].mxu0
        %v1339 = vadd.f32 0.0, %v1338
        %v1340 = vpop.f32.mrb[0].mxu0
        %1341 = vmatprep.mubr.bf16.mxu0 0
        %1342 = vmatmul.mubr.bf16.gmra.mrb[0].mxu0 %v1228
        %v1343 = vpop.f32.mrb[0].mxu0
        %v1344 = vadd.f32 0.0, %v1343
        %v1345 = vpop.f32.mrb[0].mxu0
        %v1346 = vpop.f32.mrb[0].mxu0
        %v1347 = vadd.f32 0.0, %v1346
        %v1348 = vpop.f32.mrb[0].mxu0
        %1349 = vmatprep.mubr.bf16.mxu0 0
        %1350 = vmatmul.mubr.bf16.gmra.mrb[0].mxu0 %v1231
        %v1351 = vpop.f32.mrb[0].mxu0
        %v1352 = vadd.f32 0.0, %v1351
        %v1353 = vpop.f32.mrb[0].mxu0
        %v1354 = vpop.f32.mrb[0].mxu0
        %v1355 = vadd.f32 0.0, %v1354
        %v1356 = vpop.f32.mrb[0].mxu0
        %1357 = vmatprep.mubr.bf16.mxu0 0
        %1358 = vmatmul.mubr.bf16.gmra.mrb[0].mxu0 %v1234
        %v1359 = vpop.f32.mrb[0].mxu0
        %v1360 = vadd.f32 0.0, %v1359
        %v1361 = vpop.f32.mrb[0].mxu0
        %v1362 = vpop.f32.mrb[0].mxu0
        %v1363 = vadd.f32 0.0, %v1362
        %v1364 = vpop.f32.mrb[0].mxu0
        %1365 = vmatprep.mubr.bf16.mxu0 0
        %1366 = vmatmul.mubr.bf16.gmra.mrb[0].mxu0 %v1237
        %v1367 = vpop.f32.mrb[0].mxu0
        %v1368 = vadd.f32 0.0, %v1367
        %v1369 = vpop.f32.mrb[0].mxu0
        %v1370 = vpop.f32.mrb[0].mxu0
        %v1371 = vadd.f32 0.0, %v1370
        %v1372 = vpop.f32.mrb[0].mxu0
        %1373 = vmatprep.mubr.bf16.mxu0 0
        %1374 = vmatmul.mubr.bf16.gmra.mrb[0].mxu0 %v1240
        %v1375 = vpop.f32.mrb[0].mxu0
        %v1376 = vadd.f32 0.0, %v1375
        %v1377 = vpop.f32.mrb[0].mxu0
        %v1378 = vpop.f32.mrb[0].mxu0
        %v1379 = vadd.f32 0.0, %v1378
        %v1380 = vpop.f32.mrb[0].mxu0
        %1381 = vmatprep.mubr.bf16.mxu0 0
        %1382 = vmatmul.mubr.bf16.gmra.mrb[0].mxu0 %v1243
        %v1383 = vpop.f32.mrb[0].mxu0
        %v1384 = vadd.f32 0.0, %v1383
        %v1385 = vpop.f32.mrb[0].mxu0
        %v1386 = vpop.f32.mrb[0].mxu0
        %v1387 = vadd.f32 0.0, %v1386
        %v1388 = vpop.f32.mrb[0].mxu0
        %1389 = vmatprep.mubr.bf16.mxu0 0
        %1390 = vmatmul.mubr.bf16.gmra.mrb[0].mxu0 %v1246
        %v1391 = vpop.f32.mrb[0].mxu0
        %v1392 = vadd.f32 0.0, %v1391
        %v1393 = vpop.f32.mrb[0].mxu0
        %v1394 = vpop.f32.mrb[0].mxu0
        %v1395 = vadd.f32 0.0, %v1394
        %v1396 = vpop.f32.mrb[0].mxu0
        %1397 = vmatprep.mubr.bf16.mxu0 0
        %1398 = vmatmul.mubr.bf16.gmra.mrb[0].mxu0 %v1249
        %v1399 = vpop.f32.mrb[0].mxu0
        %v1400 = vadd.f32 0.0, %v1399
        %v1401 = vpop.f32.mrb[0].mxu0
        %v1402 = vpop.f32.mrb[0].mxu0
        %v1403 = vadd.f32 0.0, %v1402
        %v1404 = vpop.f32.mrb[0].mxu0
        %1405 = vmatprep.mubr.bf16.mxu0 0
        %1406 = vmatmul.mubr.bf16.gmra.mrb[0].mxu0 %v1252
        %v1407 = vpop.f32.mrb[0].mxu0
        %v1408 = vadd.f32 0.0, %v1407
        %v1409 = vpop.f32.mrb[0].mxu0
        %v1410 = vpop.f32.mrb[0].mxu0
        %v1411 = vadd.f32 0.0, %v1410
        %v1412 = vpop.f32.mrb[0].mxu0
        %1413 = vmatprep.mubr.bf16.mxu0 0
        %1414 = vmatmul.mubr.bf16.gmra.mrb[0].mxu0 %v1255
        %v1415 = vpop.f32.mrb[0].mxu0
        %v1416 = vadd.f32 0.0, %v1415
        %v1417 = vpop.f32.mrb[0].mxu0
        %v1418 = vpop.f32.mrb[0].mxu0
        %v1419 = vadd.f32 0.0, %v1418
        %v1420 = vpop.f32.mrb[0].mxu0
        %1421 = vdwg.mxu0
        %v1423 = vsel %vm273, %v1142, 0
        %v1426 = vsel %vm273, %v1143, 0
        %v1429 = vsel %vm273, %v1144, 0
        %v1432 = vsel %vm273, %v1145, 0
        %v1435 = vsel %vm273, %v1146, 0
        %v1438 = vsel %vm273, %v1147, 0
        %v1441 = vsel %vm273, %v1148, 0
        %v1444 = vsel %vm273, %v1149, 0
        %v1447 = vsel %vm273, %v1150, 0
        %v1450 = vsel %vm273, %v1151, 0
        %v1453 = vsel %vm273, %v1152, 0
        %v1456 = vsel %vm273, %v1153, 0
        %v1459 = vsel %vm273, %v1154, 0
        %v1462 = vsel %vm273, %v1155, 0
        %v1465 = vsel %vm273, %v1156, 0
        %v1468 = vsel %vm273, %v1157, 0
        %v1471 = vsel %vm1257, %v1158, 0
        %1473 = vmatprep.subr.bf16.mxu0 0
        %1474 = vmatpush1.bf16.msra.mxu0 %v1471
        %1475 = vmatprep.subr.bf16.mxu0 0
        %1476 = vmatpush1.bf16.msra.mxu0 0
        %1477 = vmatprep.subr.bf16.mxu0 0
        %1478 = vmatpush1.bf16.msra.mxu0 0
        %1479 = vmatprep.subr.bf16.mxu0 0
        %1480 = vmatpush1.bf16.msra.mxu0 0
        %1481 = vmatprep.subr.bf16.mxu0 0
        %1482 = vmatpush1.bf16.msra.mxu0 0
        %1483 = vmatprep.subr.bf16.mxu0 0
        %1484 = vmatpush1.bf16.msra.mxu0 0
        %1485 = vmatprep.subr.bf16.mxu0 0
        %1486 = vmatpush1.bf16.msra.mxu0 0
        %1487 = vmatprep.subr.bf16.mxu0 0
        %1488 = vmatpush1.bf16.msra.mxu0 0
        %1489 = vmatprep.subr.bf16.mxu0 0
        %1490 = vmatpush1.bf16.msra.mxu0 0
        %1491 = vmatprep.subr.bf16.mxu0 0
        %1492 = vmatpush1.bf16.msra.mxu0 0
        %1493 = vmatprep.subr.bf16.mxu0 0
        %1494 = vmatpush1.bf16.msra.mxu0 0
        %1495 = vmatprep.subr.bf16.mxu0 0
        %1496 = vmatpush1.bf16.msra.mxu0 0
        %1497 = vmatprep.subr.bf16.mxu0 0
        %1498 = vmatpush1.bf16.msra.mxu0 0
        %1499 = vmatprep.subr.bf16.mxu0 0
        %1500 = vmatpush1.bf16.msra.mxu0 0
        %1501 = vmatprep.subr.bf16.mxu0 0
        %1502 = vmatpush1.bf16.msra.mxu0 0
        %1503 = vmatprep.subr.bf16.mxu0 0
        %1504 = vmatpush1.bf16.msra.mxu0 0
        %1505 = vmatprep.mubr.bf16.mxu0 0
        %1506 = vmatmul.mubr.bf16.gmra.mrb[0].mxu0 %v1423
        %v1507 = vpop.f32.mrb[0].mxu0
        %v1508 = vadd.f32 %v1296, %v1507
        %v1509 = vpop.f32.mrb[0].mxu0
        %v1510 = vpop.f32.mrb[0].mxu0
        %v1511 = vadd.f32 %v1299, %v1510
        %v1512 = vpop.f32.mrb[0].mxu0
        %1513 = vmatprep.mubr.bf16.mxu0 0
        %1514 = vmatmul.mubr.bf16.gmra.mrb[0].mxu0 %v1426
        %v1515 = vpop.f32.mrb[0].mxu0
        %v1516 = vadd.f32 %v1304, %v1515
        %v1517 = vpop.f32.mrb[0].mxu0
        %v1518 = vpop.f32.mrb[0].mxu0
        %v1519 = vadd.f32 %v1307, %v1518
        %v1520 = vpop.f32.mrb[0].mxu0
        %1521 = vmatprep.mubr.bf16.mxu0 0
        %1522 = vmatmul.mubr.bf16.gmra.mrb[0].mxu0 %v1429
        %v1523 = vpop.f32.mrb[0].mxu0
        %v1524 = vadd.f32 %v1312, %v1523
        %v1525 = vpop.f32.mrb[0].mxu0
        %v1526 = vpop.f32.mrb[0].mxu0
        %v1527 = vadd.f32 %v1315, %v1526
        %v1528 = vpop.f32.mrb[0].mxu0
        %1529 = vmatprep.mubr.bf16.mxu0 0
        %1530 = vmatmul.mubr.bf16.gmra.mrb[0].mxu0 %v1432
        %v1531 = vpop.f32.mrb[0].mxu0
        %v1532 = vadd.f32 %v1320, %v1531
        %v1533 = vpop.f32.mrb[0].mxu0
        %v1534 = vpop.f32.mrb[0].mxu0
        %v1535 = vadd.f32 %v1323, %v1534
        %v1536 = vpop.f32.mrb[0].mxu0
        %1537 = vmatprep.mubr.bf16.mxu0 0
        %1538 = vmatmul.mubr.bf16.gmra.mrb[0].mxu0 %v1435
        %v1539 = vpop.f32.mrb[0].mxu0
        %v1540 = vadd.f32 %v1328, %v1539
        %v1541 = vpop.f32.mrb[0].mxu0
        %v1542 = vpop.f32.mrb[0].mxu0
        %v1543 = vadd.f32 %v1331, %v1542
        %v1544 = vpop.f32.mrb[0].mxu0
        %1545 = vmatprep.mubr.bf16.mxu0 0
        %1546 = vmatmul.mubr.bf16.gmra.mrb[0].mxu0 %v1438
        %v1547 = vpop.f32.mrb[0].mxu0
        %v1548 = vadd.f32 %v1336, %v1547
        %v1549 = vpop.f32.mrb[0].mxu0
        %v1550 = vpop.f32.mrb[0].mxu0
        %v1551 = vadd.f32 %v1339, %v1550
        %v1552 = vpop.f32.mrb[0].mxu0
        %1553 = vmatprep.mubr.bf16.mxu0 0
        %1554 = vmatmul.mubr.bf16.gmra.mrb[0].mxu0 %v1441
        %v1555 = vpop.f32.mrb[0].mxu0
        %v1556 = vadd.f32 %v1344, %v1555
        %v1557 = vpop.f32.mrb[0].mxu0
        %v1558 = vpop.f32.mrb[0].mxu0
        %v1559 = vadd.f32 %v1347, %v1558
        %v1560 = vpop.f32.mrb[0].mxu0
        %1561 = vmatprep.mubr.bf16.mxu0 0
        %1562 = vmatmul.mubr.bf16.gmra.mrb[0].mxu0 %v1444
        %v1563 = vpop.f32.mrb[0].mxu0
        %v1564 = vadd.f32 %v1352, %v1563
        %v1565 = vpop.f32.mrb[0].mxu0
        %v1566 = vpop.f32.mrb[0].mxu0
        %v1567 = vadd.f32 %v1355, %v1566
        %v1568 = vpop.f32.mrb[0].mxu0
        %1569 = vmatprep.mubr.bf16.mxu0 0
        %1570 = vmatmul.mubr.bf16.gmra.mrb[0].mxu0 %v1447
        %v1571 = vpop.f32.mrb[0].mxu0
        %v1572 = vadd.f32 %v1360, %v1571
        %v1573 = vpop.f32.mrb[0].mxu0
        %v1574 = vpop.f32.mrb[0].mxu0
        %v1575 = vadd.f32 %v1363, %v1574
        %v1576 = vpop.f32.mrb[0].mxu0
        %1577 = vmatprep.mubr.bf16.mxu0 0
        %1578 = vmatmul.mubr.bf16.gmra.mrb[0].mxu0 %v1450
        %v1579 = vpop.f32.mrb[0].mxu0
        %v1580 = vadd.f32 %v1368, %v1579
        %v1581 = vpop.f32.mrb[0].mxu0
        %v1582 = vpop.f32.mrb[0].mxu0
        %v1583 = vadd.f32 %v1371, %v1582
        %v1584 = vpop.f32.mrb[0].mxu0
        %1585 = vmatprep.mubr.bf16.mxu0 0
        %1586 = vmatmul.mubr.bf16.gmra.mrb[0].mxu0 %v1453
        %v1587 = vpop.f32.mrb[0].mxu0
        %v1588 = vadd.f32 %v1376, %v1587
        %v1589 = vpop.f32.mrb[0].mxu0
        %v1590 = vpop.f32.mrb[0].mxu0
        %v1591 = vadd.f32 %v1379, %v1590
        %v1592 = vpop.f32.mrb[0].mxu0
        %1593 = vmatprep.mubr.bf16.mxu0 0
        %1594 = vmatmul.mubr.bf16.gmra.mrb[0].mxu0 %v1456
        %v1595 = vpop.f32.mrb[0].mxu0
        %v1596 = vadd.f32 %v1384, %v1595
        %v1597 = vpop.f32.mrb[0].mxu0
        %v1598 = vpop.f32.mrb[0].mxu0
        %v1599 = vadd.f32 %v1387, %v1598
        %v1600 = vpop.f32.mrb[0].mxu0
        %1601 = vmatprep.mubr.bf16.mxu0 0
        %1602 = vmatmul.mubr.bf16.gmra.mrb[0].mxu0 %v1459
        %v1603 = vpop.f32.mrb[0].mxu0
        %v1604 = vadd.f32 %v1392, %v1603
        %v1605 = vpop.f32.mrb[0].mxu0
        %v1606 = vpop.f32.mrb[0].mxu0
        %v1607 = vadd.f32 %v1395, %v1606
        %v1608 = vpop.f32.mrb[0].mxu0
        %1609 = vmatprep.mubr.bf16.mxu0 0
        %1610 = vmatmul.mubr.bf16.gmra.mrb[0].mxu0 %v1462
        %v1611 = vpop.f32.mrb[0].mxu0
        %v1612 = vadd.f32 %v1400, %v1611
        %v1613 = vpop.f32.mrb[0].mxu0
        %v1614 = vpop.f32.mrb[0].mxu0
        %v1615 = vadd.f32 %v1403, %v1614
        %v1616 = vpop.f32.mrb[0].mxu0
        %1617 = vmatprep.mubr.bf16.mxu0 0
        %1618 = vmatmul.mubr.bf16.gmra.mrb[0].mxu0 %v1465
        %v1619 = vpop.f32.mrb[0].mxu0
        %v1620 = vadd.f32 %v1408, %v1619
        %v1621 = vpop.f32.mrb[0].mxu0
        %v1622 = vpop.f32.mrb[0].mxu0
        %v1623 = vadd.f32 %v1411, %v1622
        %v1624 = vpop.f32.mrb[0].mxu0
        %1625 = vmatprep.mubr.bf16.mxu0 0
        %1626 = vmatmul.mubr.bf16.gmra.mrb[0].mxu0 %v1468
        %v1627 = vpop.f32.mrb[0].mxu0
        %v1628 = vadd.f32 %v1416, %v1627
        %v1629 = vpop.f32.mrb[0].mxu0
        %v1630 = vpop.f32.mrb[0].mxu0
        %v1631 = vadd.f32 %v1419, %v1630
        %v1632 = vpop.f32.mrb[0].mxu0
        %1633 = vdwg.mxu0
        %v1634 = vld [vmem:[#allocation2 + $0x2] sm:$0xff]
        %v1635 = vld [vmem:[#allocation2 + $0xa] sm:$0xff]
        %v1636 = vld [vmem:[#allocation2 + $0x1a] sm:$0xff]
        %v1637 = vld [vmem:[#allocation2 + $0x22] sm:$0xff]
        %v1638 = vld [vmem:[#allocation2 + $0x32] sm:$0xff]
        %v1639 = vld [vmem:[#allocation2 + $0x3a] sm:$0xff]
        %v1640 = vld [vmem:[#allocation2 + $0x4a] sm:$0xff]
        %v1641 = vld [vmem:[#allocation2 + $0x52] sm:$0xff]
        %v1642 = vld [vmem:[#allocation2 + $0x62] sm:$0xff]
        %v1643 = vld [vmem:[#allocation2 + $0x6a] sm:$0xff]
        %v1644 = vld [vmem:[#allocation2 + $0x7a] sm:$0xff]
        %v1645 = vld [vmem:[#allocation2 + $0x82] sm:$0xff]
        %v1646 = vld [vmem:[#allocation2 + $0x92] sm:$0xff]
        %v1647 = vld [vmem:[#allocation2 + $0x9a] sm:$0xff]
        %v1648 = vld [vmem:[#allocation2 + $0xaa] sm:$0xff]
        %v1649 = vld [vmem:[#allocation2 + $0xb2] sm:$0xff]
        %v1650 = vld [vmem:[#allocation2 + $0xc2] sm:$0xff]
        %v1651 = vld [vmem:[#allocation2 + $0xca] sm:$0xff]
        %v1652 = vld [vmem:[#allocation2 + $0xda] sm:$0xff]
        %v1653 = vld [vmem:[#allocation2 + $0xe2] sm:$0xff]
        %v1654 = vld [vmem:[#allocation2 + $0xf2] sm:$0xff]
        %v1655 = vld [vmem:[#allocation2 + $0xfa] sm:$0xff]
        %v1656 = vld [vmem:[#allocation2 + $0x10a] sm:$0xff]
        %v1657 = vld [vmem:[#allocation2 + $0x112] sm:$0xff]
        %v1658 = vld [vmem:[#allocation2 + $0x122] sm:$0xff]
        %v1659 = vld [vmem:[#allocation2 + $0x12a] sm:$0xff]
        %v1660 = vld [vmem:[#allocation2 + $0x13a] sm:$0xff]
        %v1661 = vld [vmem:[#allocation2 + $0x142] sm:$0xff]
        %v1662 = vld [vmem:[#allocation2 + $0x152] sm:$0xff]
        %v1663 = vld [vmem:[#allocation2 + $0x15a] sm:$0xff]
        %v1664 = vld [vmem:[#allocation2 + $0x16a] sm:$0xff]
        %v1665 = vld [vmem:[#allocation2 + $0x172] sm:$0xff]
        %v1666 = vpack.c.bf16 %v1635, %v1634
        %v1667 = vpack.c.bf16 %v1637, %v1636
        %v1668 = vpack.c.bf16 %v1639, %v1638
        %v1669 = vpack.c.bf16 %v1641, %v1640
        %v1670 = vpack.c.bf16 %v1643, %v1642
        %v1671 = vpack.c.bf16 %v1645, %v1644
        %v1672 = vpack.c.bf16 %v1647, %v1646
        %v1673 = vpack.c.bf16 %v1649, %v1648
        %v1674 = vpack.c.bf16 %v1651, %v1650
        %v1675 = vpack.c.bf16 %v1653, %v1652
        %v1676 = vpack.c.bf16 %v1655, %v1654
        %v1677 = vpack.c.bf16 %v1657, %v1656
        %v1678 = vpack.c.bf16 %v1659, %v1658
        %v1679 = vpack.c.bf16 %v1661, %v1660
        %v1680 = vpack.c.bf16 %v1663, %v1662
        %v1681 = vpack.c.bf16 %v1665, %v1664
        %s1682 = scalar_lea.vmem [#allocation7], 4
        %v1683 = vld [vmem:[%s1682] sm:$0x3]
        %v1685 = vsel %vm273, %v1666, 0
        %v1688 = vsel %vm273, %v1667, 0
        %v1691 = vsel %vm273, %v1668, 0
        %v1694 = vsel %vm273, %v1669, 0
        %v1697 = vsel %vm273, %v1670, 0
        %v1700 = vsel %vm273, %v1671, 0
        %v1703 = vsel %vm273, %v1672, 0
        %v1706 = vsel %vm273, %v1673, 0
        %v1709 = vsel %vm273, %v1674, 0
        %v1712 = vsel %vm273, %v1675, 0
        %v1715 = vsel %vm273, %v1676, 0
        %v1718 = vsel %vm273, %v1677, 0
        %v1721 = vsel %vm273, %v1678, 0
        %v1724 = vsel %vm273, %v1679, 0
        %v1727 = vsel %vm273, %v1680, 0
        %v1730 = vsel %vm273, %v1681, 0
        %v1733 = vsel %vm1257, %v1683, 0
        %1735 = vmatprep.subr.bf16.mxu0 0
        %1736 = vmatpush1.bf16.msra.mxu0 %v1733
        %1737 = vmatprep.subr.bf16.mxu0 0
        %1738 = vmatpush1.bf16.msra.mxu0 0
        %1739 = vmatprep.subr.bf16.mxu0 0
        %1740 = vmatpush1.bf16.msra.mxu0 0
        %1741 = vmatprep.subr.bf16.mxu0 0
        %1742 = vmatpush1.bf16.msra.mxu0 0
        %1743 = vmatprep.subr.bf16.mxu0 0
        %1744 = vmatpush1.bf16.msra.mxu0 0
        %1745 = vmatprep.subr.bf16.mxu0 0
        %1746 = vmatpush1.bf16.msra.mxu0 0
        %1747 = vmatprep.subr.bf16.mxu0 0
        %1748 = vmatpush1.bf16.msra.mxu0 0
        %1749 = vmatprep.subr.bf16.mxu0 0
        %1750 = vmatpush1.bf16.msra.mxu0 0
        %1751 = vmatprep.subr.bf16.mxu0 0
        %1752 = vmatpush1.bf16.msra.mxu0 0
        %1753 = vmatprep.subr.bf16.mxu0 0
        %1754 = vmatpush1.bf16.msra.mxu0 0
        %1755 = vmatprep.subr.bf16.mxu0 0
        %1756 = vmatpush1.bf16.msra.mxu0 0
        %1757 = vmatprep.subr.bf16.mxu0 0
        %1758 = vmatpush1.bf16.msra.mxu0 0
        %1759 = vmatprep.subr.bf16.mxu0 0
        %1760 = vmatpush1.bf16.msra.mxu0 0
        %1761 = vmatprep.subr.bf16.mxu0 0
        %1762 = vmatpush1.bf16.msra.mxu0 0
        %1763 = vmatprep.subr.bf16.mxu0 0
        %1764 = vmatpush1.bf16.msra.mxu0 0
        %1765 = vmatprep.subr.bf16.mxu0 0
        %1766 = vmatpush1.bf16.msra.mxu0 0
        %1767 = vmatprep.mubr.bf16.mxu0 0
        %1768 = vmatmul.mubr.bf16.gmra.mrb[0].mxu0 %v1685
        %v1769 = vpop.f32.mrb[0].mxu0
        %v1770 = vadd.f32 0.0, %v1769
        %v1771 = vpop.f32.mrb[0].mxu0
        %v1772 = vpop.f32.mrb[0].mxu0
        %v1773 = vadd.f32 0.0, %v1772
        %v1774 = vpop.f32.mrb[0].mxu0
        %1775 = vmatprep.mubr.bf16.mxu0 0
        %1776 = vmatmul.mubr.bf16.gmra.mrb[0].mxu0 %v1688
        %v1777 = vpop.f32.mrb[0].mxu0
        %v1778 = vadd.f32 0.0, %v1777
        %v1779 = vpop.f32.mrb[0].mxu0
        %v1780 = vpop.f32.mrb[0].mxu0
        %v1781 = vadd.f32 0.0, %v1780
        %v1782 = vpop.f32.mrb[0].mxu0
        %1783 = vmatprep.mubr.bf16.mxu0 0
        %1784 = vmatmul.mubr.bf16.gmra.mrb[0].mxu0 %v1691
        %v1785 = vpop.f32.mrb[0].mxu0
        %v1786 = vadd.f32 0.0, %v1785
        %v1787 = vpop.f32.mrb[0].mxu0
        %v1788 = vpop.f32.mrb[0].mxu0
        %v1789 = vadd.f32 0.0, %v1788
        %v1790 = vpop.f32.mrb[0].mxu0
        %1791 = vmatprep.mubr.bf16.mxu0 0
        %1792 = vmatmul.mubr.bf16.gmra.mrb[0].mxu0 %v1694
        %v1793 = vpop.f32.mrb[0].mxu0
        %v1794 = vadd.f32 0.0, %v1793
        %v1795 = vpop.f32.mrb[0].mxu0
        %v1796 = vpop.f32.mrb[0].mxu0
        %v1797 = vadd.f32 0.0, %v1796
        %v1798 = vpop.f32.mrb[0].mxu0
        %1799 = vmatprep.mubr.bf16.mxu0 0
        %1800 = vmatmul.mubr.bf16.gmra.mrb[0].mxu0 %v1697
        %v1801 = vpop.f32.mrb[0].mxu0
        %v1802 = vadd.f32 0.0, %v1801
        %v1803 = vpop.f32.mrb[0].mxu0
        %v1804 = vpop.f32.mrb[0].mxu0
        %v1805 = vadd.f32 0.0, %v1804
        %v1806 = vpop.f32.mrb[0].mxu0
        %1807 = vmatprep.mubr.bf16.mxu0 0
        %1808 = vmatmul.mubr.bf16.gmra.mrb[0].mxu0 %v1700
        %v1809 = vpop.f32.mrb[0].mxu0
        %v1810 = vadd.f32 0.0, %v1809
        %v1811 = vpop.f32.mrb[0].mxu0
        %v1812 = vpop.f32.mrb[0].mxu0
        %v1813 = vadd.f32 0.0, %v1812
        %v1814 = vpop.f32.mrb[0].mxu0
        %1815 = vmatprep.mubr.bf16.mxu0 0
        %1816 = vmatmul.mubr.bf16.gmra.mrb[0].mxu0 %v1703
        %v1817 = vpop.f32.mrb[0].mxu0
        %v1818 = vadd.f32 0.0, %v1817
        %v1819 = vpop.f32.mrb[0].mxu0
        %v1820 = vpop.f32.mrb[0].mxu0
        %v1821 = vadd.f32 0.0, %v1820
        %v1822 = vpop.f32.mrb[0].mxu0
        %1823 = vmatprep.mubr.bf16.mxu0 0
        %1824 = vmatmul.mubr.bf16.gmra.mrb[0].mxu0 %v1706
        %v1825 = vpop.f32.mrb[0].mxu0
        %v1826 = vadd.f32 0.0, %v1825
        %v1827 = vpop.f32.mrb[0].mxu0
        %v1828 = vpop.f32.mrb[0].mxu0
        %v1829 = vadd.f32 0.0, %v1828
        %v1830 = vpop.f32.mrb[0].mxu0
        %1831 = vmatprep.mubr.bf16.mxu0 0
        %1832 = vmatmul.mubr.bf16.gmra.mrb[0].mxu0 %v1709
        %v1833 = vpop.f32.mrb[0].mxu0
        %v1834 = vadd.f32 0.0, %v1833
        %v1835 = vpop.f32.mrb[0].mxu0
        %v1836 = vpop.f32.mrb[0].mxu0
        %v1837 = vadd.f32 0.0, %v1836
        %v1838 = vpop.f32.mrb[0].mxu0
        %1839 = vmatprep.mubr.bf16.mxu0 0
        %1840 = vmatmul.mubr.bf16.gmra.mrb[0].mxu0 %v1712
        %v1841 = vpop.f32.mrb[0].mxu0
        %v1842 = vadd.f32 0.0, %v1841
        %v1843 = vpop.f32.mrb[0].mxu0
        %v1844 = vpop.f32.mrb[0].mxu0
        %v1845 = vadd.f32 0.0, %v1844
        %v1846 = vpop.f32.mrb[0].mxu0
        %1847 = vmatprep.mubr.bf16.mxu0 0
        %1848 = vmatmul.mubr.bf16.gmra.mrb[0].mxu0 %v1715
        %v1849 = vpop.f32.mrb[0].mxu0
        %v1850 = vadd.f32 0.0, %v1849
        %v1851 = vpop.f32.mrb[0].mxu0
        %v1852 = vpop.f32.mrb[0].mxu0
        %v1853 = vadd.f32 0.0, %v1852
        %v1854 = vpop.f32.mrb[0].mxu0
        %1855 = vmatprep.mubr.bf16.mxu0 0
        %1856 = vmatmul.mubr.bf16.gmra.mrb[0].mxu0 %v1718
        %v1857 = vpop.f32.mrb[0].mxu0
        %v1858 = vadd.f32 0.0, %v1857
        %v1859 = vpop.f32.mrb[0].mxu0
        %v1860 = vpop.f32.mrb[0].mxu0
        %v1861 = vadd.f32 0.0, %v1860
        %v1862 = vpop.f32.mrb[0].mxu0
        %1863 = vmatprep.mubr.bf16.mxu0 0
        %1864 = vmatmul.mubr.bf16.gmra.mrb[0].mxu0 %v1721
        %v1865 = vpop.f32.mrb[0].mxu0
        %v1866 = vadd.f32 0.0, %v1865
        %v1867 = vpop.f32.mrb[0].mxu0
        %v1868 = vpop.f32.mrb[0].mxu0
        %v1869 = vadd.f32 0.0, %v1868
        %v1870 = vpop.f32.mrb[0].mxu0
        %1871 = vmatprep.mubr.bf16.mxu0 0
        %1872 = vmatmul.mubr.bf16.gmra.mrb[0].mxu0 %v1724
        %v1873 = vpop.f32.mrb[0].mxu0
        %v1874 = vadd.f32 0.0, %v1873
        %v1875 = vpop.f32.mrb[0].mxu0
        %v1876 = vpop.f32.mrb[0].mxu0
        %v1877 = vadd.f32 0.0, %v1876
        %v1878 = vpop.f32.mrb[0].mxu0
        %1879 = vmatprep.mubr.bf16.mxu0 0
        %1880 = vmatmul.mubr.bf16.gmra.mrb[0].mxu0 %v1727
        %v1881 = vpop.f32.mrb[0].mxu0
        %v1882 = vadd.f32 0.0, %v1881
        %v1883 = vpop.f32.mrb[0].mxu0
        %v1884 = vpop.f32.mrb[0].mxu0
        %v1885 = vadd.f32 0.0, %v1884
        %v1886 = vpop.f32.mrb[0].mxu0
        %1887 = vmatprep.mubr.bf16.mxu0 0
        %1888 = vmatmul.mubr.bf16.gmra.mrb[0].mxu0 %v1730
        %v1889 = vpop.f32.mrb[0].mxu0
        %v1890 = vadd.f32 0.0, %v1889
        %v1891 = vpop.f32.mrb[0].mxu0
        %v1892 = vpop.f32.mrb[0].mxu0
        %v1893 = vadd.f32 0.0, %v1892
        %v1894 = vpop.f32.mrb[0].mxu0
        %1895 = vdwg.mxu0
        %v1896 = vadd.f32 %v1508, %v1770
        %v1897 = vadd.f32 %v1511, %v1773
        %v1898 = vadd.f32 %v1516, %v1778
        %v1899 = vadd.f32 %v1519, %v1781
        %v1900 = vadd.f32 %v1524, %v1786
        %v1901 = vadd.f32 %v1527, %v1789
        %v1902 = vadd.f32 %v1532, %v1794
        %v1903 = vadd.f32 %v1535, %v1797
        %v1904 = vadd.f32 %v1540, %v1802
        %v1905 = vadd.f32 %v1543, %v1805
        %v1906 = vadd.f32 %v1548, %v1810
        %v1907 = vadd.f32 %v1551, %v1813
        %v1908 = vadd.f32 %v1556, %v1818
        %v1909 = vadd.f32 %v1559, %v1821
        %v1910 = vadd.f32 %v1564, %v1826
        %v1911 = vadd.f32 %v1567, %v1829
        %v1912 = vadd.f32 %v1572, %v1834
        %v1913 = vadd.f32 %v1575, %v1837
        %v1914 = vadd.f32 %v1580, %v1842
        %v1915 = vadd.f32 %v1583, %v1845
        %v1916 = vadd.f32 %v1588, %v1850
        %v1917 = vadd.f32 %v1591, %v1853
        %v1918 = vadd.f32 %v1596, %v1858
        %v1919 = vadd.f32 %v1599, %v1861
        %v1920 = vadd.f32 %v1604, %v1866
        %v1921 = vadd.f32 %v1607, %v1869
        %v1922 = vadd.f32 %v1612, %v1874
        %v1923 = vadd.f32 %v1615, %v1877
        %v1924 = vadd.f32 %v1620, %v1882
        %v1925 = vadd.f32 %v1623, %v1885
        %v1926 = vadd.f32 %v1628, %v1890
        %v1927 = vadd.f32 %v1631, %v1893
        %v1928 = vld [vmem:[%s1077] sm:$0xff]
        %v1929 = vld [vmem:[%s1077 + $0x8] sm:$0xff]
        %v1930 = vld [vmem:[%s1077 + $0x18] sm:$0xff]
        %v1931 = vld [vmem:[%s1077 + $0x20] sm:$0xff]
        %v1932 = vld [vmem:[%s1077 + $0x30] sm:$0xff]
        %v1933 = vld [vmem:[%s1077 + $0x38] sm:$0xff]
        %v1934 = vld [vmem:[%s1077 + $0x48] sm:$0xff]
        %v1935 = vld [vmem:[%s1077 + $0x50] sm:$0xff]
        %v1936 = vld [vmem:[%s1077 + $0x60] sm:$0xff]
        %v1937 = vld [vmem:[%s1077 + $0x68] sm:$0xff]
        %v1938 = vld [vmem:[%s1077 + $0x78] sm:$0xff]
        %v1939 = vld [vmem:[%s1077 + $0x80] sm:$0xff]
        %v1940 = vld [vmem:[%s1077 + $0x90] sm:$0xff]
        %v1941 = vld [vmem:[%s1077 + $0x98] sm:$0xff]
        %v1942 = vld [vmem:[%s1077 + $0xa8] sm:$0xff]
        %v1943 = vld [vmem:[%s1077 + $0xb0] sm:$0xff]
        %v1944 = vld [vmem:[%s1077 + $0xc0] sm:$0xff]
        %v1945 = vld [vmem:[%s1077 + $0xc8] sm:$0xff]
        %v1946 = vld [vmem:[%s1077 + $0xd8] sm:$0xff]
        %v1947 = vld [vmem:[%s1077 + $0xe0] sm:$0xff]
        %v1948 = vld [vmem:[%s1077 + $0xf0] sm:$0xff]
        %v1949 = vld [vmem:[%s1077 + $0xf8] sm:$0xff]
        %v1950 = vld [vmem:[%s1077 + $0x108] sm:$0xff]
        %v1951 = vld [vmem:[%s1077 + $0x110] sm:$0xff]
        %v1952 = vld [vmem:[%s1077 + $0x120] sm:$0xff]
        %v1953 = vld [vmem:[%s1077 + $0x128] sm:$0xff]
        %v1954 = vld [vmem:[%s1077 + $0x138] sm:$0xff]
        %v1955 = vld [vmem:[%s1077 + $0x140] sm:$0xff]
        %v1956 = vld [vmem:[%s1077 + $0x150] sm:$0xff]
        %v1957 = vld [vmem:[%s1077 + $0x158] sm:$0xff]
        %v1958 = vld [vmem:[%s1077 + $0x168] sm:$0xff]
        %v1959 = vld [vmem:[%s1077 + $0x170] sm:$0xff]
        %v1960 = vpack.c.bf16 %v1929, %v1928
        %v1961 = vpack.c.bf16 %v1931, %v1930
        %v1962 = vpack.c.bf16 %v1933, %v1932
        %v1963 = vpack.c.bf16 %v1935, %v1934
        %v1964 = vpack.c.bf16 %v1937, %v1936
        %v1965 = vpack.c.bf16 %v1939, %v1938
        %v1966 = vpack.c.bf16 %v1941, %v1940
        %v1967 = vpack.c.bf16 %v1943, %v1942
        %v1968 = vpack.c.bf16 %v1945, %v1944
        %v1969 = vpack.c.bf16 %v1947, %v1946
        %v1970 = vpack.c.bf16 %v1949, %v1948
        %v1971 = vpack.c.bf16 %v1951, %v1950
        %v1972 = vpack.c.bf16 %v1953, %v1952
        %v1973 = vpack.c.bf16 %v1955, %v1954
        %v1974 = vpack.c.bf16 %v1957, %v1956
        %v1975 = vpack.c.bf16 %v1959, %v1958
        %s1976 = scalar_lea.vmem [#allocation7], 6
        %v1977 = vld [vmem:[%s1976] sm:$0x3]
        %v1979 = vsel %vm273, %v1960, 0
        %v1982 = vsel %vm273, %v1961, 0
        %v1985 = vsel %vm273, %v1962, 0
        %v1988 = vsel %vm273, %v1963, 0
        %v1991 = vsel %vm273, %v1964, 0
        %v1994 = vsel %vm273, %v1965, 0
        %v1997 = vsel %vm273, %v1966, 0
        %v2000 = vsel %vm273, %v1967, 0
        %v2003 = vsel %vm273, %v1968, 0
        %v2006 = vsel %vm273, %v1969, 0
        %v2009 = vsel %vm273, %v1970, 0
        %v2012 = vsel %vm273, %v1971, 0
        %v2015 = vsel %vm273, %v1972, 0
        %v2018 = vsel %vm273, %v1973, 0
        %v2021 = vsel %vm273, %v1974, 0
        %v2024 = vsel %vm273, %v1975, 0
        %v2027 = vsel %vm1257, %v1977, 0
        %2029 = vmatprep.subr.bf16.mxu0 0
        %2030 = vmatpush1.bf16.msra.mxu0 %v2027
        %2031 = vmatprep.subr.bf16.mxu0 0
        %2032 = vmatpush1.bf16.msra.mxu0 0
        %2033 = vmatprep.subr.bf16.mxu0 0
        %2034 = vmatpush1.bf16.msra.mxu0 0
        %2035 = vmatprep.subr.bf16.mxu0 0
        %2036 = vmatpush1.bf16.msra.mxu0 0
        %2037 = vmatprep.subr.bf16.mxu0 0
        %2038 = vmatpush1.bf16.msra.mxu0 0
        %2039 = vmatprep.subr.bf16.mxu0 0
        %2040 = vmatpush1.bf16.msra.mxu0 0
        %2041 = vmatprep.subr.bf16.mxu0 0
        %2042 = vmatpush1.bf16.msra.mxu0 0
        %2043 = vmatprep.subr.bf16.mxu0 0
        %2044 = vmatpush1.bf16.msra.mxu0 0
        %2045 = vmatprep.subr.bf16.mxu0 0
        %2046 = vmatpush1.bf16.msra.mxu0 0
        %2047 = vmatprep.subr.bf16.mxu0 0
        %2048 = vmatpush1.bf16.msra.mxu0 0
        %2049 = vmatprep.subr.bf16.mxu0 0
        %2050 = vmatpush1.bf16.msra.mxu0 0
        %2051 = vmatprep.subr.bf16.mxu0 0
        %2052 = vmatpush1.bf16.msra.mxu0 0
        %2053 = vmatprep.subr.bf16.mxu0 0
        %2054 = vmatpush1.bf16.msra.mxu0 0
        %2055 = vmatprep.subr.bf16.mxu0 0
        %2056 = vmatpush1.bf16.msra.mxu0 0
        %2057 = vmatprep.subr.bf16.mxu0 0
        %2058 = vmatpush1.bf16.msra.mxu0 0
        %2059 = vmatprep.subr.bf16.mxu0 0
        %2060 = vmatpush1.bf16.msra.mxu0 0
        %2061 = vmatprep.mubr.bf16.mxu0 0
        %2062 = vmatmul.mubr.bf16.gmra.mrb[0].mxu0 %v1979
        %v2063 = vpop.f32.mrb[0].mxu0
        %v2064 = vadd.f32 0.0, %v2063
        %v2065 = vpop.f32.mrb[0].mxu0
        %v2066 = vpop.f32.mrb[0].mxu0
        %v2067 = vadd.f32 0.0, %v2066
        %v2068 = vpop.f32.mrb[0].mxu0
        %2069 = vmatprep.mubr.bf16.mxu0 0
        %2070 = vmatmul.mubr.bf16.gmra.mrb[0].mxu0 %v1982
        %v2071 = vpop.f32.mrb[0].mxu0
        %v2072 = vadd.f32 0.0, %v2071
        %v2073 = vpop.f32.mrb[0].mxu0
        %v2074 = vpop.f32.mrb[0].mxu0
        %v2075 = vadd.f32 0.0, %v2074
        %v2076 = vpop.f32.mrb[0].mxu0
        %2077 = vmatprep.mubr.bf16.mxu0 0
        %2078 = vmatmul.mubr.bf16.gmra.mrb[0].mxu0 %v1985
        %v2079 = vpop.f32.mrb[0].mxu0
        %v2080 = vadd.f32 0.0, %v2079
        %v2081 = vpop.f32.mrb[0].mxu0
        %v2082 = vpop.f32.mrb[0].mxu0
        %v2083 = vadd.f32 0.0, %v2082
        %v2084 = vpop.f32.mrb[0].mxu0
        %2085 = vmatprep.mubr.bf16.mxu0 0
        %2086 = vmatmul.mubr.bf16.gmra.mrb[0].mxu0 %v1988
        %v2087 = vpop.f32.mrb[0].mxu0
        %v2088 = vadd.f32 0.0, %v2087
        %v2089 = vpop.f32.mrb[0].mxu0
        %v2090 = vpop.f32.mrb[0].mxu0
        %v2091 = vadd.f32 0.0, %v2090
        %v2092 = vpop.f32.mrb[0].mxu0
        %2093 = vmatprep.mubr.bf16.mxu0 0
        %2094 = vmatmul.mubr.bf16.gmra.mrb[0].mxu0 %v1991
        %v2095 = vpop.f32.mrb[0].mxu0
        %v2096 = vadd.f32 0.0, %v2095
        %v2097 = vpop.f32.mrb[0].mxu0
        %v2098 = vpop.f32.mrb[0].mxu0
        %v2099 = vadd.f32 0.0, %v2098
        %v2100 = vpop.f32.mrb[0].mxu0
        %2101 = vmatprep.mubr.bf16.mxu0 0
        %2102 = vmatmul.mubr.bf16.gmra.mrb[0].mxu0 %v1994
        %v2103 = vpop.f32.mrb[0].mxu0
        %v2104 = vadd.f32 0.0, %v2103
        %v2105 = vpop.f32.mrb[0].mxu0
        %v2106 = vpop.f32.mrb[0].mxu0
        %v2107 = vadd.f32 0.0, %v2106
        %v2108 = vpop.f32.mrb[0].mxu0
        %2109 = vmatprep.mubr.bf16.mxu0 0
        %2110 = vmatmul.mubr.bf16.gmra.mrb[0].mxu0 %v1997
        %v2111 = vpop.f32.mrb[0].mxu0
        %v2112 = vadd.f32 0.0, %v2111
        %v2113 = vpop.f32.mrb[0].mxu0
        %v2114 = vpop.f32.mrb[0].mxu0
        %v2115 = vadd.f32 0.0, %v2114
        %v2116 = vpop.f32.mrb[0].mxu0
        %2117 = vmatprep.mubr.bf16.mxu0 0
        %2118 = vmatmul.mubr.bf16.gmra.mrb[0].mxu0 %v2000
        %v2119 = vpop.f32.mrb[0].mxu0
        %v2120 = vadd.f32 0.0, %v2119
        %v2121 = vpop.f32.mrb[0].mxu0
        %v2122 = vpop.f32.mrb[0].mxu0
        %v2123 = vadd.f32 0.0, %v2122
        %v2124 = vpop.f32.mrb[0].mxu0
        %2125 = vmatprep.mubr.bf16.mxu0 0
        %2126 = vmatmul.mubr.bf16.gmra.mrb[0].mxu0 %v2003
        %v2127 = vpop.f32.mrb[0].mxu0
        %v2128 = vadd.f32 0.0, %v2127
        %v2129 = vpop.f32.mrb[0].mxu0
        %v2130 = vpop.f32.mrb[0].mxu0
        %v2131 = vadd.f32 0.0, %v2130
        %v2132 = vpop.f32.mrb[0].mxu0
        %2133 = vmatprep.mubr.bf16.mxu0 0
        %2134 = vmatmul.mubr.bf16.gmra.mrb[0].mxu0 %v2006
        %v2135 = vpop.f32.mrb[0].mxu0
        %v2136 = vadd.f32 0.0, %v2135
        %v2137 = vpop.f32.mrb[0].mxu0
        %v2138 = vpop.f32.mrb[0].mxu0
        %v2139 = vadd.f32 0.0, %v2138
        %v2140 = vpop.f32.mrb[0].mxu0
        %2141 = vmatprep.mubr.bf16.mxu0 0
        %2142 = vmatmul.mubr.bf16.gmra.mrb[0].mxu0 %v2009
        %v2143 = vpop.f32.mrb[0].mxu0
        %v2144 = vadd.f32 0.0, %v2143
        %v2145 = vpop.f32.mrb[0].mxu0
        %v2146 = vpop.f32.mrb[0].mxu0
        %v2147 = vadd.f32 0.0, %v2146
        %v2148 = vpop.f32.mrb[0].mxu0
        %2149 = vmatprep.mubr.bf16.mxu0 0
        %2150 = vmatmul.mubr.bf16.gmra.mrb[0].mxu0 %v2012
        %v2151 = vpop.f32.mrb[0].mxu0
        %v2152 = vadd.f32 0.0, %v2151
        %v2153 = vpop.f32.mrb[0].mxu0
        %v2154 = vpop.f32.mrb[0].mxu0
        %v2155 = vadd.f32 0.0, %v2154
        %v2156 = vpop.f32.mrb[0].mxu0
        %2157 = vmatprep.mubr.bf16.mxu0 0
        %2158 = vmatmul.mubr.bf16.gmra.mrb[0].mxu0 %v2015
        %v2159 = vpop.f32.mrb[0].mxu0
        %v2160 = vadd.f32 0.0, %v2159
        %v2161 = vpop.f32.mrb[0].mxu0
        %v2162 = vpop.f32.mrb[0].mxu0
        %v2163 = vadd.f32 0.0, %v2162
        %v2164 = vpop.f32.mrb[0].mxu0
        %2165 = vmatprep.mubr.bf16.mxu0 0
        %2166 = vmatmul.mubr.bf16.gmra.mrb[0].mxu0 %v2018
        %v2167 = vpop.f32.mrb[0].mxu0
        %v2168 = vadd.f32 0.0, %v2167
        %v2169 = vpop.f32.mrb[0].mxu0
        %v2170 = vpop.f32.mrb[0].mxu0
        %v2171 = vadd.f32 0.0, %v2170
        %v2172 = vpop.f32.mrb[0].mxu0
        %2173 = vmatprep.mubr.bf16.mxu0 0
        %2174 = vmatmul.mubr.bf16.gmra.mrb[0].mxu0 %v2021
        %v2175 = vpop.f32.mrb[0].mxu0
        %v2176 = vadd.f32 0.0, %v2175
        %v2177 = vpop.f32.mrb[0].mxu0
        %v2178 = vpop.f32.mrb[0].mxu0
        %v2179 = vadd.f32 0.0, %v2178
        %v2180 = vpop.f32.mrb[0].mxu0
        %2181 = vmatprep.mubr.bf16.mxu0 0
        %2182 = vmatmul.mubr.bf16.gmra.mrb[0].mxu0 %v2024
        %v2183 = vpop.f32.mrb[0].mxu0
        %v2184 = vadd.f32 0.0, %v2183
        %v2185 = vpop.f32.mrb[0].mxu0
        %v2186 = vpop.f32.mrb[0].mxu0
        %v2187 = vadd.f32 0.0, %v2186
        %v2188 = vpop.f32.mrb[0].mxu0
        %2189 = vdwg.mxu0
        %v2190 = vadd.f32 %v1896, %v2064
        %v2191 = vadd.f32 %v1897, %v2067
        %v2192 = vadd.f32 %v1898, %v2072
        %v2193 = vadd.f32 %v1899, %v2075
        %v2194 = vadd.f32 %v1900, %v2080
        %v2195 = vadd.f32 %v1901, %v2083
        %v2196 = vadd.f32 %v1902, %v2088
        %v2197 = vadd.f32 %v1903, %v2091
        %v2198 = vadd.f32 %v1904, %v2096
        %v2199 = vadd.f32 %v1905, %v2099
        %v2200 = vadd.f32 %v1906, %v2104
        %v2201 = vadd.f32 %v1907, %v2107
        %v2202 = vadd.f32 %v1908, %v2112
        %v2203 = vadd.f32 %v1909, %v2115
        %v2204 = vadd.f32 %v1910, %v2120
        %v2205 = vadd.f32 %v1911, %v2123
        %v2206 = vadd.f32 %v1912, %v2128
        %v2207 = vadd.f32 %v1913, %v2131
        %v2208 = vadd.f32 %v1914, %v2136
        %v2209 = vadd.f32 %v1915, %v2139
        %v2210 = vadd.f32 %v1916, %v2144
        %v2211 = vadd.f32 %v1917, %v2147
        %v2212 = vadd.f32 %v1918, %v2152
        %v2213 = vadd.f32 %v1919, %v2155
        %v2214 = vadd.f32 %v1920, %v2160
        %v2215 = vadd.f32 %v1921, %v2163
        %v2216 = vadd.f32 %v1922, %v2168
        %v2217 = vadd.f32 %v1923, %v2171
        %v2218 = vadd.f32 %v1924, %v2176
        %v2219 = vadd.f32 %v1925, %v2179
        %v2220 = vadd.f32 %v1926, %v2184
        %v2221 = vadd.f32 %v1927, %v2187
        %v2222 = vld [vmem:[%s1077 + $0x1] sm:$0xff]
        %v2223 = vld [vmem:[%s1077 + $0x9] sm:$0xff]
        %v2224 = vld [vmem:[%s1077 + $0x19] sm:$0xff]
        %v2225 = vld [vmem:[%s1077 + $0x21] sm:$0xff]
        %v2226 = vld [vmem:[%s1077 + $0x31] sm:$0xff]
        %v2227 = vld [vmem:[%s1077 + $0x39] sm:$0xff]
        %v2228 = vld [vmem:[%s1077 + $0x49] sm:$0xff]
        %v2229 = vld [vmem:[%s1077 + $0x51] sm:$0xff]
        %v2230 = vld [vmem:[%s1077 + $0x61] sm:$0xff]
        %v2231 = vld [vmem:[%s1077 + $0x69] sm:$0xff]
        %v2232 = vld [vmem:[%s1077 + $0x79] sm:$0xff]
        %v2233 = vld [vmem:[%s1077 + $0x81] sm:$0xff]
        %v2234 = vld [vmem:[%s1077 + $0x91] sm:$0xff]
        %v2235 = vld [vmem:[%s1077 + $0x99] sm:$0xff]
        %v2236 = vld [vmem:[%s1077 + $0xa9] sm:$0xff]
        %v2237 = vld [vmem:[%s1077 + $0xb1] sm:$0xff]
        %v2238 = vld [vmem:[%s1077 + $0xc1] sm:$0xff]
        %v2239 = vld [vmem:[%s1077 + $0xc9] sm:$0xff]
        %v2240 = vld [vmem:[%s1077 + $0xd9] sm:$0xff]
        %v2241 = vld [vmem:[%s1077 + $0xe1] sm:$0xff]
        %v2242 = vld [vmem:[%s1077 + $0xf1] sm:$0xff]
        %v2243 = vld [vmem:[%s1077 + $0xf9] sm:$0xff]
        %v2244 = vld [vmem:[%s1077 + $0x109] sm:$0xff]
        %v2245 = vld [vmem:[%s1077 + $0x111] sm:$0xff]
        %v2246 = vld [vmem:[%s1077 + $0x121] sm:$0xff]
        %v2247 = vld [vmem:[%s1077 + $0x129] sm:$0xff]
        %v2248 = vld [vmem:[%s1077 + $0x139] sm:$0xff]
        %v2249 = vld [vmem:[%s1077 + $0x141] sm:$0xff]
        %v2250 = vld [vmem:[%s1077 + $0x151] sm:$0xff]
        %v2251 = vld [vmem:[%s1077 + $0x159] sm:$0xff]
        %v2252 = vld [vmem:[%s1077 + $0x169] sm:$0xff]
        %v2253 = vld [vmem:[%s1077 + $0x171] sm:$0xff]
        %v2254 = vpack.c.bf16 %v2223, %v2222
        %v2255 = vpack.c.bf16 %v2225, %v2224
        %v2256 = vpack.c.bf16 %v2227, %v2226
        %v2257 = vpack.c.bf16 %v2229, %v2228
        %v2258 = vpack.c.bf16 %v2231, %v2230
        %v2259 = vpack.c.bf16 %v2233, %v2232
        %v2260 = vpack.c.bf16 %v2235, %v2234
        %v2261 = vpack.c.bf16 %v2237, %v2236
        %v2262 = vpack.c.bf16 %v2239, %v2238
        %v2263 = vpack.c.bf16 %v2241, %v2240
        %v2264 = vpack.c.bf16 %v2243, %v2242
        %v2265 = vpack.c.bf16 %v2245, %v2244
        %v2266 = vpack.c.bf16 %v2247, %v2246
        %v2267 = vpack.c.bf16 %v2249, %v2248
        %v2268 = vpack.c.bf16 %v2251, %v2250
        %v2269 = vpack.c.bf16 %v2253, %v2252
        %s2270 = scalar_lea.vmem [#allocation7], 8
        %v2271 = vld [vmem:[%s2270] sm:$0x3]
        %v2273 = vsel %vm273, %v2254, 0
        %v2276 = vsel %vm273, %v2255, 0
        %v2279 = vsel %vm273, %v2256, 0
        %v2282 = vsel %vm273, %v2257, 0
        %v2285 = vsel %vm273, %v2258, 0
        %v2288 = vsel %vm273, %v2259, 0
        %v2291 = vsel %vm273, %v2260, 0
        %v2294 = vsel %vm273, %v2261, 0
        %v2297 = vsel %vm273, %v2262, 0
        %v2300 = vsel %vm273, %v2263, 0
        %v2303 = vsel %vm273, %v2264, 0
        %v2306 = vsel %vm273, %v2265, 0
        %v2309 = vsel %vm273, %v2266, 0
        %v2312 = vsel %vm273, %v2267, 0
        %v2315 = vsel %vm273, %v2268, 0
        %v2318 = vsel %vm273, %v2269, 0
        %v2321 = vsel %vm1257, %v2271, 0
        %2323 = vmatprep.subr.bf16.mxu0 0
        %2324 = vmatpush1.bf16.msra.mxu0 %v2321
        %2325 = vmatprep.subr.bf16.mxu0 0
        %2326 = vmatpush1.bf16.msra.mxu0 0
        %2327 = vmatprep.subr.bf16.mxu0 0
        %2328 = vmatpush1.bf16.msra.mxu0 0
        %2329 = vmatprep.subr.bf16.mxu0 0
        %2330 = vmatpush1.bf16.msra.mxu0 0
        %2331 = vmatprep.subr.bf16.mxu0 0
        %2332 = vmatpush1.bf16.msra.mxu0 0
        %2333 = vmatprep.subr.bf16.mxu0 0
        %2334 = vmatpush1.bf16.msra.mxu0 0
        %2335 = vmatprep.subr.bf16.mxu0 0
        %2336 = vmatpush1.bf16.msra.mxu0 0
        %2337 = vmatprep.subr.bf16.mxu0 0
        %2338 = vmatpush1.bf16.msra.mxu0 0
        %2339 = vmatprep.subr.bf16.mxu0 0
        %2340 = vmatpush1.bf16.msra.mxu0 0
        %2341 = vmatprep.subr.bf16.mxu0 0
        %2342 = vmatpush1.bf16.msra.mxu0 0
        %2343 = vmatprep.subr.bf16.mxu0 0
        %2344 = vmatpush1.bf16.msra.mxu0 0
        %2345 = vmatprep.subr.bf16.mxu0 0
        %2346 = vmatpush1.bf16.msra.mxu0 0
        %2347 = vmatprep.subr.bf16.mxu0 0
        %2348 = vmatpush1.bf16.msra.mxu0 0
        %2349 = vmatprep.subr.bf16.mxu0 0
        %2350 = vmatpush1.bf16.msra.mxu0 0
        %2351 = vmatprep.subr.bf16.mxu0 0
        %2352 = vmatpush1.bf16.msra.mxu0 0
        %2353 = vmatprep.subr.bf16.mxu0 0
        %2354 = vmatpush1.bf16.msra.mxu0 0
        %2355 = vmatprep.mubr.bf16.mxu0 0
        %2356 = vmatmul.mubr.bf16.gmra.mrb[0].mxu0 %v2273
        %v2357 = vpop.f32.mrb[0].mxu0
        %v2358 = vadd.f32 0.0, %v2357
        %v2359 = vpop.f32.mrb[0].mxu0
        %v2360 = vpop.f32.mrb[0].mxu0
        %v2361 = vadd.f32 0.0, %v2360
        %v2362 = vpop.f32.mrb[0].mxu0
        %2363 = vmatprep.mubr.bf16.mxu0 0
        %2364 = vmatmul.mubr.bf16.gmra.mrb[0].mxu0 %v2276
        %v2365 = vpop.f32.mrb[0].mxu0
        %v2366 = vadd.f32 0.0, %v2365
        %v2367 = vpop.f32.mrb[0].mxu0
        %v2368 = vpop.f32.mrb[0].mxu0
        %v2369 = vadd.f32 0.0, %v2368
        %v2370 = vpop.f32.mrb[0].mxu0
        %2371 = vmatprep.mubr.bf16.mxu0 0
        %2372 = vmatmul.mubr.bf16.gmra.mrb[0].mxu0 %v2279
        %v2373 = vpop.f32.mrb[0].mxu0
        %v2374 = vadd.f32 0.0, %v2373
        %v2375 = vpop.f32.mrb[0].mxu0
        %v2376 = vpop.f32.mrb[0].mxu0
        %v2377 = vadd.f32 0.0, %v2376
        %v2378 = vpop.f32.mrb[0].mxu0
        %2379 = vmatprep.mubr.bf16.mxu0 0
        %2380 = vmatmul.mubr.bf16.gmra.mrb[0].mxu0 %v2282
        %v2381 = vpop.f32.mrb[0].mxu0
        %v2382 = vadd.f32 0.0, %v2381
        %v2383 = vpop.f32.mrb[0].mxu0
        %v2384 = vpop.f32.mrb[0].mxu0
        %v2385 = vadd.f32 0.0, %v2384
        %v2386 = vpop.f32.mrb[0].mxu0
        %2387 = vmatprep.mubr.bf16.mxu0 0
        %2388 = vmatmul.mubr.bf16.gmra.mrb[0].mxu0 %v2285
        %v2389 = vpop.f32.mrb[0].mxu0
        %v2390 = vadd.f32 0.0, %v2389
        %v2391 = vpop.f32.mrb[0].mxu0
        %v2392 = vpop.f32.mrb[0].mxu0
        %v2393 = vadd.f32 0.0, %v2392
        %v2394 = vpop.f32.mrb[0].mxu0
        %2395 = vmatprep.mubr.bf16.mxu0 0
        %2396 = vmatmul.mubr.bf16.gmra.mrb[0].mxu0 %v2288
        %v2397 = vpop.f32.mrb[0].mxu0
        %v2398 = vadd.f32 0.0, %v2397
        %v2399 = vpop.f32.mrb[0].mxu0
        %v2400 = vpop.f32.mrb[0].mxu0
        %v2401 = vadd.f32 0.0, %v2400
        %v2402 = vpop.f32.mrb[0].mxu0
        %2403 = vmatprep.mubr.bf16.mxu0 0
        %2404 = vmatmul.mubr.bf16.gmra.mrb[0].mxu0 %v2291
        %v2405 = vpop.f32.mrb[0].mxu0
        %v2406 = vadd.f32 0.0, %v2405
        %v2407 = vpop.f32.mrb[0].mxu0
        %v2408 = vpop.f32.mrb[0].mxu0
        %v2409 = vadd.f32 0.0, %v2408
        %v2410 = vpop.f32.mrb[0].mxu0
        %2411 = vmatprep.mubr.bf16.mxu0 0
        %2412 = vmatmul.mubr.bf16.gmra.mrb[0].mxu0 %v2294
        %v2413 = vpop.f32.mrb[0].mxu0
        %v2414 = vadd.f32 0.0, %v2413
        %v2415 = vpop.f32.mrb[0].mxu0
        %v2416 = vpop.f32.mrb[0].mxu0
        %v2417 = vadd.f32 0.0, %v2416
        %v2418 = vpop.f32.mrb[0].mxu0
        %2419 = vmatprep.mubr.bf16.mxu0 0
        %2420 = vmatmul.mubr.bf16.gmra.mrb[0].mxu0 %v2297
        %v2421 = vpop.f32.mrb[0].mxu0
        %v2422 = vadd.f32 0.0, %v2421
        %v2423 = vpop.f32.mrb[0].mxu0
        %v2424 = vpop.f32.mrb[0].mxu0
        %v2425 = vadd.f32 0.0, %v2424
        %v2426 = vpop.f32.mrb[0].mxu0
        %2427 = vmatprep.mubr.bf16.mxu0 0
        %2428 = vmatmul.mubr.bf16.gmra.mrb[0].mxu0 %v2300
        %v2429 = vpop.f32.mrb[0].mxu0
        %v2430 = vadd.f32 0.0, %v2429
        %v2431 = vpop.f32.mrb[0].mxu0
        %v2432 = vpop.f32.mrb[0].mxu0
        %v2433 = vadd.f32 0.0, %v2432
        %v2434 = vpop.f32.mrb[0].mxu0
        %2435 = vmatprep.mubr.bf16.mxu0 0
        %2436 = vmatmul.mubr.bf16.gmra.mrb[0].mxu0 %v2303
        %v2437 = vpop.f32.mrb[0].mxu0
        %v2438 = vadd.f32 0.0, %v2437
        %v2439 = vpop.f32.mrb[0].mxu0
        %v2440 = vpop.f32.mrb[0].mxu0
        %v2441 = vadd.f32 0.0, %v2440
        %v2442 = vpop.f32.mrb[0].mxu0
        %2443 = vmatprep.mubr.bf16.mxu0 0
        %2444 = vmatmul.mubr.bf16.gmra.mrb[0].mxu0 %v2306
        %v2445 = vpop.f32.mrb[0].mxu0
        %v2446 = vadd.f32 0.0, %v2445
        %v2447 = vpop.f32.mrb[0].mxu0
        %v2448 = vpop.f32.mrb[0].mxu0
        %v2449 = vadd.f32 0.0, %v2448
        %v2450 = vpop.f32.mrb[0].mxu0
        %2451 = vmatprep.mubr.bf16.mxu0 0
        %2452 = vmatmul.mubr.bf16.gmra.mrb[0].mxu0 %v2309
        %v2453 = vpop.f32.mrb[0].mxu0
        %v2454 = vadd.f32 0.0, %v2453
        %v2455 = vpop.f32.mrb[0].mxu0
        %v2456 = vpop.f32.mrb[0].mxu0
        %v2457 = vadd.f32 0.0, %v2456
        %v2458 = vpop.f32.mrb[0].mxu0
        %2459 = vmatprep.mubr.bf16.mxu0 0
        %2460 = vmatmul.mubr.bf16.gmra.mrb[0].mxu0 %v2312
        %v2461 = vpop.f32.mrb[0].mxu0
        %v2462 = vadd.f32 0.0, %v2461
        %v2463 = vpop.f32.mrb[0].mxu0
        %v2464 = vpop.f32.mrb[0].mxu0
        %v2465 = vadd.f32 0.0, %v2464
        %v2466 = vpop.f32.mrb[0].mxu0
        %2467 = vmatprep.mubr.bf16.mxu0 0
        %2468 = vmatmul.mubr.bf16.gmra.mrb[0].mxu0 %v2315
        %v2469 = vpop.f32.mrb[0].mxu0
        %v2470 = vadd.f32 0.0, %v2469
        %v2471 = vpop.f32.mrb[0].mxu0
        %v2472 = vpop.f32.mrb[0].mxu0
        %v2473 = vadd.f32 0.0, %v2472
        %v2474 = vpop.f32.mrb[0].mxu0
        %2475 = vmatprep.mubr.bf16.mxu0 0
        %2476 = vmatmul.mubr.bf16.gmra.mrb[0].mxu0 %v2318
        %v2477 = vpop.f32.mrb[0].mxu0
        %v2478 = vadd.f32 0.0, %v2477
        %v2479 = vpop.f32.mrb[0].mxu0
        %v2480 = vpop.f32.mrb[0].mxu0
        %v2481 = vadd.f32 0.0, %v2480
        %v2482 = vpop.f32.mrb[0].mxu0
        %2483 = vdwg.mxu0
        %v2484 = vadd.f32 %v2190, %v2358
        %v2485 = vadd.f32 %v2191, %v2361
        %v2486 = vadd.f32 %v2192, %v2366
        %v2487 = vadd.f32 %v2193, %v2369
        %v2488 = vadd.f32 %v2194, %v2374
        %v2489 = vadd.f32 %v2195, %v2377
        %v2490 = vadd.f32 %v2196, %v2382
        %v2491 = vadd.f32 %v2197, %v2385
        %v2492 = vadd.f32 %v2198, %v2390
        %v2493 = vadd.f32 %v2199, %v2393
        %v2494 = vadd.f32 %v2200, %v2398
        %v2495 = vadd.f32 %v2201, %v2401
        %v2496 = vadd.f32 %v2202, %v2406
        %v2497 = vadd.f32 %v2203, %v2409
        %v2498 = vadd.f32 %v2204, %v2414
        %v2499 = vadd.f32 %v2205, %v2417
        %v2500 = vadd.f32 %v2206, %v2422
        %v2501 = vadd.f32 %v2207, %v2425
        %v2502 = vadd.f32 %v2208, %v2430
        %v2503 = vadd.f32 %v2209, %v2433
        %v2504 = vadd.f32 %v2210, %v2438
        %v2505 = vadd.f32 %v2211, %v2441
        %v2506 = vadd.f32 %v2212, %v2446
        %v2507 = vadd.f32 %v2213, %v2449
        %v2508 = vadd.f32 %v2214, %v2454
        %v2509 = vadd.f32 %v2215, %v2457
        %v2510 = vadd.f32 %v2216, %v2462
        %v2511 = vadd.f32 %v2217, %v2465
        %v2512 = vadd.f32 %v2218, %v2470
        %v2513 = vadd.f32 %v2219, %v2473
        %v2514 = vadd.f32 %v2220, %v2478
        %v2515 = vadd.f32 %v2221, %v2481
        %v2516 = vld [vmem:[%s1077 + $0x2] sm:$0xff]
        %v2517 = vld [vmem:[%s1077 + $0xa] sm:$0xff]
        %v2518 = vld [vmem:[%s1077 + $0x1a] sm:$0xff]
        %v2519 = vld [vmem:[%s1077 + $0x22] sm:$0xff]
        %v2520 = vld [vmem:[%s1077 + $0x32] sm:$0xff]
        %v2521 = vld [vmem:[%s1077 + $0x3a] sm:$0xff]
        %v2522 = vld [vmem:[%s1077 + $0x4a] sm:$0xff]
        %v2523 = vld [vmem:[%s1077 + $0x52] sm:$0xff]
        %v2524 = vld [vmem:[%s1077 + $0x62] sm:$0xff]
        %v2525 = vld [vmem:[%s1077 + $0x6a] sm:$0xff]
        %v2526 = vld [vmem:[%s1077 + $0x7a] sm:$0xff]
        %v2527 = vld [vmem:[%s1077 + $0x82] sm:$0xff]
        %v2528 = vld [vmem:[%s1077 + $0x92] sm:$0xff]
        %v2529 = vld [vmem:[%s1077 + $0x9a] sm:$0xff]
        %v2530 = vld [vmem:[%s1077 + $0xaa] sm:$0xff]
        %v2531 = vld [vmem:[%s1077 + $0xb2] sm:$0xff]
        %v2532 = vld [vmem:[%s1077 + $0xc2] sm:$0xff]
        %v2533 = vld [vmem:[%s1077 + $0xca] sm:$0xff]
        %v2534 = vld [vmem:[%s1077 + $0xda] sm:$0xff]
        %v2535 = vld [vmem:[%s1077 + $0xe2] sm:$0xff]
        %v2536 = vld [vmem:[%s1077 + $0xf2] sm:$0xff]
        %v2537 = vld [vmem:[%s1077 + $0xfa] sm:$0xff]
        %v2538 = vld [vmem:[%s1077 + $0x10a] sm:$0xff]
        %v2539 = vld [vmem:[%s1077 + $0x112] sm:$0xff]
        %v2540 = vld [vmem:[%s1077 + $0x122] sm:$0xff]
        %v2541 = vld [vmem:[%s1077 + $0x12a] sm:$0xff]
        %v2542 = vld [vmem:[%s1077 + $0x13a] sm:$0xff]
        %v2543 = vld [vmem:[%s1077 + $0x142] sm:$0xff]
        %v2544 = vld [vmem:[%s1077 + $0x152] sm:$0xff]
        %v2545 = vld [vmem:[%s1077 + $0x15a] sm:$0xff]
        %v2546 = vld [vmem:[%s1077 + $0x16a] sm:$0xff]
        %v2547 = vld [vmem:[%s1077 + $0x172] sm:$0xff]
        %v2548 = vpack.c.bf16 %v2517, %v2516
        %v2549 = vpack.c.bf16 %v2519, %v2518
        %v2550 = vpack.c.bf16 %v2521, %v2520
        %v2551 = vpack.c.bf16 %v2523, %v2522
        %v2552 = vpack.c.bf16 %v2525, %v2524
        %v2553 = vpack.c.bf16 %v2527, %v2526
        %v2554 = vpack.c.bf16 %v2529, %v2528
        %v2555 = vpack.c.bf16 %v2531, %v2530
        %v2556 = vpack.c.bf16 %v2533, %v2532
        %v2557 = vpack.c.bf16 %v2535, %v2534
        %v2558 = vpack.c.bf16 %v2537, %v2536
        %v2559 = vpack.c.bf16 %v2539, %v2538
        %v2560 = vpack.c.bf16 %v2541, %v2540
        %v2561 = vpack.c.bf16 %v2543, %v2542
        %v2562 = vpack.c.bf16 %v2545, %v2544
        %v2563 = vpack.c.bf16 %v2547, %v2546
        %s2564 = scalar_lea.vmem [#allocation7], 10
        %v2565 = vld [vmem:[%s2564] sm:$0x3]
        %v2567 = vsel %vm273, %v2548, 0
        %v2570 = vsel %vm273, %v2549, 0
        %v2573 = vsel %vm273, %v2550, 0
        %v2576 = vsel %vm273, %v2551, 0
        %v2579 = vsel %vm273, %v2552, 0
        %v2582 = vsel %vm273, %v2553, 0
        %v2585 = vsel %vm273, %v2554, 0
        %v2588 = vsel %vm273, %v2555, 0
        %v2591 = vsel %vm273, %v2556, 0
        %v2594 = vsel %vm273, %v2557, 0
        %v2597 = vsel %vm273, %v2558, 0
        %v2600 = vsel %vm273, %v2559, 0
        %v2603 = vsel %vm273, %v2560, 0
        %v2606 = vsel %vm273, %v2561, 0
        %v2609 = vsel %vm273, %v2562, 0
        %v2612 = vsel %vm273, %v2563, 0
        %v2615 = vsel %vm1257, %v2565, 0
        %2617 = vmatprep.subr.bf16.mxu0 0
        %2618 = vmatpush1.bf16.msra.mxu0 %v2615
        %2619 = vmatprep.subr.bf16.mxu0 0
        %2620 = vmatpush1.bf16.msra.mxu0 0
        %2621 = vmatprep.subr.bf16.mxu0 0
        %2622 = vmatpush1.bf16.msra.mxu0 0
        %2623 = vmatprep.subr.bf16.mxu0 0
        %2624 = vmatpush1.bf16.msra.mxu0 0
        %2625 = vmatprep.subr.bf16.mxu0 0
        %2626 = vmatpush1.bf16.msra.mxu0 0
        %2627 = vmatprep.subr.bf16.mxu0 0
        %2628 = vmatpush1.bf16.msra.mxu0 0
        %2629 = vmatprep.subr.bf16.mxu0 0
        %2630 = vmatpush1.bf16.msra.mxu0 0
        %2631 = vmatprep.subr.bf16.mxu0 0
        %2632 = vmatpush1.bf16.msra.mxu0 0
        %2633 = vmatprep.subr.bf16.mxu0 0
        %2634 = vmatpush1.bf16.msra.mxu0 0
        %2635 = vmatprep.subr.bf16.mxu0 0
        %2636 = vmatpush1.bf16.msra.mxu0 0
        %2637 = vmatprep.subr.bf16.mxu0 0
        %2638 = vmatpush1.bf16.msra.mxu0 0
        %2639 = vmatprep.subr.bf16.mxu0 0
        %2640 = vmatpush1.bf16.msra.mxu0 0
        %2641 = vmatprep.subr.bf16.mxu0 0
        %2642 = vmatpush1.bf16.msra.mxu0 0
        %2643 = vmatprep.subr.bf16.mxu0 0
        %2644 = vmatpush1.bf16.msra.mxu0 0
        %2645 = vmatprep.subr.bf16.mxu0 0
        %2646 = vmatpush1.bf16.msra.mxu0 0
        %2647 = vmatprep.subr.bf16.mxu0 0
        %2648 = vmatpush1.bf16.msra.mxu0 0
        %2649 = vmatprep.mubr.bf16.mxu0 0
        %2650 = vmatmul.mubr.bf16.gmra.mrb[0].mxu0 %v2567
        %v2651 = vpop.f32.mrb[0].mxu0
        %v2652 = vadd.f32 0.0, %v2651
        %v2653 = vpop.f32.mrb[0].mxu0
        %v2654 = vpop.f32.mrb[0].mxu0
        %v2655 = vadd.f32 0.0, %v2654
        %v2656 = vpop.f32.mrb[0].mxu0
        %2657 = vmatprep.mubr.bf16.mxu0 0
        %2658 = vmatmul.mubr.bf16.gmra.mrb[0].mxu0 %v2570
        %v2659 = vpop.f32.mrb[0].mxu0
        %v2660 = vadd.f32 0.0, %v2659
        %v2661 = vpop.f32.mrb[0].mxu0
        %v2662 = vpop.f32.mrb[0].mxu0
        %v2663 = vadd.f32 0.0, %v2662
        %v2664 = vpop.f32.mrb[0].mxu0
        %2665 = vmatprep.mubr.bf16.mxu0 0
        %2666 = vmatmul.mubr.bf16.gmra.mrb[0].mxu0 %v2573
        %v2667 = vpop.f32.mrb[0].mxu0
        %v2668 = vadd.f32 0.0, %v2667
        %v2669 = vpop.f32.mrb[0].mxu0
        %v2670 = vpop.f32.mrb[0].mxu0
        %v2671 = vadd.f32 0.0, %v2670
        %v2672 = vpop.f32.mrb[0].mxu0
        %2673 = vmatprep.mubr.bf16.mxu0 0
        %2674 = vmatmul.mubr.bf16.gmra.mrb[0].mxu0 %v2576
        %v2675 = vpop.f32.mrb[0].mxu0
        %v2676 = vadd.f32 0.0, %v2675
        %v2677 = vpop.f32.mrb[0].mxu0
        %v2678 = vpop.f32.mrb[0].mxu0
        %v2679 = vadd.f32 0.0, %v2678
        %v2680 = vpop.f32.mrb[0].mxu0
        %2681 = vmatprep.mubr.bf16.mxu0 0
        %2682 = vmatmul.mubr.bf16.gmra.mrb[0].mxu0 %v2579
        %v2683 = vpop.f32.mrb[0].mxu0
        %v2684 = vadd.f32 0.0, %v2683
        %v2685 = vpop.f32.mrb[0].mxu0
        %v2686 = vpop.f32.mrb[0].mxu0
        %v2687 = vadd.f32 0.0, %v2686
        %v2688 = vpop.f32.mrb[0].mxu0
        %2689 = vmatprep.mubr.bf16.mxu0 0
        %2690 = vmatmul.mubr.bf16.gmra.mrb[0].mxu0 %v2582
        %v2691 = vpop.f32.mrb[0].mxu0
        %v2692 = vadd.f32 0.0, %v2691
        %v2693 = vpop.f32.mrb[0].mxu0
        %v2694 = vpop.f32.mrb[0].mxu0
        %v2695 = vadd.f32 0.0, %v2694
        %v2696 = vpop.f32.mrb[0].mxu0
        %2697 = vmatprep.mubr.bf16.mxu0 0
        %2698 = vmatmul.mubr.bf16.gmra.mrb[0].mxu0 %v2585
        %v2699 = vpop.f32.mrb[0].mxu0
        %v2700 = vadd.f32 0.0, %v2699
        %v2701 = vpop.f32.mrb[0].mxu0
        %v2702 = vpop.f32.mrb[0].mxu0
        %v2703 = vadd.f32 0.0, %v2702
        %v2704 = vpop.f32.mrb[0].mxu0
        %2705 = vmatprep.mubr.bf16.mxu0 0
        %2706 = vmatmul.mubr.bf16.gmra.mrb[0].mxu0 %v2588
        %v2707 = vpop.f32.mrb[0].mxu0
        %v2708 = vadd.f32 0.0, %v2707
        %v2709 = vpop.f32.mrb[0].mxu0
        %v2710 = vpop.f32.mrb[0].mxu0
        %v2711 = vadd.f32 0.0, %v2710
        %v2712 = vpop.f32.mrb[0].mxu0
        %2713 = vmatprep.mubr.bf16.mxu0 0
        %2714 = vmatmul.mubr.bf16.gmra.mrb[0].mxu0 %v2591
        %v2715 = vpop.f32.mrb[0].mxu0
        %v2716 = vadd.f32 0.0, %v2715
        %v2717 = vpop.f32.mrb[0].mxu0
        %v2718 = vpop.f32.mrb[0].mxu0
        %v2719 = vadd.f32 0.0, %v2718
        %v2720 = vpop.f32.mrb[0].mxu0
        %2721 = vmatprep.mubr.bf16.mxu0 0
        %2722 = vmatmul.mubr.bf16.gmra.mrb[0].mxu0 %v2594
        %v2723 = vpop.f32.mrb[0].mxu0
        %v2724 = vadd.f32 0.0, %v2723
        %v2725 = vpop.f32.mrb[0].mxu0
        %v2726 = vpop.f32.mrb[0].mxu0
        %v2727 = vadd.f32 0.0, %v2726
        %v2728 = vpop.f32.mrb[0].mxu0
        %2729 = vmatprep.mubr.bf16.mxu0 0
        %2730 = vmatmul.mubr.bf16.gmra.mrb[0].mxu0 %v2597
        %v2731 = vpop.f32.mrb[0].mxu0
        %v2732 = vadd.f32 0.0, %v2731
        %v2733 = vpop.f32.mrb[0].mxu0
        %v2734 = vpop.f32.mrb[0].mxu0
        %v2735 = vadd.f32 0.0, %v2734
        %v2736 = vpop.f32.mrb[0].mxu0
        %2737 = vmatprep.mubr.bf16.mxu0 0
        %2738 = vmatmul.mubr.bf16.gmra.mrb[0].mxu0 %v2600
        %v2739 = vpop.f32.mrb[0].mxu0
        %v2740 = vadd.f32 0.0, %v2739
        %v2741 = vpop.f32.mrb[0].mxu0
        %v2742 = vpop.f32.mrb[0].mxu0
        %v2743 = vadd.f32 0.0, %v2742
        %v2744 = vpop.f32.mrb[0].mxu0
        %2745 = vmatprep.mubr.bf16.mxu0 0
        %2746 = vmatmul.mubr.bf16.gmra.mrb[0].mxu0 %v2603
        %v2747 = vpop.f32.mrb[0].mxu0
        %v2748 = vadd.f32 0.0, %v2747
        %v2749 = vpop.f32.mrb[0].mxu0
        %v2750 = vpop.f32.mrb[0].mxu0
        %v2751 = vadd.f32 0.0, %v2750
        %v2752 = vpop.f32.mrb[0].mxu0
        %2753 = vmatprep.mubr.bf16.mxu0 0
        %2754 = vmatmul.mubr.bf16.gmra.mrb[0].mxu0 %v2606
        %v2755 = vpop.f32.mrb[0].mxu0
        %v2756 = vadd.f32 0.0, %v2755
        %v2757 = vpop.f32.mrb[0].mxu0
        %v2758 = vpop.f32.mrb[0].mxu0
        %v2759 = vadd.f32 0.0, %v2758
        %v2760 = vpop.f32.mrb[0].mxu0
        %2761 = vmatprep.mubr.bf16.mxu0 0
        %2762 = vmatmul.mubr.bf16.gmra.mrb[0].mxu0 %v2609
        %v2763 = vpop.f32.mrb[0].mxu0
        %v2764 = vadd.f32 0.0, %v2763
        %v2765 = vpop.f32.mrb[0].mxu0
        %v2766 = vpop.f32.mrb[0].mxu0
        %v2767 = vadd.f32 0.0, %v2766
        %v2768 = vpop.f32.mrb[0].mxu0
        %2769 = vmatprep.mubr.bf16.mxu0 0
        %2770 = vmatmul.mubr.bf16.gmra.mrb[0].mxu0 %v2612
        %v2771 = vpop.f32.mrb[0].mxu0
        %v2772 = vadd.f32 0.0, %v2771
        %v2773 = vpop.f32.mrb[0].mxu0
        %v2774 = vpop.f32.mrb[0].mxu0
        %v2775 = vadd.f32 0.0, %v2774
        %v2776 = vpop.f32.mrb[0].mxu0
        %2777 = vdwg.mxu0
        %v2778 = vadd.f32 %v2484, %v2652
        %v2779 = vadd.f32 %v2485, %v2655
        %v2780 = vadd.f32 %v2486, %v2660
        %v2781 = vadd.f32 %v2487, %v2663
        %v2782 = vadd.f32 %v2488, %v2668
        %v2783 = vadd.f32 %v2489, %v2671
        %v2784 = vadd.f32 %v2490, %v2676
        %v2785 = vadd.f32 %v2491, %v2679
        %v2786 = vadd.f32 %v2492, %v2684
        %v2787 = vadd.f32 %v2493, %v2687
        %v2788 = vadd.f32 %v2494, %v2692
        %v2789 = vadd.f32 %v2495, %v2695
        %v2790 = vadd.f32 %v2496, %v2700
        %v2791 = vadd.f32 %v2497, %v2703
        %v2792 = vadd.f32 %v2498, %v2708
        %v2793 = vadd.f32 %v2499, %v2711
        %v2794 = vadd.f32 %v2500, %v2716
        %v2795 = vadd.f32 %v2501, %v2719
        %v2796 = vadd.f32 %v2502, %v2724
        %v2797 = vadd.f32 %v2503, %v2727
        %v2798 = vadd.f32 %v2504, %v2732
        %v2799 = vadd.f32 %v2505, %v2735
        %v2800 = vadd.f32 %v2506, %v2740
        %v2801 = vadd.f32 %v2507, %v2743
        %v2802 = vadd.f32 %v2508, %v2748
        %v2803 = vadd.f32 %v2509, %v2751
        %v2804 = vadd.f32 %v2510, %v2756
        %v2805 = vadd.f32 %v2511, %v2759
        %v2806 = vadd.f32 %v2512, %v2764
        %v2807 = vadd.f32 %v2513, %v2767
        %v2808 = vadd.f32 %v2514, %v2772
        %v2809 = vadd.f32 %v2515, %v2775
        %s2810 = scalar_lea.vmem [#allocation2], 48
        %v2811 = vld [vmem:[%s2810] sm:$0xff]
        %v2812 = vld [vmem:[%s2810 + $0x8] sm:$0xff]
        %v2813 = vld [vmem:[%s2810 + $0x18] sm:$0xff]
        %v2814 = vld [vmem:[%s2810 + $0x20] sm:$0xff]
        %v2815 = vld [vmem:[%s2810 + $0x30] sm:$0xff]
        %v2816 = vld [vmem:[%s2810 + $0x38] sm:$0xff]
        %v2817 = vld [vmem:[%s2810 + $0x48] sm:$0xff]
        %v2818 = vld [vmem:[%s2810 + $0x50] sm:$0xff]
        %v2819 = vld [vmem:[%s2810 + $0x60] sm:$0xff]
        %v2820 = vld [vmem:[%s2810 + $0x68] sm:$0xff]
        %v2821 = vld [vmem:[%s2810 + $0x78] sm:$0xff]
        %v2822 = vld [vmem:[%s2810 + $0x80] sm:$0xff]
        %v2823 = vld [vmem:[%s2810 + $0x90] sm:$0xff]
        %v2824 = vld [vmem:[%s2810 + $0x98] sm:$0xff]
        %v2825 = vld [vmem:[%s2810 + $0xa8] sm:$0xff]
        %v2826 = vld [vmem:[%s2810 + $0xb0] sm:$0xff]
        %v2827 = vld [vmem:[%s2810 + $0xc0] sm:$0xff]
        %v2828 = vld [vmem:[%s2810 + $0xc8] sm:$0xff]
        %v2829 = vld [vmem:[%s2810 + $0xd8] sm:$0xff]
        %v2830 = vld [vmem:[%s2810 + $0xe0] sm:$0xff]
        %v2831 = vld [vmem:[%s2810 + $0xf0] sm:$0xff]
        %v2832 = vld [vmem:[%s2810 + $0xf8] sm:$0xff]
        %v2833 = vld [vmem:[%s2810 + $0x108] sm:$0xff]
        %v2834 = vld [vmem:[%s2810 + $0x110] sm:$0xff]
        %v2835 = vld [vmem:[%s2810 + $0x120] sm:$0xff]
        %v2836 = vld [vmem:[%s2810 + $0x128] sm:$0xff]
        %v2837 = vld [vmem:[%s2810 + $0x138] sm:$0xff]
        %v2838 = vld [vmem:[%s2810 + $0x140] sm:$0xff]
        %v2839 = vld [vmem:[%s2810 + $0x150] sm:$0xff]
        %v2840 = vld [vmem:[%s2810 + $0x158] sm:$0xff]
        %v2841 = vld [vmem:[%s2810 + $0x168] sm:$0xff]
        %v2842 = vld [vmem:[%s2810 + $0x170] sm:$0xff]
        %v2843 = vpack.c.bf16 %v2812, %v2811
        %v2844 = vpack.c.bf16 %v2814, %v2813
        %v2845 = vpack.c.bf16 %v2816, %v2815
        %v2846 = vpack.c.bf16 %v2818, %v2817
        %v2847 = vpack.c.bf16 %v2820, %v2819
        %v2848 = vpack.c.bf16 %v2822, %v2821
        %v2849 = vpack.c.bf16 %v2824, %v2823
        %v2850 = vpack.c.bf16 %v2826, %v2825
        %v2851 = vpack.c.bf16 %v2828, %v2827
        %v2852 = vpack.c.bf16 %v2830, %v2829
        %v2853 = vpack.c.bf16 %v2832, %v2831
        %v2854 = vpack.c.bf16 %v2834, %v2833
        %v2855 = vpack.c.bf16 %v2836, %v2835
        %v2856 = vpack.c.bf16 %v2838, %v2837
        %v2857 = vpack.c.bf16 %v2840, %v2839
        %v2858 = vpack.c.bf16 %v2842, %v2841
        %s2859 = scalar_lea.vmem [#allocation7], 12
        %v2860 = vld [vmem:[%s2859] sm:$0x3]
        %v2862 = vsel %vm273, %v2843, 0
        %v2865 = vsel %vm273, %v2844, 0
        %v2868 = vsel %vm273, %v2845, 0
        %v2871 = vsel %vm273, %v2846, 0
        %v2874 = vsel %vm273, %v2847, 0
        %v2877 = vsel %vm273, %v2848, 0
        %v2880 = vsel %vm273, %v2849, 0
        %v2883 = vsel %vm273, %v2850, 0
        %v2886 = vsel %vm273, %v2851, 0
        %v2889 = vsel %vm273, %v2852, 0
        %v2892 = vsel %vm273, %v2853, 0
        %v2895 = vsel %vm273, %v2854, 0
        %v2898 = vsel %vm273, %v2855, 0
        %v2901 = vsel %vm273, %v2856, 0
        %v2904 = vsel %vm273, %v2857, 0
        %v2907 = vsel %vm273, %v2858, 0
        %v2910 = vsel %vm1257, %v2860, 0
        %2912 = vmatprep.subr.bf16.mxu0 0
        %2913 = vmatpush1.bf16.msra.mxu0 %v2910
        %2914 = vmatprep.subr.bf16.mxu0 0
        %2915 = vmatpush1.bf16.msra.mxu0 0
        %2916 = vmatprep.subr.bf16.mxu0 0
        %2917 = vmatpush1.bf16.msra.mxu0 0
        %2918 = vmatprep.subr.bf16.mxu0 0
        %2919 = vmatpush1.bf16.msra.mxu0 0
        %2920 = vmatprep.subr.bf16.mxu0 0
        %2921 = vmatpush1.bf16.msra.mxu0 0
        %2922 = vmatprep.subr.bf16.mxu0 0
        %2923 = vmatpush1.bf16.msra.mxu0 0
        %2924 = vmatprep.subr.bf16.mxu0 0
        %2925 = vmatpush1.bf16.msra.mxu0 0
        %2926 = vmatprep.subr.bf16.mxu0 0
        %2927 = vmatpush1.bf16.msra.mxu0 0
        %2928 = vmatprep.subr.bf16.mxu0 0
        %2929 = vmatpush1.bf16.msra.mxu0 0
        %2930 = vmatprep.subr.bf16.mxu0 0
        %2931 = vmatpush1.bf16.msra.mxu0 0
        %2932 = vmatprep.subr.bf16.mxu0 0
        %2933 = vmatpush1.bf16.msra.mxu0 0
        %2934 = vmatprep.subr.bf16.mxu0 0
        %2935 = vmatpush1.bf16.msra.mxu0 0
        %2936 = vmatprep.subr.bf16.mxu0 0
        %2937 = vmatpush1.bf16.msra.mxu0 0
        %2938 = vmatprep.subr.bf16.mxu0 0
        %2939 = vmatpush1.bf16.msra.mxu0 0
        %2940 = vmatprep.subr.bf16.mxu0 0
        %2941 = vmatpush1.bf16.msra.mxu0 0
        %2942 = vmatprep.subr.bf16.mxu0 0
        %2943 = vmatpush1.bf16.msra.mxu0 0
        %2944 = vmatprep.mubr.bf16.mxu0 0
        %2945 = vmatmul.mubr.bf16.gmra.mrb[0].mxu0 %v2862
        %v2946 = vpop.f32.mrb[0].mxu0
        %v2947 = vadd.f32 0.0, %v2946
        %v2948 = vpop.f32.mrb[0].mxu0
        %v2949 = vpop.f32.mrb[0].mxu0
        %v2950 = vadd.f32 0.0, %v2949
        %v2951 = vpop.f32.mrb[0].mxu0
        %2952 = vmatprep.mubr.bf16.mxu0 0
        %2953 = vmatmul.mubr.bf16.gmra.mrb[0].mxu0 %v2865
        %v2954 = vpop.f32.mrb[0].mxu0
        %v2955 = vadd.f32 0.0, %v2954
        %v2956 = vpop.f32.mrb[0].mxu0
        %v2957 = vpop.f32.mrb[0].mxu0
        %v2958 = vadd.f32 0.0, %v2957
        %v2959 = vpop.f32.mrb[0].mxu0
        %2960 = vmatprep.mubr.bf16.mxu0 0
        %2961 = vmatmul.mubr.bf16.gmra.mrb[0].mxu0 %v2868
        %v2962 = vpop.f32.mrb[0].mxu0
        %v2963 = vadd.f32 0.0, %v2962
        %v2964 = vpop.f32.mrb[0].mxu0
        %v2965 = vpop.f32.mrb[0].mxu0
        %v2966 = vadd.f32 0.0, %v2965
        %v2967 = vpop.f32.mrb[0].mxu0
        %2968 = vmatprep.mubr.bf16.mxu0 0
        %2969 = vmatmul.mubr.bf16.gmra.mrb[0].mxu0 %v2871
        %v2970 = vpop.f32.mrb[0].mxu0
        %v2971 = vadd.f32 0.0, %v2970
        %v2972 = vpop.f32.mrb[0].mxu0
        %v2973 = vpop.f32.mrb[0].mxu0
        %v2974 = vadd.f32 0.0, %v2973
        %v2975 = vpop.f32.mrb[0].mxu0
        %2976 = vmatprep.mubr.bf16.mxu0 0
        %2977 = vmatmul.mubr.bf16.gmra.mrb[0].mxu0 %v2874
        %v2978 = vpop.f32.mrb[0].mxu0
        %v2979 = vadd.f32 0.0, %v2978
        %v2980 = vpop.f32.mrb[0].mxu0
        %v2981 = vpop.f32.mrb[0].mxu0
        %v2982 = vadd.f32 0.0, %v2981
        %v2983 = vpop.f32.mrb[0].mxu0
        %2984 = vmatprep.mubr.bf16.mxu0 0
        %2985 = vmatmul.mubr.bf16.gmra.mrb[0].mxu0 %v2877
        %v2986 = vpop.f32.mrb[0].mxu0
        %v2987 = vadd.f32 0.0, %v2986
        %v2988 = vpop.f32.mrb[0].mxu0
        %v2989 = vpop.f32.mrb[0].mxu0
        %v2990 = vadd.f32 0.0, %v2989
        %v2991 = vpop.f32.mrb[0].mxu0
        %2992 = vmatprep.mubr.bf16.mxu0 0
        %2993 = vmatmul.mubr.bf16.gmra.mrb[0].mxu0 %v2880
        %v2994 = vpop.f32.mrb[0].mxu0
        %v2995 = vadd.f32 0.0, %v2994
        %v2996 = vpop.f32.mrb[0].mxu0
        %v2997 = vpop.f32.mrb[0].mxu0
        %v2998 = vadd.f32 0.0, %v2997
        %v2999 = vpop.f32.mrb[0].mxu0
        %3000 = vmatprep.mubr.bf16.mxu0 0
        %3001 = vmatmul.mubr.bf16.gmra.mrb[0].mxu0 %v2883
        %v3002 = vpop.f32.mrb[0].mxu0
        %v3003 = vadd.f32 0.0, %v3002
        %v3004 = vpop.f32.mrb[0].mxu0
        %v3005 = vpop.f32.mrb[0].mxu0
        %v3006 = vadd.f32 0.0, %v3005
        %v3007 = vpop.f32.mrb[0].mxu0
        %3008 = vmatprep.mubr.bf16.mxu0 0
        %3009 = vmatmul.mubr.bf16.gmra.mrb[0].mxu0 %v2886
        %v3010 = vpop.f32.mrb[0].mxu0
        %v3011 = vadd.f32 0.0, %v3010
        %v3012 = vpop.f32.mrb[0].mxu0
        %v3013 = vpop.f32.mrb[0].mxu0
        %v3014 = vadd.f32 0.0, %v3013
        %v3015 = vpop.f32.mrb[0].mxu0
        %3016 = vmatprep.mubr.bf16.mxu0 0
        %3017 = vmatmul.mubr.bf16.gmra.mrb[0].mxu0 %v2889
        %v3018 = vpop.f32.mrb[0].mxu0
        %v3019 = vadd.f32 0.0, %v3018
        %v3020 = vpop.f32.mrb[0].mxu0
        %v3021 = vpop.f32.mrb[0].mxu0
        %v3022 = vadd.f32 0.0, %v3021
        %v3023 = vpop.f32.mrb[0].mxu0
        %3024 = vmatprep.mubr.bf16.mxu0 0
        %3025 = vmatmul.mubr.bf16.gmra.mrb[0].mxu0 %v2892
        %v3026 = vpop.f32.mrb[0].mxu0
        %v3027 = vadd.f32 0.0, %v3026
        %v3028 = vpop.f32.mrb[0].mxu0
        %v3029 = vpop.f32.mrb[0].mxu0
        %v3030 = vadd.f32 0.0, %v3029
        %v3031 = vpop.f32.mrb[0].mxu0
        %3032 = vmatprep.mubr.bf16.mxu0 0
        %3033 = vmatmul.mubr.bf16.gmra.mrb[0].mxu0 %v2895
        %v3034 = vpop.f32.mrb[0].mxu0
        %v3035 = vadd.f32 0.0, %v3034
        %v3036 = vpop.f32.mrb[0].mxu0
        %v3037 = vpop.f32.mrb[0].mxu0
        %v3038 = vadd.f32 0.0, %v3037
        %v3039 = vpop.f32.mrb[0].mxu0
        %3040 = vmatprep.mubr.bf16.mxu0 0
        %3041 = vmatmul.mubr.bf16.gmra.mrb[0].mxu0 %v2898
        %v3042 = vpop.f32.mrb[0].mxu0
        %v3043 = vadd.f32 0.0, %v3042
        %v3044 = vpop.f32.mrb[0].mxu0
        %v3045 = vpop.f32.mrb[0].mxu0
        %v3046 = vadd.f32 0.0, %v3045
        %v3047 = vpop.f32.mrb[0].mxu0
        %3048 = vmatprep.mubr.bf16.mxu0 0
        %3049 = vmatmul.mubr.bf16.gmra.mrb[0].mxu0 %v2901
        %v3050 = vpop.f32.mrb[0].mxu0
        %v3051 = vadd.f32 0.0, %v3050
        %v3052 = vpop.f32.mrb[0].mxu0
        %v3053 = vpop.f32.mrb[0].mxu0
        %v3054 = vadd.f32 0.0, %v3053
        %v3055 = vpop.f32.mrb[0].mxu0
        %3056 = vmatprep.mubr.bf16.mxu0 0
        %3057 = vmatmul.mubr.bf16.gmra.mrb[0].mxu0 %v2904
        %v3058 = vpop.f32.mrb[0].mxu0
        %v3059 = vadd.f32 0.0, %v3058
        %v3060 = vpop.f32.mrb[0].mxu0
        %v3061 = vpop.f32.mrb[0].mxu0
        %v3062 = vadd.f32 0.0, %v3061
        %v3063 = vpop.f32.mrb[0].mxu0
        %3064 = vmatprep.mubr.bf16.mxu0 0
        %3065 = vmatmul.mubr.bf16.gmra.mrb[0].mxu0 %v2907
        %v3066 = vpop.f32.mrb[0].mxu0
        %v3067 = vadd.f32 0.0, %v3066
        %v3068 = vpop.f32.mrb[0].mxu0
        %v3069 = vpop.f32.mrb[0].mxu0
        %v3070 = vadd.f32 0.0, %v3069
        %v3071 = vpop.f32.mrb[0].mxu0
        %3072 = vdwg.mxu0
        %v3073 = vadd.f32 %v2778, %v2947
        %v3074 = vadd.f32 %v2779, %v2950
        %v3075 = vadd.f32 %v2780, %v2955
        %v3076 = vadd.f32 %v2781, %v2958
        %v3077 = vadd.f32 %v2782, %v2963
        %v3078 = vadd.f32 %v2783, %v2966
        %v3079 = vadd.f32 %v2784, %v2971
        %v3080 = vadd.f32 %v2785, %v2974
        %v3081 = vadd.f32 %v2786, %v2979
        %v3082 = vadd.f32 %v2787, %v2982
        %v3083 = vadd.f32 %v2788, %v2987
        %v3084 = vadd.f32 %v2789, %v2990
        %v3085 = vadd.f32 %v2790, %v2995
        %v3086 = vadd.f32 %v2791, %v2998
        %v3087 = vadd.f32 %v2792, %v3003
        %v3088 = vadd.f32 %v2793, %v3006
        %v3089 = vadd.f32 %v2794, %v3011
        %v3090 = vadd.f32 %v2795, %v3014
        %v3091 = vadd.f32 %v2796, %v3019
        %v3092 = vadd.f32 %v2797, %v3022
        %v3093 = vadd.f32 %v2798, %v3027
        %v3094 = vadd.f32 %v2799, %v3030
        %v3095 = vadd.f32 %v2800, %v3035
        %v3096 = vadd.f32 %v2801, %v3038
        %v3097 = vadd.f32 %v2802, %v3043
        %v3098 = vadd.f32 %v2803, %v3046
        %v3099 = vadd.f32 %v2804, %v3051
        %v3100 = vadd.f32 %v2805, %v3054
        %v3101 = vadd.f32 %v2806, %v3059
        %v3102 = vadd.f32 %v2807, %v3062
        %v3103 = vadd.f32 %v2808, %v3067
        %v3104 = vadd.f32 %v2809, %v3070
        %v3105 = vld [vmem:[%s2810 + $0x1] sm:$0xff]
        %v3106 = vld [vmem:[%s2810 + $0x9] sm:$0xff]
        %v3107 = vld [vmem:[%s2810 + $0x19] sm:$0xff]
        %v3108 = vld [vmem:[%s2810 + $0x21] sm:$0xff]
        %v3109 = vld [vmem:[%s2810 + $0x31] sm:$0xff]
        %v3110 = vld [vmem:[%s2810 + $0x39] sm:$0xff]
        %v3111 = vld [vmem:[%s2810 + $0x49] sm:$0xff]
        %v3112 = vld [vmem:[%s2810 + $0x51] sm:$0xff]
        %v3113 = vld [vmem:[%s2810 + $0x61] sm:$0xff]
        %v3114 = vld [vmem:[%s2810 + $0x69] sm:$0xff]
        %v3115 = vld [vmem:[%s2810 + $0x79] sm:$0xff]
        %v3116 = vld [vmem:[%s2810 + $0x81] sm:$0xff]
        %v3117 = vld [vmem:[%s2810 + $0x91] sm:$0xff]
        %v3118 = vld [vmem:[%s2810 + $0x99] sm:$0xff]
        %v3119 = vld [vmem:[%s2810 + $0xa9] sm:$0xff]
        %v3120 = vld [vmem:[%s2810 + $0xb1] sm:$0xff]
        %v3121 = vld [vmem:[%s2810 + $0xc1] sm:$0xff]
        %v3122 = vld [vmem:[%s2810 + $0xc9] sm:$0xff]
        %v3123 = vld [vmem:[%s2810 + $0xd9] sm:$0xff]
        %v3124 = vld [vmem:[%s2810 + $0xe1] sm:$0xff]
        %v3125 = vld [vmem:[%s2810 + $0xf1] sm:$0xff]
        %v3126 = vld [vmem:[%s2810 + $0xf9] sm:$0xff]
        %v3127 = vld [vmem:[%s2810 + $0x109] sm:$0xff]
        %v3128 = vld [vmem:[%s2810 + $0x111] sm:$0xff]
        %v3129 = vld [vmem:[%s2810 + $0x121] sm:$0xff]
        %v3130 = vld [vmem:[%s2810 + $0x129] sm:$0xff]
        %v3131 = vld [vmem:[%s2810 + $0x139] sm:$0xff]
        %v3132 = vld [vmem:[%s2810 + $0x141] sm:$0xff]
        %v3133 = vld [vmem:[%s2810 + $0x151] sm:$0xff]
        %v3134 = vld [vmem:[%s2810 + $0x159] sm:$0xff]
        %v3135 = vld [vmem:[%s2810 + $0x169] sm:$0xff]
        %v3136 = vld [vmem:[%s2810 + $0x171] sm:$0xff]
        %v3137 = vpack.c.bf16 %v3106, %v3105
        %v3138 = vpack.c.bf16 %v3108, %v3107
        %v3139 = vpack.c.bf16 %v3110, %v3109
        %v3140 = vpack.c.bf16 %v3112, %v3111
        %v3141 = vpack.c.bf16 %v3114, %v3113
        %v3142 = vpack.c.bf16 %v3116, %v3115
        %v3143 = vpack.c.bf16 %v3118, %v3117
        %v3144 = vpack.c.bf16 %v3120, %v3119
        %v3145 = vpack.c.bf16 %v3122, %v3121
        %v3146 = vpack.c.bf16 %v3124, %v3123
        %v3147 = vpack.c.bf16 %v3126, %v3125
        %v3148 = vpack.c.bf16 %v3128, %v3127
        %v3149 = vpack.c.bf16 %v3130, %v3129
        %v3150 = vpack.c.bf16 %v3132, %v3131
        %v3151 = vpack.c.bf16 %v3134, %v3133
        %v3152 = vpack.c.bf16 %v3136, %v3135
        %s3153 = scalar_lea.vmem [#allocation7], 14
        %v3154 = vld [vmem:[%s3153] sm:$0x3]
        %v3156 = vsel %vm273, %v3137, 0
        %v3159 = vsel %vm273, %v3138, 0
        %v3162 = vsel %vm273, %v3139, 0
        %v3165 = vsel %vm273, %v3140, 0
        %v3168 = vsel %vm273, %v3141, 0
        %v3171 = vsel %vm273, %v3142, 0
        %v3174 = vsel %vm273, %v3143, 0
        %v3177 = vsel %vm273, %v3144, 0
        %v3180 = vsel %vm273, %v3145, 0
        %v3183 = vsel %vm273, %v3146, 0
        %v3186 = vsel %vm273, %v3147, 0
        %v3189 = vsel %vm273, %v3148, 0
        %v3192 = vsel %vm273, %v3149, 0
        %v3195 = vsel %vm273, %v3150, 0
        %v3198 = vsel %vm273, %v3151, 0
        %v3201 = vsel %vm273, %v3152, 0
        %v3204 = vsel %vm1257, %v3154, 0
        %3206 = vmatprep.subr.bf16.mxu0 0
        %3207 = vmatpush1.bf16.msra.mxu0 %v3204
        %3208 = vmatprep.subr.bf16.mxu0 0
        %3209 = vmatpush1.bf16.msra.mxu0 0
        %3210 = vmatprep.subr.bf16.mxu0 0
        %3211 = vmatpush1.bf16.msra.mxu0 0
        %3212 = vmatprep.subr.bf16.mxu0 0
        %3213 = vmatpush1.bf16.msra.mxu0 0
        %3214 = vmatprep.subr.bf16.mxu0 0
        %3215 = vmatpush1.bf16.msra.mxu0 0
        %3216 = vmatprep.subr.bf16.mxu0 0
        %3217 = vmatpush1.bf16.msra.mxu0 0
        %3218 = vmatprep.subr.bf16.mxu0 0
        %3219 = vmatpush1.bf16.msra.mxu0 0
        %3220 = vmatprep.subr.bf16.mxu0 0
        %3221 = vmatpush1.bf16.msra.mxu0 0
        %3222 = vmatprep.subr.bf16.mxu0 0
        %3223 = vmatpush1.bf16.msra.mxu0 0
        %3224 = vmatprep.subr.bf16.mxu0 0
        %3225 = vmatpush1.bf16.msra.mxu0 0
        %3226 = vmatprep.subr.bf16.mxu0 0
        %3227 = vmatpush1.bf16.msra.mxu0 0
        %3228 = vmatprep.subr.bf16.mxu0 0
        %3229 = vmatpush1.bf16.msra.mxu0 0
        %3230 = vmatprep.subr.bf16.mxu0 0
        %3231 = vmatpush1.bf16.msra.mxu0 0
        %3232 = vmatprep.subr.bf16.mxu0 0
        %3233 = vmatpush1.bf16.msra.mxu0 0
        %3234 = vmatprep.subr.bf16.mxu0 0
        %3235 = vmatpush1.bf16.msra.mxu0 0
        %3236 = vmatprep.subr.bf16.mxu0 0
        %3237 = vmatpush1.bf16.msra.mxu0 0
        %3238 = vmatprep.mubr.bf16.mxu0 0
        %3239 = vmatmul.mubr.bf16.gmra.mrb[0].mxu0 %v3156
        %v3240 = vpop.f32.mrb[0].mxu0
        %v3241 = vadd.f32 0.0, %v3240
        %v3242 = vpop.f32.mrb[0].mxu0
        %v3243 = vpop.f32.mrb[0].mxu0
        %v3244 = vadd.f32 0.0, %v3243
        %v3245 = vpop.f32.mrb[0].mxu0
        %3246 = vmatprep.mubr.bf16.mxu0 0
        %3247 = vmatmul.mubr.bf16.gmra.mrb[0].mxu0 %v3159
        %v3248 = vpop.f32.mrb[0].mxu0
        %v3249 = vadd.f32 0.0, %v3248
        %v3250 = vpop.f32.mrb[0].mxu0
        %v3251 = vpop.f32.mrb[0].mxu0
        %v3252 = vadd.f32 0.0, %v3251
        %v3253 = vpop.f32.mrb[0].mxu0
        %3254 = vmatprep.mubr.bf16.mxu0 0
        %3255 = vmatmul.mubr.bf16.gmra.mrb[0].mxu0 %v3162
        %v3256 = vpop.f32.mrb[0].mxu0
        %v3257 = vadd.f32 0.0, %v3256
        %v3258 = vpop.f32.mrb[0].mxu0
        %v3259 = vpop.f32.mrb[0].mxu0
        %v3260 = vadd.f32 0.0, %v3259
        %v3261 = vpop.f32.mrb[0].mxu0
        %3262 = vmatprep.mubr.bf16.mxu0 0
        %3263 = vmatmul.mubr.bf16.gmra.mrb[0].mxu0 %v3165
        %v3264 = vpop.f32.mrb[0].mxu0
        %v3265 = vadd.f32 0.0, %v3264
        %v3266 = vpop.f32.mrb[0].mxu0
        %v3267 = vpop.f32.mrb[0].mxu0
        %v3268 = vadd.f32 0.0, %v3267
        %v3269 = vpop.f32.mrb[0].mxu0
        %3270 = vmatprep.mubr.bf16.mxu0 0
        %3271 = vmatmul.mubr.bf16.gmra.mrb[0].mxu0 %v3168
        %v3272 = vpop.f32.mrb[0].mxu0
        %v3273 = vadd.f32 0.0, %v3272
        %v3274 = vpop.f32.mrb[0].mxu0
        %v3275 = vpop.f32.mrb[0].mxu0
        %v3276 = vadd.f32 0.0, %v3275
        %v3277 = vpop.f32.mrb[0].mxu0
        %3278 = vmatprep.mubr.bf16.mxu0 0
        %3279 = vmatmul.mubr.bf16.gmra.mrb[0].mxu0 %v3171
        %v3280 = vpop.f32.mrb[0].mxu0
        %v3281 = vadd.f32 0.0, %v3280
        %v3282 = vpop.f32.mrb[0].mxu0
        %v3283 = vpop.f32.mrb[0].mxu0
        %v3284 = vadd.f32 0.0, %v3283
        %v3285 = vpop.f32.mrb[0].mxu0
        %3286 = vmatprep.mubr.bf16.mxu0 0
        %3287 = vmatmul.mubr.bf16.gmra.mrb[0].mxu0 %v3174
        %v3288 = vpop.f32.mrb[0].mxu0
        %v3289 = vadd.f32 0.0, %v3288
        %v3290 = vpop.f32.mrb[0].mxu0
        %v3291 = vpop.f32.mrb[0].mxu0
        %v3292 = vadd.f32 0.0, %v3291
        %v3293 = vpop.f32.mrb[0].mxu0
        %3294 = vmatprep.mubr.bf16.mxu0 0
        %3295 = vmatmul.mubr.bf16.gmra.mrb[0].mxu0 %v3177
        %v3296 = vpop.f32.mrb[0].mxu0
        %v3297 = vadd.f32 0.0, %v3296
        %v3298 = vpop.f32.mrb[0].mxu0
        %v3299 = vpop.f32.mrb[0].mxu0
        %v3300 = vadd.f32 0.0, %v3299
        %v3301 = vpop.f32.mrb[0].mxu0
        %3302 = vmatprep.mubr.bf16.mxu0 0
        %3303 = vmatmul.mubr.bf16.gmra.mrb[0].mxu0 %v3180
        %v3304 = vpop.f32.mrb[0].mxu0
        %v3305 = vadd.f32 0.0, %v3304
        %v3306 = vpop.f32.mrb[0].mxu0
        %v3307 = vpop.f32.mrb[0].mxu0
        %v3308 = vadd.f32 0.0, %v3307
        %v3309 = vpop.f32.mrb[0].mxu0
        %3310 = vmatprep.mubr.bf16.mxu0 0
        %3311 = vmatmul.mubr.bf16.gmra.mrb[0].mxu0 %v3183
        %v3312 = vpop.f32.mrb[0].mxu0
        %v3313 = vadd.f32 0.0, %v3312
        %v3314 = vpop.f32.mrb[0].mxu0
        %v3315 = vpop.f32.mrb[0].mxu0
        %v3316 = vadd.f32 0.0, %v3315
        %v3317 = vpop.f32.mrb[0].mxu0
        %3318 = vmatprep.mubr.bf16.mxu0 0
        %3319 = vmatmul.mubr.bf16.gmra.mrb[0].mxu0 %v3186
        %v3320 = vpop.f32.mrb[0].mxu0
        %v3321 = vadd.f32 0.0, %v3320
        %v3322 = vpop.f32.mrb[0].mxu0
        %v3323 = vpop.f32.mrb[0].mxu0
        %v3324 = vadd.f32 0.0, %v3323
        %v3325 = vpop.f32.mrb[0].mxu0
        %3326 = vmatprep.mubr.bf16.mxu0 0
        %3327 = vmatmul.mubr.bf16.gmra.mrb[0].mxu0 %v3189
        %v3328 = vpop.f32.mrb[0].mxu0
        %v3329 = vadd.f32 0.0, %v3328
        %v3330 = vpop.f32.mrb[0].mxu0
        %v3331 = vpop.f32.mrb[0].mxu0
        %v3332 = vadd.f32 0.0, %v3331
        %v3333 = vpop.f32.mrb[0].mxu0
        %3334 = vmatprep.mubr.bf16.mxu0 0
        %3335 = vmatmul.mubr.bf16.gmra.mrb[0].mxu0 %v3192
        %v3336 = vpop.f32.mrb[0].mxu0
        %v3337 = vadd.f32 0.0, %v3336
        %v3338 = vpop.f32.mrb[0].mxu0
        %v3339 = vpop.f32.mrb[0].mxu0
        %v3340 = vadd.f32 0.0, %v3339
        %v3341 = vpop.f32.mrb[0].mxu0
        %3342 = vmatprep.mubr.bf16.mxu0 0
        %3343 = vmatmul.mubr.bf16.gmra.mrb[0].mxu0 %v3195
        %v3344 = vpop.f32.mrb[0].mxu0
        %v3345 = vadd.f32 0.0, %v3344
        %v3346 = vpop.f32.mrb[0].mxu0
        %v3347 = vpop.f32.mrb[0].mxu0
        %v3348 = vadd.f32 0.0, %v3347
        %v3349 = vpop.f32.mrb[0].mxu0
        %3350 = vmatprep.mubr.bf16.mxu0 0
        %3351 = vmatmul.mubr.bf16.gmra.mrb[0].mxu0 %v3198
        %v3352 = vpop.f32.mrb[0].mxu0
        %v3353 = vadd.f32 0.0, %v3352
        %v3354 = vpop.f32.mrb[0].mxu0
        %v3355 = vpop.f32.mrb[0].mxu0
        %v3356 = vadd.f32 0.0, %v3355
        %v3357 = vpop.f32.mrb[0].mxu0
        %3358 = vmatprep.mubr.bf16.mxu0 0
        %3359 = vmatmul.mubr.bf16.gmra.mrb[0].mxu0 %v3201
        %v3360 = vpop.f32.mrb[0].mxu0
        %v3361 = vadd.f32 0.0, %v3360
        %v3362 = vpop.f32.mrb[0].mxu0
        %v3363 = vpop.f32.mrb[0].mxu0
        %v3364 = vadd.f32 0.0, %v3363
        %v3365 = vpop.f32.mrb[0].mxu0
        %3366 = vdwg.mxu0
        %v3367 = vadd.f32 %v3073, %v3241
        %v3368 = vadd.f32 %v3074, %v3244
        %v3369 = vadd.f32 %v3075, %v3249
        %v3370 = vadd.f32 %v3076, %v3252
        %v3371 = vadd.f32 %v3077, %v3257
        %v3372 = vadd.f32 %v3078, %v3260
        %v3373 = vadd.f32 %v3079, %v3265
        %v3374 = vadd.f32 %v3080, %v3268
        %v3375 = vadd.f32 %v3081, %v3273
        %v3376 = vadd.f32 %v3082, %v3276
        %v3377 = vadd.f32 %v3083, %v3281
        %v3378 = vadd.f32 %v3084, %v3284
        %v3379 = vadd.f32 %v3085, %v3289
        %v3380 = vadd.f32 %v3086, %v3292
        %v3381 = vadd.f32 %v3087, %v3297
        %v3382 = vadd.f32 %v3088, %v3300
        %v3383 = vadd.f32 %v3089, %v3305
        %v3384 = vadd.f32 %v3090, %v3308
        %v3385 = vadd.f32 %v3091, %v3313
        %v3386 = vadd.f32 %v3092, %v3316
        %v3387 = vadd.f32 %v3093, %v3321
        %v3388 = vadd.f32 %v3094, %v3324
        %v3389 = vadd.f32 %v3095, %v3329
        %v3390 = vadd.f32 %v3096, %v3332
        %v3391 = vadd.f32 %v3097, %v3337
        %v3392 = vadd.f32 %v3098, %v3340
        %v3393 = vadd.f32 %v3099, %v3345
        %v3394 = vadd.f32 %v3100, %v3348
        %v3395 = vadd.f32 %v3101, %v3353
        %v3396 = vadd.f32 %v3102, %v3356
        %v3397 = vadd.f32 %v3103, %v3361
        %v3398 = vadd.f32 %v3104, %v3364
        %v3399 = vld [vmem:[%s2810 + $0x2] sm:$0xff]
        %v3400 = vld [vmem:[%s2810 + $0xa] sm:$0xff]
        %v3401 = vld [vmem:[%s2810 + $0x1a] sm:$0xff]
        %v3402 = vld [vmem:[%s2810 + $0x22] sm:$0xff]
        %v3403 = vld [vmem:[%s2810 + $0x32] sm:$0xff]
        %v3404 = vld [vmem:[%s2810 + $0x3a] sm:$0xff]
        %v3405 = vld [vmem:[%s2810 + $0x4a] sm:$0xff]
        %v3406 = vld [vmem:[%s2810 + $0x52] sm:$0xff]
        %v3407 = vld [vmem:[%s2810 + $0x62] sm:$0xff]
        %v3408 = vld [vmem:[%s2810 + $0x6a] sm:$0xff]
        %v3409 = vld [vmem:[%s2810 + $0x7a] sm:$0xff]
        %v3410 = vld [vmem:[%s2810 + $0x82] sm:$0xff]
        %v3411 = vld [vmem:[%s2810 + $0x92] sm:$0xff]
        %v3412 = vld [vmem:[%s2810 + $0x9a] sm:$0xff]
        %v3413 = vld [vmem:[%s2810 + $0xaa] sm:$0xff]
        %v3414 = vld [vmem:[%s2810 + $0xb2] sm:$0xff]
        %v3415 = vld [vmem:[%s2810 + $0xc2] sm:$0xff]
        %v3416 = vld [vmem:[%s2810 + $0xca] sm:$0xff]
        %v3417 = vld [vmem:[%s2810 + $0xda] sm:$0xff]
        %v3418 = vld [vmem:[%s2810 + $0xe2] sm:$0xff]
        %v3419 = vld [vmem:[%s2810 + $0xf2] sm:$0xff]
        %v3420 = vld [vmem:[%s2810 + $0xfa] sm:$0xff]
        %v3421 = vld [vmem:[%s2810 + $0x10a] sm:$0xff]
        %v3422 = vld [vmem:[%s2810 + $0x112] sm:$0xff]
        %v3423 = vld [vmem:[%s2810 + $0x122] sm:$0xff]
        %v3424 = vld [vmem:[%s2810 + $0x12a] sm:$0xff]
        %v3425 = vld [vmem:[%s2810 + $0x13a] sm:$0xff]
        %v3426 = vld [vmem:[%s2810 + $0x142] sm:$0xff]
        %v3427 = vld [vmem:[%s2810 + $0x152] sm:$0xff]
        %v3428 = vld [vmem:[%s2810 + $0x15a] sm:$0xff]
        %v3429 = vld [vmem:[%s2810 + $0x16a] sm:$0xff]
        %v3430 = vld [vmem:[%s2810 + $0x172] sm:$0xff]
        %v3431 = vpack.c.bf16 %v3400, %v3399
        %v3432 = vpack.c.bf16 %v3402, %v3401
        %v3433 = vpack.c.bf16 %v3404, %v3403
        %v3434 = vpack.c.bf16 %v3406, %v3405
        %v3435 = vpack.c.bf16 %v3408, %v3407
        %v3436 = vpack.c.bf16 %v3410, %v3409
        %v3437 = vpack.c.bf16 %v3412, %v3411
        %v3438 = vpack.c.bf16 %v3414, %v3413
        %v3439 = vpack.c.bf16 %v3416, %v3415
        %v3440 = vpack.c.bf16 %v3418, %v3417
        %v3441 = vpack.c.bf16 %v3420, %v3419
        %v3442 = vpack.c.bf16 %v3422, %v3421
        %v3443 = vpack.c.bf16 %v3424, %v3423
        %v3444 = vpack.c.bf16 %v3426, %v3425
        %v3445 = vpack.c.bf16 %v3428, %v3427
        %v3446 = vpack.c.bf16 %v3430, %v3429
        %s3447 = scalar_lea.vmem [#allocation7], 16
        %v3448 = vld [vmem:[%s3447] sm:$0x3]
        %v3450 = vsel %vm273, %v3431, 0
        %v3453 = vsel %vm273, %v3432, 0
        %v3456 = vsel %vm273, %v3433, 0
        %v3459 = vsel %vm273, %v3434, 0
        %v3462 = vsel %vm273, %v3435, 0
        %v3465 = vsel %vm273, %v3436, 0
        %v3468 = vsel %vm273, %v3437, 0
        %v3471 = vsel %vm273, %v3438, 0
        %v3474 = vsel %vm273, %v3439, 0
        %v3477 = vsel %vm273, %v3440, 0
        %v3480 = vsel %vm273, %v3441, 0
        %v3483 = vsel %vm273, %v3442, 0
        %v3486 = vsel %vm273, %v3443, 0
        %v3489 = vsel %vm273, %v3444, 0
        %v3492 = vsel %vm273, %v3445, 0
        %v3495 = vsel %vm273, %v3446, 0
        %v3498 = vsel %vm1257, %v3448, 0
        %3500 = vmatprep.subr.bf16.mxu0 0
        %3501 = vmatpush1.bf16.msra.mxu0 %v3498
        %3502 = vmatprep.subr.bf16.mxu0 0
        %3503 = vmatpush1.bf16.msra.mxu0 0
        %3504 = vmatprep.subr.bf16.mxu0 0
        %3505 = vmatpush1.bf16.msra.mxu0 0
        %3506 = vmatprep.subr.bf16.mxu0 0
        %3507 = vmatpush1.bf16.msra.mxu0 0
        %3508 = vmatprep.subr.bf16.mxu0 0
        %3509 = vmatpush1.bf16.msra.mxu0 0
        %3510 = vmatprep.subr.bf16.mxu0 0
        %3511 = vmatpush1.bf16.msra.mxu0 0
        %3512 = vmatprep.subr.bf16.mxu0 0
        %3513 = vmatpush1.bf16.msra.mxu0 0
        %3514 = vmatprep.subr.bf16.mxu0 0
        %3515 = vmatpush1.bf16.msra.mxu0 0
        %3516 = vmatprep.subr.bf16.mxu0 0
        %3517 = vmatpush1.bf16.msra.mxu0 0
        %3518 = vmatprep.subr.bf16.mxu0 0
        %3519 = vmatpush1.bf16.msra.mxu0 0
        %3520 = vmatprep.subr.bf16.mxu0 0
        %3521 = vmatpush1.bf16.msra.mxu0 0
        %3522 = vmatprep.subr.bf16.mxu0 0
        %3523 = vmatpush1.bf16.msra.mxu0 0
        %3524 = vmatprep.subr.bf16.mxu0 0
        %3525 = vmatpush1.bf16.msra.mxu0 0
        %3526 = vmatprep.subr.bf16.mxu0 0
        %3527 = vmatpush1.bf16.msra.mxu0 0
        %3528 = vmatprep.subr.bf16.mxu0 0
        %3529 = vmatpush1.bf16.msra.mxu0 0
        %3530 = vmatprep.subr.bf16.mxu0 0
        %3531 = vmatpush1.bf16.msra.mxu0 0
        %3532 = vmatprep.mubr.bf16.mxu0 0
        %3533 = vmatmul.mubr.bf16.gmra.mrb[0].mxu0 %v3450
        %v3534 = vpop.f32.mrb[0].mxu0
        %v3535 = vadd.f32 0.0, %v3534
        %v3536 = vpop.f32.mrb[0].mxu0
        %v3537 = vpop.f32.mrb[0].mxu0
        %v3538 = vadd.f32 0.0, %v3537
        %v3539 = vpop.f32.mrb[0].mxu0
        %3540 = vmatprep.mubr.bf16.mxu0 0
        %3541 = vmatmul.mubr.bf16.gmra.mrb[0].mxu0 %v3453
        %v3542 = vpop.f32.mrb[0].mxu0
        %v3543 = vadd.f32 0.0, %v3542
        %v3544 = vpop.f32.mrb[0].mxu0
        %v3545 = vpop.f32.mrb[0].mxu0
        %v3546 = vadd.f32 0.0, %v3545
        %v3547 = vpop.f32.mrb[0].mxu0
        %3548 = vmatprep.mubr.bf16.mxu0 0
        %3549 = vmatmul.mubr.bf16.gmra.mrb[0].mxu0 %v3456
        %v3550 = vpop.f32.mrb[0].mxu0
        %v3551 = vadd.f32 0.0, %v3550
        %v3552 = vpop.f32.mrb[0].mxu0
        %v3553 = vpop.f32.mrb[0].mxu0
        %v3554 = vadd.f32 0.0, %v3553
        %v3555 = vpop.f32.mrb[0].mxu0
        %3556 = vmatprep.mubr.bf16.mxu0 0
        %3557 = vmatmul.mubr.bf16.gmra.mrb[0].mxu0 %v3459
        %v3558 = vpop.f32.mrb[0].mxu0
        %v3559 = vadd.f32 0.0, %v3558
        %v3560 = vpop.f32.mrb[0].mxu0
        %v3561 = vpop.f32.mrb[0].mxu0
        %v3562 = vadd.f32 0.0, %v3561
        %v3563 = vpop.f32.mrb[0].mxu0
        %3564 = vmatprep.mubr.bf16.mxu0 0
        %3565 = vmatmul.mubr.bf16.gmra.mrb[0].mxu0 %v3462
        %v3566 = vpop.f32.mrb[0].mxu0
        %v3567 = vadd.f32 0.0, %v3566
        %v3568 = vpop.f32.mrb[0].mxu0
        %v3569 = vpop.f32.mrb[0].mxu0
        %v3570 = vadd.f32 0.0, %v3569
        %v3571 = vpop.f32.mrb[0].mxu0
        %3572 = vmatprep.mubr.bf16.mxu0 0
        %3573 = vmatmul.mubr.bf16.gmra.mrb[0].mxu0 %v3465
        %v3574 = vpop.f32.mrb[0].mxu0
        %v3575 = vadd.f32 0.0, %v3574
        %v3576 = vpop.f32.mrb[0].mxu0
        %v3577 = vpop.f32.mrb[0].mxu0
        %v3578 = vadd.f32 0.0, %v3577
        %v3579 = vpop.f32.mrb[0].mxu0
        %3580 = vmatprep.mubr.bf16.mxu0 0
        %3581 = vmatmul.mubr.bf16.gmra.mrb[0].mxu0 %v3468
        %v3582 = vpop.f32.mrb[0].mxu0
        %v3583 = vadd.f32 0.0, %v3582
        %v3584 = vpop.f32.mrb[0].mxu0
        %v3585 = vpop.f32.mrb[0].mxu0
        %v3586 = vadd.f32 0.0, %v3585
        %v3587 = vpop.f32.mrb[0].mxu0
        %3588 = vmatprep.mubr.bf16.mxu0 0
        %3589 = vmatmul.mubr.bf16.gmra.mrb[0].mxu0 %v3471
        %v3590 = vpop.f32.mrb[0].mxu0
        %v3591 = vadd.f32 0.0, %v3590
        %v3592 = vpop.f32.mrb[0].mxu0
        %v3593 = vpop.f32.mrb[0].mxu0
        %v3594 = vadd.f32 0.0, %v3593
        %v3595 = vpop.f32.mrb[0].mxu0
        %3596 = vmatprep.mubr.bf16.mxu0 0
        %3597 = vmatmul.mubr.bf16.gmra.mrb[0].mxu0 %v3474
        %v3598 = vpop.f32.mrb[0].mxu0
        %v3599 = vadd.f32 0.0, %v3598
        %v3600 = vpop.f32.mrb[0].mxu0
        %v3601 = vpop.f32.mrb[0].mxu0
        %v3602 = vadd.f32 0.0, %v3601
        %v3603 = vpop.f32.mrb[0].mxu0
        %3604 = vmatprep.mubr.bf16.mxu0 0
        %3605 = vmatmul.mubr.bf16.gmra.mrb[0].mxu0 %v3477
        %v3606 = vpop.f32.mrb[0].mxu0
        %v3607 = vadd.f32 0.0, %v3606
        %v3608 = vpop.f32.mrb[0].mxu0
        %v3609 = vpop.f32.mrb[0].mxu0
        %v3610 = vadd.f32 0.0, %v3609
        %v3611 = vpop.f32.mrb[0].mxu0
        %3612 = vmatprep.mubr.bf16.mxu0 0
        %3613 = vmatmul.mubr.bf16.gmra.mrb[0].mxu0 %v3480
        %v3614 = vpop.f32.mrb[0].mxu0
        %v3615 = vadd.f32 0.0, %v3614
        %v3616 = vpop.f32.mrb[0].mxu0
        %v3617 = vpop.f32.mrb[0].mxu0
        %v3618 = vadd.f32 0.0, %v3617
        %v3619 = vpop.f32.mrb[0].mxu0
        %3620 = vmatprep.mubr.bf16.mxu0 0
        %3621 = vmatmul.mubr.bf16.gmra.mrb[0].mxu0 %v3483
        %v3622 = vpop.f32.mrb[0].mxu0
        %v3623 = vadd.f32 0.0, %v3622
        %v3624 = vpop.f32.mrb[0].mxu0
        %v3625 = vpop.f32.mrb[0].mxu0
        %v3626 = vadd.f32 0.0, %v3625
        %v3627 = vpop.f32.mrb[0].mxu0
        %3628 = vmatprep.mubr.bf16.mxu0 0
        %3629 = vmatmul.mubr.bf16.gmra.mrb[0].mxu0 %v3486
        %v3630 = vpop.f32.mrb[0].mxu0
        %v3631 = vadd.f32 0.0, %v3630
        %v3632 = vpop.f32.mrb[0].mxu0
        %v3633 = vpop.f32.mrb[0].mxu0
        %v3634 = vadd.f32 0.0, %v3633
        %v3635 = vpop.f32.mrb[0].mxu0
        %3636 = vmatprep.mubr.bf16.mxu0 0
        %3637 = vmatmul.mubr.bf16.gmra.mrb[0].mxu0 %v3489
        %v3638 = vpop.f32.mrb[0].mxu0
        %v3639 = vadd.f32 0.0, %v3638
        %v3640 = vpop.f32.mrb[0].mxu0
        %v3641 = vpop.f32.mrb[0].mxu0
        %v3642 = vadd.f32 0.0, %v3641
        %v3643 = vpop.f32.mrb[0].mxu0
        %3644 = vmatprep.mubr.bf16.mxu0 0
        %3645 = vmatmul.mubr.bf16.gmra.mrb[0].mxu0 %v3492
        %v3646 = vpop.f32.mrb[0].mxu0
        %v3647 = vadd.f32 0.0, %v3646
        %v3648 = vpop.f32.mrb[0].mxu0
        %v3649 = vpop.f32.mrb[0].mxu0
        %v3650 = vadd.f32 0.0, %v3649
        %v3651 = vpop.f32.mrb[0].mxu0
        %3652 = vmatprep.mubr.bf16.mxu0 0
        %3653 = vmatmul.mubr.bf16.gmra.mrb[0].mxu0 %v3495
        %v3654 = vpop.f32.mrb[0].mxu0
        %v3655 = vadd.f32 0.0, %v3654
        %v3656 = vpop.f32.mrb[0].mxu0
        %v3657 = vpop.f32.mrb[0].mxu0
        %v3658 = vadd.f32 0.0, %v3657
        %v3659 = vpop.f32.mrb[0].mxu0
        %3660 = vdwg.mxu0
        %v3661 = vadd.f32 %v3367, %v3535
        %v3662 = vadd.f32 %v3368, %v3538
        %v3663 = vadd.f32 %v3369, %v3543
        %v3664 = vadd.f32 %v3370, %v3546
        %v3665 = vadd.f32 %v3371, %v3551
        %v3666 = vadd.f32 %v3372, %v3554
        %v3667 = vadd.f32 %v3373, %v3559
        %v3668 = vadd.f32 %v3374, %v3562
        %v3669 = vadd.f32 %v3375, %v3567
        %v3670 = vadd.f32 %v3376, %v3570
        %v3671 = vadd.f32 %v3377, %v3575
        %v3672 = vadd.f32 %v3378, %v3578
        %v3673 = vadd.f32 %v3379, %v3583
        %v3674 = vadd.f32 %v3380, %v3586
        %v3675 = vadd.f32 %v3381, %v3591
        %v3676 = vadd.f32 %v3382, %v3594
        %v3677 = vadd.f32 %v3383, %v3599
        %v3678 = vadd.f32 %v3384, %v3602
        %v3679 = vadd.f32 %v3385, %v3607
        %v3680 = vadd.f32 %v3386, %v3610
        %v3681 = vadd.f32 %v3387, %v3615
        %v3682 = vadd.f32 %v3388, %v3618
        %v3683 = vadd.f32 %v3389, %v3623
        %v3684 = vadd.f32 %v3390, %v3626
        %v3685 = vadd.f32 %v3391, %v3631
        %v3686 = vadd.f32 %v3392, %v3634
        %v3687 = vadd.f32 %v3393, %v3639
        %v3688 = vadd.f32 %v3394, %v3642
        %v3689 = vadd.f32 %v3395, %v3647
        %v3690 = vadd.f32 %v3396, %v3650
        %v3691 = vadd.f32 %v3397, %v3655
        %v3692 = vadd.f32 %v3398, %v3658
        %v3693 = vld [vmem:[%s2] sm:$0x1]
        %v3695 = vlaneseq
        %v3696 = vshrl.u32 %v3695, 7
        %v3697 = vsub.s32 0, %v3696
        %v3698 = vrot.slane %v3693, %v3697
        %v3700 = vadd.f32 %v3661, %v3698
        %v3701 = vadd.f32 %v3662, %v3698
        %v3702 = vadd.f32 %v3663, %v3698
        %v3703 = vadd.f32 %v3664, %v3698
        %v3704 = vadd.f32 %v3665, %v3698
        %v3705 = vadd.f32 %v3666, %v3698
        %v3706 = vadd.f32 %v3667, %v3698
        %v3707 = vadd.f32 %v3668, %v3698
        %v3708 = vadd.f32 %v3669, %v3698
        %v3709 = vadd.f32 %v3670, %v3698
        %v3710 = vadd.f32 %v3671, %v3698
        %v3711 = vadd.f32 %v3672, %v3698
        %v3712 = vadd.f32 %v3673, %v3698
        %v3713 = vadd.f32 %v3674, %v3698
        %v3714 = vadd.f32 %v3675, %v3698
        %v3715 = vadd.f32 %v3676, %v3698
        %v3716 = vadd.f32 %v3677, %v3698
        %v3717 = vadd.f32 %v3678, %v3698
        %v3718 = vadd.f32 %v3679, %v3698
        %v3719 = vadd.f32 %v3680, %v3698
        %v3720 = vadd.f32 %v3681, %v3698
        %v3721 = vadd.f32 %v3682, %v3698
        %v3722 = vadd.f32 %v3683, %v3698
        %v3723 = vadd.f32 %v3684, %v3698
        %v3724 = vadd.f32 %v3685, %v3698
        %v3725 = vadd.f32 %v3686, %v3698
        %v3726 = vadd.f32 %v3687, %v3698
        %v3727 = vadd.f32 %v3688, %v3698
        %v3728 = vadd.f32 %v3689, %v3698
        %v3729 = vadd.f32 %v3690, %v3698
        %v3730 = vadd.f32 %v3691, %v3698
        %v3731 = vadd.f32 %v3692, %v3698
        %v3732 = vmax.f32 %v3700, 0.0
        %v3733 = vmax.f32 %v3701, 0.0
        %v3734 = vmax.f32 %v3702, 0.0
        %v3735 = vmax.f32 %v3703, 0.0
        %v3736 = vmax.f32 %v3704, 0.0
        %v3737 = vmax.f32 %v3705, 0.0
        %v3738 = vmax.f32 %v3706, 0.0
        %v3739 = vmax.f32 %v3707, 0.0
        %v3740 = vmax.f32 %v3708, 0.0
        %v3741 = vmax.f32 %v3709, 0.0
        %v3742 = vmax.f32 %v3710, 0.0
        %v3743 = vmax.f32 %v3711, 0.0
        %v3744 = vmax.f32 %v3712, 0.0
        %v3745 = vmax.f32 %v3713, 0.0
        %v3746 = vmax.f32 %v3714, 0.0
        %v3747 = vmax.f32 %v3715, 0.0
        %v3748 = vmax.f32 %v3716, 0.0
        %v3749 = vmax.f32 %v3717, 0.0
        %v3750 = vmax.f32 %v3718, 0.0
        %v3751 = vmax.f32 %v3719, 0.0
        %v3752 = vmax.f32 %v3720, 0.0
        %v3753 = vmax.f32 %v3721, 0.0
        %v3754 = vmax.f32 %v3722, 0.0
        %v3755 = vmax.f32 %v3723, 0.0
        %v3756 = vmax.f32 %v3724, 0.0
        %v3757 = vmax.f32 %v3725, 0.0
        %v3758 = vmax.f32 %v3726, 0.0
        %v3759 = vmax.f32 %v3727, 0.0
        %v3760 = vmax.f32 %v3728, 0.0
        %v3761 = vmax.f32 %v3729, 0.0
        %v3762 = vmax.f32 %v3730, 0.0
        %v3763 = vmax.f32 %v3731, 0.0
        %v3764 = vpack.c.bf16 %v3733, %v3732
        %v3765 = vpack.c.bf16 %v3735, %v3734
        %v3766 = vpack.c.bf16 %v3737, %v3736
        %v3767 = vpack.c.bf16 %v3739, %v3738
        %v3768 = vpack.c.bf16 %v3741, %v3740
        %v3769 = vpack.c.bf16 %v3743, %v3742
        %v3770 = vpack.c.bf16 %v3745, %v3744
        %v3771 = vpack.c.bf16 %v3747, %v3746
        %v3772 = vpack.c.bf16 %v3749, %v3748
        %v3773 = vpack.c.bf16 %v3751, %v3750
        %v3774 = vpack.c.bf16 %v3753, %v3752
        %v3775 = vpack.c.bf16 %v3755, %v3754
        %v3776 = vpack.c.bf16 %v3757, %v3756
        %v3777 = vpack.c.bf16 %v3759, %v3758
        %v3778 = vpack.c.bf16 %v3761, %v3760
        %v3779 = vpack.c.bf16 %v3763, %v3762
        %v3796 = vunpack.c.l.b16 %v3764
        %v3797 = vunpack.c.h.b16 %v3764
        %v3798 = vunpack.c.l.b16 %v3765
        %v3799 = vunpack.c.h.b16 %v3765
        %v3800 = vunpack.c.l.b16 %v3766
        %v3801 = vunpack.c.h.b16 %v3766
        %v3802 = vunpack.c.l.b16 %v3767
        %v3803 = vunpack.c.h.b16 %v3767
        %v3804 = vunpack.c.l.b16 %v3768
        %v3805 = vunpack.c.h.b16 %v3768
        %v3806 = vunpack.c.l.b16 %v3769
        %v3807 = vunpack.c.h.b16 %v3769
        %v3808 = vunpack.c.l.b16 %v3770
        %v3809 = vunpack.c.h.b16 %v3770
        %v3810 = vunpack.c.l.b16 %v3771
        %v3811 = vunpack.c.h.b16 %v3771
        %v3812 = vunpack.c.l.b16 %v3772
        %v3813 = vunpack.c.h.b16 %v3772
        %v3814 = vunpack.c.l.b16 %v3773
        %v3815 = vunpack.c.h.b16 %v3773
        %v3816 = vunpack.c.l.b16 %v3774
        %v3817 = vunpack.c.h.b16 %v3774
        %v3818 = vunpack.c.l.b16 %v3775
        %v3819 = vunpack.c.h.b16 %v3775
        %v3820 = vunpack.c.l.b16 %v3776
        %v3821 = vunpack.c.h.b16 %v3776
        %v3822 = vunpack.c.l.b16 %v3777
        %v3823 = vunpack.c.h.b16 %v3777
        %v3824 = vunpack.c.l.b16 %v3778
        %v3825 = vunpack.c.h.b16 %v3778
        %v3826 = vunpack.c.l.b16 %v3779
        %v3827 = vunpack.c.h.b16 %v3779
        %v3828 = vpack.c.b16 %v3796, %v3796
        %v3829 = vpack.c.b16 %v3797, %v3797
        %v3830 = vpack.c.b16 %v3798, %v3798
        %v3831 = vpack.c.b16 %v3799, %v3799
        %v3832 = vpack.c.b16 %v3800, %v3800
        %v3833 = vpack.c.b16 %v3801, %v3801
        %v3834 = vpack.c.b16 %v3802, %v3802
        %v3835 = vpack.c.b16 %v3803, %v3803
        %v3836 = vpack.c.b16 %v3804, %v3804
        %v3837 = vpack.c.b16 %v3805, %v3805
        %v3838 = vpack.c.b16 %v3806, %v3806
        %v3839 = vpack.c.b16 %v3807, %v3807
        %v3840 = vpack.c.b16 %v3808, %v3808
        %v3841 = vpack.c.b16 %v3809, %v3809
        %v3842 = vpack.c.b16 %v3810, %v3810
        %v3843 = vpack.c.b16 %v3811, %v3811
        %v3844 = vpack.c.b16 %v3812, %v3812
        %v3845 = vpack.c.b16 %v3813, %v3813
        %v3846 = vpack.c.b16 %v3814, %v3814
        %v3847 = vpack.c.b16 %v3815, %v3815
        %v3848 = vpack.c.b16 %v3816, %v3816
        %v3849 = vpack.c.b16 %v3817, %v3817
        %v3850 = vpack.c.b16 %v3818, %v3818
        %v3851 = vpack.c.b16 %v3819, %v3819
        %v3852 = vpack.c.b16 %v3820, %v3820
        %v3853 = vpack.c.b16 %v3821, %v3821
        %v3854 = vpack.c.b16 %v3822, %v3822
        %v3855 = vpack.c.b16 %v3823, %v3823
        %v3856 = vpack.c.b16 %v3824, %v3824
        %v3857 = vpack.c.b16 %v3825, %v3825
        %v3858 = vpack.c.b16 %v3826, %v3826
        %v3859 = vpack.c.b16 %v3827, %v3827
        %vm3860 = vsmask.f32 4368
        %vm3861 = vmor %vm327, %vm3860
        %v3863 = vshrl.u32 %v3828, 16
        %v3865 = vrot.slane %v3863, 7
        %v3866 = vshll.u32 %v3828, 16
        %v3868 = vor.u32 %v3865, %v3866
        %v3869 = vrot.slane %v3865, 4
        %v3871 = vshrl.u32 %v3829, 16
        %v3873 = vrot.slane %v3871, 7
        %v3874 = vshll.u32 %v3829, 16
        %v3876 = vor.u32 %v3873, %v3874
        %v3877 = vsel %vm3861, %v3869, %v3876
        %v3878 = vrot.slane %v3873, 4
        %v3880 = vshrl.u32 %v3830, 16
        %v3882 = vrot.slane %v3880, 7
        %v3883 = vshll.u32 %v3830, 16
        %v3885 = vor.u32 %v3882, %v3883
        %v3886 = vrot.slane %v3882, 4
        %v3888 = vshrl.u32 %v3831, 16
        %v3890 = vrot.slane %v3888, 7
        %v3891 = vshll.u32 %v3831, 16
        %v3893 = vor.u32 %v3890, %v3891
        %v3894 = vsel %vm3861, %v3886, %v3893
        %v3895 = vrot.slane %v3890, 4
        %v3897 = vshrl.u32 %v3832, 16
        %v3899 = vrot.slane %v3897, 7
        %v3900 = vshll.u32 %v3832, 16
        %v3902 = vor.u32 %v3899, %v3900
        %v3903 = vrot.slane %v3899, 4
        %v3905 = vshrl.u32 %v3833, 16
        %v3907 = vrot.slane %v3905, 7
        %v3908 = vshll.u32 %v3833, 16
        %v3910 = vor.u32 %v3907, %v3908
        %v3911 = vsel %vm3861, %v3903, %v3910
        %v3912 = vrot.slane %v3907, 4
        %v3914 = vshrl.u32 %v3834, 16
        %v3916 = vrot.slane %v3914, 7
        %v3917 = vshll.u32 %v3834, 16
        %v3919 = vor.u32 %v3916, %v3917
        %v3920 = vrot.slane %v3916, 4
        %v3922 = vshrl.u32 %v3835, 16
        %v3924 = vrot.slane %v3922, 7
        %v3925 = vshll.u32 %v3835, 16
        %v3927 = vor.u32 %v3924, %v3925
        %v3928 = vsel %vm3861, %v3920, %v3927
        %v3929 = vrot.slane %v3924, 4
        %v3931 = vshrl.u32 %v3836, 16
        %v3933 = vrot.slane %v3931, 7
        %v3934 = vshll.u32 %v3836, 16
        %v3936 = vor.u32 %v3933, %v3934
        %v3937 = vrot.slane %v3933, 4
        %v3939 = vshrl.u32 %v3837, 16
        %v3941 = vrot.slane %v3939, 7
        %v3942 = vshll.u32 %v3837, 16
        %v3944 = vor.u32 %v3941, %v3942
        %v3945 = vsel %vm3861, %v3937, %v3944
        %v3946 = vrot.slane %v3941, 4
        %v3948 = vshrl.u32 %v3838, 16
        %v3950 = vrot.slane %v3948, 7
        %v3951 = vshll.u32 %v3838, 16
        %v3953 = vor.u32 %v3950, %v3951
        %v3954 = vrot.slane %v3950, 4
        %v3956 = vshrl.u32 %v3839, 16
        %v3958 = vrot.slane %v3956, 7
        %v3959 = vshll.u32 %v3839, 16
        %v3961 = vor.u32 %v3958, %v3959
        %v3962 = vsel %vm3861, %v3954, %v3961
        %v3963 = vrot.slane %v3958, 4
        %v3965 = vshrl.u32 %v3840, 16
        %v3967 = vrot.slane %v3965, 7
        %v3968 = vshll.u32 %v3840, 16
        %v3970 = vor.u32 %v3967, %v3968
        %v3971 = vrot.slane %v3967, 4
        %v3973 = vshrl.u32 %v3841, 16
        %v3975 = vrot.slane %v3973, 7
        %v3976 = vshll.u32 %v3841, 16
        %v3978 = vor.u32 %v3975, %v3976
        %v3979 = vsel %vm3861, %v3971, %v3978
        %v3980 = vrot.slane %v3975, 4
        %v3982 = vshrl.u32 %v3842, 16
        %v3984 = vrot.slane %v3982, 7
        %v3985 = vshll.u32 %v3842, 16
        %v3987 = vor.u32 %v3984, %v3985
        %v3988 = vrot.slane %v3984, 4
        %v3990 = vshrl.u32 %v3843, 16
        %v3992 = vrot.slane %v3990, 7
        %v3993 = vshll.u32 %v3843, 16
        %v3995 = vor.u32 %v3992, %v3993
        %v3996 = vsel %vm3861, %v3988, %v3995
        %v3997 = vrot.slane %v3992, 4
        %v3999 = vshrl.u32 %v3844, 16
        %v4001 = vrot.slane %v3999, 7
        %v4002 = vshll.u32 %v3844, 16
        %v4004 = vor.u32 %v4001, %v4002
        %v4005 = vrot.slane %v4001, 4
        %v4007 = vshrl.u32 %v3845, 16
        %v4009 = vrot.slane %v4007, 7
        %v4010 = vshll.u32 %v3845, 16
        %v4012 = vor.u32 %v4009, %v4010
        %v4013 = vsel %vm3861, %v4005, %v4012
        %v4014 = vrot.slane %v4009, 4
        %v4016 = vshrl.u32 %v3846, 16
        %v4018 = vrot.slane %v4016, 7
        %v4019 = vshll.u32 %v3846, 16
        %v4021 = vor.u32 %v4018, %v4019
        %v4022 = vrot.slane %v4018, 4
        %v4024 = vshrl.u32 %v3847, 16
        %v4026 = vrot.slane %v4024, 7
        %v4027 = vshll.u32 %v3847, 16
        %v4029 = vor.u32 %v4026, %v4027
        %v4030 = vsel %vm3861, %v4022, %v4029
        %v4031 = vrot.slane %v4026, 4
        %v4033 = vshrl.u32 %v3848, 16
        %v4035 = vrot.slane %v4033, 7
        %v4036 = vshll.u32 %v3848, 16
        %v4038 = vor.u32 %v4035, %v4036
        %v4039 = vrot.slane %v4035, 4
        %v4041 = vshrl.u32 %v3849, 16
        %v4043 = vrot.slane %v4041, 7
        %v4044 = vshll.u32 %v3849, 16
        %v4046 = vor.u32 %v4043, %v4044
        %v4047 = vsel %vm3861, %v4039, %v4046
        %v4048 = vrot.slane %v4043, 4
        %v4050 = vshrl.u32 %v3850, 16
        %v4052 = vrot.slane %v4050, 7
        %v4053 = vshll.u32 %v3850, 16
        %v4055 = vor.u32 %v4052, %v4053
        %v4056 = vrot.slane %v4052, 4
        %v4058 = vshrl.u32 %v3851, 16
        %v4060 = vrot.slane %v4058, 7
        %v4061 = vshll.u32 %v3851, 16
        %v4063 = vor.u32 %v4060, %v4061
        %v4064 = vsel %vm3861, %v4056, %v4063
        %v4065 = vrot.slane %v4060, 4
        %v4067 = vshrl.u32 %v3852, 16
        %v4069 = vrot.slane %v4067, 7
        %v4070 = vshll.u32 %v3852, 16
        %v4072 = vor.u32 %v4069, %v4070
        %v4073 = vrot.slane %v4069, 4
        %v4075 = vshrl.u32 %v3853, 16
        %v4077 = vrot.slane %v4075, 7
        %v4078 = vshll.u32 %v3853, 16
        %v4080 = vor.u32 %v4077, %v4078
        %v4081 = vsel %vm3861, %v4073, %v4080
        %v4082 = vrot.slane %v4077, 4
        %v4084 = vshrl.u32 %v3854, 16
        %v4086 = vrot.slane %v4084, 7
        %v4087 = vshll.u32 %v3854, 16
        %v4089 = vor.u32 %v4086, %v4087
        %v4090 = vrot.slane %v4086, 4
        %v4092 = vshrl.u32 %v3855, 16
        %v4094 = vrot.slane %v4092, 7
        %v4095 = vshll.u32 %v3855, 16
        %v4097 = vor.u32 %v4094, %v4095
        %v4098 = vsel %vm3861, %v4090, %v4097
        %v4099 = vrot.slane %v4094, 4
        %v4101 = vshrl.u32 %v3856, 16
        %v4103 = vrot.slane %v4101, 7
        %v4104 = vshll.u32 %v3856, 16
        %v4106 = vor.u32 %v4103, %v4104
        %v4107 = vrot.slane %v4103, 4
        %v4109 = vshrl.u32 %v3857, 16
        %v4111 = vrot.slane %v4109, 7
        %v4112 = vshll.u32 %v3857, 16
        %v4114 = vor.u32 %v4111, %v4112
        %v4115 = vsel %vm3861, %v4107, %v4114
        %v4116 = vrot.slane %v4111, 4
        %v4118 = vshrl.u32 %v3858, 16
        %v4120 = vrot.slane %v4118, 7
        %v4121 = vshll.u32 %v3858, 16
        %v4123 = vor.u32 %v4120, %v4121
        %v4124 = vrot.slane %v4120, 4
        %v4126 = vshrl.u32 %v3859, 16
        %v4128 = vrot.slane %v4126, 7
        %v4129 = vshll.u32 %v3859, 16
        %v4131 = vor.u32 %v4128, %v4129
        %v4132 = vsel %vm3861, %v4124, %v4131
        %v4133 = vrot.slane %v4128, 4
        %s4182 = scalar_lea.vmem [#allocation3], 12
        %vm4183 = vcmask 1043456
        %vm4184 = vmand %vm4183, %vm383
        %v4185 = vld [vmem:[%s4182] sm:$0xf]
        %v4186 = vsel %vm4184, %v3868, %v4185
        %4187 = vst [vmem:[%s4182] sm:$0xf] %v4186
        %4188 = vst [vmem:[%s4182 + $0x4] sm:$0xf] %v3877
        %v4189 = vld [vmem:[%s4182 + $0x8] sm:$0x1]
        %v4190 = vsel %vm328, %v3878, %v4189
        %4191 = vst [vmem:[%s4182 + $0x8] sm:$0x1] %v4190
        %v4192 = vld [vmem:[%s4182 + $0xc] sm:$0xf]
        %v4193 = vsel %vm4184, %v3885, %v4192
        %4194 = vst [vmem:[%s4182 + $0xc] sm:$0xf] %v4193
        %4195 = vst [vmem:[%s4182 + $0x10] sm:$0xf] %v3894
        %v4196 = vld [vmem:[%s4182 + $0x14] sm:$0x1]
        %v4197 = vsel %vm328, %v3895, %v4196
        %4198 = vst [vmem:[%s4182 + $0x14] sm:$0x1] %v4197
        %v4199 = vld [vmem:[%s4182 + $0x18] sm:$0xf]
        %v4200 = vsel %vm4184, %v3902, %v4199
        %4201 = vst [vmem:[%s4182 + $0x18] sm:$0xf] %v4200
        %4202 = vst [vmem:[%s4182 + $0x1c] sm:$0xf] %v3911
        %v4203 = vld [vmem:[%s4182 + $0x20] sm:$0x1]
        %v4204 = vsel %vm328, %v3912, %v4203
        %4205 = vst [vmem:[%s4182 + $0x20] sm:$0x1] %v4204
        %v4206 = vld [vmem:[%s4182 + $0x24] sm:$0xf]
        %v4207 = vsel %vm4184, %v3919, %v4206
        %4208 = vst [vmem:[%s4182 + $0x24] sm:$0xf] %v4207
        %4209 = vst [vmem:[%s4182 + $0x28] sm:$0xf] %v3928
        %v4210 = vld [vmem:[%s4182 + $0x2c] sm:$0x1]
        %v4211 = vsel %vm328, %v3929, %v4210
        %4212 = vst [vmem:[%s4182 + $0x2c] sm:$0x1] %v4211
        %v4213 = vld [vmem:[%s4182 + $0x30] sm:$0xf]
        %v4214 = vsel %vm4184, %v3936, %v4213
        %4215 = vst [vmem:[%s4182 + $0x30] sm:$0xf] %v4214
        %4216 = vst [vmem:[%s4182 + $0x34] sm:$0xf] %v3945
        %v4217 = vld [vmem:[%s4182 + $0x38] sm:$0x1]
        %v4218 = vsel %vm328, %v3946, %v4217
        %4219 = vst [vmem:[%s4182 + $0x38] sm:$0x1] %v4218
        %v4220 = vld [vmem:[%s4182 + $0x3c] sm:$0xf]
        %v4221 = vsel %vm4184, %v3953, %v4220
        %4222 = vst [vmem:[%s4182 + $0x3c] sm:$0xf] %v4221
        %4223 = vst [vmem:[%s4182 + $0x40] sm:$0xf] %v3962
        %v4224 = vld [vmem:[%s4182 + $0x44] sm:$0x1]
        %v4225 = vsel %vm328, %v3963, %v4224
        %4226 = vst [vmem:[%s4182 + $0x44] sm:$0x1] %v4225
        %v4227 = vld [vmem:[%s4182 + $0x48] sm:$0xf]
        %v4228 = vsel %vm4184, %v3970, %v4227
        %4229 = vst [vmem:[%s4182 + $0x48] sm:$0xf] %v4228
        %4230 = vst [vmem:[%s4182 + $0x4c] sm:$0xf] %v3979
        %v4231 = vld [vmem:[%s4182 + $0x50] sm:$0x1]
        %v4232 = vsel %vm328, %v3980, %v4231
        %4233 = vst [vmem:[%s4182 + $0x50] sm:$0x1] %v4232
        %v4234 = vld [vmem:[%s4182 + $0x54] sm:$0xf]
        %v4235 = vsel %vm4184, %v3987, %v4234
        %4236 = vst [vmem:[%s4182 + $0x54] sm:$0xf] %v4235
        %4237 = vst [vmem:[%s4182 + $0x58] sm:$0xf] %v3996
        %v4238 = vld [vmem:[%s4182 + $0x5c] sm:$0x1]
        %v4239 = vsel %vm328, %v3997, %v4238
        %4240 = vst [vmem:[%s4182 + $0x5c] sm:$0x1] %v4239
        %v4241 = vld [vmem:[%s4182 + $0x60] sm:$0xf]
        %v4242 = vsel %vm4184, %v4004, %v4241
        %4243 = vst [vmem:[%s4182 + $0x60] sm:$0xf] %v4242
        %4244 = vst [vmem:[%s4182 + $0x64] sm:$0xf] %v4013
        %v4245 = vld [vmem:[%s4182 + $0x68] sm:$0x1]
        %v4246 = vsel %vm328, %v4014, %v4245
        %4247 = vst [vmem:[%s4182 + $0x68] sm:$0x1] %v4246
        %v4248 = vld [vmem:[%s4182 + $0x6c] sm:$0xf]
        %v4249 = vsel %vm4184, %v4021, %v4248
        %4250 = vst [vmem:[%s4182 + $0x6c] sm:$0xf] %v4249
        %4251 = vst [vmem:[%s4182 + $0x70] sm:$0xf] %v4030
        %v4252 = vld [vmem:[%s4182 + $0x74] sm:$0x1]
        %v4253 = vsel %vm328, %v4031, %v4252
        %4254 = vst [vmem:[%s4182 + $0x74] sm:$0x1] %v4253
        %v4255 = vld [vmem:[%s4182 + $0x78] sm:$0xf]
        %v4256 = vsel %vm4184, %v4038, %v4255
        %4257 = vst [vmem:[%s4182 + $0x78] sm:$0xf] %v4256
        %4258 = vst [vmem:[%s4182 + $0x7c] sm:$0xf] %v4047
        %v4259 = vld [vmem:[%s4182 + $0x80] sm:$0x1]
        %v4260 = vsel %vm328, %v4048, %v4259
        %4261 = vst [vmem:[%s4182 + $0x80] sm:$0x1] %v4260
        %v4262 = vld [vmem:[%s4182 + $0x84] sm:$0xf]
        %v4263 = vsel %vm4184, %v4055, %v4262
        %4264 = vst [vmem:[%s4182 + $0x84] sm:$0xf] %v4263
        %4265 = vst [vmem:[%s4182 + $0x88] sm:$0xf] %v4064
        %v4266 = vld [vmem:[%s4182 + $0x8c] sm:$0x1]
        %v4267 = vsel %vm328, %v4065, %v4266
        %4268 = vst [vmem:[%s4182 + $0x8c] sm:$0x1] %v4267
        %v4269 = vld [vmem:[%s4182 + $0x90] sm:$0xf]
        %v4270 = vsel %vm4184, %v4072, %v4269
        %4271 = vst [vmem:[%s4182 + $0x90] sm:$0xf] %v4270
        %4272 = vst [vmem:[%s4182 + $0x94] sm:$0xf] %v4081
        %v4273 = vld [vmem:[%s4182 + $0x98] sm:$0x1]
        %v4274 = vsel %vm328, %v4082, %v4273
        %4275 = vst [vmem:[%s4182 + $0x98] sm:$0x1] %v4274
        %v4276 = vld [vmem:[%s4182 + $0x9c] sm:$0xf]
        %v4277 = vsel %vm4184, %v4089, %v4276
        %4278 = vst [vmem:[%s4182 + $0x9c] sm:$0xf] %v4277
        %4279 = vst [vmem:[%s4182 + $0xa0] sm:$0xf] %v4098
        %v4280 = vld [vmem:[%s4182 + $0xa4] sm:$0x1]
        %v4281 = vsel %vm328, %v4099, %v4280
        %4282 = vst [vmem:[%s4182 + $0xa4] sm:$0x1] %v4281
        %v4283 = vld [vmem:[%s4182 + $0xa8] sm:$0xf]
        %v4284 = vsel %vm4184, %v4106, %v4283
        %4285 = vst [vmem:[%s4182 + $0xa8] sm:$0xf] %v4284
        %4286 = vst [vmem:[%s4182 + $0xac] sm:$0xf] %v4115
        %v4287 = vld [vmem:[%s4182 + $0xb0] sm:$0x1]
        %v4288 = vsel %vm328, %v4116, %v4287
        %4289 = vst [vmem:[%s4182 + $0xb0] sm:$0x1] %v4288
        %v4290 = vld [vmem:[%s4182 + $0xb4] sm:$0xf]
        %v4291 = vsel %vm4184, %v4123, %v4290
        %4292 = vst [vmem:[%s4182 + $0xb4] sm:$0xf] %v4291
        %4293 = vst [vmem:[%s4182 + $0xb8] sm:$0xf] %v4132
        %v4294 = vld [vmem:[%s4182 + $0xbc] sm:$0x1]
        %v4295 = vsel %vm328, %v4133, %v4294
        %4296 = vst [vmem:[%s4182 + $0xbc] sm:$0x1] %v4295
        %v4297 = vld [vmem:[#allocation3] sm:$0xf]
        %v4298 = vld [vmem:[#allocation3 + $0x4] sm:$0xf]
        %v4299 = vld [vmem:[#allocation3 + $0xc] sm:$0xf]
        %v4300 = vld [vmem:[#allocation3 + $0x10] sm:$0xf]
        %v4301 = vld [vmem:[#allocation3 + $0x18] sm:$0xf]
        %v4302 = vld [vmem:[#allocation3 + $0x1c] sm:$0xf]
        %v4303 = vld [vmem:[#allocation3 + $0x24] sm:$0xf]
        %v4304 = vld [vmem:[#allocation3 + $0x28] sm:$0xf]
        %v4305 = vld [vmem:[#allocation3 + $0x30] sm:$0xf]
        %v4306 = vld [vmem:[#allocation3 + $0x34] sm:$0xf]
        %v4307 = vld [vmem:[#allocation3 + $0x3c] sm:$0xf]
        %v4308 = vld [vmem:[#allocation3 + $0x40] sm:$0xf]
        %v4309 = vld [vmem:[#allocation3 + $0x48] sm:$0xf]
        %v4310 = vld [vmem:[#allocation3 + $0x4c] sm:$0xf]
        %v4311 = vld [vmem:[#allocation3 + $0x54] sm:$0xf]
        %v4312 = vld [vmem:[#allocation3 + $0x58] sm:$0xf]
        %v4313 = vld [vmem:[#allocation3 + $0x60] sm:$0xf]
        %v4314 = vld [vmem:[#allocation3 + $0x64] sm:$0xf]
        %v4315 = vld [vmem:[#allocation3 + $0x6c] sm:$0xf]
        %v4316 = vld [vmem:[#allocation3 + $0x70] sm:$0xf]
        %v4317 = vld [vmem:[#allocation3 + $0x78] sm:$0xf]
        %v4318 = vld [vmem:[#allocation3 + $0x7c] sm:$0xf]
        %v4319 = vld [vmem:[#allocation3 + $0x84] sm:$0xf]
        %v4320 = vld [vmem:[#allocation3 + $0x88] sm:$0xf]
        %v4321 = vld [vmem:[#allocation3 + $0x90] sm:$0xf]
        %v4322 = vld [vmem:[#allocation3 + $0x94] sm:$0xf]
        %v4323 = vld [vmem:[#allocation3 + $0x9c] sm:$0xf]
        %v4324 = vld [vmem:[#allocation3 + $0xa0] sm:$0xf]
        %v4325 = vld [vmem:[#allocation3 + $0xa8] sm:$0xf]
        %v4326 = vld [vmem:[#allocation3 + $0xac] sm:$0xf]
        %v4327 = vld [vmem:[#allocation3 + $0xb4] sm:$0xf]
        %v4328 = vld [vmem:[#allocation3 + $0xb8] sm:$0xf]
        %v4329 = vld [vmem:[#allocation9] sm:$0xf]
        %v4330 = vld [vmem:[#allocation9 + $0x4] sm:$0xf]
        %v4331 = vld [vmem:[#allocation9 + $0x8] sm:$0xf]
        %v4332 = vld [vmem:[#allocation9 + $0xc] sm:$0xf]
        %v4333 = vld [vmem:[#allocation9 + $0x10] sm:$0xf]
        %v4334 = vld [vmem:[#allocation9 + $0x14] sm:$0xf]
        %v4335 = vld [vmem:[#allocation9 + $0x18] sm:$0xf]
        %v4336 = vld [vmem:[#allocation9 + $0x1c] sm:$0xf]
        %v4337 = vld [vmem:[#allocation9 + $0x20] sm:$0xf]
        %v4338 = vld [vmem:[#allocation9 + $0x24] sm:$0xf]
        %v4339 = vld [vmem:[#allocation9 + $0x28] sm:$0xf]
        %v4340 = vld [vmem:[#allocation9 + $0x2c] sm:$0xf]
        %v4341 = vld [vmem:[#allocation9 + $0x30] sm:$0xf]
        %v4342 = vld [vmem:[#allocation9 + $0x34] sm:$0xf]
        %v4343 = vld [vmem:[#allocation9 + $0x38] sm:$0xf]
        %v4344 = vld [vmem:[#allocation9 + $0x3c] sm:$0xf]
        %v4345 = vld [vmem:[#allocation3 + $0x8] sm:$0x1]
        %v4346 = vld [vmem:[#allocation3 + $0x14] sm:$0x1]
        %v4347 = vld [vmem:[#allocation3 + $0x20] sm:$0x1]
        %v4348 = vld [vmem:[#allocation3 + $0x2c] sm:$0x1]
        %v4349 = vld [vmem:[#allocation3 + $0x38] sm:$0x1]
        %v4350 = vld [vmem:[#allocation3 + $0x44] sm:$0x1]
        %v4351 = vld [vmem:[#allocation3 + $0x50] sm:$0x1]
        %v4352 = vld [vmem:[#allocation3 + $0x5c] sm:$0x1]
        %v4353 = vld [vmem:[#allocation3 + $0x68] sm:$0x1]
        %v4354 = vld [vmem:[#allocation3 + $0x74] sm:$0x1]
        %v4355 = vld [vmem:[#allocation3 + $0x80] sm:$0x1]
        %v4356 = vld [vmem:[#allocation3 + $0x8c] sm:$0x1]
        %v4357 = vld [vmem:[#allocation3 + $0x98] sm:$0x1]
        %v4358 = vld [vmem:[#allocation3 + $0xa4] sm:$0x1]
        %v4359 = vld [vmem:[#allocation3 + $0xb0] sm:$0x1]
        %v4360 = vld [vmem:[#allocation3 + $0xbc] sm:$0x1]
        %vm4361 = vsmask.f32 3328
        %vm4362 = vsmask.f32 7440
        %vm4363 = vmor %vm4361, %vm4362
        %v4365 = vshrl.u32 %v4297, 16
        %v4367 = vrot.slane %v4365, 4
        %v4368 = vshll.u32 %v4297, 16
        %v4370 = vrot.slane %v4368, 5
        %v4371 = vor.u32 %v4367, %v4370
        %v4372 = vrot.slane %v4371, 4
        %v4374 = vshll.u32 %v4298, 16
        %v4376 = vrot.slane %v4374, 5
        %v4377 = vsel %vm4363, %v4372, %v4376
        %v4378 = vshrl.u32 %v4298, 16
        %v4380 = vrot.slane %v4378, 4
        %v4381 = vor.u32 %v4380, %v4376
        %v4382 = vrot.slane %v4381, 4
        %v4384 = vshll.u32 %v4345, 16
        %v4386 = vrot.slane %v4384, 5
        %v4387 = vsel %vm4363, %v4382, %v4386
        %v4389 = vshrl.u32 %v4299, 16
        %v4391 = vrot.slane %v4389, 4
        %v4392 = vshll.u32 %v4299, 16
        %v4394 = vrot.slane %v4392, 5
        %v4395 = vor.u32 %v4391, %v4394
        %v4396 = vrot.slane %v4395, 4
        %v4398 = vshll.u32 %v4300, 16
        %v4400 = vrot.slane %v4398, 5
        %v4401 = vsel %vm4363, %v4396, %v4400
        %v4402 = vshrl.u32 %v4300, 16
        %v4404 = vrot.slane %v4402, 4
        %v4405 = vor.u32 %v4404, %v4400
        %v4406 = vrot.slane %v4405, 4
        %v4408 = vshll.u32 %v4346, 16
        %v4410 = vrot.slane %v4408, 5
        %v4411 = vsel %vm4363, %v4406, %v4410
        %v4413 = vshrl.u32 %v4301, 16
        %v4415 = vrot.slane %v4413, 4
        %v4416 = vshll.u32 %v4301, 16
        %v4418 = vrot.slane %v4416, 5
        %v4419 = vor.u32 %v4415, %v4418
        %v4420 = vrot.slane %v4419, 4
        %v4422 = vshll.u32 %v4302, 16
        %v4424 = vrot.slane %v4422, 5
        %v4425 = vsel %vm4363, %v4420, %v4424
        %v4426 = vshrl.u32 %v4302, 16
        %v4428 = vrot.slane %v4426, 4
        %v4429 = vor.u32 %v4428, %v4424
        %v4430 = vrot.slane %v4429, 4
        %v4432 = vshll.u32 %v4347, 16
        %v4434 = vrot.slane %v4432, 5
        %v4435 = vsel %vm4363, %v4430, %v4434
        %v4437 = vshrl.u32 %v4303, 16
        %v4439 = vrot.slane %v4437, 4
        %v4440 = vshll.u32 %v4303, 16
        %v4442 = vrot.slane %v4440, 5
        %v4443 = vor.u32 %v4439, %v4442
        %v4444 = vrot.slane %v4443, 4
        %v4446 = vshll.u32 %v4304, 16
        %v4448 = vrot.slane %v4446, 5
        %v4449 = vsel %vm4363, %v4444, %v4448
        %v4450 = vshrl.u32 %v4304, 16
        %v4452 = vrot.slane %v4450, 4
        %v4453 = vor.u32 %v4452, %v4448
        %v4454 = vrot.slane %v4453, 4
        %v4456 = vshll.u32 %v4348, 16
        %v4458 = vrot.slane %v4456, 5
        %v4459 = vsel %vm4363, %v4454, %v4458
        %v4461 = vshrl.u32 %v4305, 16
        %v4463 = vrot.slane %v4461, 4
        %v4464 = vshll.u32 %v4305, 16
        %v4466 = vrot.slane %v4464, 5
        %v4467 = vor.u32 %v4463, %v4466
        %v4468 = vrot.slane %v4467, 4
        %v4470 = vshll.u32 %v4306, 16
        %v4472 = vrot.slane %v4470, 5
        %v4473 = vsel %vm4363, %v4468, %v4472
        %v4474 = vshrl.u32 %v4306, 16
        %v4476 = vrot.slane %v4474, 4
        %v4477 = vor.u32 %v4476, %v4472
        %v4478 = vrot.slane %v4477, 4
        %v4480 = vshll.u32 %v4349, 16
        %v4482 = vrot.slane %v4480, 5
        %v4483 = vsel %vm4363, %v4478, %v4482
        %v4485 = vshrl.u32 %v4307, 16
        %v4487 = vrot.slane %v4485, 4
        %v4488 = vshll.u32 %v4307, 16
        %v4490 = vrot.slane %v4488, 5
        %v4491 = vor.u32 %v4487, %v4490
        %v4492 = vrot.slane %v4491, 4
        %v4494 = vshll.u32 %v4308, 16
        %v4496 = vrot.slane %v4494, 5
        %v4497 = vsel %vm4363, %v4492, %v4496
        %v4498 = vshrl.u32 %v4308, 16
        %v4500 = vrot.slane %v4498, 4
        %v4501 = vor.u32 %v4500, %v4496
        %v4502 = vrot.slane %v4501, 4
        %v4504 = vshll.u32 %v4350, 16
        %v4506 = vrot.slane %v4504, 5
        %v4507 = vsel %vm4363, %v4502, %v4506
        %v4509 = vshrl.u32 %v4309, 16
        %v4511 = vrot.slane %v4509, 4
        %v4512 = vshll.u32 %v4309, 16
        %v4514 = vrot.slane %v4512, 5
        %v4515 = vor.u32 %v4511, %v4514
        %v4516 = vrot.slane %v4515, 4
        %v4518 = vshll.u32 %v4310, 16
        %v4520 = vrot.slane %v4518, 5
        %v4521 = vsel %vm4363, %v4516, %v4520
        %v4522 = vshrl.u32 %v4310, 16
        %v4524 = vrot.slane %v4522, 4
        %v4525 = vor.u32 %v4524, %v4520
        %v4526 = vrot.slane %v4525, 4
        %v4528 = vshll.u32 %v4351, 16
        %v4530 = vrot.slane %v4528, 5
        %v4531 = vsel %vm4363, %v4526, %v4530
        %v4533 = vshrl.u32 %v4311, 16
        %v4535 = vrot.slane %v4533, 4
        %v4536 = vshll.u32 %v4311, 16
        %v4538 = vrot.slane %v4536, 5
        %v4539 = vor.u32 %v4535, %v4538
        %v4540 = vrot.slane %v4539, 4
        %v4542 = vshll.u32 %v4312, 16
        %v4544 = vrot.slane %v4542, 5
        %v4545 = vsel %vm4363, %v4540, %v4544
        %v4546 = vshrl.u32 %v4312, 16
        %v4548 = vrot.slane %v4546, 4
        %v4549 = vor.u32 %v4548, %v4544
        %v4550 = vrot.slane %v4549, 4
        %v4552 = vshll.u32 %v4352, 16
        %v4554 = vrot.slane %v4552, 5
        %v4555 = vsel %vm4363, %v4550, %v4554
        %v4557 = vshrl.u32 %v4313, 16
        %v4559 = vrot.slane %v4557, 4
        %v4560 = vshll.u32 %v4313, 16
        %v4562 = vrot.slane %v4560, 5
        %v4563 = vor.u32 %v4559, %v4562
        %v4564 = vrot.slane %v4563, 4
        %v4566 = vshll.u32 %v4314, 16
        %v4568 = vrot.slane %v4566, 5
        %v4569 = vsel %vm4363, %v4564, %v4568
        %v4570 = vshrl.u32 %v4314, 16
        %v4572 = vrot.slane %v4570, 4
        %v4573 = vor.u32 %v4572, %v4568
        %v4574 = vrot.slane %v4573, 4
        %v4576 = vshll.u32 %v4353, 16
        %v4578 = vrot.slane %v4576, 5
        %v4579 = vsel %vm4363, %v4574, %v4578
        %v4581 = vshrl.u32 %v4315, 16
        %v4583 = vrot.slane %v4581, 4
        %v4584 = vshll.u32 %v4315, 16
        %v4586 = vrot.slane %v4584, 5
        %v4587 = vor.u32 %v4583, %v4586
        %v4588 = vrot.slane %v4587, 4
        %v4590 = vshll.u32 %v4316, 16
        %v4592 = vrot.slane %v4590, 5
        %v4593 = vsel %vm4363, %v4588, %v4592
        %v4594 = vshrl.u32 %v4316, 16
        %v4596 = vrot.slane %v4594, 4
        %v4597 = vor.u32 %v4596, %v4592
        %v4598 = vrot.slane %v4597, 4
        %v4600 = vshll.u32 %v4354, 16
        %v4602 = vrot.slane %v4600, 5
        %v4603 = vsel %vm4363, %v4598, %v4602
        %v4605 = vshrl.u32 %v4317, 16
        %v4607 = vrot.slane %v4605, 4
        %v4608 = vshll.u32 %v4317, 16
        %v4610 = vrot.slane %v4608, 5
        %v4611 = vor.u32 %v4607, %v4610
        %v4612 = vrot.slane %v4611, 4
        %v4614 = vshll.u32 %v4318, 16
        %v4616 = vrot.slane %v4614, 5
        %v4617 = vsel %vm4363, %v4612, %v4616
        %v4618 = vshrl.u32 %v4318, 16
        %v4620 = vrot.slane %v4618, 4
        %v4621 = vor.u32 %v4620, %v4616
        %v4622 = vrot.slane %v4621, 4
        %v4624 = vshll.u32 %v4355, 16
        %v4626 = vrot.slane %v4624, 5
        %v4627 = vsel %vm4363, %v4622, %v4626
        %v4629 = vshrl.u32 %v4319, 16
        %v4631 = vrot.slane %v4629, 4
        %v4632 = vshll.u32 %v4319, 16
        %v4634 = vrot.slane %v4632, 5
        %v4635 = vor.u32 %v4631, %v4634
        %v4636 = vrot.slane %v4635, 4
        %v4638 = vshll.u32 %v4320, 16
        %v4640 = vrot.slane %v4638, 5
        %v4641 = vsel %vm4363, %v4636, %v4640
        %v4642 = vshrl.u32 %v4320, 16
        %v4644 = vrot.slane %v4642, 4
        %v4645 = vor.u32 %v4644, %v4640
        %v4646 = vrot.slane %v4645, 4
        %v4648 = vshll.u32 %v4356, 16
        %v4650 = vrot.slane %v4648, 5
        %v4651 = vsel %vm4363, %v4646, %v4650
        %v4653 = vshrl.u32 %v4321, 16
        %v4655 = vrot.slane %v4653, 4
        %v4656 = vshll.u32 %v4321, 16
        %v4658 = vrot.slane %v4656, 5
        %v4659 = vor.u32 %v4655, %v4658
        %v4660 = vrot.slane %v4659, 4
        %v4662 = vshll.u32 %v4322, 16
        %v4664 = vrot.slane %v4662, 5
        %v4665 = vsel %vm4363, %v4660, %v4664
        %v4666 = vshrl.u32 %v4322, 16
        %v4668 = vrot.slane %v4666, 4
        %v4669 = vor.u32 %v4668, %v4664
        %v4670 = vrot.slane %v4669, 4
        %v4672 = vshll.u32 %v4357, 16
        %v4674 = vrot.slane %v4672, 5
        %v4675 = vsel %vm4363, %v4670, %v4674
        %v4677 = vshrl.u32 %v4323, 16
        %v4679 = vrot.slane %v4677, 4
        %v4680 = vshll.u32 %v4323, 16
        %v4682 = vrot.slane %v4680, 5
        %v4683 = vor.u32 %v4679, %v4682
        %v4684 = vrot.slane %v4683, 4
        %v4686 = vshll.u32 %v4324, 16
        %v4688 = vrot.slane %v4686, 5
        %v4689 = vsel %vm4363, %v4684, %v4688
        %v4690 = vshrl.u32 %v4324, 16
        %v4692 = vrot.slane %v4690, 4
        %v4693 = vor.u32 %v4692, %v4688
        %v4694 = vrot.slane %v4693, 4
        %v4696 = vshll.u32 %v4358, 16
        %v4698 = vrot.slane %v4696, 5
        %v4699 = vsel %vm4363, %v4694, %v4698
        %v4701 = vshrl.u32 %v4325, 16
        %v4703 = vrot.slane %v4701, 4
        %v4704 = vshll.u32 %v4325, 16
        %v4706 = vrot.slane %v4704, 5
        %v4707 = vor.u32 %v4703, %v4706
        %v4708 = vrot.slane %v4707, 4
        %v4710 = vshll.u32 %v4326, 16
        %v4712 = vrot.slane %v4710, 5
        %v4713 = vsel %vm4363, %v4708, %v4712
        %v4714 = vshrl.u32 %v4326, 16
        %v4716 = vrot.slane %v4714, 4
        %v4717 = vor.u32 %v4716, %v4712
        %v4718 = vrot.slane %v4717, 4
        %v4720 = vshll.u32 %v4359, 16
        %v4722 = vrot.slane %v4720, 5
        %v4723 = vsel %vm4363, %v4718, %v4722
        %v4725 = vshrl.u32 %v4327, 16
        %v4727 = vrot.slane %v4725, 4
        %v4728 = vshll.u32 %v4327, 16
        %v4730 = vrot.slane %v4728, 5
        %v4731 = vor.u32 %v4727, %v4730
        %v4732 = vrot.slane %v4731, 4
        %v4734 = vshll.u32 %v4328, 16
        %v4736 = vrot.slane %v4734, 5
        %v4737 = vsel %vm4363, %v4732, %v4736
        %v4738 = vshrl.u32 %v4328, 16
        %v4740 = vrot.slane %v4738, 4
        %v4741 = vor.u32 %v4740, %v4736
        %v4742 = vrot.slane %v4741, 4
        %v4744 = vshll.u32 %v4360, 16
        %v4746 = vrot.slane %v4744, 5
        %v4747 = vsel %vm4363, %v4742, %v4746
        %s4748 = scalar_lea.vmem [#allocation9], 64
        %v4749 = vld [vmem:[%s4748] sm:$0xf]
        %v4750 = vld [vmem:[%s4748 + $0x4] sm:$0xf]
        %v4751 = vld [vmem:[%s4748 + $0x8] sm:$0xf]
        %v4752 = vld [vmem:[%s4748 + $0xc] sm:$0xf]
        %v4753 = vld [vmem:[%s4748 + $0x10] sm:$0xf]
        %v4754 = vld [vmem:[%s4748 + $0x14] sm:$0xf]
        %v4755 = vld [vmem:[%s4748 + $0x18] sm:$0xf]
        %v4756 = vld [vmem:[%s4748 + $0x1c] sm:$0xf]
        %v4757 = vld [vmem:[%s4748 + $0x20] sm:$0xf]
        %v4758 = vld [vmem:[%s4748 + $0x24] sm:$0xf]
        %v4759 = vld [vmem:[%s4748 + $0x28] sm:$0xf]
        %v4760 = vld [vmem:[%s4748 + $0x2c] sm:$0xf]
        %v4761 = vld [vmem:[%s4748 + $0x30] sm:$0xf]
        %v4762 = vld [vmem:[%s4748 + $0x34] sm:$0xf]
        %v4763 = vld [vmem:[%s4748 + $0x38] sm:$0xf]
        %v4764 = vld [vmem:[%s4748 + $0x3c] sm:$0xf]
        %v4765 = vunpack.c.l.b16 %v4377
        %v4766 = vunpack.c.l.b16 %v4387
        %v4767 = vunpack.c.l.b16 %v4401
        %v4768 = vunpack.c.l.b16 %v4411
        %v4769 = vunpack.c.l.b16 %v4425
        %v4770 = vunpack.c.l.b16 %v4435
        %v4771 = vunpack.c.l.b16 %v4449
        %v4772 = vunpack.c.l.b16 %v4459
        %v4773 = vunpack.c.l.b16 %v4473
        %v4774 = vunpack.c.l.b16 %v4483
        %v4775 = vunpack.c.l.b16 %v4497
        %v4776 = vunpack.c.l.b16 %v4507
        %v4777 = vunpack.c.l.b16 %v4521
        %v4778 = vunpack.c.l.b16 %v4531
        %v4779 = vunpack.c.l.b16 %v4545
        %v4780 = vunpack.c.l.b16 %v4555
        %v4781 = vunpack.c.l.b16 %v4569
        %v4782 = vunpack.c.l.b16 %v4579
        %v4783 = vunpack.c.l.b16 %v4593
        %v4784 = vunpack.c.l.b16 %v4603
        %v4785 = vunpack.c.l.b16 %v4617
        %v4786 = vunpack.c.l.b16 %v4627
        %v4787 = vunpack.c.l.b16 %v4641
        %v4788 = vunpack.c.l.b16 %v4651
        %v4789 = vunpack.c.l.b16 %v4665
        %v4790 = vunpack.c.l.b16 %v4675
        %v4791 = vunpack.c.l.b16 %v4689
        %v4792 = vunpack.c.l.b16 %v4699
        %v4793 = vunpack.c.l.b16 %v4713
        %v4794 = vunpack.c.l.b16 %v4723
        %v4795 = vunpack.c.l.b16 %v4737
        %v4796 = vunpack.c.l.b16 %v4747
        %v4797 = vpack.c.b16 %v4766, %v4765
        %v4798 = vpack.c.b16 %v4768, %v4767
        %v4799 = vpack.c.b16 %v4770, %v4769
        %v4800 = vpack.c.b16 %v4772, %v4771
        %v4801 = vpack.c.b16 %v4774, %v4773
        %v4802 = vpack.c.b16 %v4776, %v4775
        %v4803 = vpack.c.b16 %v4778, %v4777
        %v4804 = vpack.c.b16 %v4780, %v4779
        %v4805 = vpack.c.b16 %v4782, %v4781
        %v4806 = vpack.c.b16 %v4784, %v4783
        %v4807 = vpack.c.b16 %v4786, %v4785
        %v4808 = vpack.c.b16 %v4788, %v4787
        %v4809 = vpack.c.b16 %v4790, %v4789
        %v4810 = vpack.c.b16 %v4792, %v4791
        %v4811 = vpack.c.b16 %v4794, %v4793
        %v4812 = vpack.c.b16 %v4796, %v4795
        %v4845 = vunpack.c.l.b16 %v4749
        %v4846 = vunpack.c.l.b16 %v4750
        %v4847 = vunpack.c.l.b16 %v4751
        %v4848 = vunpack.c.l.b16 %v4752
        %v4849 = vunpack.c.l.b16 %v4753
        %v4850 = vunpack.c.l.b16 %v4754
        %v4851 = vunpack.c.l.b16 %v4755
        %v4852 = vunpack.c.l.b16 %v4756
        %v4853 = vunpack.c.l.b16 %v4757
        %v4854 = vunpack.c.l.b16 %v4758
        %v4855 = vunpack.c.l.b16 %v4759
        %v4856 = vunpack.c.l.b16 %v4760
        %v4857 = vunpack.c.l.b16 %v4761
        %v4858 = vunpack.c.l.b16 %v4762
        %v4859 = vunpack.c.l.b16 %v4763
        %v4860 = vunpack.c.l.b16 %v4764
        %v4861 = vpack.c.b16 %v4846, %v4845
        %v4862 = vpack.c.b16 %v4848, %v4847
        %v4863 = vpack.c.b16 %v4850, %v4849
        %v4864 = vpack.c.b16 %v4852, %v4851
        %v4865 = vpack.c.b16 %v4854, %v4853
        %v4866 = vpack.c.b16 %v4856, %v4855
        %v4867 = vpack.c.b16 %v4858, %v4857
        %v4868 = vpack.c.b16 %v4860, %v4859
        %4877 = vmatprep.subr.bf16.mxu0 0
        %4878 = vmatpush1.bf16.msra.mxu0 %v4861
        %4879 = vmatprep.subr.bf16.mxu0 0
        %4880 = vmatpush1.bf16.msra.mxu0 %v4862
        %4881 = vmatprep.subr.bf16.mxu0 0
        %4882 = vmatpush1.bf16.msra.mxu0 %v4863
        %4883 = vmatprep.subr.bf16.mxu0 0
        %4884 = vmatpush1.bf16.msra.mxu0 %v4864
        %4885 = vmatprep.subr.bf16.mxu0 0
        %4886 = vmatpush1.bf16.msra.mxu0 %v4865
        %4887 = vmatprep.subr.bf16.mxu0 0
        %4888 = vmatpush1.bf16.msra.mxu0 %v4866
        %4889 = vmatprep.subr.bf16.mxu0 0
        %4890 = vmatpush1.bf16.msra.mxu0 %v4867
        %4891 = vmatprep.subr.bf16.mxu0 0
        %4892 = vmatpush1.bf16.msra.mxu0 %v4868
        %4893 = vmatprep.subr.bf16.mxu0 0
        %4894 = vmatpush1.bf16.msra.mxu0 0
        %4895 = vmatprep.subr.bf16.mxu0 0
        %4896 = vmatpush1.bf16.msra.mxu0 0
        %4897 = vmatprep.subr.bf16.mxu0 0
        %4898 = vmatpush1.bf16.msra.mxu0 0
        %4899 = vmatprep.subr.bf16.mxu0 0
        %4900 = vmatpush1.bf16.msra.mxu0 0
        %4901 = vmatprep.subr.bf16.mxu0 0
        %4902 = vmatpush1.bf16.msra.mxu0 0
        %4903 = vmatprep.subr.bf16.mxu0 0
        %4904 = vmatpush1.bf16.msra.mxu0 0
        %4905 = vmatprep.subr.bf16.mxu0 0
        %4906 = vmatpush1.bf16.msra.mxu0 0
        %4907 = vmatprep.subr.bf16.mxu0 0
        %4908 = vmatpush1.bf16.msra.mxu0 0
        %4909 = vmatprep.mubr.bf16.mxu0 0
        %4910 = vmatmul.mubr.bf16.gmra.mrb[0].mxu0 %v4797
        %v4911 = vpop.f32.mrb[0].mxu0
        %v4912 = vadd.f32 0.0, %v4911
        %v4913 = vpop.f32.mrb[0].mxu0
        %v4914 = vpop.f32.mrb[0].mxu0
        %v4915 = vadd.f32 0.0, %v4914
        %v4916 = vpop.f32.mrb[0].mxu0
        %4917 = vmatprep.mubr.bf16.mxu0 0
        %4918 = vmatmul.mubr.bf16.gmra.mrb[0].mxu0 %v4798
        %v4919 = vpop.f32.mrb[0].mxu0
        %v4920 = vadd.f32 0.0, %v4919
        %v4921 = vpop.f32.mrb[0].mxu0
        %v4922 = vpop.f32.mrb[0].mxu0
        %v4923 = vadd.f32 0.0, %v4922
        %v4924 = vpop.f32.mrb[0].mxu0
        %4925 = vmatprep.mubr.bf16.mxu0 0
        %4926 = vmatmul.mubr.bf16.gmra.mrb[0].mxu0 %v4799
        %v4927 = vpop.f32.mrb[0].mxu0
        %v4928 = vadd.f32 0.0, %v4927
        %v4929 = vpop.f32.mrb[0].mxu0
        %v4930 = vpop.f32.mrb[0].mxu0
        %v4931 = vadd.f32 0.0, %v4930
        %v4932 = vpop.f32.mrb[0].mxu0
        %4933 = vmatprep.mubr.bf16.mxu0 0
        %4934 = vmatmul.mubr.bf16.gmra.mrb[0].mxu0 %v4800
        %v4935 = vpop.f32.mrb[0].mxu0
        %v4936 = vadd.f32 0.0, %v4935
        %v4937 = vpop.f32.mrb[0].mxu0
        %v4938 = vpop.f32.mrb[0].mxu0
        %v4939 = vadd.f32 0.0, %v4938
        %v4940 = vpop.f32.mrb[0].mxu0
        %4941 = vmatprep.mubr.bf16.mxu0 0
        %4942 = vmatmul.mubr.bf16.gmra.mrb[0].mxu0 %v4801
        %v4943 = vpop.f32.mrb[0].mxu0
        %v4944 = vadd.f32 0.0, %v4943
        %v4945 = vpop.f32.mrb[0].mxu0
        %v4946 = vpop.f32.mrb[0].mxu0
        %v4947 = vadd.f32 0.0, %v4946
        %v4948 = vpop.f32.mrb[0].mxu0
        %4949 = vmatprep.mubr.bf16.mxu0 0
        %4950 = vmatmul.mubr.bf16.gmra.mrb[0].mxu0 %v4802
        %v4951 = vpop.f32.mrb[0].mxu0
        %v4952 = vadd.f32 0.0, %v4951
        %v4953 = vpop.f32.mrb[0].mxu0
        %v4954 = vpop.f32.mrb[0].mxu0
        %v4955 = vadd.f32 0.0, %v4954
        %v4956 = vpop.f32.mrb[0].mxu0
        %4957 = vmatprep.mubr.bf16.mxu0 0
        %4958 = vmatmul.mubr.bf16.gmra.mrb[0].mxu0 %v4803
        %v4959 = vpop.f32.mrb[0].mxu0
        %v4960 = vadd.f32 0.0, %v4959
        %v4961 = vpop.f32.mrb[0].mxu0
        %v4962 = vpop.f32.mrb[0].mxu0
        %v4963 = vadd.f32 0.0, %v4962
        %v4964 = vpop.f32.mrb[0].mxu0
        %4965 = vmatprep.mubr.bf16.mxu0 0
        %4966 = vmatmul.mubr.bf16.gmra.mrb[0].mxu0 %v4804
        %v4967 = vpop.f32.mrb[0].mxu0
        %v4968 = vadd.f32 0.0, %v4967
        %v4969 = vpop.f32.mrb[0].mxu0
        %v4970 = vpop.f32.mrb[0].mxu0
        %v4971 = vadd.f32 0.0, %v4970
        %v4972 = vpop.f32.mrb[0].mxu0
        %4973 = vmatprep.mubr.bf16.mxu0 0
        %4974 = vmatmul.mubr.bf16.gmra.mrb[0].mxu0 %v4805
        %v4975 = vpop.f32.mrb[0].mxu0
        %v4976 = vadd.f32 0.0, %v4975
        %v4977 = vpop.f32.mrb[0].mxu0
        %v4978 = vpop.f32.mrb[0].mxu0
        %v4979 = vadd.f32 0.0, %v4978
        %v4980 = vpop.f32.mrb[0].mxu0
        %4981 = vmatprep.mubr.bf16.mxu0 0
        %4982 = vmatmul.mubr.bf16.gmra.mrb[0].mxu0 %v4806
        %v4983 = vpop.f32.mrb[0].mxu0
        %v4984 = vadd.f32 0.0, %v4983
        %v4985 = vpop.f32.mrb[0].mxu0
        %v4986 = vpop.f32.mrb[0].mxu0
        %v4987 = vadd.f32 0.0, %v4986
        %v4988 = vpop.f32.mrb[0].mxu0
        %4989 = vmatprep.mubr.bf16.mxu0 0
        %4990 = vmatmul.mubr.bf16.gmra.mrb[0].mxu0 %v4807
        %v4991 = vpop.f32.mrb[0].mxu0
        %v4992 = vadd.f32 0.0, %v4991
        %v4993 = vpop.f32.mrb[0].mxu0
        %v4994 = vpop.f32.mrb[0].mxu0
        %v4995 = vadd.f32 0.0, %v4994
        %v4996 = vpop.f32.mrb[0].mxu0
        %4997 = vmatprep.mubr.bf16.mxu0 0
        %4998 = vmatmul.mubr.bf16.gmra.mrb[0].mxu0 %v4808
        %v4999 = vpop.f32.mrb[0].mxu0
        %v5000 = vadd.f32 0.0, %v4999
        %v5001 = vpop.f32.mrb[0].mxu0
        %v5002 = vpop.f32.mrb[0].mxu0
        %v5003 = vadd.f32 0.0, %v5002
        %v5004 = vpop.f32.mrb[0].mxu0
        %5005 = vmatprep.mubr.bf16.mxu0 0
        %5006 = vmatmul.mubr.bf16.gmra.mrb[0].mxu0 %v4809
        %v5007 = vpop.f32.mrb[0].mxu0
        %v5008 = vadd.f32 0.0, %v5007
        %v5009 = vpop.f32.mrb[0].mxu0
        %v5010 = vpop.f32.mrb[0].mxu0
        %v5011 = vadd.f32 0.0, %v5010
        %v5012 = vpop.f32.mrb[0].mxu0
        %5013 = vmatprep.mubr.bf16.mxu0 0
        %5014 = vmatmul.mubr.bf16.gmra.mrb[0].mxu0 %v4810
        %v5015 = vpop.f32.mrb[0].mxu0
        %v5016 = vadd.f32 0.0, %v5015
        %v5017 = vpop.f32.mrb[0].mxu0
        %v5018 = vpop.f32.mrb[0].mxu0
        %v5019 = vadd.f32 0.0, %v5018
        %v5020 = vpop.f32.mrb[0].mxu0
        %5021 = vmatprep.mubr.bf16.mxu0 0
        %5022 = vmatmul.mubr.bf16.gmra.mrb[0].mxu0 %v4811
        %v5023 = vpop.f32.mrb[0].mxu0
        %v5024 = vadd.f32 0.0, %v5023
        %v5025 = vpop.f32.mrb[0].mxu0
        %v5026 = vpop.f32.mrb[0].mxu0
        %v5027 = vadd.f32 0.0, %v5026
        %v5028 = vpop.f32.mrb[0].mxu0
        %5029 = vmatprep.mubr.bf16.mxu0 0
        %5030 = vmatmul.mubr.bf16.gmra.mrb[0].mxu0 %v4812
        %v5031 = vpop.f32.mrb[0].mxu0
        %v5032 = vadd.f32 0.0, %v5031
        %v5033 = vpop.f32.mrb[0].mxu0
        %v5034 = vpop.f32.mrb[0].mxu0
        %v5035 = vadd.f32 0.0, %v5034
        %v5036 = vpop.f32.mrb[0].mxu0
        %5037 = vdwg.mxu0
        %v5070 = vunpack.c.l.b16 %v4297
        %v5071 = vunpack.c.l.b16 %v4298
        %v5072 = vunpack.c.l.b16 %v4299
        %v5073 = vunpack.c.l.b16 %v4300
        %v5074 = vunpack.c.l.b16 %v4301
        %v5075 = vunpack.c.l.b16 %v4302
        %v5076 = vunpack.c.l.b16 %v4303
        %v5077 = vunpack.c.l.b16 %v4304
        %v5078 = vunpack.c.l.b16 %v4305
        %v5079 = vunpack.c.l.b16 %v4306
        %v5080 = vunpack.c.l.b16 %v4307
        %v5081 = vunpack.c.l.b16 %v4308
        %v5082 = vunpack.c.l.b16 %v4309
        %v5083 = vunpack.c.l.b16 %v4310
        %v5084 = vunpack.c.l.b16 %v4311
        %v5085 = vunpack.c.l.b16 %v4312
        %v5086 = vunpack.c.l.b16 %v4313
        %v5087 = vunpack.c.l.b16 %v4314
        %v5088 = vunpack.c.l.b16 %v4315
        %v5089 = vunpack.c.l.b16 %v4316
        %v5090 = vunpack.c.l.b16 %v4317
        %v5091 = vunpack.c.l.b16 %v4318
        %v5092 = vunpack.c.l.b16 %v4319
        %v5093 = vunpack.c.l.b16 %v4320
        %v5094 = vunpack.c.l.b16 %v4321
        %v5095 = vunpack.c.l.b16 %v4322
        %v5096 = vunpack.c.l.b16 %v4323
        %v5097 = vunpack.c.l.b16 %v4324
        %v5098 = vunpack.c.l.b16 %v4325
        %v5099 = vunpack.c.l.b16 %v4326
        %v5100 = vunpack.c.l.b16 %v4327
        %v5101 = vunpack.c.l.b16 %v4328
        %v5102 = vpack.c.b16 %v5071, %v5070
        %v5103 = vpack.c.b16 %v5073, %v5072
        %v5104 = vpack.c.b16 %v5075, %v5074
        %v5105 = vpack.c.b16 %v5077, %v5076
        %v5106 = vpack.c.b16 %v5079, %v5078
        %v5107 = vpack.c.b16 %v5081, %v5080
        %v5108 = vpack.c.b16 %v5083, %v5082
        %v5109 = vpack.c.b16 %v5085, %v5084
        %v5110 = vpack.c.b16 %v5087, %v5086
        %v5111 = vpack.c.b16 %v5089, %v5088
        %v5112 = vpack.c.b16 %v5091, %v5090
        %v5113 = vpack.c.b16 %v5093, %v5092
        %v5114 = vpack.c.b16 %v5095, %v5094
        %v5115 = vpack.c.b16 %v5097, %v5096
        %v5116 = vpack.c.b16 %v5099, %v5098
        %v5117 = vpack.c.b16 %v5101, %v5100
        %v5150 = vunpack.c.l.b16 %v4329
        %v5151 = vunpack.c.l.b16 %v4330
        %v5152 = vunpack.c.l.b16 %v4331
        %v5153 = vunpack.c.l.b16 %v4332
        %v5154 = vunpack.c.l.b16 %v4333
        %v5155 = vunpack.c.l.b16 %v4334
        %v5156 = vunpack.c.l.b16 %v4335
        %v5157 = vunpack.c.l.b16 %v4336
        %v5158 = vunpack.c.l.b16 %v4337
        %v5159 = vunpack.c.l.b16 %v4338
        %v5160 = vunpack.c.l.b16 %v4339
        %v5161 = vunpack.c.l.b16 %v4340
        %v5162 = vunpack.c.l.b16 %v4341
        %v5163 = vunpack.c.l.b16 %v4342
        %v5164 = vunpack.c.l.b16 %v4343
        %v5165 = vunpack.c.l.b16 %v4344
        %v5166 = vpack.c.b16 %v5151, %v5150
        %v5167 = vpack.c.b16 %v5153, %v5152
        %v5168 = vpack.c.b16 %v5155, %v5154
        %v5169 = vpack.c.b16 %v5157, %v5156
        %v5170 = vpack.c.b16 %v5159, %v5158
        %v5171 = vpack.c.b16 %v5161, %v5160
        %v5172 = vpack.c.b16 %v5163, %v5162
        %v5173 = vpack.c.b16 %v5165, %v5164
        %5182 = vmatprep.subr.bf16.mxu0 0
        %5183 = vmatpush1.bf16.msra.mxu0 %v5166
        %5184 = vmatprep.subr.bf16.mxu0 0
        %5185 = vmatpush1.bf16.msra.mxu0 %v5167
        %5186 = vmatprep.subr.bf16.mxu0 0
        %5187 = vmatpush1.bf16.msra.mxu0 %v5168
        %5188 = vmatprep.subr.bf16.mxu0 0
        %5189 = vmatpush1.bf16.msra.mxu0 %v5169
        %5190 = vmatprep.subr.bf16.mxu0 0
        %5191 = vmatpush1.bf16.msra.mxu0 %v5170
        %5192 = vmatprep.subr.bf16.mxu0 0
        %5193 = vmatpush1.bf16.msra.mxu0 %v5171
        %5194 = vmatprep.subr.bf16.mxu0 0
        %5195 = vmatpush1.bf16.msra.mxu0 %v5172
        %5196 = vmatprep.subr.bf16.mxu0 0
        %5197 = vmatpush1.bf16.msra.mxu0 %v5173
        %5198 = vmatprep.subr.bf16.mxu0 0
        %5199 = vmatpush1.bf16.msra.mxu0 0
        %5200 = vmatprep.subr.bf16.mxu0 0
        %5201 = vmatpush1.bf16.msra.mxu0 0
        %5202 = vmatprep.subr.bf16.mxu0 0
        %5203 = vmatpush1.bf16.msra.mxu0 0
        %5204 = vmatprep.subr.bf16.mxu0 0
        %5205 = vmatpush1.bf16.msra.mxu0 0
        %5206 = vmatprep.subr.bf16.mxu0 0
        %5207 = vmatpush1.bf16.msra.mxu0 0
        %5208 = vmatprep.subr.bf16.mxu0 0
        %5209 = vmatpush1.bf16.msra.mxu0 0
        %5210 = vmatprep.subr.bf16.mxu0 0
        %5211 = vmatpush1.bf16.msra.mxu0 0
        %5212 = vmatprep.subr.bf16.mxu0 0
        %5213 = vmatpush1.bf16.msra.mxu0 0
        %5214 = vmatprep.mubr.bf16.mxu0 0
        %5215 = vmatmul.mubr.bf16.gmra.mrb[0].mxu0 %v5102
        %v5216 = vpop.f32.mrb[0].mxu0
        %v5217 = vadd.f32 %v4912, %v5216
        %v5218 = vpop.f32.mrb[0].mxu0
        %v5219 = vpop.f32.mrb[0].mxu0
        %v5220 = vadd.f32 %v4915, %v5219
        %v5221 = vpop.f32.mrb[0].mxu0
        %5222 = vmatprep.mubr.bf16.mxu0 0
        %5223 = vmatmul.mubr.bf16.gmra.mrb[0].mxu0 %v5103
        %v5224 = vpop.f32.mrb[0].mxu0
        %v5225 = vadd.f32 %v4920, %v5224
        %v5226 = vpop.f32.mrb[0].mxu0
        %v5227 = vpop.f32.mrb[0].mxu0
        %v5228 = vadd.f32 %v4923, %v5227
        %v5229 = vpop.f32.mrb[0].mxu0
        %5230 = vmatprep.mubr.bf16.mxu0 0
        %5231 = vmatmul.mubr.bf16.gmra.mrb[0].mxu0 %v5104
        %v5232 = vpop.f32.mrb[0].mxu0
        %v5233 = vadd.f32 %v4928, %v5232
        %v5234 = vpop.f32.mrb[0].mxu0
        %v5235 = vpop.f32.mrb[0].mxu0
        %v5236 = vadd.f32 %v4931, %v5235
        %v5237 = vpop.f32.mrb[0].mxu0
        %5238 = vmatprep.mubr.bf16.mxu0 0
        %5239 = vmatmul.mubr.bf16.gmra.mrb[0].mxu0 %v5105
        %v5240 = vpop.f32.mrb[0].mxu0
        %v5241 = vadd.f32 %v4936, %v5240
        %v5242 = vpop.f32.mrb[0].mxu0
        %v5243 = vpop.f32.mrb[0].mxu0
        %v5244 = vadd.f32 %v4939, %v5243
        %v5245 = vpop.f32.mrb[0].mxu0
        %5246 = vmatprep.mubr.bf16.mxu0 0
        %5247 = vmatmul.mubr.bf16.gmra.mrb[0].mxu0 %v5106
        %v5248 = vpop.f32.mrb[0].mxu0
        %v5249 = vadd.f32 %v4944, %v5248
        %v5250 = vpop.f32.mrb[0].mxu0
        %v5251 = vpop.f32.mrb[0].mxu0
        %v5252 = vadd.f32 %v4947, %v5251
        %v5253 = vpop.f32.mrb[0].mxu0
        %5254 = vmatprep.mubr.bf16.mxu0 0
        %5255 = vmatmul.mubr.bf16.gmra.mrb[0].mxu0 %v5107
        %v5256 = vpop.f32.mrb[0].mxu0
        %v5257 = vadd.f32 %v4952, %v5256
        %v5258 = vpop.f32.mrb[0].mxu0
        %v5259 = vpop.f32.mrb[0].mxu0
        %v5260 = vadd.f32 %v4955, %v5259
        %v5261 = vpop.f32.mrb[0].mxu0
        %5262 = vmatprep.mubr.bf16.mxu0 0
        %5263 = vmatmul.mubr.bf16.gmra.mrb[0].mxu0 %v5108
        %v5264 = vpop.f32.mrb[0].mxu0
        %v5265 = vadd.f32 %v4960, %v5264
        %v5266 = vpop.f32.mrb[0].mxu0
        %v5267 = vpop.f32.mrb[0].mxu0
        %v5268 = vadd.f32 %v4963, %v5267
        %v5269 = vpop.f32.mrb[0].mxu0
        %5270 = vmatprep.mubr.bf16.mxu0 0
        %5271 = vmatmul.mubr.bf16.gmra.mrb[0].mxu0 %v5109
        %v5272 = vpop.f32.mrb[0].mxu0
        %v5273 = vadd.f32 %v4968, %v5272
        %v5274 = vpop.f32.mrb[0].mxu0
        %v5275 = vpop.f32.mrb[0].mxu0
        %v5276 = vadd.f32 %v4971, %v5275
        %v5277 = vpop.f32.mrb[0].mxu0
        %5278 = vmatprep.mubr.bf16.mxu0 0
        %5279 = vmatmul.mubr.bf16.gmra.mrb[0].mxu0 %v5110
        %v5280 = vpop.f32.mrb[0].mxu0
        %v5281 = vadd.f32 %v4976, %v5280
        %v5282 = vpop.f32.mrb[0].mxu0
        %v5283 = vpop.f32.mrb[0].mxu0
        %v5284 = vadd.f32 %v4979, %v5283
        %v5285 = vpop.f32.mrb[0].mxu0
        %5286 = vmatprep.mubr.bf16.mxu0 0
        %5287 = vmatmul.mubr.bf16.gmra.mrb[0].mxu0 %v5111
        %v5288 = vpop.f32.mrb[0].mxu0
        %v5289 = vadd.f32 %v4984, %v5288
        %v5290 = vpop.f32.mrb[0].mxu0
        %v5291 = vpop.f32.mrb[0].mxu0
        %v5292 = vadd.f32 %v4987, %v5291
        %v5293 = vpop.f32.mrb[0].mxu0
        %5294 = vmatprep.mubr.bf16.mxu0 0
        %5295 = vmatmul.mubr.bf16.gmra.mrb[0].mxu0 %v5112
        %v5296 = vpop.f32.mrb[0].mxu0
        %v5297 = vadd.f32 %v4992, %v5296
        %v5298 = vpop.f32.mrb[0].mxu0
        %v5299 = vpop.f32.mrb[0].mxu0
        %v5300 = vadd.f32 %v4995, %v5299
        %v5301 = vpop.f32.mrb[0].mxu0
        %5302 = vmatprep.mubr.bf16.mxu0 0
        %5303 = vmatmul.mubr.bf16.gmra.mrb[0].mxu0 %v5113
        %v5304 = vpop.f32.mrb[0].mxu0
        %v5305 = vadd.f32 %v5000, %v5304
        %v5306 = vpop.f32.mrb[0].mxu0
        %v5307 = vpop.f32.mrb[0].mxu0
        %v5308 = vadd.f32 %v5003, %v5307
        %v5309 = vpop.f32.mrb[0].mxu0
        %5310 = vmatprep.mubr.bf16.mxu0 0
        %5311 = vmatmul.mubr.bf16.gmra.mrb[0].mxu0 %v5114
        %v5312 = vpop.f32.mrb[0].mxu0
        %v5313 = vadd.f32 %v5008, %v5312
        %v5314 = vpop.f32.mrb[0].mxu0
        %v5315 = vpop.f32.mrb[0].mxu0
        %v5316 = vadd.f32 %v5011, %v5315
        %v5317 = vpop.f32.mrb[0].mxu0
        %5318 = vmatprep.mubr.bf16.mxu0 0
        %5319 = vmatmul.mubr.bf16.gmra.mrb[0].mxu0 %v5115
        %v5320 = vpop.f32.mrb[0].mxu0
        %v5321 = vadd.f32 %v5016, %v5320
        %v5322 = vpop.f32.mrb[0].mxu0
        %v5323 = vpop.f32.mrb[0].mxu0
        %v5324 = vadd.f32 %v5019, %v5323
        %v5325 = vpop.f32.mrb[0].mxu0
        %5326 = vmatprep.mubr.bf16.mxu0 0
        %5327 = vmatmul.mubr.bf16.gmra.mrb[0].mxu0 %v5116
        %v5328 = vpop.f32.mrb[0].mxu0
        %v5329 = vadd.f32 %v5024, %v5328
        %v5330 = vpop.f32.mrb[0].mxu0
        %v5331 = vpop.f32.mrb[0].mxu0
        %v5332 = vadd.f32 %v5027, %v5331
        %v5333 = vpop.f32.mrb[0].mxu0
        %5334 = vmatprep.mubr.bf16.mxu0 0
        %5335 = vmatmul.mubr.bf16.gmra.mrb[0].mxu0 %v5117
        %v5336 = vpop.f32.mrb[0].mxu0
        %v5337 = vadd.f32 %v5032, %v5336
        %v5338 = vpop.f32.mrb[0].mxu0
        %v5339 = vpop.f32.mrb[0].mxu0
        %v5340 = vadd.f32 %v5035, %v5339
        %v5341 = vpop.f32.mrb[0].mxu0
        %5342 = vdwg.mxu0
        %v5343 = vld [vmem:[#allocation3] sm:$0xe]
        %v5344 = vld [vmem:[#allocation3 + $0xc] sm:$0xe]
        %v5345 = vld [vmem:[#allocation3 + $0x18] sm:$0xe]
        %v5346 = vld [vmem:[#allocation3 + $0x24] sm:$0xe]
        %v5347 = vld [vmem:[#allocation3 + $0x30] sm:$0xe]
        %v5348 = vld [vmem:[#allocation3 + $0x3c] sm:$0xe]
        %v5349 = vld [vmem:[#allocation3 + $0x48] sm:$0xe]
        %v5350 = vld [vmem:[#allocation3 + $0x54] sm:$0xe]
        %v5351 = vld [vmem:[#allocation3 + $0x60] sm:$0xe]
        %v5352 = vld [vmem:[#allocation3 + $0x6c] sm:$0xe]
        %v5353 = vld [vmem:[#allocation3 + $0x78] sm:$0xe]
        %v5354 = vld [vmem:[#allocation3 + $0x84] sm:$0xe]
        %v5355 = vld [vmem:[#allocation3 + $0x90] sm:$0xe]
        %v5356 = vld [vmem:[#allocation3 + $0x9c] sm:$0xe]
        %v5357 = vld [vmem:[#allocation3 + $0xa8] sm:$0xe]
        %v5358 = vld [vmem:[#allocation3 + $0xb4] sm:$0xe]
        %vm5391 = vcmask 1042432
        %vm5392 = vcmask 1046532
        %vm5393 = vmor %vm5391, %vm5392
        %v5394 = vrot.slane %v5343, 5
        %v5395 = vrot.slane %v5394, 4
        %v5396 = vrot.slane %v4298, 5
        %v5397 = vsel %vm5393, %v5395, %v5396
        %v5398 = vrot.slane %v5396, 4
        %v5399 = vrot.slane %v4345, 5
        %v5400 = vsel %vm5393, %v5398, %v5399
        %v5401 = vrot.slane %v5344, 5
        %v5402 = vrot.slane %v5401, 4
        %v5403 = vrot.slane %v4300, 5
        %v5404 = vsel %vm5393, %v5402, %v5403
        %v5405 = vrot.slane %v5403, 4
        %v5406 = vrot.slane %v4346, 5
        %v5407 = vsel %vm5393, %v5405, %v5406
        %v5408 = vrot.slane %v5345, 5
        %v5409 = vrot.slane %v5408, 4
        %v5410 = vrot.slane %v4302, 5
        %v5411 = vsel %vm5393, %v5409, %v5410
        %v5412 = vrot.slane %v5410, 4
        %v5413 = vrot.slane %v4347, 5
        %v5414 = vsel %vm5393, %v5412, %v5413
        %v5415 = vrot.slane %v5346, 5
        %v5416 = vrot.slane %v5415, 4
        %v5417 = vrot.slane %v4304, 5
        %v5418 = vsel %vm5393, %v5416, %v5417
        %v5419 = vrot.slane %v5417, 4
        %v5420 = vrot.slane %v4348, 5
        %v5421 = vsel %vm5393, %v5419, %v5420
        %v5422 = vrot.slane %v5347, 5
        %v5423 = vrot.slane %v5422, 4
        %v5424 = vrot.slane %v4306, 5
        %v5425 = vsel %vm5393, %v5423, %v5424
        %v5426 = vrot.slane %v5424, 4
        %v5427 = vrot.slane %v4349, 5
        %v5428 = vsel %vm5393, %v5426, %v5427
        %v5429 = vrot.slane %v5348, 5
        %v5430 = vrot.slane %v5429, 4
        %v5431 = vrot.slane %v4308, 5
        %v5432 = vsel %vm5393, %v5430, %v5431
        %v5433 = vrot.slane %v5431, 4
        %v5434 = vrot.slane %v4350, 5
        %v5435 = vsel %vm5393, %v5433, %v5434
        %v5436 = vrot.slane %v5349, 5
        %v5437 = vrot.slane %v5436, 4
        %v5438 = vrot.slane %v4310, 5
        %v5439 = vsel %vm5393, %v5437, %v5438
        %v5440 = vrot.slane %v5438, 4
        %v5441 = vrot.slane %v4351, 5
        %v5442 = vsel %vm5393, %v5440, %v5441
        %v5443 = vrot.slane %v5350, 5
        %v5444 = vrot.slane %v5443, 4
        %v5445 = vrot.slane %v4312, 5
        %v5446 = vsel %vm5393, %v5444, %v5445
        %v5447 = vrot.slane %v5445, 4
        %v5448 = vrot.slane %v4352, 5
        %v5449 = vsel %vm5393, %v5447, %v5448
        %v5450 = vrot.slane %v5351, 5
        %v5451 = vrot.slane %v5450, 4
        %v5452 = vrot.slane %v4314, 5
        %v5453 = vsel %vm5393, %v5451, %v5452
        %v5454 = vrot.slane %v5452, 4
        %v5455 = vrot.slane %v4353, 5
        %v5456 = vsel %vm5393, %v5454, %v5455
        %v5457 = vrot.slane %v5352, 5
        %v5458 = vrot.slane %v5457, 4
        %v5459 = vrot.slane %v4316, 5
        %v5460 = vsel %vm5393, %v5458, %v5459
        %v5461 = vrot.slane %v5459, 4
        %v5462 = vrot.slane %v4354, 5
        %v5463 = vsel %vm5393, %v5461, %v5462
        %v5464 = vrot.slane %v5353, 5
        %v5465 = vrot.slane %v5464, 4
        %v5466 = vrot.slane %v4318, 5
        %v5467 = vsel %vm5393, %v5465, %v5466
        %v5468 = vrot.slane %v5466, 4
        %v5469 = vrot.slane %v4355, 5
        %v5470 = vsel %vm5393, %v5468, %v5469
        %v5471 = vrot.slane %v5354, 5
        %v5472 = vrot.slane %v5471, 4
        %v5473 = vrot.slane %v4320, 5
        %v5474 = vsel %vm5393, %v5472, %v5473
        %v5475 = vrot.slane %v5473, 4
        %v5476 = vrot.slane %v4356, 5
        %v5477 = vsel %vm5393, %v5475, %v5476
        %v5478 = vrot.slane %v5355, 5
        %v5479 = vrot.slane %v5478, 4
        %v5480 = vrot.slane %v4322, 5
        %v5481 = vsel %vm5393, %v5479, %v5480
        %v5482 = vrot.slane %v5480, 4
        %v5483 = vrot.slane %v4357, 5
        %v5484 = vsel %vm5393, %v5482, %v5483
        %v5485 = vrot.slane %v5356, 5
        %v5486 = vrot.slane %v5485, 4
        %v5487 = vrot.slane %v4324, 5
        %v5488 = vsel %vm5393, %v5486, %v5487
        %v5489 = vrot.slane %v5487, 4
        %v5490 = vrot.slane %v4358, 5
        %v5491 = vsel %vm5393, %v5489, %v5490
        %v5492 = vrot.slane %v5357, 5
        %v5493 = vrot.slane %v5492, 4
        %v5494 = vrot.slane %v4326, 5
        %v5495 = vsel %vm5393, %v5493, %v5494
        %v5496 = vrot.slane %v5494, 4
        %v5497 = vrot.slane %v4359, 5
        %v5498 = vsel %vm5393, %v5496, %v5497
        %v5499 = vrot.slane %v5358, 5
        %v5500 = vrot.slane %v5499, 4
        %v5501 = vrot.slane %v4328, 5
        %v5502 = vsel %vm5393, %v5500, %v5501
        %v5503 = vrot.slane %v5501, 4
        %v5504 = vrot.slane %v4360, 5
        %v5505 = vsel %vm5393, %v5503, %v5504
        %s5506 = scalar_lea.vmem [#allocation9], 128
        %v5507 = vld [vmem:[%s5506] sm:$0xf]
        %v5508 = vld [vmem:[%s5506 + $0x4] sm:$0xf]
        %v5509 = vld [vmem:[%s5506 + $0x8] sm:$0xf]
        %v5510 = vld [vmem:[%s5506 + $0xc] sm:$0xf]
        %v5511 = vld [vmem:[%s5506 + $0x10] sm:$0xf]
        %v5512 = vld [vmem:[%s5506 + $0x14] sm:$0xf]
        %v5513 = vld [vmem:[%s5506 + $0x18] sm:$0xf]
        %v5514 = vld [vmem:[%s5506 + $0x1c] sm:$0xf]
        %v5515 = vld [vmem:[%s5506 + $0x20] sm:$0xf]
        %v5516 = vld [vmem:[%s5506 + $0x24] sm:$0xf]
        %v5517 = vld [vmem:[%s5506 + $0x28] sm:$0xf]
        %v5518 = vld [vmem:[%s5506 + $0x2c] sm:$0xf]
        %v5519 = vld [vmem:[%s5506 + $0x30] sm:$0xf]
        %v5520 = vld [vmem:[%s5506 + $0x34] sm:$0xf]
        %v5521 = vld [vmem:[%s5506 + $0x38] sm:$0xf]
        %v5522 = vld [vmem:[%s5506 + $0x3c] sm:$0xf]
        %v5523 = vunpack.c.l.b16 %v5397
        %v5524 = vunpack.c.l.b16 %v5400
        %v5525 = vunpack.c.l.b16 %v5404
        %v5526 = vunpack.c.l.b16 %v5407
        %v5527 = vunpack.c.l.b16 %v5411
        %v5528 = vunpack.c.l.b16 %v5414
        %v5529 = vunpack.c.l.b16 %v5418
        %v5530 = vunpack.c.l.b16 %v5421
        %v5531 = vunpack.c.l.b16 %v5425
        %v5532 = vunpack.c.l.b16 %v5428
        %v5533 = vunpack.c.l.b16 %v5432
        %v5534 = vunpack.c.l.b16 %v5435
        %v5535 = vunpack.c.l.b16 %v5439
        %v5536 = vunpack.c.l.b16 %v5442
        %v5537 = vunpack.c.l.b16 %v5446
        %v5538 = vunpack.c.l.b16 %v5449
        %v5539 = vunpack.c.l.b16 %v5453
        %v5540 = vunpack.c.l.b16 %v5456
        %v5541 = vunpack.c.l.b16 %v5460
        %v5542 = vunpack.c.l.b16 %v5463
        %v5543 = vunpack.c.l.b16 %v5467
        %v5544 = vunpack.c.l.b16 %v5470
        %v5545 = vunpack.c.l.b16 %v5474
        %v5546 = vunpack.c.l.b16 %v5477
        %v5547 = vunpack.c.l.b16 %v5481
        %v5548 = vunpack.c.l.b16 %v5484
        %v5549 = vunpack.c.l.b16 %v5488
        %v5550 = vunpack.c.l.b16 %v5491
        %v5551 = vunpack.c.l.b16 %v5495
        %v5552 = vunpack.c.l.b16 %v5498
        %v5553 = vunpack.c.l.b16 %v5502
        %v5554 = vunpack.c.l.b16 %v5505
        %v5555 = vpack.c.b16 %v5524, %v5523
        %v5556 = vpack.c.b16 %v5526, %v5525
        %v5557 = vpack.c.b16 %v5528, %v5527
        %v5558 = vpack.c.b16 %v5530, %v5529
        %v5559 = vpack.c.b16 %v5532, %v5531
        %v5560 = vpack.c.b16 %v5534, %v5533
        %v5561 = vpack.c.b16 %v5536, %v5535
        %v5562 = vpack.c.b16 %v5538, %v5537
        %v5563 = vpack.c.b16 %v5540, %v5539
        %v5564 = vpack.c.b16 %v5542, %v5541
        %v5565 = vpack.c.b16 %v5544, %v5543
        %v5566 = vpack.c.b16 %v5546, %v5545
        %v5567 = vpack.c.b16 %v5548, %v5547
        %v5568 = vpack.c.b16 %v5550, %v5549
        %v5569 = vpack.c.b16 %v5552, %v5551
        %v5570 = vpack.c.b16 %v5554, %v5553
        %v5603 = vunpack.c.l.b16 %v5507
        %v5604 = vunpack.c.l.b16 %v5508
        %v5605 = vunpack.c.l.b16 %v5509
        %v5606 = vunpack.c.l.b16 %v5510
        %v5607 = vunpack.c.l.b16 %v5511
        %v5608 = vunpack.c.l.b16 %v5512
        %v5609 = vunpack.c.l.b16 %v5513
        %v5610 = vunpack.c.l.b16 %v5514
        %v5611 = vunpack.c.l.b16 %v5515
        %v5612 = vunpack.c.l.b16 %v5516
        %v5613 = vunpack.c.l.b16 %v5517
        %v5614 = vunpack.c.l.b16 %v5518
        %v5615 = vunpack.c.l.b16 %v5519
        %v5616 = vunpack.c.l.b16 %v5520
        %v5617 = vunpack.c.l.b16 %v5521
        %v5618 = vunpack.c.l.b16 %v5522
        %v5619 = vpack.c.b16 %v5604, %v5603
        %v5620 = vpack.c.b16 %v5606, %v5605
        %v5621 = vpack.c.b16 %v5608, %v5607
        %v5622 = vpack.c.b16 %v5610, %v5609
        %v5623 = vpack.c.b16 %v5612, %v5611
        %v5624 = vpack.c.b16 %v5614, %v5613
        %v5625 = vpack.c.b16 %v5616, %v5615
        %v5626 = vpack.c.b16 %v5618, %v5617
        %5635 = vmatprep.subr.bf16.mxu0 0
        %5636 = vmatpush1.bf16.msra.mxu0 %v5619
        %5637 = vmatprep.subr.bf16.mxu0 0
        %5638 = vmatpush1.bf16.msra.mxu0 %v5620
        %5639 = vmatprep.subr.bf16.mxu0 0
        %5640 = vmatpush1.bf16.msra.mxu0 %v5621
        %5641 = vmatprep.subr.bf16.mxu0 0
        %5642 = vmatpush1.bf16.msra.mxu0 %v5622
        %5643 = vmatprep.subr.bf16.mxu0 0
        %5644 = vmatpush1.bf16.msra.mxu0 %v5623
        %5645 = vmatprep.subr.bf16.mxu0 0
        %5646 = vmatpush1.bf16.msra.mxu0 %v5624
        %5647 = vmatprep.subr.bf16.mxu0 0
        %5648 = vmatpush1.bf16.msra.mxu0 %v5625
        %5649 = vmatprep.subr.bf16.mxu0 0
        %5650 = vmatpush1.bf16.msra.mxu0 %v5626
        %5651 = vmatprep.subr.bf16.mxu0 0
        %5652 = vmatpush1.bf16.msra.mxu0 0
        %5653 = vmatprep.subr.bf16.mxu0 0
        %5654 = vmatpush1.bf16.msra.mxu0 0
        %5655 = vmatprep.subr.bf16.mxu0 0
        %5656 = vmatpush1.bf16.msra.mxu0 0
        %5657 = vmatprep.subr.bf16.mxu0 0
        %5658 = vmatpush1.bf16.msra.mxu0 0
        %5659 = vmatprep.subr.bf16.mxu0 0
        %5660 = vmatpush1.bf16.msra.mxu0 0
        %5661 = vmatprep.subr.bf16.mxu0 0
        %5662 = vmatpush1.bf16.msra.mxu0 0
        %5663 = vmatprep.subr.bf16.mxu0 0
        %5664 = vmatpush1.bf16.msra.mxu0 0
        %5665 = vmatprep.subr.bf16.mxu0 0
        %5666 = vmatpush1.bf16.msra.mxu0 0
        %5667 = vmatprep.mubr.bf16.mxu0 0
        %5668 = vmatmul.mubr.bf16.gmra.mrb[0].mxu0 %v5555
        %v5669 = vpop.f32.mrb[0].mxu0
        %v5670 = vadd.f32 0.0, %v5669
        %v5671 = vpop.f32.mrb[0].mxu0
        %v5672 = vpop.f32.mrb[0].mxu0
        %v5673 = vadd.f32 0.0, %v5672
        %v5674 = vpop.f32.mrb[0].mxu0
        %5675 = vmatprep.mubr.bf16.mxu0 0
        %5676 = vmatmul.mubr.bf16.gmra.mrb[0].mxu0 %v5556
        %v5677 = vpop.f32.mrb[0].mxu0
        %v5678 = vadd.f32 0.0, %v5677
        %v5679 = vpop.f32.mrb[0].mxu0
        %v5680 = vpop.f32.mrb[0].mxu0
        %v5681 = vadd.f32 0.0, %v5680
        %v5682 = vpop.f32.mrb[0].mxu0
        %5683 = vmatprep.mubr.bf16.mxu0 0
        %5684 = vmatmul.mubr.bf16.gmra.mrb[0].mxu0 %v5557
        %v5685 = vpop.f32.mrb[0].mxu0
        %v5686 = vadd.f32 0.0, %v5685
        %v5687 = vpop.f32.mrb[0].mxu0
        %v5688 = vpop.f32.mrb[0].mxu0
        %v5689 = vadd.f32 0.0, %v5688
        %v5690 = vpop.f32.mrb[0].mxu0
        %5691 = vmatprep.mubr.bf16.mxu0 0
        %5692 = vmatmul.mubr.bf16.gmra.mrb[0].mxu0 %v5558
        %v5693 = vpop.f32.mrb[0].mxu0
        %v5694 = vadd.f32 0.0, %v5693
        %v5695 = vpop.f32.mrb[0].mxu0
        %v5696 = vpop.f32.mrb[0].mxu0
        %v5697 = vadd.f32 0.0, %v5696
        %v5698 = vpop.f32.mrb[0].mxu0
        %5699 = vmatprep.mubr.bf16.mxu0 0
        %5700 = vmatmul.mubr.bf16.gmra.mrb[0].mxu0 %v5559
        %v5701 = vpop.f32.mrb[0].mxu0
        %v5702 = vadd.f32 0.0, %v5701
        %v5703 = vpop.f32.mrb[0].mxu0
        %v5704 = vpop.f32.mrb[0].mxu0
        %v5705 = vadd.f32 0.0, %v5704
        %v5706 = vpop.f32.mrb[0].mxu0
        %5707 = vmatprep.mubr.bf16.mxu0 0
        %5708 = vmatmul.mubr.bf16.gmra.mrb[0].mxu0 %v5560
        %v5709 = vpop.f32.mrb[0].mxu0
        %v5710 = vadd.f32 0.0, %v5709
        %v5711 = vpop.f32.mrb[0].mxu0
        %v5712 = vpop.f32.mrb[0].mxu0
        %v5713 = vadd.f32 0.0, %v5712
        %v5714 = vpop.f32.mrb[0].mxu0
        %5715 = vmatprep.mubr.bf16.mxu0 0
        %5716 = vmatmul.mubr.bf16.gmra.mrb[0].mxu0 %v5561
        %v5717 = vpop.f32.mrb[0].mxu0
        %v5718 = vadd.f32 0.0, %v5717
        %v5719 = vpop.f32.mrb[0].mxu0
        %v5720 = vpop.f32.mrb[0].mxu0
        %v5721 = vadd.f32 0.0, %v5720
        %v5722 = vpop.f32.mrb[0].mxu0
        %5723 = vmatprep.mubr.bf16.mxu0 0
        %5724 = vmatmul.mubr.bf16.gmra.mrb[0].mxu0 %v5562
        %v5725 = vpop.f32.mrb[0].mxu0
        %v5726 = vadd.f32 0.0, %v5725
        %v5727 = vpop.f32.mrb[0].mxu0
        %v5728 = vpop.f32.mrb[0].mxu0
        %v5729 = vadd.f32 0.0, %v5728
        %v5730 = vpop.f32.mrb[0].mxu0
        %5731 = vmatprep.mubr.bf16.mxu0 0
        %5732 = vmatmul.mubr.bf16.gmra.mrb[0].mxu0 %v5563
        %v5733 = vpop.f32.mrb[0].mxu0
        %v5734 = vadd.f32 0.0, %v5733
        %v5735 = vpop.f32.mrb[0].mxu0
        %v5736 = vpop.f32.mrb[0].mxu0
        %v5737 = vadd.f32 0.0, %v5736
        %v5738 = vpop.f32.mrb[0].mxu0
        %5739 = vmatprep.mubr.bf16.mxu0 0
        %5740 = vmatmul.mubr.bf16.gmra.mrb[0].mxu0 %v5564
        %v5741 = vpop.f32.mrb[0].mxu0
        %v5742 = vadd.f32 0.0, %v5741
        %v5743 = vpop.f32.mrb[0].mxu0
        %v5744 = vpop.f32.mrb[0].mxu0
        %v5745 = vadd.f32 0.0, %v5744
        %v5746 = vpop.f32.mrb[0].mxu0
        %5747 = vmatprep.mubr.bf16.mxu0 0
        %5748 = vmatmul.mubr.bf16.gmra.mrb[0].mxu0 %v5565
        %v5749 = vpop.f32.mrb[0].mxu0
        %v5750 = vadd.f32 0.0, %v5749
        %v5751 = vpop.f32.mrb[0].mxu0
        %v5752 = vpop.f32.mrb[0].mxu0
        %v5753 = vadd.f32 0.0, %v5752
        %v5754 = vpop.f32.mrb[0].mxu0
        %5755 = vmatprep.mubr.bf16.mxu0 0
        %5756 = vmatmul.mubr.bf16.gmra.mrb[0].mxu0 %v5566
        %v5757 = vpop.f32.mrb[0].mxu0
        %v5758 = vadd.f32 0.0, %v5757
        %v5759 = vpop.f32.mrb[0].mxu0
        %v5760 = vpop.f32.mrb[0].mxu0
        %v5761 = vadd.f32 0.0, %v5760
        %v5762 = vpop.f32.mrb[0].mxu0
        %5763 = vmatprep.mubr.bf16.mxu0 0
        %5764 = vmatmul.mubr.bf16.gmra.mrb[0].mxu0 %v5567
        %v5765 = vpop.f32.mrb[0].mxu0
        %v5766 = vadd.f32 0.0, %v5765
        %v5767 = vpop.f32.mrb[0].mxu0
        %v5768 = vpop.f32.mrb[0].mxu0
        %v5769 = vadd.f32 0.0, %v5768
        %v5770 = vpop.f32.mrb[0].mxu0
        %5771 = vmatprep.mubr.bf16.mxu0 0
        %5772 = vmatmul.mubr.bf16.gmra.mrb[0].mxu0 %v5568
        %v5773 = vpop.f32.mrb[0].mxu0
        %v5774 = vadd.f32 0.0, %v5773
        %v5775 = vpop.f32.mrb[0].mxu0
        %v5776 = vpop.f32.mrb[0].mxu0
        %v5777 = vadd.f32 0.0, %v5776
        %v5778 = vpop.f32.mrb[0].mxu0
        %5779 = vmatprep.mubr.bf16.mxu0 0
        %5780 = vmatmul.mubr.bf16.gmra.mrb[0].mxu0 %v5569
        %v5781 = vpop.f32.mrb[0].mxu0
        %v5782 = vadd.f32 0.0, %v5781
        %v5783 = vpop.f32.mrb[0].mxu0
        %v5784 = vpop.f32.mrb[0].mxu0
        %v5785 = vadd.f32 0.0, %v5784
        %v5786 = vpop.f32.mrb[0].mxu0
        %5787 = vmatprep.mubr.bf16.mxu0 0
        %5788 = vmatmul.mubr.bf16.gmra.mrb[0].mxu0 %v5570
        %v5789 = vpop.f32.mrb[0].mxu0
        %v5790 = vadd.f32 0.0, %v5789
        %v5791 = vpop.f32.mrb[0].mxu0
        %v5792 = vpop.f32.mrb[0].mxu0
        %v5793 = vadd.f32 0.0, %v5792
        %v5794 = vpop.f32.mrb[0].mxu0
        %5795 = vdwg.mxu0
        %v5796 = vadd.f32 %v5217, %v5670
        %v5797 = vadd.f32 %v5220, %v5673
        %v5798 = vadd.f32 %v5225, %v5678
        %v5799 = vadd.f32 %v5228, %v5681
        %v5800 = vadd.f32 %v5233, %v5686
        %v5801 = vadd.f32 %v5236, %v5689
        %v5802 = vadd.f32 %v5241, %v5694
        %v5803 = vadd.f32 %v5244, %v5697
        %v5804 = vadd.f32 %v5249, %v5702
        %v5805 = vadd.f32 %v5252, %v5705
        %v5806 = vadd.f32 %v5257, %v5710
        %v5807 = vadd.f32 %v5260, %v5713
        %v5808 = vadd.f32 %v5265, %v5718
        %v5809 = vadd.f32 %v5268, %v5721
        %v5810 = vadd.f32 %v5273, %v5726
        %v5811 = vadd.f32 %v5276, %v5729
        %v5812 = vadd.f32 %v5281, %v5734
        %v5813 = vadd.f32 %v5284, %v5737
        %v5814 = vadd.f32 %v5289, %v5742
        %v5815 = vadd.f32 %v5292, %v5745
        %v5816 = vadd.f32 %v5297, %v5750
        %v5817 = vadd.f32 %v5300, %v5753
        %v5818 = vadd.f32 %v5305, %v5758
        %v5819 = vadd.f32 %v5308, %v5761
        %v5820 = vadd.f32 %v5313, %v5766
        %v5821 = vadd.f32 %v5316, %v5769
        %v5822 = vadd.f32 %v5321, %v5774
        %v5823 = vadd.f32 %v5324, %v5777
        %v5824 = vadd.f32 %v5329, %v5782
        %v5825 = vadd.f32 %v5332, %v5785
        %v5826 = vadd.f32 %v5337, %v5790
        %v5827 = vadd.f32 %v5340, %v5793
        %v5828 = vld [vmem:[%s4182] sm:$0xf]
        %v5829 = vld [vmem:[%s4182 + $0x4] sm:$0xf]
        %v5830 = vld [vmem:[%s4182 + $0xc] sm:$0xf]
        %v5831 = vld [vmem:[%s4182 + $0x10] sm:$0xf]
        %v5832 = vld [vmem:[%s4182 + $0x18] sm:$0xf]
        %v5833 = vld [vmem:[%s4182 + $0x1c] sm:$0xf]
        %v5834 = vld [vmem:[%s4182 + $0x24] sm:$0xf]
        %v5835 = vld [vmem:[%s4182 + $0x28] sm:$0xf]
        %v5836 = vld [vmem:[%s4182 + $0x30] sm:$0xf]
        %v5837 = vld [vmem:[%s4182 + $0x34] sm:$0xf]
        %v5838 = vld [vmem:[%s4182 + $0x3c] sm:$0xf]
        %v5839 = vld [vmem:[%s4182 + $0x40] sm:$0xf]
        %v5840 = vld [vmem:[%s4182 + $0x48] sm:$0xf]
        %v5841 = vld [vmem:[%s4182 + $0x4c] sm:$0xf]
        %v5842 = vld [vmem:[%s4182 + $0x54] sm:$0xf]
        %v5843 = vld [vmem:[%s4182 + $0x58] sm:$0xf]
        %v5844 = vld [vmem:[%s4182 + $0x60] sm:$0xf]
        %v5845 = vld [vmem:[%s4182 + $0x64] sm:$0xf]
        %v5846 = vld [vmem:[%s4182 + $0x6c] sm:$0xf]
        %v5847 = vld [vmem:[%s4182 + $0x70] sm:$0xf]
        %v5848 = vld [vmem:[%s4182 + $0x78] sm:$0xf]
        %v5849 = vld [vmem:[%s4182 + $0x7c] sm:$0xf]
        %v5850 = vld [vmem:[%s4182 + $0x84] sm:$0xf]
        %v5851 = vld [vmem:[%s4182 + $0x88] sm:$0xf]
        %v5852 = vld [vmem:[%s4182 + $0x90] sm:$0xf]
        %v5853 = vld [vmem:[%s4182 + $0x94] sm:$0xf]
        %v5854 = vld [vmem:[%s4182 + $0x9c] sm:$0xf]
        %v5855 = vld [vmem:[%s4182 + $0xa0] sm:$0xf]
        %v5856 = vld [vmem:[%s4182 + $0xa8] sm:$0xf]
        %v5857 = vld [vmem:[%s4182 + $0xac] sm:$0xf]
        %v5858 = vld [vmem:[%s4182 + $0xb4] sm:$0xf]
        %v5859 = vld [vmem:[%s4182 + $0xb8] sm:$0xf]
        %s5860 = scalar_lea.vmem [#allocation9], 192
        %v5861 = vld [vmem:[%s5860] sm:$0xf]
        %v5862 = vld [vmem:[%s5860 + $0x4] sm:$0xf]
        %v5863 = vld [vmem:[%s5860 + $0x8] sm:$0xf]
        %v5864 = vld [vmem:[%s5860 + $0xc] sm:$0xf]
        %v5865 = vld [vmem:[%s5860 + $0x10] sm:$0xf]
        %v5866 = vld [vmem:[%s5860 + $0x14] sm:$0xf]
        %v5867 = vld [vmem:[%s5860 + $0x18] sm:$0xf]
        %v5868 = vld [vmem:[%s5860 + $0x1c] sm:$0xf]
        %v5869 = vld [vmem:[%s5860 + $0x20] sm:$0xf]
        %v5870 = vld [vmem:[%s5860 + $0x24] sm:$0xf]
        %v5871 = vld [vmem:[%s5860 + $0x28] sm:$0xf]
        %v5872 = vld [vmem:[%s5860 + $0x2c] sm:$0xf]
        %v5873 = vld [vmem:[%s5860 + $0x30] sm:$0xf]
        %v5874 = vld [vmem:[%s5860 + $0x34] sm:$0xf]
        %v5875 = vld [vmem:[%s5860 + $0x38] sm:$0xf]
        %v5876 = vld [vmem:[%s5860 + $0x3c] sm:$0xf]
        %v5909 = vunpack.c.l.b16 %v5828
        %v5910 = vunpack.c.l.b16 %v5829
        %v5911 = vunpack.c.l.b16 %v5830
        %v5912 = vunpack.c.l.b16 %v5831
        %v5913 = vunpack.c.l.b16 %v5832
        %v5914 = vunpack.c.l.b16 %v5833
        %v5915 = vunpack.c.l.b16 %v5834
        %v5916 = vunpack.c.l.b16 %v5835
        %v5917 = vunpack.c.l.b16 %v5836
        %v5918 = vunpack.c.l.b16 %v5837
        %v5919 = vunpack.c.l.b16 %v5838
        %v5920 = vunpack.c.l.b16 %v5839
        %v5921 = vunpack.c.l.b16 %v5840
        %v5922 = vunpack.c.l.b16 %v5841
        %v5923 = vunpack.c.l.b16 %v5842
        %v5924 = vunpack.c.l.b16 %v5843
        %v5925 = vunpack.c.l.b16 %v5844
        %v5926 = vunpack.c.l.b16 %v5845
        %v5927 = vunpack.c.l.b16 %v5846
        %v5928 = vunpack.c.l.b16 %v5847
        %v5929 = vunpack.c.l.b16 %v5848
        %v5930 = vunpack.c.l.b16 %v5849
        %v5931 = vunpack.c.l.b16 %v5850
        %v5932 = vunpack.c.l.b16 %v5851
        %v5933 = vunpack.c.l.b16 %v5852
        %v5934 = vunpack.c.l.b16 %v5853
        %v5935 = vunpack.c.l.b16 %v5854
        %v5936 = vunpack.c.l.b16 %v5855
        %v5937 = vunpack.c.l.b16 %v5856
        %v5938 = vunpack.c.l.b16 %v5857
        %v5939 = vunpack.c.l.b16 %v5858
        %v5940 = vunpack.c.l.b16 %v5859
        %v5941 = vpack.c.b16 %v5910, %v5909
        %v5942 = vpack.c.b16 %v5912, %v5911
        %v5943 = vpack.c.b16 %v5914, %v5913
        %v5944 = vpack.c.b16 %v5916, %v5915
        %v5945 = vpack.c.b16 %v5918, %v5917
        %v5946 = vpack.c.b16 %v5920, %v5919
        %v5947 = vpack.c.b16 %v5922, %v5921
        %v5948 = vpack.c.b16 %v5924, %v5923
        %v5949 = vpack.c.b16 %v5926, %v5925
        %v5950 = vpack.c.b16 %v5928, %v5927
        %v5951 = vpack.c.b16 %v5930, %v5929
        %v5952 = vpack.c.b16 %v5932, %v5931
        %v5953 = vpack.c.b16 %v5934, %v5933
        %v5954 = vpack.c.b16 %v5936, %v5935
        %v5955 = vpack.c.b16 %v5938, %v5937
        %v5956 = vpack.c.b16 %v5940, %v5939
        %v5989 = vunpack.c.l.b16 %v5861
        %v5990 = vunpack.c.l.b16 %v5862
        %v5991 = vunpack.c.l.b16 %v5863
        %v5992 = vunpack.c.l.b16 %v5864
        %v5993 = vunpack.c.l.b16 %v5865
        %v5994 = vunpack.c.l.b16 %v5866
        %v5995 = vunpack.c.l.b16 %v5867
        %v5996 = vunpack.c.l.b16 %v5868
        %v5997 = vunpack.c.l.b16 %v5869
        %v5998 = vunpack.c.l.b16 %v5870
        %v5999 = vunpack.c.l.b16 %v5871
        %v6000 = vunpack.c.l.b16 %v5872
        %v6001 = vunpack.c.l.b16 %v5873
        %v6002 = vunpack.c.l.b16 %v5874
        %v6003 = vunpack.c.l.b16 %v5875
        %v6004 = vunpack.c.l.b16 %v5876
        %v6005 = vpack.c.b16 %v5990, %v5989
        %v6006 = vpack.c.b16 %v5992, %v5991
        %v6007 = vpack.c.b16 %v5994, %v5993
        %v6008 = vpack.c.b16 %v5996, %v5995
        %v6009 = vpack.c.b16 %v5998, %v5997
        %v6010 = vpack.c.b16 %v6000, %v5999
        %v6011 = vpack.c.b16 %v6002, %v6001
        %v6012 = vpack.c.b16 %v6004, %v6003
        %6021 = vmatprep.subr.bf16.mxu0 0
        %6022 = vmatpush1.bf16.msra.mxu0 %v6005
        %6023 = vmatprep.subr.bf16.mxu0 0
        %6024 = vmatpush1.bf16.msra.mxu0 %v6006
        %6025 = vmatprep.subr.bf16.mxu0 0
        %6026 = vmatpush1.bf16.msra.mxu0 %v6007
        %6027 = vmatprep.subr.bf16.mxu0 0
        %6028 = vmatpush1.bf16.msra.mxu0 %v6008
        %6029 = vmatprep.subr.bf16.mxu0 0
        %6030 = vmatpush1.bf16.msra.mxu0 %v6009
        %6031 = vmatprep.subr.bf16.mxu0 0
        %6032 = vmatpush1.bf16.msra.mxu0 %v6010
        %6033 = vmatprep.subr.bf16.mxu0 0
        %6034 = vmatpush1.bf16.msra.mxu0 %v6011
        %6035 = vmatprep.subr.bf16.mxu0 0
        %6036 = vmatpush1.bf16.msra.mxu0 %v6012
        %6037 = vmatprep.subr.bf16.mxu0 0
        %6038 = vmatpush1.bf16.msra.mxu0 0
        %6039 = vmatprep.subr.bf16.mxu0 0
        %6040 = vmatpush1.bf16.msra.mxu0 0
        %6041 = vmatprep.subr.bf16.mxu0 0
        %6042 = vmatpush1.bf16.msra.mxu0 0
        %6043 = vmatprep.subr.bf16.mxu0 0
        %6044 = vmatpush1.bf16.msra.mxu0 0
        %6045 = vmatprep.subr.bf16.mxu0 0
        %6046 = vmatpush1.bf16.msra.mxu0 0
        %6047 = vmatprep.subr.bf16.mxu0 0
        %6048 = vmatpush1.bf16.msra.mxu0 0
        %6049 = vmatprep.subr.bf16.mxu0 0
        %6050 = vmatpush1.bf16.msra.mxu0 0
        %6051 = vmatprep.subr.bf16.mxu0 0
        %6052 = vmatpush1.bf16.msra.mxu0 0
        %6053 = vmatprep.mubr.bf16.mxu0 0
        %6054 = vmatmul.mubr.bf16.gmra.mrb[0].mxu0 %v5941
        %v6055 = vpop.f32.mrb[0].mxu0
        %v6056 = vadd.f32 0.0, %v6055
        %v6057 = vpop.f32.mrb[0].mxu0
        %v6058 = vpop.f32.mrb[0].mxu0
        %v6059 = vadd.f32 0.0, %v6058
        %v6060 = vpop.f32.mrb[0].mxu0
        %6061 = vmatprep.mubr.bf16.mxu0 0
        %6062 = vmatmul.mubr.bf16.gmra.mrb[0].mxu0 %v5942
        %v6063 = vpop.f32.mrb[0].mxu0
        %v6064 = vadd.f32 0.0, %v6063
        %v6065 = vpop.f32.mrb[0].mxu0
        %v6066 = vpop.f32.mrb[0].mxu0
        %v6067 = vadd.f32 0.0, %v6066
        %v6068 = vpop.f32.mrb[0].mxu0
        %6069 = vmatprep.mubr.bf16.mxu0 0
        %6070 = vmatmul.mubr.bf16.gmra.mrb[0].mxu0 %v5943
        %v6071 = vpop.f32.mrb[0].mxu0
        %v6072 = vadd.f32 0.0, %v6071
        %v6073 = vpop.f32.mrb[0].mxu0
        %v6074 = vpop.f32.mrb[0].mxu0
        %v6075 = vadd.f32 0.0, %v6074
        %v6076 = vpop.f32.mrb[0].mxu0
        %6077 = vmatprep.mubr.bf16.mxu0 0
        %6078 = vmatmul.mubr.bf16.gmra.mrb[0].mxu0 %v5944
        %v6079 = vpop.f32.mrb[0].mxu0
        %v6080 = vadd.f32 0.0, %v6079
        %v6081 = vpop.f32.mrb[0].mxu0
        %v6082 = vpop.f32.mrb[0].mxu0
        %v6083 = vadd.f32 0.0, %v6082
        %v6084 = vpop.f32.mrb[0].mxu0
        %6085 = vmatprep.mubr.bf16.mxu0 0
        %6086 = vmatmul.mubr.bf16.gmra.mrb[0].mxu0 %v5945
        %v6087 = vpop.f32.mrb[0].mxu0
        %v6088 = vadd.f32 0.0, %v6087
        %v6089 = vpop.f32.mrb[0].mxu0
        %v6090 = vpop.f32.mrb[0].mxu0
        %v6091 = vadd.f32 0.0, %v6090
        %v6092 = vpop.f32.mrb[0].mxu0
        %6093 = vmatprep.mubr.bf16.mxu0 0
        %6094 = vmatmul.mubr.bf16.gmra.mrb[0].mxu0 %v5946
        %v6095 = vpop.f32.mrb[0].mxu0
        %v6096 = vadd.f32 0.0, %v6095
        %v6097 = vpop.f32.mrb[0].mxu0
        %v6098 = vpop.f32.mrb[0].mxu0
        %v6099 = vadd.f32 0.0, %v6098
        %v6100 = vpop.f32.mrb[0].mxu0
        %6101 = vmatprep.mubr.bf16.mxu0 0
        %6102 = vmatmul.mubr.bf16.gmra.mrb[0].mxu0 %v5947
        %v6103 = vpop.f32.mrb[0].mxu0
        %v6104 = vadd.f32 0.0, %v6103
        %v6105 = vpop.f32.mrb[0].mxu0
        %v6106 = vpop.f32.mrb[0].mxu0
        %v6107 = vadd.f32 0.0, %v6106
        %v6108 = vpop.f32.mrb[0].mxu0
        %6109 = vmatprep.mubr.bf16.mxu0 0
        %6110 = vmatmul.mubr.bf16.gmra.mrb[0].mxu0 %v5948
        %v6111 = vpop.f32.mrb[0].mxu0
        %v6112 = vadd.f32 0.0, %v6111
        %v6113 = vpop.f32.mrb[0].mxu0
        %v6114 = vpop.f32.mrb[0].mxu0
        %v6115 = vadd.f32 0.0, %v6114
        %v6116 = vpop.f32.mrb[0].mxu0
        %6117 = vmatprep.mubr.bf16.mxu0 0
        %6118 = vmatmul.mubr.bf16.gmra.mrb[0].mxu0 %v5949
        %v6119 = vpop.f32.mrb[0].mxu0
        %v6120 = vadd.f32 0.0, %v6119
        %v6121 = vpop.f32.mrb[0].mxu0
        %v6122 = vpop.f32.mrb[0].mxu0
        %v6123 = vadd.f32 0.0, %v6122
        %v6124 = vpop.f32.mrb[0].mxu0
        %6125 = vmatprep.mubr.bf16.mxu0 0
        %6126 = vmatmul.mubr.bf16.gmra.mrb[0].mxu0 %v5950
        %v6127 = vpop.f32.mrb[0].mxu0
        %v6128 = vadd.f32 0.0, %v6127
        %v6129 = vpop.f32.mrb[0].mxu0
        %v6130 = vpop.f32.mrb[0].mxu0
        %v6131 = vadd.f32 0.0, %v6130
        %v6132 = vpop.f32.mrb[0].mxu0
        %6133 = vmatprep.mubr.bf16.mxu0 0
        %6134 = vmatmul.mubr.bf16.gmra.mrb[0].mxu0 %v5951
        %v6135 = vpop.f32.mrb[0].mxu0
        %v6136 = vadd.f32 0.0, %v6135
        %v6137 = vpop.f32.mrb[0].mxu0
        %v6138 = vpop.f32.mrb[0].mxu0
        %v6139 = vadd.f32 0.0, %v6138
        %v6140 = vpop.f32.mrb[0].mxu0
        %6141 = vmatprep.mubr.bf16.mxu0 0
        %6142 = vmatmul.mubr.bf16.gmra.mrb[0].mxu0 %v5952
        %v6143 = vpop.f32.mrb[0].mxu0
        %v6144 = vadd.f32 0.0, %v6143
        %v6145 = vpop.f32.mrb[0].mxu0
        %v6146 = vpop.f32.mrb[0].mxu0
        %v6147 = vadd.f32 0.0, %v6146
        %v6148 = vpop.f32.mrb[0].mxu0
        %6149 = vmatprep.mubr.bf16.mxu0 0
        %6150 = vmatmul.mubr.bf16.gmra.mrb[0].mxu0 %v5953
        %v6151 = vpop.f32.mrb[0].mxu0
        %v6152 = vadd.f32 0.0, %v6151
        %v6153 = vpop.f32.mrb[0].mxu0
        %v6154 = vpop.f32.mrb[0].mxu0
        %v6155 = vadd.f32 0.0, %v6154
        %v6156 = vpop.f32.mrb[0].mxu0
        %6157 = vmatprep.mubr.bf16.mxu0 0
        %6158 = vmatmul.mubr.bf16.gmra.mrb[0].mxu0 %v5954
        %v6159 = vpop.f32.mrb[0].mxu0
        %v6160 = vadd.f32 0.0, %v6159
        %v6161 = vpop.f32.mrb[0].mxu0
        %v6162 = vpop.f32.mrb[0].mxu0
        %v6163 = vadd.f32 0.0, %v6162
        %v6164 = vpop.f32.mrb[0].mxu0
        %6165 = vmatprep.mubr.bf16.mxu0 0
        %6166 = vmatmul.mubr.bf16.gmra.mrb[0].mxu0 %v5955
        %v6167 = vpop.f32.mrb[0].mxu0
        %v6168 = vadd.f32 0.0, %v6167
        %v6169 = vpop.f32.mrb[0].mxu0
        %v6170 = vpop.f32.mrb[0].mxu0
        %v6171 = vadd.f32 0.0, %v6170
        %v6172 = vpop.f32.mrb[0].mxu0
        %6173 = vmatprep.mubr.bf16.mxu0 0
        %6174 = vmatmul.mubr.bf16.gmra.mrb[0].mxu0 %v5956
        %v6175 = vpop.f32.mrb[0].mxu0
        %v6176 = vadd.f32 0.0, %v6175
        %v6177 = vpop.f32.mrb[0].mxu0
        %v6178 = vpop.f32.mrb[0].mxu0
        %v6179 = vadd.f32 0.0, %v6178
        %v6180 = vpop.f32.mrb[0].mxu0
        %6181 = vdwg.mxu0
        %v6182 = vadd.f32 %v5796, %v6056
        %v6183 = vadd.f32 %v5797, %v6059
        %v6184 = vadd.f32 %v5798, %v6064
        %v6185 = vadd.f32 %v5799, %v6067
        %v6186 = vadd.f32 %v5800, %v6072
        %v6187 = vadd.f32 %v5801, %v6075
        %v6188 = vadd.f32 %v5802, %v6080
        %v6189 = vadd.f32 %v5803, %v6083
        %v6190 = vadd.f32 %v5804, %v6088
        %v6191 = vadd.f32 %v5805, %v6091
        %v6192 = vadd.f32 %v5806, %v6096
        %v6193 = vadd.f32 %v5807, %v6099
        %v6194 = vadd.f32 %v5808, %v6104
        %v6195 = vadd.f32 %v5809, %v6107
        %v6196 = vadd.f32 %v5810, %v6112
        %v6197 = vadd.f32 %v5811, %v6115
        %v6198 = vadd.f32 %v5812, %v6120
        %v6199 = vadd.f32 %v5813, %v6123
        %v6200 = vadd.f32 %v5814, %v6128
        %v6201 = vadd.f32 %v5815, %v6131
        %v6202 = vadd.f32 %v5816, %v6136
        %v6203 = vadd.f32 %v5817, %v6139
        %v6204 = vadd.f32 %v5818, %v6144
        %v6205 = vadd.f32 %v5819, %v6147
        %v6206 = vadd.f32 %v5820, %v6152
        %v6207 = vadd.f32 %v5821, %v6155
        %v6208 = vadd.f32 %v5822, %v6160
        %v6209 = vadd.f32 %v5823, %v6163
        %v6210 = vadd.f32 %v5824, %v6168
        %v6211 = vadd.f32 %v5825, %v6171
        %v6212 = vadd.f32 %v5826, %v6176
        %v6213 = vadd.f32 %v5827, %v6179
        %v6214 = vld [vmem:[%s4182] sm:$0xf]
        %v6215 = vld [vmem:[%s4182 + $0x4] sm:$0xf]
        %v6216 = vld [vmem:[%s4182 + $0x8] sm:$0x1]
        %v6217 = vld [vmem:[%s4182 + $0xc] sm:$0xf]
        %v6218 = vld [vmem:[%s4182 + $0x10] sm:$0xf]
        %v6219 = vld [vmem:[%s4182 + $0x14] sm:$0x1]
        %v6220 = vld [vmem:[%s4182 + $0x18] sm:$0xf]
        %v6221 = vld [vmem:[%s4182 + $0x1c] sm:$0xf]
        %v6222 = vld [vmem:[%s4182 + $0x20] sm:$0x1]
        %v6223 = vld [vmem:[%s4182 + $0x24] sm:$0xf]
        %v6224 = vld [vmem:[%s4182 + $0x28] sm:$0xf]
        %v6225 = vld [vmem:[%s4182 + $0x2c] sm:$0x1]
        %v6226 = vld [vmem:[%s4182 + $0x30] sm:$0xf]
        %v6227 = vld [vmem:[%s4182 + $0x34] sm:$0xf]
        %v6228 = vld [vmem:[%s4182 + $0x38] sm:$0x1]
        %v6229 = vld [vmem:[%s4182 + $0x3c] sm:$0xf]
        %v6230 = vld [vmem:[%s4182 + $0x40] sm:$0xf]
        %v6231 = vld [vmem:[%s4182 + $0x44] sm:$0x1]
        %v6232 = vld [vmem:[%s4182 + $0x48] sm:$0xf]
        %v6233 = vld [vmem:[%s4182 + $0x4c] sm:$0xf]
        %v6234 = vld [vmem:[%s4182 + $0x50] sm:$0x1]
        %v6235 = vld [vmem:[%s4182 + $0x54] sm:$0xf]
        %v6236 = vld [vmem:[%s4182 + $0x58] sm:$0xf]
        %v6237 = vld [vmem:[%s4182 + $0x5c] sm:$0x1]
        %v6238 = vld [vmem:[%s4182 + $0x60] sm:$0xf]
        %v6239 = vld [vmem:[%s4182 + $0x64] sm:$0xf]
        %v6240 = vld [vmem:[%s4182 + $0x68] sm:$0x1]
        %v6241 = vld [vmem:[%s4182 + $0x6c] sm:$0xf]
        %v6242 = vld [vmem:[%s4182 + $0x70] sm:$0xf]
        %v6243 = vld [vmem:[%s4182 + $0x74] sm:$0x1]
        %v6244 = vld [vmem:[%s4182 + $0x78] sm:$0xf]
        %v6245 = vld [vmem:[%s4182 + $0x7c] sm:$0xf]
        %v6246 = vld [vmem:[%s4182 + $0x80] sm:$0x1]
        %v6247 = vld [vmem:[%s4182 + $0x84] sm:$0xf]
        %v6248 = vld [vmem:[%s4182 + $0x88] sm:$0xf]
        %v6249 = vld [vmem:[%s4182 + $0x8c] sm:$0x1]
        %v6250 = vld [vmem:[%s4182 + $0x90] sm:$0xf]
        %v6251 = vld [vmem:[%s4182 + $0x94] sm:$0xf]
        %v6252 = vld [vmem:[%s4182 + $0x98] sm:$0x1]
        %v6253 = vld [vmem:[%s4182 + $0x9c] sm:$0xf]
        %v6254 = vld [vmem:[%s4182 + $0xa0] sm:$0xf]
        %v6255 = vld [vmem:[%s4182 + $0xa4] sm:$0x1]
        %v6256 = vld [vmem:[%s4182 + $0xa8] sm:$0xf]
        %v6257 = vld [vmem:[%s4182 + $0xac] sm:$0xf]
        %v6258 = vld [vmem:[%s4182 + $0xb0] sm:$0x1]
        %v6259 = vld [vmem:[%s4182 + $0xb4] sm:$0xf]
        %v6260 = vld [vmem:[%s4182 + $0xb8] sm:$0xf]
        %v6261 = vld [vmem:[%s4182 + $0xbc] sm:$0x1]
        %v6263 = vshrl.u32 %v6214, 16
        %v6265 = vrot.slane %v6263, 4
        %v6266 = vshll.u32 %v6214, 16
        %v6268 = vrot.slane %v6266, 5
        %v6269 = vor.u32 %v6265, %v6268
        %v6270 = vrot.slane %v6269, 4
        %v6272 = vshll.u32 %v6215, 16
        %v6274 = vrot.slane %v6272, 5
        %v6275 = vsel %vm4363, %v6270, %v6274
        %v6276 = vshrl.u32 %v6215, 16
        %v6278 = vrot.slane %v6276, 4
        %v6279 = vor.u32 %v6278, %v6274
        %v6280 = vrot.slane %v6279, 4
        %v6282 = vshll.u32 %v6216, 16
        %v6284 = vrot.slane %v6282, 5
        %v6285 = vsel %vm4363, %v6280, %v6284
        %v6287 = vshrl.u32 %v6217, 16
        %v6289 = vrot.slane %v6287, 4
        %v6290 = vshll.u32 %v6217, 16
        %v6292 = vrot.slane %v6290, 5
        %v6293 = vor.u32 %v6289, %v6292
        %v6294 = vrot.slane %v6293, 4
        %v6296 = vshll.u32 %v6218, 16
        %v6298 = vrot.slane %v6296, 5
        %v6299 = vsel %vm4363, %v6294, %v6298
        %v6300 = vshrl.u32 %v6218, 16
        %v6302 = vrot.slane %v6300, 4
        %v6303 = vor.u32 %v6302, %v6298
        %v6304 = vrot.slane %v6303, 4
        %v6306 = vshll.u32 %v6219, 16
        %v6308 = vrot.slane %v6306, 5
        %v6309 = vsel %vm4363, %v6304, %v6308
        %v6311 = vshrl.u32 %v6220, 16
        %v6313 = vrot.slane %v6311, 4
        %v6314 = vshll.u32 %v6220, 16
        %v6316 = vrot.slane %v6314, 5
        %v6317 = vor.u32 %v6313, %v6316
        %v6318 = vrot.slane %v6317, 4
        %v6320 = vshll.u32 %v6221, 16
        %v6322 = vrot.slane %v6320, 5
        %v6323 = vsel %vm4363, %v6318, %v6322
        %v6324 = vshrl.u32 %v6221, 16
        %v6326 = vrot.slane %v6324, 4
        %v6327 = vor.u32 %v6326, %v6322
        %v6328 = vrot.slane %v6327, 4
        %v6330 = vshll.u32 %v6222, 16
        %v6332 = vrot.slane %v6330, 5
        %v6333 = vsel %vm4363, %v6328, %v6332
        %v6335 = vshrl.u32 %v6223, 16
        %v6337 = vrot.slane %v6335, 4
        %v6338 = vshll.u32 %v6223, 16
        %v6340 = vrot.slane %v6338, 5
        %v6341 = vor.u32 %v6337, %v6340
        %v6342 = vrot.slane %v6341, 4
        %v6344 = vshll.u32 %v6224, 16
        %v6346 = vrot.slane %v6344, 5
        %v6347 = vsel %vm4363, %v6342, %v6346
        %v6348 = vshrl.u32 %v6224, 16
        %v6350 = vrot.slane %v6348, 4
        %v6351 = vor.u32 %v6350, %v6346
        %v6352 = vrot.slane %v6351, 4
        %v6354 = vshll.u32 %v6225, 16
        %v6356 = vrot.slane %v6354, 5
        %v6357 = vsel %vm4363, %v6352, %v6356
        %v6359 = vshrl.u32 %v6226, 16
        %v6361 = vrot.slane %v6359, 4
        %v6362 = vshll.u32 %v6226, 16
        %v6364 = vrot.slane %v6362, 5
        %v6365 = vor.u32 %v6361, %v6364
        %v6366 = vrot.slane %v6365, 4
        %v6368 = vshll.u32 %v6227, 16
        %v6370 = vrot.slane %v6368, 5
        %v6371 = vsel %vm4363, %v6366, %v6370
        %v6372 = vshrl.u32 %v6227, 16
        %v6374 = vrot.slane %v6372, 4
        %v6375 = vor.u32 %v6374, %v6370
        %v6376 = vrot.slane %v6375, 4
        %v6378 = vshll.u32 %v6228, 16
        %v6380 = vrot.slane %v6378, 5
        %v6381 = vsel %vm4363, %v6376, %v6380
        %v6383 = vshrl.u32 %v6229, 16
        %v6385 = vrot.slane %v6383, 4
        %v6386 = vshll.u32 %v6229, 16
        %v6388 = vrot.slane %v6386, 5
        %v6389 = vor.u32 %v6385, %v6388
        %v6390 = vrot.slane %v6389, 4
        %v6392 = vshll.u32 %v6230, 16
        %v6394 = vrot.slane %v6392, 5
        %v6395 = vsel %vm4363, %v6390, %v6394
        %v6396 = vshrl.u32 %v6230, 16
        %v6398 = vrot.slane %v6396, 4
        %v6399 = vor.u32 %v6398, %v6394
        %v6400 = vrot.slane %v6399, 4
        %v6402 = vshll.u32 %v6231, 16
        %v6404 = vrot.slane %v6402, 5
        %v6405 = vsel %vm4363, %v6400, %v6404
        %v6407 = vshrl.u32 %v6232, 16
        %v6409 = vrot.slane %v6407, 4
        %v6410 = vshll.u32 %v6232, 16
        %v6412 = vrot.slane %v6410, 5
        %v6413 = vor.u32 %v6409, %v6412
        %v6414 = vrot.slane %v6413, 4
        %v6416 = vshll.u32 %v6233, 16
        %v6418 = vrot.slane %v6416, 5
        %v6419 = vsel %vm4363, %v6414, %v6418
        %v6420 = vshrl.u32 %v6233, 16
        %v6422 = vrot.slane %v6420, 4
        %v6423 = vor.u32 %v6422, %v6418
        %v6424 = vrot.slane %v6423, 4
        %v6426 = vshll.u32 %v6234, 16
        %v6428 = vrot.slane %v6426, 5
        %v6429 = vsel %vm4363, %v6424, %v6428
        %v6431 = vshrl.u32 %v6235, 16
        %v6433 = vrot.slane %v6431, 4
        %v6434 = vshll.u32 %v6235, 16
        %v6436 = vrot.slane %v6434, 5
        %v6437 = vor.u32 %v6433, %v6436
        %v6438 = vrot.slane %v6437, 4
        %v6440 = vshll.u32 %v6236, 16
        %v6442 = vrot.slane %v6440, 5
        %v6443 = vsel %vm4363, %v6438, %v6442
        %v6444 = vshrl.u32 %v6236, 16
        %v6446 = vrot.slane %v6444, 4
        %v6447 = vor.u32 %v6446, %v6442
        %v6448 = vrot.slane %v6447, 4
        %v6450 = vshll.u32 %v6237, 16
        %v6452 = vrot.slane %v6450, 5
        %v6453 = vsel %vm4363, %v6448, %v6452
        %v6455 = vshrl.u32 %v6238, 16
        %v6457 = vrot.slane %v6455, 4
        %v6458 = vshll.u32 %v6238, 16
        %v6460 = vrot.slane %v6458, 5
        %v6461 = vor.u32 %v6457, %v6460
        %v6462 = vrot.slane %v6461, 4
        %v6464 = vshll.u32 %v6239, 16
        %v6466 = vrot.slane %v6464, 5
        %v6467 = vsel %vm4363, %v6462, %v6466
        %v6468 = vshrl.u32 %v6239, 16
        %v6470 = vrot.slane %v6468, 4
        %v6471 = vor.u32 %v6470, %v6466
        %v6472 = vrot.slane %v6471, 4
        %v6474 = vshll.u32 %v6240, 16
        %v6476 = vrot.slane %v6474, 5
        %v6477 = vsel %vm4363, %v6472, %v6476
        %v6479 = vshrl.u32 %v6241, 16
        %v6481 = vrot.slane %v6479, 4
        %v6482 = vshll.u32 %v6241, 16
        %v6484 = vrot.slane %v6482, 5
        %v6485 = vor.u32 %v6481, %v6484
        %v6486 = vrot.slane %v6485, 4
        %v6488 = vshll.u32 %v6242, 16
        %v6490 = vrot.slane %v6488, 5
        %v6491 = vsel %vm4363, %v6486, %v6490
        %v6492 = vshrl.u32 %v6242, 16
        %v6494 = vrot.slane %v6492, 4
        %v6495 = vor.u32 %v6494, %v6490
        %v6496 = vrot.slane %v6495, 4
        %v6498 = vshll.u32 %v6243, 16
        %v6500 = vrot.slane %v6498, 5
        %v6501 = vsel %vm4363, %v6496, %v6500
        %v6503 = vshrl.u32 %v6244, 16
        %v6505 = vrot.slane %v6503, 4
        %v6506 = vshll.u32 %v6244, 16
        %v6508 = vrot.slane %v6506, 5
        %v6509 = vor.u32 %v6505, %v6508
        %v6510 = vrot.slane %v6509, 4
        %v6512 = vshll.u32 %v6245, 16
        %v6514 = vrot.slane %v6512, 5
        %v6515 = vsel %vm4363, %v6510, %v6514
        %v6516 = vshrl.u32 %v6245, 16
        %v6518 = vrot.slane %v6516, 4
        %v6519 = vor.u32 %v6518, %v6514
        %v6520 = vrot.slane %v6519, 4
        %v6522 = vshll.u32 %v6246, 16
        %v6524 = vrot.slane %v6522, 5
        %v6525 = vsel %vm4363, %v6520, %v6524
        %v6527 = vshrl.u32 %v6247, 16
        %v6529 = vrot.slane %v6527, 4
        %v6530 = vshll.u32 %v6247, 16
        %v6532 = vrot.slane %v6530, 5
        %v6533 = vor.u32 %v6529, %v6532
        %v6534 = vrot.slane %v6533, 4
        %v6536 = vshll.u32 %v6248, 16
        %v6538 = vrot.slane %v6536, 5
        %v6539 = vsel %vm4363, %v6534, %v6538
        %v6540 = vshrl.u32 %v6248, 16
        %v6542 = vrot.slane %v6540, 4
        %v6543 = vor.u32 %v6542, %v6538
        %v6544 = vrot.slane %v6543, 4
        %v6546 = vshll.u32 %v6249, 16
        %v6548 = vrot.slane %v6546, 5
        %v6549 = vsel %vm4363, %v6544, %v6548
        %v6551 = vshrl.u32 %v6250, 16
        %v6553 = vrot.slane %v6551, 4
        %v6554 = vshll.u32 %v6250, 16
        %v6556 = vrot.slane %v6554, 5
        %v6557 = vor.u32 %v6553, %v6556
        %v6558 = vrot.slane %v6557, 4
        %v6560 = vshll.u32 %v6251, 16
        %v6562 = vrot.slane %v6560, 5
        %v6563 = vsel %vm4363, %v6558, %v6562
        %v6564 = vshrl.u32 %v6251, 16
        %v6566 = vrot.slane %v6564, 4
        %v6567 = vor.u32 %v6566, %v6562
        %v6568 = vrot.slane %v6567, 4
        %v6570 = vshll.u32 %v6252, 16
        %v6572 = vrot.slane %v6570, 5
        %v6573 = vsel %vm4363, %v6568, %v6572
        %v6575 = vshrl.u32 %v6253, 16
        %v6577 = vrot.slane %v6575, 4
        %v6578 = vshll.u32 %v6253, 16
        %v6580 = vrot.slane %v6578, 5
        %v6581 = vor.u32 %v6577, %v6580
        %v6582 = vrot.slane %v6581, 4
        %v6584 = vshll.u32 %v6254, 16
        %v6586 = vrot.slane %v6584, 5
        %v6587 = vsel %vm4363, %v6582, %v6586
        %v6588 = vshrl.u32 %v6254, 16
        %v6590 = vrot.slane %v6588, 4
        %v6591 = vor.u32 %v6590, %v6586
        %v6592 = vrot.slane %v6591, 4
        %v6594 = vshll.u32 %v6255, 16
        %v6596 = vrot.slane %v6594, 5
        %v6597 = vsel %vm4363, %v6592, %v6596
        %v6599 = vshrl.u32 %v6256, 16
        %v6601 = vrot.slane %v6599, 4
        %v6602 = vshll.u32 %v6256, 16
        %v6604 = vrot.slane %v6602, 5
        %v6605 = vor.u32 %v6601, %v6604
        %v6606 = vrot.slane %v6605, 4
        %v6608 = vshll.u32 %v6257, 16
        %v6610 = vrot.slane %v6608, 5
        %v6611 = vsel %vm4363, %v6606, %v6610
        %v6612 = vshrl.u32 %v6257, 16
        %v6614 = vrot.slane %v6612, 4
        %v6615 = vor.u32 %v6614, %v6610
        %v6616 = vrot.slane %v6615, 4
        %v6618 = vshll.u32 %v6258, 16
        %v6620 = vrot.slane %v6618, 5
        %v6621 = vsel %vm4363, %v6616, %v6620
        %v6623 = vshrl.u32 %v6259, 16
        %v6625 = vrot.slane %v6623, 4
        %v6626 = vshll.u32 %v6259, 16
        %v6628 = vrot.slane %v6626, 5
        %v6629 = vor.u32 %v6625, %v6628
        %v6630 = vrot.slane %v6629, 4
        %v6632 = vshll.u32 %v6260, 16
        %v6634 = vrot.slane %v6632, 5
        %v6635 = vsel %vm4363, %v6630, %v6634
        %v6636 = vshrl.u32 %v6260, 16
        %v6638 = vrot.slane %v6636, 4
        %v6639 = vor.u32 %v6638, %v6634
        %v6640 = vrot.slane %v6639, 4
        %v6642 = vshll.u32 %v6261, 16
        %v6644 = vrot.slane %v6642, 5
        %v6645 = vsel %vm4363, %v6640, %v6644
        %s6646 = scalar_lea.vmem [#allocation9], 256
        %v6647 = vld [vmem:[%s6646] sm:$0xf]
        %v6648 = vld [vmem:[%s6646 + $0x4] sm:$0xf]
        %v6649 = vld [vmem:[%s6646 + $0x8] sm:$0xf]
        %v6650 = vld [vmem:[%s6646 + $0xc] sm:$0xf]
        %v6651 = vld [vmem:[%s6646 + $0x10] sm:$0xf]
        %v6652 = vld [vmem:[%s6646 + $0x14] sm:$0xf]
        %v6653 = vld [vmem:[%s6646 + $0x18] sm:$0xf]
        %v6654 = vld [vmem:[%s6646 + $0x1c] sm:$0xf]
        %v6655 = vld [vmem:[%s6646 + $0x20] sm:$0xf]
        %v6656 = vld [vmem:[%s6646 + $0x24] sm:$0xf]
        %v6657 = vld [vmem:[%s6646 + $0x28] sm:$0xf]
        %v6658 = vld [vmem:[%s6646 + $0x2c] sm:$0xf]
        %v6659 = vld [vmem:[%s6646 + $0x30] sm:$0xf]
        %v6660 = vld [vmem:[%s6646 + $0x34] sm:$0xf]
        %v6661 = vld [vmem:[%s6646 + $0x38] sm:$0xf]
        %v6662 = vld [vmem:[%s6646 + $0x3c] sm:$0xf]
        %v6663 = vunpack.c.l.b16 %v6275
        %v6664 = vunpack.c.l.b16 %v6285
        %v6665 = vunpack.c.l.b16 %v6299
        %v6666 = vunpack.c.l.b16 %v6309
        %v6667 = vunpack.c.l.b16 %v6323
        %v6668 = vunpack.c.l.b16 %v6333
        %v6669 = vunpack.c.l.b16 %v6347
        %v6670 = vunpack.c.l.b16 %v6357
        %v6671 = vunpack.c.l.b16 %v6371
        %v6672 = vunpack.c.l.b16 %v6381
        %v6673 = vunpack.c.l.b16 %v6395
        %v6674 = vunpack.c.l.b16 %v6405
        %v6675 = vunpack.c.l.b16 %v6419
        %v6676 = vunpack.c.l.b16 %v6429
        %v6677 = vunpack.c.l.b16 %v6443
        %v6678 = vunpack.c.l.b16 %v6453
        %v6679 = vunpack.c.l.b16 %v6467
        %v6680 = vunpack.c.l.b16 %v6477
        %v6681 = vunpack.c.l.b16 %v6491
        %v6682 = vunpack.c.l.b16 %v6501
        %v6683 = vunpack.c.l.b16 %v6515
        %v6684 = vunpack.c.l.b16 %v6525
        %v6685 = vunpack.c.l.b16 %v6539
        %v6686 = vunpack.c.l.b16 %v6549
        %v6687 = vunpack.c.l.b16 %v6563
        %v6688 = vunpack.c.l.b16 %v6573
        %v6689 = vunpack.c.l.b16 %v6587
        %v6690 = vunpack.c.l.b16 %v6597
        %v6691 = vunpack.c.l.b16 %v6611
        %v6692 = vunpack.c.l.b16 %v6621
        %v6693 = vunpack.c.l.b16 %v6635
        %v6694 = vunpack.c.l.b16 %v6645
        %v6695 = vpack.c.b16 %v6664, %v6663
        %v6696 = vpack.c.b16 %v6666, %v6665
        %v6697 = vpack.c.b16 %v6668, %v6667
        %v6698 = vpack.c.b16 %v6670, %v6669
        %v6699 = vpack.c.b16 %v6672, %v6671
        %v6700 = vpack.c.b16 %v6674, %v6673
        %v6701 = vpack.c.b16 %v6676, %v6675
        %v6702 = vpack.c.b16 %v6678, %v6677
        %v6703 = vpack.c.b16 %v6680, %v6679
        %v6704 = vpack.c.b16 %v6682, %v6681
        %v6705 = vpack.c.b16 %v6684, %v6683
        %v6706 = vpack.c.b16 %v6686, %v6685
        %v6707 = vpack.c.b16 %v6688, %v6687
        %v6708 = vpack.c.b16 %v6690, %v6689
        %v6709 = vpack.c.b16 %v6692, %v6691
        %v6710 = vpack.c.b16 %v6694, %v6693
        %v6743 = vunpack.c.l.b16 %v6647
        %v6744 = vunpack.c.l.b16 %v6648
        %v6745 = vunpack.c.l.b16 %v6649
        %v6746 = vunpack.c.l.b16 %v6650
        %v6747 = vunpack.c.l.b16 %v6651
        %v6748 = vunpack.c.l.b16 %v6652
        %v6749 = vunpack.c.l.b16 %v6653
        %v6750 = vunpack.c.l.b16 %v6654
        %v6751 = vunpack.c.l.b16 %v6655
        %v6752 = vunpack.c.l.b16 %v6656
        %v6753 = vunpack.c.l.b16 %v6657
        %v6754 = vunpack.c.l.b16 %v6658
        %v6755 = vunpack.c.l.b16 %v6659
        %v6756 = vunpack.c.l.b16 %v6660
        %v6757 = vunpack.c.l.b16 %v6661
        %v6758 = vunpack.c.l.b16 %v6662
        %v6759 = vpack.c.b16 %v6744, %v6743
        %v6760 = vpack.c.b16 %v6746, %v6745
        %v6761 = vpack.c.b16 %v6748, %v6747
        %v6762 = vpack.c.b16 %v6750, %v6749
        %v6763 = vpack.c.b16 %v6752, %v6751
        %v6764 = vpack.c.b16 %v6754, %v6753
        %v6765 = vpack.c.b16 %v6756, %v6755
        %v6766 = vpack.c.b16 %v6758, %v6757
        %6775 = vmatprep.subr.bf16.mxu0 0
        %6776 = vmatpush1.bf16.msra.mxu0 %v6759
        %6777 = vmatprep.subr.bf16.mxu0 0
        %6778 = vmatpush1.bf16.msra.mxu0 %v6760
        %6779 = vmatprep.subr.bf16.mxu0 0
        %6780 = vmatpush1.bf16.msra.mxu0 %v6761
        %6781 = vmatprep.subr.bf16.mxu0 0
        %6782 = vmatpush1.bf16.msra.mxu0 %v6762
        %6783 = vmatprep.subr.bf16.mxu0 0
        %6784 = vmatpush1.bf16.msra.mxu0 %v6763
        %6785 = vmatprep.subr.bf16.mxu0 0
        %6786 = vmatpush1.bf16.msra.mxu0 %v6764
        %6787 = vmatprep.subr.bf16.mxu0 0
        %6788 = vmatpush1.bf16.msra.mxu0 %v6765
        %6789 = vmatprep.subr.bf16.mxu0 0
        %6790 = vmatpush1.bf16.msra.mxu0 %v6766
        %6791 = vmatprep.subr.bf16.mxu0 0
        %6792 = vmatpush1.bf16.msra.mxu0 0
        %6793 = vmatprep.subr.bf16.mxu0 0
        %6794 = vmatpush1.bf16.msra.mxu0 0
        %6795 = vmatprep.subr.bf16.mxu0 0
        %6796 = vmatpush1.bf16.msra.mxu0 0
        %6797 = vmatprep.subr.bf16.mxu0 0
        %6798 = vmatpush1.bf16.msra.mxu0 0
        %6799 = vmatprep.subr.bf16.mxu0 0
        %6800 = vmatpush1.bf16.msra.mxu0 0
        %6801 = vmatprep.subr.bf16.mxu0 0
        %6802 = vmatpush1.bf16.msra.mxu0 0
        %6803 = vmatprep.subr.bf16.mxu0 0
        %6804 = vmatpush1.bf16.msra.mxu0 0
        %6805 = vmatprep.subr.bf16.mxu0 0
        %6806 = vmatpush1.bf16.msra.mxu0 0
        %6807 = vmatprep.mubr.bf16.mxu0 0
        %6808 = vmatmul.mubr.bf16.gmra.mrb[0].mxu0 %v6695
        %v6809 = vpop.f32.mrb[0].mxu0
        %v6810 = vadd.f32 0.0, %v6809
        %v6811 = vpop.f32.mrb[0].mxu0
        %v6812 = vpop.f32.mrb[0].mxu0
        %v6813 = vadd.f32 0.0, %v6812
        %v6814 = vpop.f32.mrb[0].mxu0
        %6815 = vmatprep.mubr.bf16.mxu0 0
        %6816 = vmatmul.mubr.bf16.gmra.mrb[0].mxu0 %v6696
        %v6817 = vpop.f32.mrb[0].mxu0
        %v6818 = vadd.f32 0.0, %v6817
        %v6819 = vpop.f32.mrb[0].mxu0
        %v6820 = vpop.f32.mrb[0].mxu0
        %v6821 = vadd.f32 0.0, %v6820
        %v6822 = vpop.f32.mrb[0].mxu0
        %6823 = vmatprep.mubr.bf16.mxu0 0
        %6824 = vmatmul.mubr.bf16.gmra.mrb[0].mxu0 %v6697
        %v6825 = vpop.f32.mrb[0].mxu0
        %v6826 = vadd.f32 0.0, %v6825
        %v6827 = vpop.f32.mrb[0].mxu0
        %v6828 = vpop.f32.mrb[0].mxu0
        %v6829 = vadd.f32 0.0, %v6828
        %v6830 = vpop.f32.mrb[0].mxu0
        %6831 = vmatprep.mubr.bf16.mxu0 0
        %6832 = vmatmul.mubr.bf16.gmra.mrb[0].mxu0 %v6698
        %v6833 = vpop.f32.mrb[0].mxu0
        %v6834 = vadd.f32 0.0, %v6833
        %v6835 = vpop.f32.mrb[0].mxu0
        %v6836 = vpop.f32.mrb[0].mxu0
        %v6837 = vadd.f32 0.0, %v6836
        %v6838 = vpop.f32.mrb[0].mxu0
        %6839 = vmatprep.mubr.bf16.mxu0 0
        %6840 = vmatmul.mubr.bf16.gmra.mrb[0].mxu0 %v6699
        %v6841 = vpop.f32.mrb[0].mxu0
        %v6842 = vadd.f32 0.0, %v6841
        %v6843 = vpop.f32.mrb[0].mxu0
        %v6844 = vpop.f32.mrb[0].mxu0
        %v6845 = vadd.f32 0.0, %v6844
        %v6846 = vpop.f32.mrb[0].mxu0
        %6847 = vmatprep.mubr.bf16.mxu0 0
        %6848 = vmatmul.mubr.bf16.gmra.mrb[0].mxu0 %v6700
        %v6849 = vpop.f32.mrb[0].mxu0
        %v6850 = vadd.f32 0.0, %v6849
        %v6851 = vpop.f32.mrb[0].mxu0
        %v6852 = vpop.f32.mrb[0].mxu0
        %v6853 = vadd.f32 0.0, %v6852
        %v6854 = vpop.f32.mrb[0].mxu0
        %6855 = vmatprep.mubr.bf16.mxu0 0
        %6856 = vmatmul.mubr.bf16.gmra.mrb[0].mxu0 %v6701
        %v6857 = vpop.f32.mrb[0].mxu0
        %v6858 = vadd.f32 0.0, %v6857
        %v6859 = vpop.f32.mrb[0].mxu0
        %v6860 = vpop.f32.mrb[0].mxu0
        %v6861 = vadd.f32 0.0, %v6860
        %v6862 = vpop.f32.mrb[0].mxu0
        %6863 = vmatprep.mubr.bf16.mxu0 0
        %6864 = vmatmul.mubr.bf16.gmra.mrb[0].mxu0 %v6702
        %v6865 = vpop.f32.mrb[0].mxu0
        %v6866 = vadd.f32 0.0, %v6865
        %v6867 = vpop.f32.mrb[0].mxu0
        %v6868 = vpop.f32.mrb[0].mxu0
        %v6869 = vadd.f32 0.0, %v6868
        %v6870 = vpop.f32.mrb[0].mxu0
        %6871 = vmatprep.mubr.bf16.mxu0 0
        %6872 = vmatmul.mubr.bf16.gmra.mrb[0].mxu0 %v6703
        %v6873 = vpop.f32.mrb[0].mxu0
        %v6874 = vadd.f32 0.0, %v6873
        %v6875 = vpop.f32.mrb[0].mxu0
        %v6876 = vpop.f32.mrb[0].mxu0
        %v6877 = vadd.f32 0.0, %v6876
        %v6878 = vpop.f32.mrb[0].mxu0
        %6879 = vmatprep.mubr.bf16.mxu0 0
        %6880 = vmatmul.mubr.bf16.gmra.mrb[0].mxu0 %v6704
        %v6881 = vpop.f32.mrb[0].mxu0
        %v6882 = vadd.f32 0.0, %v6881
        %v6883 = vpop.f32.mrb[0].mxu0
        %v6884 = vpop.f32.mrb[0].mxu0
        %v6885 = vadd.f32 0.0, %v6884
        %v6886 = vpop.f32.mrb[0].mxu0
        %6887 = vmatprep.mubr.bf16.mxu0 0
        %6888 = vmatmul.mubr.bf16.gmra.mrb[0].mxu0 %v6705
        %v6889 = vpop.f32.mrb[0].mxu0
        %v6890 = vadd.f32 0.0, %v6889
        %v6891 = vpop.f32.mrb[0].mxu0
        %v6892 = vpop.f32.mrb[0].mxu0
        %v6893 = vadd.f32 0.0, %v6892
        %v6894 = vpop.f32.mrb[0].mxu0
        %6895 = vmatprep.mubr.bf16.mxu0 0
        %6896 = vmatmul.mubr.bf16.gmra.mrb[0].mxu0 %v6706
        %v6897 = vpop.f32.mrb[0].mxu0
        %v6898 = vadd.f32 0.0, %v6897
        %v6899 = vpop.f32.mrb[0].mxu0
        %v6900 = vpop.f32.mrb[0].mxu0
        %v6901 = vadd.f32 0.0, %v6900
        %v6902 = vpop.f32.mrb[0].mxu0
        %6903 = vmatprep.mubr.bf16.mxu0 0
        %6904 = vmatmul.mubr.bf16.gmra.mrb[0].mxu0 %v6707
        %v6905 = vpop.f32.mrb[0].mxu0
        %v6906 = vadd.f32 0.0, %v6905
        %v6907 = vpop.f32.mrb[0].mxu0
        %v6908 = vpop.f32.mrb[0].mxu0
        %v6909 = vadd.f32 0.0, %v6908
        %v6910 = vpop.f32.mrb[0].mxu0
        %6911 = vmatprep.mubr.bf16.mxu0 0
        %6912 = vmatmul.mubr.bf16.gmra.mrb[0].mxu0 %v6708
        %v6913 = vpop.f32.mrb[0].mxu0
        %v6914 = vadd.f32 0.0, %v6913
        %v6915 = vpop.f32.mrb[0].mxu0
        %v6916 = vpop.f32.mrb[0].mxu0
        %v6917 = vadd.f32 0.0, %v6916
        %v6918 = vpop.f32.mrb[0].mxu0
        %6919 = vmatprep.mubr.bf16.mxu0 0
        %6920 = vmatmul.mubr.bf16.gmra.mrb[0].mxu0 %v6709
        %v6921 = vpop.f32.mrb[0].mxu0
        %v6922 = vadd.f32 0.0, %v6921
        %v6923 = vpop.f32.mrb[0].mxu0
        %v6924 = vpop.f32.mrb[0].mxu0
        %v6925 = vadd.f32 0.0, %v6924
        %v6926 = vpop.f32.mrb[0].mxu0
        %6927 = vmatprep.mubr.bf16.mxu0 0
        %6928 = vmatmul.mubr.bf16.gmra.mrb[0].mxu0 %v6710
        %v6929 = vpop.f32.mrb[0].mxu0
        %v6930 = vadd.f32 0.0, %v6929
        %v6931 = vpop.f32.mrb[0].mxu0
        %v6932 = vpop.f32.mrb[0].mxu0
        %v6933 = vadd.f32 0.0, %v6932
        %v6934 = vpop.f32.mrb[0].mxu0
        %6935 = vdwg.mxu0
        %v6936 = vadd.f32 %v6182, %v6810
        %v6937 = vadd.f32 %v6183, %v6813
        %v6938 = vadd.f32 %v6184, %v6818
        %v6939 = vadd.f32 %v6185, %v6821
        %v6940 = vadd.f32 %v6186, %v6826
        %v6941 = vadd.f32 %v6187, %v6829
        %v6942 = vadd.f32 %v6188, %v6834
        %v6943 = vadd.f32 %v6189, %v6837
        %v6944 = vadd.f32 %v6190, %v6842
        %v6945 = vadd.f32 %v6191, %v6845
        %v6946 = vadd.f32 %v6192, %v6850
        %v6947 = vadd.f32 %v6193, %v6853
        %v6948 = vadd.f32 %v6194, %v6858
        %v6949 = vadd.f32 %v6195, %v6861
        %v6950 = vadd.f32 %v6196, %v6866
        %v6951 = vadd.f32 %v6197, %v6869
        %v6952 = vadd.f32 %v6198, %v6874
        %v6953 = vadd.f32 %v6199, %v6877
        %v6954 = vadd.f32 %v6200, %v6882
        %v6955 = vadd.f32 %v6201, %v6885
        %v6956 = vadd.f32 %v6202, %v6890
        %v6957 = vadd.f32 %v6203, %v6893
        %v6958 = vadd.f32 %v6204, %v6898
        %v6959 = vadd.f32 %v6205, %v6901
        %v6960 = vadd.f32 %v6206, %v6906
        %v6961 = vadd.f32 %v6207, %v6909
        %v6962 = vadd.f32 %v6208, %v6914
        %v6963 = vadd.f32 %v6209, %v6917
        %v6964 = vadd.f32 %v6210, %v6922
        %v6965 = vadd.f32 %v6211, %v6925
        %v6966 = vadd.f32 %v6212, %v6930
        %v6967 = vadd.f32 %v6213, %v6933
        %v6968 = vld [vmem:[%s4182] sm:$0xe]
        %v6969 = vld [vmem:[%s4182 + $0xc] sm:$0xe]
        %v6970 = vld [vmem:[%s4182 + $0x18] sm:$0xe]
        %v6971 = vld [vmem:[%s4182 + $0x24] sm:$0xe]
        %v6972 = vld [vmem:[%s4182 + $0x30] sm:$0xe]
        %v6973 = vld [vmem:[%s4182 + $0x3c] sm:$0xe]
        %v6974 = vld [vmem:[%s4182 + $0x48] sm:$0xe]
        %v6975 = vld [vmem:[%s4182 + $0x54] sm:$0xe]
        %v6976 = vld [vmem:[%s4182 + $0x60] sm:$0xe]
        %v6977 = vld [vmem:[%s4182 + $0x6c] sm:$0xe]
        %v6978 = vld [vmem:[%s4182 + $0x78] sm:$0xe]
        %v6979 = vld [vmem:[%s4182 + $0x84] sm:$0xe]
        %v6980 = vld [vmem:[%s4182 + $0x90] sm:$0xe]
        %v6981 = vld [vmem:[%s4182 + $0x9c] sm:$0xe]
        %v6982 = vld [vmem:[%s4182 + $0xa8] sm:$0xe]
        %v6983 = vld [vmem:[%s4182 + $0xb4] sm:$0xe]
        %v7032 = vrot.slane %v6968, 5
        %v7033 = vrot.slane %v7032, 4
        %v7034 = vrot.slane %v6215, 5
        %v7035 = vsel %vm5393, %v7033, %v7034
        %v7036 = vrot.slane %v7034, 4
        %v7037 = vrot.slane %v6216, 5
        %v7038 = vsel %vm5393, %v7036, %v7037
        %v7039 = vrot.slane %v6969, 5
        %v7040 = vrot.slane %v7039, 4
        %v7041 = vrot.slane %v6218, 5
        %v7042 = vsel %vm5393, %v7040, %v7041
        %v7043 = vrot.slane %v7041, 4
        %v7044 = vrot.slane %v6219, 5
        %v7045 = vsel %vm5393, %v7043, %v7044
        %v7046 = vrot.slane %v6970, 5
        %v7047 = vrot.slane %v7046, 4
        %v7048 = vrot.slane %v6221, 5
        %v7049 = vsel %vm5393, %v7047, %v7048
        %v7050 = vrot.slane %v7048, 4
        %v7051 = vrot.slane %v6222, 5
        %v7052 = vsel %vm5393, %v7050, %v7051
        %v7053 = vrot.slane %v6971, 5
        %v7054 = vrot.slane %v7053, 4
        %v7055 = vrot.slane %v6224, 5
        %v7056 = vsel %vm5393, %v7054, %v7055
        %v7057 = vrot.slane %v7055, 4
        %v7058 = vrot.slane %v6225, 5
        %v7059 = vsel %vm5393, %v7057, %v7058
        %v7060 = vrot.slane %v6972, 5
        %v7061 = vrot.slane %v7060, 4
        %v7062 = vrot.slane %v6227, 5
        %v7063 = vsel %vm5393, %v7061, %v7062
        %v7064 = vrot.slane %v7062, 4
        %v7065 = vrot.slane %v6228, 5
        %v7066 = vsel %vm5393, %v7064, %v7065
        %v7067 = vrot.slane %v6973, 5
        %v7068 = vrot.slane %v7067, 4
        %v7069 = vrot.slane %v6230, 5
        %v7070 = vsel %vm5393, %v7068, %v7069
        %v7071 = vrot.slane %v7069, 4
        %v7072 = vrot.slane %v6231, 5
        %v7073 = vsel %vm5393, %v7071, %v7072
        %v7074 = vrot.slane %v6974, 5
        %v7075 = vrot.slane %v7074, 4
        %v7076 = vrot.slane %v6233, 5
        %v7077 = vsel %vm5393, %v7075, %v7076
        %v7078 = vrot.slane %v7076, 4
        %v7079 = vrot.slane %v6234, 5
        %v7080 = vsel %vm5393, %v7078, %v7079
        %v7081 = vrot.slane %v6975, 5
        %v7082 = vrot.slane %v7081, 4
        %v7083 = vrot.slane %v6236, 5
        %v7084 = vsel %vm5393, %v7082, %v7083
        %v7085 = vrot.slane %v7083, 4
        %v7086 = vrot.slane %v6237, 5
        %v7087 = vsel %vm5393, %v7085, %v7086
        %v7088 = vrot.slane %v6976, 5
        %v7089 = vrot.slane %v7088, 4
        %v7090 = vrot.slane %v6239, 5
        %v7091 = vsel %vm5393, %v7089, %v7090
        %v7092 = vrot.slane %v7090, 4
        %v7093 = vrot.slane %v6240, 5
        %v7094 = vsel %vm5393, %v7092, %v7093
        %v7095 = vrot.slane %v6977, 5
        %v7096 = vrot.slane %v7095, 4
        %v7097 = vrot.slane %v6242, 5
        %v7098 = vsel %vm5393, %v7096, %v7097
        %v7099 = vrot.slane %v7097, 4
        %v7100 = vrot.slane %v6243, 5
        %v7101 = vsel %vm5393, %v7099, %v7100
        %v7102 = vrot.slane %v6978, 5
        %v7103 = vrot.slane %v7102, 4
        %v7104 = vrot.slane %v6245, 5
        %v7105 = vsel %vm5393, %v7103, %v7104
        %v7106 = vrot.slane %v7104, 4
        %v7107 = vrot.slane %v6246, 5
        %v7108 = vsel %vm5393, %v7106, %v7107
        %v7109 = vrot.slane %v6979, 5
        %v7110 = vrot.slane %v7109, 4
        %v7111 = vrot.slane %v6248, 5
        %v7112 = vsel %vm5393, %v7110, %v7111
        %v7113 = vrot.slane %v7111, 4
        %v7114 = vrot.slane %v6249, 5
        %v7115 = vsel %vm5393, %v7113, %v7114
        %v7116 = vrot.slane %v6980, 5
        %v7117 = vrot.slane %v7116, 4
        %v7118 = vrot.slane %v6251, 5
        %v7119 = vsel %vm5393, %v7117, %v7118
        %v7120 = vrot.slane %v7118, 4
        %v7121 = vrot.slane %v6252, 5
        %v7122 = vsel %vm5393, %v7120, %v7121
        %v7123 = vrot.slane %v6981, 5
        %v7124 = vrot.slane %v7123, 4
        %v7125 = vrot.slane %v6254, 5
        %v7126 = vsel %vm5393, %v7124, %v7125
        %v7127 = vrot.slane %v7125, 4
        %v7128 = vrot.slane %v6255, 5
        %v7129 = vsel %vm5393, %v7127, %v7128
        %v7130 = vrot.slane %v6982, 5
        %v7131 = vrot.slane %v7130, 4
        %v7132 = vrot.slane %v6257, 5
        %v7133 = vsel %vm5393, %v7131, %v7132
        %v7134 = vrot.slane %v7132, 4
        %v7135 = vrot.slane %v6258, 5
        %v7136 = vsel %vm5393, %v7134, %v7135
        %v7137 = vrot.slane %v6983, 5
        %v7138 = vrot.slane %v7137, 4
        %v7139 = vrot.slane %v6260, 5
        %v7140 = vsel %vm5393, %v7138, %v7139
        %v7141 = vrot.slane %v7139, 4
        %v7142 = vrot.slane %v6261, 5
        %v7143 = vsel %vm5393, %v7141, %v7142
        %s7144 = scalar_lea.vmem [#allocation9], 320
        %v7145 = vld [vmem:[%s7144] sm:$0xf]
        %v7146 = vld [vmem:[%s7144 + $0x4] sm:$0xf]
        %v7147 = vld [vmem:[%s7144 + $0x8] sm:$0xf]
        %v7148 = vld [vmem:[%s7144 + $0xc] sm:$0xf]
        %v7149 = vld [vmem:[%s7144 + $0x10] sm:$0xf]
        %v7150 = vld [vmem:[%s7144 + $0x14] sm:$0xf]
        %v7151 = vld [vmem:[%s7144 + $0x18] sm:$0xf]
        %v7152 = vld [vmem:[%s7144 + $0x1c] sm:$0xf]
        %v7153 = vld [vmem:[%s7144 + $0x20] sm:$0xf]
        %v7154 = vld [vmem:[%s7144 + $0x24] sm:$0xf]
        %v7155 = vld [vmem:[%s7144 + $0x28] sm:$0xf]
        %v7156 = vld [vmem:[%s7144 + $0x2c] sm:$0xf]
        %v7157 = vld [vmem:[%s7144 + $0x30] sm:$0xf]
        %v7158 = vld [vmem:[%s7144 + $0x34] sm:$0xf]
        %v7159 = vld [vmem:[%s7144 + $0x38] sm:$0xf]
        %v7160 = vld [vmem:[%s7144 + $0x3c] sm:$0xf]
        %v7161 = vunpack.c.l.b16 %v7035
        %v7162 = vunpack.c.l.b16 %v7038
        %v7163 = vunpack.c.l.b16 %v7042
        %v7164 = vunpack.c.l.b16 %v7045
        %v7165 = vunpack.c.l.b16 %v7049
        %v7166 = vunpack.c.l.b16 %v7052
        %v7167 = vunpack.c.l.b16 %v7056
        %v7168 = vunpack.c.l.b16 %v7059
        %v7169 = vunpack.c.l.b16 %v7063
        %v7170 = vunpack.c.l.b16 %v7066
        %v7171 = vunpack.c.l.b16 %v7070
        %v7172 = vunpack.c.l.b16 %v7073
        %v7173 = vunpack.c.l.b16 %v7077
        %v7174 = vunpack.c.l.b16 %v7080
        %v7175 = vunpack.c.l.b16 %v7084
        %v7176 = vunpack.c.l.b16 %v7087
        %v7177 = vunpack.c.l.b16 %v7091
        %v7178 = vunpack.c.l.b16 %v7094
        %v7179 = vunpack.c.l.b16 %v7098
        %v7180 = vunpack.c.l.b16 %v7101
        %v7181 = vunpack.c.l.b16 %v7105
        %v7182 = vunpack.c.l.b16 %v7108
        %v7183 = vunpack.c.l.b16 %v7112
        %v7184 = vunpack.c.l.b16 %v7115
        %v7185 = vunpack.c.l.b16 %v7119
        %v7186 = vunpack.c.l.b16 %v7122
        %v7187 = vunpack.c.l.b16 %v7126
        %v7188 = vunpack.c.l.b16 %v7129
        %v7189 = vunpack.c.l.b16 %v7133
        %v7190 = vunpack.c.l.b16 %v7136
        %v7191 = vunpack.c.l.b16 %v7140
        %v7192 = vunpack.c.l.b16 %v7143
        %v7193 = vpack.c.b16 %v7162, %v7161
        %v7194 = vpack.c.b16 %v7164, %v7163
        %v7195 = vpack.c.b16 %v7166, %v7165
        %v7196 = vpack.c.b16 %v7168, %v7167
        %v7197 = vpack.c.b16 %v7170, %v7169
        %v7198 = vpack.c.b16 %v7172, %v7171
        %v7199 = vpack.c.b16 %v7174, %v7173
        %v7200 = vpack.c.b16 %v7176, %v7175
        %v7201 = vpack.c.b16 %v7178, %v7177
        %v7202 = vpack.c.b16 %v7180, %v7179
        %v7203 = vpack.c.b16 %v7182, %v7181
        %v7204 = vpack.c.b16 %v7184, %v7183
        %v7205 = vpack.c.b16 %v7186, %v7185
        %v7206 = vpack.c.b16 %v7188, %v7187
        %v7207 = vpack.c.b16 %v7190, %v7189
        %v7208 = vpack.c.b16 %v7192, %v7191
        %v7241 = vunpack.c.l.b16 %v7145
        %v7242 = vunpack.c.l.b16 %v7146
        %v7243 = vunpack.c.l.b16 %v7147
        %v7244 = vunpack.c.l.b16 %v7148
        %v7245 = vunpack.c.l.b16 %v7149
        %v7246 = vunpack.c.l.b16 %v7150
        %v7247 = vunpack.c.l.b16 %v7151
        %v7248 = vunpack.c.l.b16 %v7152
        %v7249 = vunpack.c.l.b16 %v7153
        %v7250 = vunpack.c.l.b16 %v7154
        %v7251 = vunpack.c.l.b16 %v7155
        %v7252 = vunpack.c.l.b16 %v7156
        %v7253 = vunpack.c.l.b16 %v7157
        %v7254 = vunpack.c.l.b16 %v7158
        %v7255 = vunpack.c.l.b16 %v7159
        %v7256 = vunpack.c.l.b16 %v7160
        %v7257 = vpack.c.b16 %v7242, %v7241
        %v7258 = vpack.c.b16 %v7244, %v7243
        %v7259 = vpack.c.b16 %v7246, %v7245
        %v7260 = vpack.c.b16 %v7248, %v7247
        %v7261 = vpack.c.b16 %v7250, %v7249
        %v7262 = vpack.c.b16 %v7252, %v7251
        %v7263 = vpack.c.b16 %v7254, %v7253
        %v7264 = vpack.c.b16 %v7256, %v7255
        %7273 = vmatprep.subr.bf16.mxu0 0
        %7274 = vmatpush1.bf16.msra.mxu0 %v7257
        %7275 = vmatprep.subr.bf16.mxu0 0
        %7276 = vmatpush1.bf16.msra.mxu0 %v7258
        %7277 = vmatprep.subr.bf16.mxu0 0
        %7278 = vmatpush1.bf16.msra.mxu0 %v7259
        %7279 = vmatprep.subr.bf16.mxu0 0
        %7280 = vmatpush1.bf16.msra.mxu0 %v7260
        %7281 = vmatprep.subr.bf16.mxu0 0
        %7282 = vmatpush1.bf16.msra.mxu0 %v7261
        %7283 = vmatprep.subr.bf16.mxu0 0
        %7284 = vmatpush1.bf16.msra.mxu0 %v7262
        %7285 = vmatprep.subr.bf16.mxu0 0
        %7286 = vmatpush1.bf16.msra.mxu0 %v7263
        %7287 = vmatprep.subr.bf16.mxu0 0
        %7288 = vmatpush1.bf16.msra.mxu0 %v7264
        %7289 = vmatprep.subr.bf16.mxu0 0
        %7290 = vmatpush1.bf16.msra.mxu0 0
        %7291 = vmatprep.subr.bf16.mxu0 0
        %7292 = vmatpush1.bf16.msra.mxu0 0
        %7293 = vmatprep.subr.bf16.mxu0 0
        %7294 = vmatpush1.bf16.msra.mxu0 0
        %7295 = vmatprep.subr.bf16.mxu0 0
        %7296 = vmatpush1.bf16.msra.mxu0 0
        %7297 = vmatprep.subr.bf16.mxu0 0
        %7298 = vmatpush1.bf16.msra.mxu0 0
        %7299 = vmatprep.subr.bf16.mxu0 0
        %7300 = vmatpush1.bf16.msra.mxu0 0
        %7301 = vmatprep.subr.bf16.mxu0 0
        %7302 = vmatpush1.bf16.msra.mxu0 0
        %7303 = vmatprep.subr.bf16.mxu0 0
        %7304 = vmatpush1.bf16.msra.mxu0 0
        %7305 = vmatprep.mubr.bf16.mxu0 0
        %7306 = vmatmul.mubr.bf16.gmra.mrb[0].mxu0 %v7193
        %v7307 = vpop.f32.mrb[0].mxu0
        %v7308 = vadd.f32 0.0, %v7307
        %v7309 = vpop.f32.mrb[0].mxu0
        %v7310 = vpop.f32.mrb[0].mxu0
        %v7311 = vadd.f32 0.0, %v7310
        %v7312 = vpop.f32.mrb[0].mxu0
        %7313 = vmatprep.mubr.bf16.mxu0 0
        %7314 = vmatmul.mubr.bf16.gmra.mrb[0].mxu0 %v7194
        %v7315 = vpop.f32.mrb[0].mxu0
        %v7316 = vadd.f32 0.0, %v7315
        %v7317 = vpop.f32.mrb[0].mxu0
        %v7318 = vpop.f32.mrb[0].mxu0
        %v7319 = vadd.f32 0.0, %v7318
        %v7320 = vpop.f32.mrb[0].mxu0
        %7321 = vmatprep.mubr.bf16.mxu0 0
        %7322 = vmatmul.mubr.bf16.gmra.mrb[0].mxu0 %v7195
        %v7323 = vpop.f32.mrb[0].mxu0
        %v7324 = vadd.f32 0.0, %v7323
        %v7325 = vpop.f32.mrb[0].mxu0
        %v7326 = vpop.f32.mrb[0].mxu0
        %v7327 = vadd.f32 0.0, %v7326
        %v7328 = vpop.f32.mrb[0].mxu0
        %7329 = vmatprep.mubr.bf16.mxu0 0
        %7330 = vmatmul.mubr.bf16.gmra.mrb[0].mxu0 %v7196
        %v7331 = vpop.f32.mrb[0].mxu0
        %v7332 = vadd.f32 0.0, %v7331
        %v7333 = vpop.f32.mrb[0].mxu0
        %v7334 = vpop.f32.mrb[0].mxu0
        %v7335 = vadd.f32 0.0, %v7334
        %v7336 = vpop.f32.mrb[0].mxu0
        %7337 = vmatprep.mubr.bf16.mxu0 0
        %7338 = vmatmul.mubr.bf16.gmra.mrb[0].mxu0 %v7197
        %v7339 = vpop.f32.mrb[0].mxu0
        %v7340 = vadd.f32 0.0, %v7339
        %v7341 = vpop.f32.mrb[0].mxu0
        %v7342 = vpop.f32.mrb[0].mxu0
        %v7343 = vadd.f32 0.0, %v7342
        %v7344 = vpop.f32.mrb[0].mxu0
        %7345 = vmatprep.mubr.bf16.mxu0 0
        %7346 = vmatmul.mubr.bf16.gmra.mrb[0].mxu0 %v7198
        %v7347 = vpop.f32.mrb[0].mxu0
        %v7348 = vadd.f32 0.0, %v7347
        %v7349 = vpop.f32.mrb[0].mxu0
        %v7350 = vpop.f32.mrb[0].mxu0
        %v7351 = vadd.f32 0.0, %v7350
        %v7352 = vpop.f32.mrb[0].mxu0
        %7353 = vmatprep.mubr.bf16.mxu0 0
        %7354 = vmatmul.mubr.bf16.gmra.mrb[0].mxu0 %v7199
        %v7355 = vpop.f32.mrb[0].mxu0
        %v7356 = vadd.f32 0.0, %v7355
        %v7357 = vpop.f32.mrb[0].mxu0
        %v7358 = vpop.f32.mrb[0].mxu0
        %v7359 = vadd.f32 0.0, %v7358
        %v7360 = vpop.f32.mrb[0].mxu0
        %7361 = vmatprep.mubr.bf16.mxu0 0
        %7362 = vmatmul.mubr.bf16.gmra.mrb[0].mxu0 %v7200
        %v7363 = vpop.f32.mrb[0].mxu0
        %v7364 = vadd.f32 0.0, %v7363
        %v7365 = vpop.f32.mrb[0].mxu0
        %v7366 = vpop.f32.mrb[0].mxu0
        %v7367 = vadd.f32 0.0, %v7366
        %v7368 = vpop.f32.mrb[0].mxu0
        %7369 = vmatprep.mubr.bf16.mxu0 0
        %7370 = vmatmul.mubr.bf16.gmra.mrb[0].mxu0 %v7201
        %v7371 = vpop.f32.mrb[0].mxu0
        %v7372 = vadd.f32 0.0, %v7371
        %v7373 = vpop.f32.mrb[0].mxu0
        %v7374 = vpop.f32.mrb[0].mxu0
        %v7375 = vadd.f32 0.0, %v7374
        %v7376 = vpop.f32.mrb[0].mxu0
        %7377 = vmatprep.mubr.bf16.mxu0 0
        %7378 = vmatmul.mubr.bf16.gmra.mrb[0].mxu0 %v7202
        %v7379 = vpop.f32.mrb[0].mxu0
        %v7380 = vadd.f32 0.0, %v7379
        %v7381 = vpop.f32.mrb[0].mxu0
        %v7382 = vpop.f32.mrb[0].mxu0
        %v7383 = vadd.f32 0.0, %v7382
        %v7384 = vpop.f32.mrb[0].mxu0
        %7385 = vmatprep.mubr.bf16.mxu0 0
        %7386 = vmatmul.mubr.bf16.gmra.mrb[0].mxu0 %v7203
        %v7387 = vpop.f32.mrb[0].mxu0
        %v7388 = vadd.f32 0.0, %v7387
        %v7389 = vpop.f32.mrb[0].mxu0
        %v7390 = vpop.f32.mrb[0].mxu0
        %v7391 = vadd.f32 0.0, %v7390
        %v7392 = vpop.f32.mrb[0].mxu0
        %7393 = vmatprep.mubr.bf16.mxu0 0
        %7394 = vmatmul.mubr.bf16.gmra.mrb[0].mxu0 %v7204
        %v7395 = vpop.f32.mrb[0].mxu0
        %v7396 = vadd.f32 0.0, %v7395
        %v7397 = vpop.f32.mrb[0].mxu0
        %v7398 = vpop.f32.mrb[0].mxu0
        %v7399 = vadd.f32 0.0, %v7398
        %v7400 = vpop.f32.mrb[0].mxu0
        %7401 = vmatprep.mubr.bf16.mxu0 0
        %7402 = vmatmul.mubr.bf16.gmra.mrb[0].mxu0 %v7205
        %v7403 = vpop.f32.mrb[0].mxu0
        %v7404 = vadd.f32 0.0, %v7403
        %v7405 = vpop.f32.mrb[0].mxu0
        %v7406 = vpop.f32.mrb[0].mxu0
        %v7407 = vadd.f32 0.0, %v7406
        %v7408 = vpop.f32.mrb[0].mxu0
        %7409 = vmatprep.mubr.bf16.mxu0 0
        %7410 = vmatmul.mubr.bf16.gmra.mrb[0].mxu0 %v7206
        %v7411 = vpop.f32.mrb[0].mxu0
        %v7412 = vadd.f32 0.0, %v7411
        %v7413 = vpop.f32.mrb[0].mxu0
        %v7414 = vpop.f32.mrb[0].mxu0
        %v7415 = vadd.f32 0.0, %v7414
        %v7416 = vpop.f32.mrb[0].mxu0
        %7417 = vmatprep.mubr.bf16.mxu0 0
        %7418 = vmatmul.mubr.bf16.gmra.mrb[0].mxu0 %v7207
        %v7419 = vpop.f32.mrb[0].mxu0
        %v7420 = vadd.f32 0.0, %v7419
        %v7421 = vpop.f32.mrb[0].mxu0
        %v7422 = vpop.f32.mrb[0].mxu0
        %v7423 = vadd.f32 0.0, %v7422
        %v7424 = vpop.f32.mrb[0].mxu0
        %7425 = vmatprep.mubr.bf16.mxu0 0
        %7426 = vmatmul.mubr.bf16.gmra.mrb[0].mxu0 %v7208
        %v7427 = vpop.f32.mrb[0].mxu0
        %v7428 = vadd.f32 0.0, %v7427
        %v7429 = vpop.f32.mrb[0].mxu0
        %v7430 = vpop.f32.mrb[0].mxu0
        %v7431 = vadd.f32 0.0, %v7430
        %v7432 = vpop.f32.mrb[0].mxu0
        %7433 = vdwg.mxu0
        %v7434 = vadd.f32 %v6936, %v7308
        %v7435 = vadd.f32 %v6937, %v7311
        %v7436 = vadd.f32 %v6938, %v7316
        %v7437 = vadd.f32 %v6939, %v7319
        %v7438 = vadd.f32 %v6940, %v7324
        %v7439 = vadd.f32 %v6941, %v7327
        %v7440 = vadd.f32 %v6942, %v7332
        %v7441 = vadd.f32 %v6943, %v7335
        %v7442 = vadd.f32 %v6944, %v7340
        %v7443 = vadd.f32 %v6945, %v7343
        %v7444 = vadd.f32 %v6946, %v7348
        %v7445 = vadd.f32 %v6947, %v7351
        %v7446 = vadd.f32 %v6948, %v7356
        %v7447 = vadd.f32 %v6949, %v7359
        %v7448 = vadd.f32 %v6950, %v7364
        %v7449 = vadd.f32 %v6951, %v7367
        %v7450 = vadd.f32 %v6952, %v7372
        %v7451 = vadd.f32 %v6953, %v7375
        %v7452 = vadd.f32 %v6954, %v7380
        %v7453 = vadd.f32 %v6955, %v7383
        %v7454 = vadd.f32 %v6956, %v7388
        %v7455 = vadd.f32 %v6957, %v7391
        %v7456 = vadd.f32 %v6958, %v7396
        %v7457 = vadd.f32 %v6959, %v7399
        %v7458 = vadd.f32 %v6960, %v7404
        %v7459 = vadd.f32 %v6961, %v7407
        %v7460 = vadd.f32 %v6962, %v7412
        %v7461 = vadd.f32 %v6963, %v7415
        %v7462 = vadd.f32 %v6964, %v7420
        %v7463 = vadd.f32 %v6965, %v7423
        %v7464 = vadd.f32 %v6966, %v7428
        %v7465 = vadd.f32 %v6967, %v7431
        %s7466 = scalar_lea.vmem [#allocation3], 24
        %v7467 = vld [vmem:[%s7466] sm:$0xf]
        %v7468 = vld [vmem:[%s7466 + $0x4] sm:$0xf]
        %v7469 = vld [vmem:[%s7466 + $0xc] sm:$0xf]
        %v7470 = vld [vmem:[%s7466 + $0x10] sm:$0xf]
        %v7471 = vld [vmem:[%s7466 + $0x18] sm:$0xf]
        %v7472 = vld [vmem:[%s7466 + $0x1c] sm:$0xf]
        %v7473 = vld [vmem:[%s7466 + $0x24] sm:$0xf]
        %v7474 = vld [vmem:[%s7466 + $0x28] sm:$0xf]
        %v7475 = vld [vmem:[%s7466 + $0x30] sm:$0xf]
        %v7476 = vld [vmem:[%s7466 + $0x34] sm:$0xf]
        %v7477 = vld [vmem:[%s7466 + $0x3c] sm:$0xf]
        %v7478 = vld [vmem:[%s7466 + $0x40] sm:$0xf]
        %v7479 = vld [vmem:[%s7466 + $0x48] sm:$0xf]
        %v7480 = vld [vmem:[%s7466 + $0x4c] sm:$0xf]
        %v7481 = vld [vmem:[%s7466 + $0x54] sm:$0xf]
        %v7482 = vld [vmem:[%s7466 + $0x58] sm:$0xf]
        %v7483 = vld [vmem:[%s7466 + $0x60] sm:$0xf]
        %v7484 = vld [vmem:[%s7466 + $0x64] sm:$0xf]
        %v7485 = vld [vmem:[%s7466 + $0x6c] sm:$0xf]
        %v7486 = vld [vmem:[%s7466 + $0x70] sm:$0xf]
        %v7487 = vld [vmem:[%s7466 + $0x78] sm:$0xf]
        %v7488 = vld [vmem:[%s7466 + $0x7c] sm:$0xf]
        %v7489 = vld [vmem:[%s7466 + $0x84] sm:$0xf]
        %v7490 = vld [vmem:[%s7466 + $0x88] sm:$0xf]
        %v7491 = vld [vmem:[%s7466 + $0x90] sm:$0xf]
        %v7492 = vld [vmem:[%s7466 + $0x94] sm:$0xf]
        %v7493 = vld [vmem:[%s7466 + $0x9c] sm:$0xf]
        %v7494 = vld [vmem:[%s7466 + $0xa0] sm:$0xf]
        %v7495 = vld [vmem:[%s7466 + $0xa8] sm:$0xf]
        %v7496 = vld [vmem:[%s7466 + $0xac] sm:$0xf]
        %v7497 = vld [vmem:[%s7466 + $0xb4] sm:$0xf]
        %v7498 = vld [vmem:[%s7466 + $0xb8] sm:$0xf]
        %s7499 = scalar_lea.vmem [#allocation9], 384
        %v7500 = vld [vmem:[%s7499] sm:$0xf]
        %v7501 = vld [vmem:[%s7499 + $0x4] sm:$0xf]
        %v7502 = vld [vmem:[%s7499 + $0x8] sm:$0xf]
        %v7503 = vld [vmem:[%s7499 + $0xc] sm:$0xf]
        %v7504 = vld [vmem:[%s7499 + $0x10] sm:$0xf]
        %v7505 = vld [vmem:[%s7499 + $0x14] sm:$0xf]
        %v7506 = vld [vmem:[%s7499 + $0x18] sm:$0xf]
        %v7507 = vld [vmem:[%s7499 + $0x1c] sm:$0xf]
        %v7508 = vld [vmem:[%s7499 + $0x20] sm:$0xf]
        %v7509 = vld [vmem:[%s7499 + $0x24] sm:$0xf]
        %v7510 = vld [vmem:[%s7499 + $0x28] sm:$0xf]
        %v7511 = vld [vmem:[%s7499 + $0x2c] sm:$0xf]
        %v7512 = vld [vmem:[%s7499 + $0x30] sm:$0xf]
        %v7513 = vld [vmem:[%s7499 + $0x34] sm:$0xf]
        %v7514 = vld [vmem:[%s7499 + $0x38] sm:$0xf]
        %v7515 = vld [vmem:[%s7499 + $0x3c] sm:$0xf]
        %v7548 = vunpack.c.l.b16 %v7467
        %v7549 = vunpack.c.l.b16 %v7468
        %v7550 = vunpack.c.l.b16 %v7469
        %v7551 = vunpack.c.l.b16 %v7470
        %v7552 = vunpack.c.l.b16 %v7471
        %v7553 = vunpack.c.l.b16 %v7472
        %v7554 = vunpack.c.l.b16 %v7473
        %v7555 = vunpack.c.l.b16 %v7474
        %v7556 = vunpack.c.l.b16 %v7475
        %v7557 = vunpack.c.l.b16 %v7476
        %v7558 = vunpack.c.l.b16 %v7477
        %v7559 = vunpack.c.l.b16 %v7478
        %v7560 = vunpack.c.l.b16 %v7479
        %v7561 = vunpack.c.l.b16 %v7480
        %v7562 = vunpack.c.l.b16 %v7481
        %v7563 = vunpack.c.l.b16 %v7482
        %v7564 = vunpack.c.l.b16 %v7483
        %v7565 = vunpack.c.l.b16 %v7484
        %v7566 = vunpack.c.l.b16 %v7485
        %v7567 = vunpack.c.l.b16 %v7486
        %v7568 = vunpack.c.l.b16 %v7487
        %v7569 = vunpack.c.l.b16 %v7488
        %v7570 = vunpack.c.l.b16 %v7489
        %v7571 = vunpack.c.l.b16 %v7490
        %v7572 = vunpack.c.l.b16 %v7491
        %v7573 = vunpack.c.l.b16 %v7492
        %v7574 = vunpack.c.l.b16 %v7493
        %v7575 = vunpack.c.l.b16 %v7494
        %v7576 = vunpack.c.l.b16 %v7495
        %v7577 = vunpack.c.l.b16 %v7496
        %v7578 = vunpack.c.l.b16 %v7497
        %v7579 = vunpack.c.l.b16 %v7498
        %v7580 = vpack.c.b16 %v7549, %v7548
        %v7581 = vpack.c.b16 %v7551, %v7550
        %v7582 = vpack.c.b16 %v7553, %v7552
        %v7583 = vpack.c.b16 %v7555, %v7554
        %v7584 = vpack.c.b16 %v7557, %v7556
        %v7585 = vpack.c.b16 %v7559, %v7558
        %v7586 = vpack.c.b16 %v7561, %v7560
        %v7587 = vpack.c.b16 %v7563, %v7562
        %v7588 = vpack.c.b16 %v7565, %v7564
        %v7589 = vpack.c.b16 %v7567, %v7566
        %v7590 = vpack.c.b16 %v7569, %v7568
        %v7591 = vpack.c.b16 %v7571, %v7570
        %v7592 = vpack.c.b16 %v7573, %v7572
        %v7593 = vpack.c.b16 %v7575, %v7574
        %v7594 = vpack.c.b16 %v7577, %v7576
        %v7595 = vpack.c.b16 %v7579, %v7578
        %v7628 = vunpack.c.l.b16 %v7500
        %v7629 = vunpack.c.l.b16 %v7501
        %v7630 = vunpack.c.l.b16 %v7502
        %v7631 = vunpack.c.l.b16 %v7503
        %v7632 = vunpack.c.l.b16 %v7504
        %v7633 = vunpack.c.l.b16 %v7505
        %v7634 = vunpack.c.l.b16 %v7506
        %v7635 = vunpack.c.l.b16 %v7507
        %v7636 = vunpack.c.l.b16 %v7508
        %v7637 = vunpack.c.l.b16 %v7509
        %v7638 = vunpack.c.l.b16 %v7510
        %v7639 = vunpack.c.l.b16 %v7511
        %v7640 = vunpack.c.l.b16 %v7512
        %v7641 = vunpack.c.l.b16 %v7513
        %v7642 = vunpack.c.l.b16 %v7514
        %v7643 = vunpack.c.l.b16 %v7515
        %v7644 = vpack.c.b16 %v7629, %v7628
        %v7645 = vpack.c.b16 %v7631, %v7630
        %v7646 = vpack.c.b16 %v7633, %v7632
        %v7647 = vpack.c.b16 %v7635, %v7634
        %v7648 = vpack.c.b16 %v7637, %v7636
        %v7649 = vpack.c.b16 %v7639, %v7638
        %v7650 = vpack.c.b16 %v7641, %v7640
        %v7651 = vpack.c.b16 %v7643, %v7642
        %7660 = vmatprep.subr.bf16.mxu0 0
        %7661 = vmatpush1.bf16.msra.mxu0 %v7644
        %7662 = vmatprep.subr.bf16.mxu0 0
        %7663 = vmatpush1.bf16.msra.mxu0 %v7645
        %7664 = vmatprep.subr.bf16.mxu0 0
        %7665 = vmatpush1.bf16.msra.mxu0 %v7646
        %7666 = vmatprep.subr.bf16.mxu0 0
        %7667 = vmatpush1.bf16.msra.mxu0 %v7647
        %7668 = vmatprep.subr.bf16.mxu0 0
        %7669 = vmatpush1.bf16.msra.mxu0 %v7648
        %7670 = vmatprep.subr.bf16.mxu0 0
        %7671 = vmatpush1.bf16.msra.mxu0 %v7649
        %7672 = vmatprep.subr.bf16.mxu0 0
        %7673 = vmatpush1.bf16.msra.mxu0 %v7650
        %7674 = vmatprep.subr.bf16.mxu0 0
        %7675 = vmatpush1.bf16.msra.mxu0 %v7651
        %7676 = vmatprep.subr.bf16.mxu0 0
        %7677 = vmatpush1.bf16.msra.mxu0 0
        %7678 = vmatprep.subr.bf16.mxu0 0
        %7679 = vmatpush1.bf16.msra.mxu0 0
        %7680 = vmatprep.subr.bf16.mxu0 0
        %7681 = vmatpush1.bf16.msra.mxu0 0
        %7682 = vmatprep.subr.bf16.mxu0 0
        %7683 = vmatpush1.bf16.msra.mxu0 0
        %7684 = vmatprep.subr.bf16.mxu0 0
        %7685 = vmatpush1.bf16.msra.mxu0 0
        %7686 = vmatprep.subr.bf16.mxu0 0
        %7687 = vmatpush1.bf16.msra.mxu0 0
        %7688 = vmatprep.subr.bf16.mxu0 0
        %7689 = vmatpush1.bf16.msra.mxu0 0
        %7690 = vmatprep.subr.bf16.mxu0 0
        %7691 = vmatpush1.bf16.msra.mxu0 0
        %7692 = vmatprep.mubr.bf16.mxu0 0
        %7693 = vmatmul.mubr.bf16.gmra.mrb[0].mxu0 %v7580
        %v7694 = vpop.f32.mrb[0].mxu0
        %v7695 = vadd.f32 0.0, %v7694
        %v7696 = vpop.f32.mrb[0].mxu0
        %v7697 = vpop.f32.mrb[0].mxu0
        %v7698 = vadd.f32 0.0, %v7697
        %v7699 = vpop.f32.mrb[0].mxu0
        %7700 = vmatprep.mubr.bf16.mxu0 0
        %7701 = vmatmul.mubr.bf16.gmra.mrb[0].mxu0 %v7581
        %v7702 = vpop.f32.mrb[0].mxu0
        %v7703 = vadd.f32 0.0, %v7702
        %v7704 = vpop.f32.mrb[0].mxu0
        %v7705 = vpop.f32.mrb[0].mxu0
        %v7706 = vadd.f32 0.0, %v7705
        %v7707 = vpop.f32.mrb[0].mxu0
        %7708 = vmatprep.mubr.bf16.mxu0 0
        %7709 = vmatmul.mubr.bf16.gmra.mrb[0].mxu0 %v7582
        %v7710 = vpop.f32.mrb[0].mxu0
        %v7711 = vadd.f32 0.0, %v7710
        %v7712 = vpop.f32.mrb[0].mxu0
        %v7713 = vpop.f32.mrb[0].mxu0
        %v7714 = vadd.f32 0.0, %v7713
        %v7715 = vpop.f32.mrb[0].mxu0
        %7716 = vmatprep.mubr.bf16.mxu0 0
        %7717 = vmatmul.mubr.bf16.gmra.mrb[0].mxu0 %v7583
        %v7718 = vpop.f32.mrb[0].mxu0
        %v7719 = vadd.f32 0.0, %v7718
        %v7720 = vpop.f32.mrb[0].mxu0
        %v7721 = vpop.f32.mrb[0].mxu0
        %v7722 = vadd.f32 0.0, %v7721
        %v7723 = vpop.f32.mrb[0].mxu0
        %7724 = vmatprep.mubr.bf16.mxu0 0
        %7725 = vmatmul.mubr.bf16.gmra.mrb[0].mxu0 %v7584
        %v7726 = vpop.f32.mrb[0].mxu0
        %v7727 = vadd.f32 0.0, %v7726
        %v7728 = vpop.f32.mrb[0].mxu0
        %v7729 = vpop.f32.mrb[0].mxu0
        %v7730 = vadd.f32 0.0, %v7729
        %v7731 = vpop.f32.mrb[0].mxu0
        %7732 = vmatprep.mubr.bf16.mxu0 0
        %7733 = vmatmul.mubr.bf16.gmra.mrb[0].mxu0 %v7585
        %v7734 = vpop.f32.mrb[0].mxu0
        %v7735 = vadd.f32 0.0, %v7734
        %v7736 = vpop.f32.mrb[0].mxu0
        %v7737 = vpop.f32.mrb[0].mxu0
        %v7738 = vadd.f32 0.0, %v7737
        %v7739 = vpop.f32.mrb[0].mxu0
        %7740 = vmatprep.mubr.bf16.mxu0 0
        %7741 = vmatmul.mubr.bf16.gmra.mrb[0].mxu0 %v7586
        %v7742 = vpop.f32.mrb[0].mxu0
        %v7743 = vadd.f32 0.0, %v7742
        %v7744 = vpop.f32.mrb[0].mxu0
        %v7745 = vpop.f32.mrb[0].mxu0
        %v7746 = vadd.f32 0.0, %v7745
        %v7747 = vpop.f32.mrb[0].mxu0
        %7748 = vmatprep.mubr.bf16.mxu0 0
        %7749 = vmatmul.mubr.bf16.gmra.mrb[0].mxu0 %v7587
        %v7750 = vpop.f32.mrb[0].mxu0
        %v7751 = vadd.f32 0.0, %v7750
        %v7752 = vpop.f32.mrb[0].mxu0
        %v7753 = vpop.f32.mrb[0].mxu0
        %v7754 = vadd.f32 0.0, %v7753
        %v7755 = vpop.f32.mrb[0].mxu0
        %7756 = vmatprep.mubr.bf16.mxu0 0
        %7757 = vmatmul.mubr.bf16.gmra.mrb[0].mxu0 %v7588
        %v7758 = vpop.f32.mrb[0].mxu0
        %v7759 = vadd.f32 0.0, %v7758
        %v7760 = vpop.f32.mrb[0].mxu0
        %v7761 = vpop.f32.mrb[0].mxu0
        %v7762 = vadd.f32 0.0, %v7761
        %v7763 = vpop.f32.mrb[0].mxu0
        %7764 = vmatprep.mubr.bf16.mxu0 0
        %7765 = vmatmul.mubr.bf16.gmra.mrb[0].mxu0 %v7589
        %v7766 = vpop.f32.mrb[0].mxu0
        %v7767 = vadd.f32 0.0, %v7766
        %v7768 = vpop.f32.mrb[0].mxu0
        %v7769 = vpop.f32.mrb[0].mxu0
        %v7770 = vadd.f32 0.0, %v7769
        %v7771 = vpop.f32.mrb[0].mxu0
        %7772 = vmatprep.mubr.bf16.mxu0 0
        %7773 = vmatmul.mubr.bf16.gmra.mrb[0].mxu0 %v7590
        %v7774 = vpop.f32.mrb[0].mxu0
        %v7775 = vadd.f32 0.0, %v7774
        %v7776 = vpop.f32.mrb[0].mxu0
        %v7777 = vpop.f32.mrb[0].mxu0
        %v7778 = vadd.f32 0.0, %v7777
        %v7779 = vpop.f32.mrb[0].mxu0
        %7780 = vmatprep.mubr.bf16.mxu0 0
        %7781 = vmatmul.mubr.bf16.gmra.mrb[0].mxu0 %v7591
        %v7782 = vpop.f32.mrb[0].mxu0
        %v7783 = vadd.f32 0.0, %v7782
        %v7784 = vpop.f32.mrb[0].mxu0
        %v7785 = vpop.f32.mrb[0].mxu0
        %v7786 = vadd.f32 0.0, %v7785
        %v7787 = vpop.f32.mrb[0].mxu0
        %7788 = vmatprep.mubr.bf16.mxu0 0
        %7789 = vmatmul.mubr.bf16.gmra.mrb[0].mxu0 %v7592
        %v7790 = vpop.f32.mrb[0].mxu0
        %v7791 = vadd.f32 0.0, %v7790
        %v7792 = vpop.f32.mrb[0].mxu0
        %v7793 = vpop.f32.mrb[0].mxu0
        %v7794 = vadd.f32 0.0, %v7793
        %v7795 = vpop.f32.mrb[0].mxu0
        %7796 = vmatprep.mubr.bf16.mxu0 0
        %7797 = vmatmul.mubr.bf16.gmra.mrb[0].mxu0 %v7593
        %v7798 = vpop.f32.mrb[0].mxu0
        %v7799 = vadd.f32 0.0, %v7798
        %v7800 = vpop.f32.mrb[0].mxu0
        %v7801 = vpop.f32.mrb[0].mxu0
        %v7802 = vadd.f32 0.0, %v7801
        %v7803 = vpop.f32.mrb[0].mxu0
        %7804 = vmatprep.mubr.bf16.mxu0 0
        %7805 = vmatmul.mubr.bf16.gmra.mrb[0].mxu0 %v7594
        %v7806 = vpop.f32.mrb[0].mxu0
        %v7807 = vadd.f32 0.0, %v7806
        %v7808 = vpop.f32.mrb[0].mxu0
        %v7809 = vpop.f32.mrb[0].mxu0
        %v7810 = vadd.f32 0.0, %v7809
        %v7811 = vpop.f32.mrb[0].mxu0
        %7812 = vmatprep.mubr.bf16.mxu0 0
        %7813 = vmatmul.mubr.bf16.gmra.mrb[0].mxu0 %v7595
        %v7814 = vpop.f32.mrb[0].mxu0
        %v7815 = vadd.f32 0.0, %v7814
        %v7816 = vpop.f32.mrb[0].mxu0
        %v7817 = vpop.f32.mrb[0].mxu0
        %v7818 = vadd.f32 0.0, %v7817
        %v7819 = vpop.f32.mrb[0].mxu0
        %7820 = vdwg.mxu0
        %v7821 = vadd.f32 %v7434, %v7695
        %v7822 = vadd.f32 %v7435, %v7698
        %v7823 = vadd.f32 %v7436, %v7703
        %v7824 = vadd.f32 %v7437, %v7706
        %v7825 = vadd.f32 %v7438, %v7711
        %v7826 = vadd.f32 %v7439, %v7714
        %v7827 = vadd.f32 %v7440, %v7719
        %v7828 = vadd.f32 %v7441, %v7722
        %v7829 = vadd.f32 %v7442, %v7727
        %v7830 = vadd.f32 %v7443, %v7730
        %v7831 = vadd.f32 %v7444, %v7735
        %v7832 = vadd.f32 %v7445, %v7738
        %v7833 = vadd.f32 %v7446, %v7743
        %v7834 = vadd.f32 %v7447, %v7746
        %v7835 = vadd.f32 %v7448, %v7751
        %v7836 = vadd.f32 %v7449, %v7754
        %v7837 = vadd.f32 %v7450, %v7759
        %v7838 = vadd.f32 %v7451, %v7762
        %v7839 = vadd.f32 %v7452, %v7767
        %v7840 = vadd.f32 %v7453, %v7770
        %v7841 = vadd.f32 %v7454, %v7775
        %v7842 = vadd.f32 %v7455, %v7778
        %v7843 = vadd.f32 %v7456, %v7783
        %v7844 = vadd.f32 %v7457, %v7786
        %v7845 = vadd.f32 %v7458, %v7791
        %v7846 = vadd.f32 %v7459, %v7794
        %v7847 = vadd.f32 %v7460, %v7799
        %v7848 = vadd.f32 %v7461, %v7802
        %v7849 = vadd.f32 %v7462, %v7807
        %v7850 = vadd.f32 %v7463, %v7810
        %v7851 = vadd.f32 %v7464, %v7815
        %v7852 = vadd.f32 %v7465, %v7818
        %v7853 = vld [vmem:[%s7466] sm:$0xf]
        %v7854 = vld [vmem:[%s7466 + $0x4] sm:$0xf]
        %v7855 = vld [vmem:[%s7466 + $0x8] sm:$0x1]
        %v7856 = vld [vmem:[%s7466 + $0xc] sm:$0xf]
        %v7857 = vld [vmem:[%s7466 + $0x10] sm:$0xf]
        %v7858 = vld [vmem:[%s7466 + $0x14] sm:$0x1]
        %v7859 = vld [vmem:[%s7466 + $0x18] sm:$0xf]
        %v7860 = vld [vmem:[%s7466 + $0x1c] sm:$0xf]
        %v7861 = vld [vmem:[%s7466 + $0x20] sm:$0x1]
        %v7862 = vld [vmem:[%s7466 + $0x24] sm:$0xf]
        %v7863 = vld [vmem:[%s7466 + $0x28] sm:$0xf]
        %v7864 = vld [vmem:[%s7466 + $0x2c] sm:$0x1]
        %v7865 = vld [vmem:[%s7466 + $0x30] sm:$0xf]
        %v7866 = vld [vmem:[%s7466 + $0x34] sm:$0xf]
        %v7867 = vld [vmem:[%s7466 + $0x38] sm:$0x1]
        %v7868 = vld [vmem:[%s7466 + $0x3c] sm:$0xf]
        %v7869 = vld [vmem:[%s7466 + $0x40] sm:$0xf]
        %v7870 = vld [vmem:[%s7466 + $0x44] sm:$0x1]
        %v7871 = vld [vmem:[%s7466 + $0x48] sm:$0xf]
        %v7872 = vld [vmem:[%s7466 + $0x4c] sm:$0xf]
        %v7873 = vld [vmem:[%s7466 + $0x50] sm:$0x1]
        %v7874 = vld [vmem:[%s7466 + $0x54] sm:$0xf]
        %v7875 = vld [vmem:[%s7466 + $0x58] sm:$0xf]
        %v7876 = vld [vmem:[%s7466 + $0x5c] sm:$0x1]
        %v7877 = vld [vmem:[%s7466 + $0x60] sm:$0xf]
        %v7878 = vld [vmem:[%s7466 + $0x64] sm:$0xf]
        %v7879 = vld [vmem:[%s7466 + $0x68] sm:$0x1]
        %v7880 = vld [vmem:[%s7466 + $0x6c] sm:$0xf]
        %v7881 = vld [vmem:[%s7466 + $0x70] sm:$0xf]
        %v7882 = vld [vmem:[%s7466 + $0x74] sm:$0x1]
        %v7883 = vld [vmem:[%s7466 + $0x78] sm:$0xf]
        %v7884 = vld [vmem:[%s7466 + $0x7c] sm:$0xf]
        %v7885 = vld [vmem:[%s7466 + $0x80] sm:$0x1]
        %v7886 = vld [vmem:[%s7466 + $0x84] sm:$0xf]
        %v7887 = vld [vmem:[%s7466 + $0x88] sm:$0xf]
        %v7888 = vld [vmem:[%s7466 + $0x8c] sm:$0x1]
        %v7889 = vld [vmem:[%s7466 + $0x90] sm:$0xf]
        %v7890 = vld [vmem:[%s7466 + $0x94] sm:$0xf]
        %v7891 = vld [vmem:[%s7466 + $0x98] sm:$0x1]
        %v7892 = vld [vmem:[%s7466 + $0x9c] sm:$0xf]
        %v7893 = vld [vmem:[%s7466 + $0xa0] sm:$0xf]
        %v7894 = vld [vmem:[%s7466 + $0xa4] sm:$0x1]
        %v7895 = vld [vmem:[%s7466 + $0xa8] sm:$0xf]
        %v7896 = vld [vmem:[%s7466 + $0xac] sm:$0xf]
        %v7897 = vld [vmem:[%s7466 + $0xb0] sm:$0x1]
        %v7898 = vld [vmem:[%s7466 + $0xb4] sm:$0xf]
        %v7899 = vld [vmem:[%s7466 + $0xb8] sm:$0xf]
        %v7900 = vld [vmem:[%s7466 + $0xbc] sm:$0x1]
        %v7902 = vshrl.u32 %v7853, 16
        %v7904 = vrot.slane %v7902, 4
        %v7905 = vshll.u32 %v7853, 16
        %v7907 = vrot.slane %v7905, 5
        %v7908 = vor.u32 %v7904, %v7907
        %v7909 = vrot.slane %v7908, 4
        %v7911 = vshll.u32 %v7854, 16
        %v7913 = vrot.slane %v7911, 5
        %v7914 = vsel %vm4363, %v7909, %v7913
        %v7915 = vshrl.u32 %v7854, 16
        %v7917 = vrot.slane %v7915, 4
        %v7918 = vor.u32 %v7917, %v7913
        %v7919 = vrot.slane %v7918, 4
        %v7921 = vshll.u32 %v7855, 16
        %v7923 = vrot.slane %v7921, 5
        %v7924 = vsel %vm4363, %v7919, %v7923
        %v7926 = vshrl.u32 %v7856, 16
        %v7928 = vrot.slane %v7926, 4
        %v7929 = vshll.u32 %v7856, 16
        %v7931 = vrot.slane %v7929, 5
        %v7932 = vor.u32 %v7928, %v7931
        %v7933 = vrot.slane %v7932, 4
        %v7935 = vshll.u32 %v7857, 16
        %v7937 = vrot.slane %v7935, 5
        %v7938 = vsel %vm4363, %v7933, %v7937
        %v7939 = vshrl.u32 %v7857, 16
        %v7941 = vrot.slane %v7939, 4
        %v7942 = vor.u32 %v7941, %v7937
        %v7943 = vrot.slane %v7942, 4
        %v7945 = vshll.u32 %v7858, 16
        %v7947 = vrot.slane %v7945, 5
        %v7948 = vsel %vm4363, %v7943, %v7947
        %v7950 = vshrl.u32 %v7859, 16
        %v7952 = vrot.slane %v7950, 4
        %v7953 = vshll.u32 %v7859, 16
        %v7955 = vrot.slane %v7953, 5
        %v7956 = vor.u32 %v7952, %v7955
        %v7957 = vrot.slane %v7956, 4
        %v7959 = vshll.u32 %v7860, 16
        %v7961 = vrot.slane %v7959, 5
        %v7962 = vsel %vm4363, %v7957, %v7961
        %v7963 = vshrl.u32 %v7860, 16
        %v7965 = vrot.slane %v7963, 4
        %v7966 = vor.u32 %v7965, %v7961
        %v7967 = vrot.slane %v7966, 4
        %v7969 = vshll.u32 %v7861, 16
        %v7971 = vrot.slane %v7969, 5
        %v7972 = vsel %vm4363, %v7967, %v7971
        %v7974 = vshrl.u32 %v7862, 16
        %v7976 = vrot.slane %v7974, 4
        %v7977 = vshll.u32 %v7862, 16
        %v7979 = vrot.slane %v7977, 5
        %v7980 = vor.u32 %v7976, %v7979
        %v7981 = vrot.slane %v7980, 4
        %v7983 = vshll.u32 %v7863, 16
        %v7985 = vrot.slane %v7983, 5
        %v7986 = vsel %vm4363, %v7981, %v7985
        %v7987 = vshrl.u32 %v7863, 16
        %v7989 = vrot.slane %v7987, 4
        %v7990 = vor.u32 %v7989, %v7985
        %v7991 = vrot.slane %v7990, 4
        %v7993 = vshll.u32 %v7864, 16
        %v7995 = vrot.slane %v7993, 5
        %v7996 = vsel %vm4363, %v7991, %v7995
        %v7998 = vshrl.u32 %v7865, 16
        %v8000 = vrot.slane %v7998, 4
        %v8001 = vshll.u32 %v7865, 16
        %v8003 = vrot.slane %v8001, 5
        %v8004 = vor.u32 %v8000, %v8003
        %v8005 = vrot.slane %v8004, 4
        %v8007 = vshll.u32 %v7866, 16
        %v8009 = vrot.slane %v8007, 5
        %v8010 = vsel %vm4363, %v8005, %v8009
        %v8011 = vshrl.u32 %v7866, 16
        %v8013 = vrot.slane %v8011, 4
        %v8014 = vor.u32 %v8013, %v8009
        %v8015 = vrot.slane %v8014, 4
        %v8017 = vshll.u32 %v7867, 16
        %v8019 = vrot.slane %v8017, 5
        %v8020 = vsel %vm4363, %v8015, %v8019
        %v8022 = vshrl.u32 %v7868, 16
        %v8024 = vrot.slane %v8022, 4
        %v8025 = vshll.u32 %v7868, 16
        %v8027 = vrot.slane %v8025, 5
        %v8028 = vor.u32 %v8024, %v8027
        %v8029 = vrot.slane %v8028, 4
        %v8031 = vshll.u32 %v7869, 16
        %v8033 = vrot.slane %v8031, 5
        %v8034 = vsel %vm4363, %v8029, %v8033
        %v8035 = vshrl.u32 %v7869, 16
        %v8037 = vrot.slane %v8035, 4
        %v8038 = vor.u32 %v8037, %v8033
        %v8039 = vrot.slane %v8038, 4
        %v8041 = vshll.u32 %v7870, 16
        %v8043 = vrot.slane %v8041, 5
        %v8044 = vsel %vm4363, %v8039, %v8043
        %v8046 = vshrl.u32 %v7871, 16
        %v8048 = vrot.slane %v8046, 4
        %v8049 = vshll.u32 %v7871, 16
        %v8051 = vrot.slane %v8049, 5
        %v8052 = vor.u32 %v8048, %v8051
        %v8053 = vrot.slane %v8052, 4
        %v8055 = vshll.u32 %v7872, 16
        %v8057 = vrot.slane %v8055, 5
        %v8058 = vsel %vm4363, %v8053, %v8057
        %v8059 = vshrl.u32 %v7872, 16
        %v8061 = vrot.slane %v8059, 4
        %v8062 = vor.u32 %v8061, %v8057
        %v8063 = vrot.slane %v8062, 4
        %v8065 = vshll.u32 %v7873, 16
        %v8067 = vrot.slane %v8065, 5
        %v8068 = vsel %vm4363, %v8063, %v8067
        %v8070 = vshrl.u32 %v7874, 16
        %v8072 = vrot.slane %v8070, 4
        %v8073 = vshll.u32 %v7874, 16
        %v8075 = vrot.slane %v8073, 5
        %v8076 = vor.u32 %v8072, %v8075
        %v8077 = vrot.slane %v8076, 4
        %v8079 = vshll.u32 %v7875, 16
        %v8081 = vrot.slane %v8079, 5
        %v8082 = vsel %vm4363, %v8077, %v8081
        %v8083 = vshrl.u32 %v7875, 16
        %v8085 = vrot.slane %v8083, 4
        %v8086 = vor.u32 %v8085, %v8081
        %v8087 = vrot.slane %v8086, 4
        %v8089 = vshll.u32 %v7876, 16
        %v8091 = vrot.slane %v8089, 5
        %v8092 = vsel %vm4363, %v8087, %v8091
        %v8094 = vshrl.u32 %v7877, 16
        %v8096 = vrot.slane %v8094, 4
        %v8097 = vshll.u32 %v7877, 16
        %v8099 = vrot.slane %v8097, 5
        %v8100 = vor.u32 %v8096, %v8099
        %v8101 = vrot.slane %v8100, 4
        %v8103 = vshll.u32 %v7878, 16
        %v8105 = vrot.slane %v8103, 5
        %v8106 = vsel %vm4363, %v8101, %v8105
        %v8107 = vshrl.u32 %v7878, 16
        %v8109 = vrot.slane %v8107, 4
        %v8110 = vor.u32 %v8109, %v8105
        %v8111 = vrot.slane %v8110, 4
        %v8113 = vshll.u32 %v7879, 16
        %v8115 = vrot.slane %v8113, 5
        %v8116 = vsel %vm4363, %v8111, %v8115
        %v8118 = vshrl.u32 %v7880, 16
        %v8120 = vrot.slane %v8118, 4
        %v8121 = vshll.u32 %v7880, 16
        %v8123 = vrot.slane %v8121, 5
        %v8124 = vor.u32 %v8120, %v8123
        %v8125 = vrot.slane %v8124, 4
        %v8127 = vshll.u32 %v7881, 16
        %v8129 = vrot.slane %v8127, 5
        %v8130 = vsel %vm4363, %v8125, %v8129
        %v8131 = vshrl.u32 %v7881, 16
        %v8133 = vrot.slane %v8131, 4
        %v8134 = vor.u32 %v8133, %v8129
        %v8135 = vrot.slane %v8134, 4
        %v8137 = vshll.u32 %v7882, 16
        %v8139 = vrot.slane %v8137, 5
        %v8140 = vsel %vm4363, %v8135, %v8139
        %v8142 = vshrl.u32 %v7883, 16
        %v8144 = vrot.slane %v8142, 4
        %v8145 = vshll.u32 %v7883, 16
        %v8147 = vrot.slane %v8145, 5
        %v8148 = vor.u32 %v8144, %v8147
        %v8149 = vrot.slane %v8148, 4
        %v8151 = vshll.u32 %v7884, 16
        %v8153 = vrot.slane %v8151, 5
        %v8154 = vsel %vm4363, %v8149, %v8153
        %v8155 = vshrl.u32 %v7884, 16
        %v8157 = vrot.slane %v8155, 4
        %v8158 = vor.u32 %v8157, %v8153
        %v8159 = vrot.slane %v8158, 4
        %v8161 = vshll.u32 %v7885, 16
        %v8163 = vrot.slane %v8161, 5
        %v8164 = vsel %vm4363, %v8159, %v8163
        %v8166 = vshrl.u32 %v7886, 16
        %v8168 = vrot.slane %v8166, 4
        %v8169 = vshll.u32 %v7886, 16
        %v8171 = vrot.slane %v8169, 5
        %v8172 = vor.u32 %v8168, %v8171
        %v8173 = vrot.slane %v8172, 4
        %v8175 = vshll.u32 %v7887, 16
        %v8177 = vrot.slane %v8175, 5
        %v8178 = vsel %vm4363, %v8173, %v8177
        %v8179 = vshrl.u32 %v7887, 16
        %v8181 = vrot.slane %v8179, 4
        %v8182 = vor.u32 %v8181, %v8177
        %v8183 = vrot.slane %v8182, 4
        %v8185 = vshll.u32 %v7888, 16
        %v8187 = vrot.slane %v8185, 5
        %v8188 = vsel %vm4363, %v8183, %v8187
        %v8190 = vshrl.u32 %v7889, 16
        %v8192 = vrot.slane %v8190, 4
        %v8193 = vshll.u32 %v7889, 16
        %v8195 = vrot.slane %v8193, 5
        %v8196 = vor.u32 %v8192, %v8195
        %v8197 = vrot.slane %v8196, 4
        %v8199 = vshll.u32 %v7890, 16
        %v8201 = vrot.slane %v8199, 5
        %v8202 = vsel %vm4363, %v8197, %v8201
        %v8203 = vshrl.u32 %v7890, 16
        %v8205 = vrot.slane %v8203, 4
        %v8206 = vor.u32 %v8205, %v8201
        %v8207 = vrot.slane %v8206, 4
        %v8209 = vshll.u32 %v7891, 16
        %v8211 = vrot.slane %v8209, 5
        %v8212 = vsel %vm4363, %v8207, %v8211
        %v8214 = vshrl.u32 %v7892, 16
        %v8216 = vrot.slane %v8214, 4
        %v8217 = vshll.u32 %v7892, 16
        %v8219 = vrot.slane %v8217, 5
        %v8220 = vor.u32 %v8216, %v8219
        %v8221 = vrot.slane %v8220, 4
        %v8223 = vshll.u32 %v7893, 16
        %v8225 = vrot.slane %v8223, 5
        %v8226 = vsel %vm4363, %v8221, %v8225
        %v8227 = vshrl.u32 %v7893, 16
        %v8229 = vrot.slane %v8227, 4
        %v8230 = vor.u32 %v8229, %v8225
        %v8231 = vrot.slane %v8230, 4
        %v8233 = vshll.u32 %v7894, 16
        %v8235 = vrot.slane %v8233, 5
        %v8236 = vsel %vm4363, %v8231, %v8235
        %v8238 = vshrl.u32 %v7895, 16
        %v8240 = vrot.slane %v8238, 4
        %v8241 = vshll.u32 %v7895, 16
        %v8243 = vrot.slane %v8241, 5
        %v8244 = vor.u32 %v8240, %v8243
        %v8245 = vrot.slane %v8244, 4
        %v8247 = vshll.u32 %v7896, 16
        %v8249 = vrot.slane %v8247, 5
        %v8250 = vsel %vm4363, %v8245, %v8249
        %v8251 = vshrl.u32 %v7896, 16
        %v8253 = vrot.slane %v8251, 4
        %v8254 = vor.u32 %v8253, %v8249
        %v8255 = vrot.slane %v8254, 4
        %v8257 = vshll.u32 %v7897, 16
        %v8259 = vrot.slane %v8257, 5
        %v8260 = vsel %vm4363, %v8255, %v8259
        %v8262 = vshrl.u32 %v7898, 16
        %v8264 = vrot.slane %v8262, 4
        %v8265 = vshll.u32 %v7898, 16
        %v8267 = vrot.slane %v8265, 5
        %v8268 = vor.u32 %v8264, %v8267
        %v8269 = vrot.slane %v8268, 4
        %v8271 = vshll.u32 %v7899, 16
        %v8273 = vrot.slane %v8271, 5
        %v8274 = vsel %vm4363, %v8269, %v8273
        %v8275 = vshrl.u32 %v7899, 16
        %v8277 = vrot.slane %v8275, 4
        %v8278 = vor.u32 %v8277, %v8273
        %v8279 = vrot.slane %v8278, 4
        %v8281 = vshll.u32 %v7900, 16
        %v8283 = vrot.slane %v8281, 5
        %v8284 = vsel %vm4363, %v8279, %v8283
        %s8285 = scalar_lea.vmem [#allocation9], 448
        %v8286 = vld [vmem:[%s8285] sm:$0xf]
        %v8287 = vld [vmem:[%s8285 + $0x4] sm:$0xf]
        %v8288 = vld [vmem:[%s8285 + $0x8] sm:$0xf]
        %v8289 = vld [vmem:[%s8285 + $0xc] sm:$0xf]
        %v8290 = vld [vmem:[%s8285 + $0x10] sm:$0xf]
        %v8291 = vld [vmem:[%s8285 + $0x14] sm:$0xf]
        %v8292 = vld [vmem:[%s8285 + $0x18] sm:$0xf]
        %v8293 = vld [vmem:[%s8285 + $0x1c] sm:$0xf]
        %v8294 = vld [vmem:[%s8285 + $0x20] sm:$0xf]
        %v8295 = vld [vmem:[%s8285 + $0x24] sm:$0xf]
        %v8296 = vld [vmem:[%s8285 + $0x28] sm:$0xf]
        %v8297 = vld [vmem:[%s8285 + $0x2c] sm:$0xf]
        %v8298 = vld [vmem:[%s8285 + $0x30] sm:$0xf]
        %v8299 = vld [vmem:[%s8285 + $0x34] sm:$0xf]
        %v8300 = vld [vmem:[%s8285 + $0x38] sm:$0xf]
        %v8301 = vld [vmem:[%s8285 + $0x3c] sm:$0xf]
        %v8302 = vunpack.c.l.b16 %v7914
        %v8303 = vunpack.c.l.b16 %v7924
        %v8304 = vunpack.c.l.b16 %v7938
        %v8305 = vunpack.c.l.b16 %v7948
        %v8306 = vunpack.c.l.b16 %v7962
        %v8307 = vunpack.c.l.b16 %v7972
        %v8308 = vunpack.c.l.b16 %v7986
        %v8309 = vunpack.c.l.b16 %v7996
        %v8310 = vunpack.c.l.b16 %v8010
        %v8311 = vunpack.c.l.b16 %v8020
        %v8312 = vunpack.c.l.b16 %v8034
        %v8313 = vunpack.c.l.b16 %v8044
        %v8314 = vunpack.c.l.b16 %v8058
        %v8315 = vunpack.c.l.b16 %v8068
        %v8316 = vunpack.c.l.b16 %v8082
        %v8317 = vunpack.c.l.b16 %v8092
        %v8318 = vunpack.c.l.b16 %v8106
        %v8319 = vunpack.c.l.b16 %v8116
        %v8320 = vunpack.c.l.b16 %v8130
        %v8321 = vunpack.c.l.b16 %v8140
        %v8322 = vunpack.c.l.b16 %v8154
        %v8323 = vunpack.c.l.b16 %v8164
        %v8324 = vunpack.c.l.b16 %v8178
        %v8325 = vunpack.c.l.b16 %v8188
        %v8326 = vunpack.c.l.b16 %v8202
        %v8327 = vunpack.c.l.b16 %v8212
        %v8328 = vunpack.c.l.b16 %v8226
        %v8329 = vunpack.c.l.b16 %v8236
        %v8330 = vunpack.c.l.b16 %v8250
        %v8331 = vunpack.c.l.b16 %v8260
        %v8332 = vunpack.c.l.b16 %v8274
        %v8333 = vunpack.c.l.b16 %v8284
        %v8334 = vpack.c.b16 %v8303, %v8302
        %v8335 = vpack.c.b16 %v8305, %v8304
        %v8336 = vpack.c.b16 %v8307, %v8306
        %v8337 = vpack.c.b16 %v8309, %v8308
        %v8338 = vpack.c.b16 %v8311, %v8310
        %v8339 = vpack.c.b16 %v8313, %v8312
        %v8340 = vpack.c.b16 %v8315, %v8314
        %v8341 = vpack.c.b16 %v8317, %v8316
        %v8342 = vpack.c.b16 %v8319, %v8318
        %v8343 = vpack.c.b16 %v8321, %v8320
        %v8344 = vpack.c.b16 %v8323, %v8322
        %v8345 = vpack.c.b16 %v8325, %v8324
        %v8346 = vpack.c.b16 %v8327, %v8326
        %v8347 = vpack.c.b16 %v8329, %v8328
        %v8348 = vpack.c.b16 %v8331, %v8330
        %v8349 = vpack.c.b16 %v8333, %v8332
        %v8382 = vunpack.c.l.b16 %v8286
        %v8383 = vunpack.c.l.b16 %v8287
        %v8384 = vunpack.c.l.b16 %v8288
        %v8385 = vunpack.c.l.b16 %v8289
        %v8386 = vunpack.c.l.b16 %v8290
        %v8387 = vunpack.c.l.b16 %v8291
        %v8388 = vunpack.c.l.b16 %v8292
        %v8389 = vunpack.c.l.b16 %v8293
        %v8390 = vunpack.c.l.b16 %v8294
        %v8391 = vunpack.c.l.b16 %v8295
        %v8392 = vunpack.c.l.b16 %v8296
        %v8393 = vunpack.c.l.b16 %v8297
        %v8394 = vunpack.c.l.b16 %v8298
        %v8395 = vunpack.c.l.b16 %v8299
        %v8396 = vunpack.c.l.b16 %v8300
        %v8397 = vunpack.c.l.b16 %v8301
        %v8398 = vpack.c.b16 %v8383, %v8382
        %v8399 = vpack.c.b16 %v8385, %v8384
        %v8400 = vpack.c.b16 %v8387, %v8386
        %v8401 = vpack.c.b16 %v8389, %v8388
        %v8402 = vpack.c.b16 %v8391, %v8390
        %v8403 = vpack.c.b16 %v8393, %v8392
        %v8404 = vpack.c.b16 %v8395, %v8394
        %v8405 = vpack.c.b16 %v8397, %v8396
        %8414 = vmatprep.subr.bf16.mxu0 0
        %8415 = vmatpush1.bf16.msra.mxu0 %v8398
        %8416 = vmatprep.subr.bf16.mxu0 0
        %8417 = vmatpush1.bf16.msra.mxu0 %v8399
        %8418 = vmatprep.subr.bf16.mxu0 0
        %8419 = vmatpush1.bf16.msra.mxu0 %v8400
        %8420 = vmatprep.subr.bf16.mxu0 0
        %8421 = vmatpush1.bf16.msra.mxu0 %v8401
        %8422 = vmatprep.subr.bf16.mxu0 0
        %8423 = vmatpush1.bf16.msra.mxu0 %v8402
        %8424 = vmatprep.subr.bf16.mxu0 0
        %8425 = vmatpush1.bf16.msra.mxu0 %v8403
        %8426 = vmatprep.subr.bf16.mxu0 0
        %8427 = vmatpush1.bf16.msra.mxu0 %v8404
        %8428 = vmatprep.subr.bf16.mxu0 0
        %8429 = vmatpush1.bf16.msra.mxu0 %v8405
        %8430 = vmatprep.subr.bf16.mxu0 0
        %8431 = vmatpush1.bf16.msra.mxu0 0
        %8432 = vmatprep.subr.bf16.mxu0 0
        %8433 = vmatpush1.bf16.msra.mxu0 0
        %8434 = vmatprep.subr.bf16.mxu0 0
        %8435 = vmatpush1.bf16.msra.mxu0 0
        %8436 = vmatprep.subr.bf16.mxu0 0
        %8437 = vmatpush1.bf16.msra.mxu0 0
        %8438 = vmatprep.subr.bf16.mxu0 0
        %8439 = vmatpush1.bf16.msra.mxu0 0
        %8440 = vmatprep.subr.bf16.mxu0 0
        %8441 = vmatpush1.bf16.msra.mxu0 0
        %8442 = vmatprep.subr.bf16.mxu0 0
        %8443 = vmatpush1.bf16.msra.mxu0 0
        %8444 = vmatprep.subr.bf16.mxu0 0
        %8445 = vmatpush1.bf16.msra.mxu0 0
        %8446 = vmatprep.mubr.bf16.mxu0 0
        %8447 = vmatmul.mubr.bf16.gmra.mrb[0].mxu0 %v8334
        %v8448 = vpop.f32.mrb[0].mxu0
        %v8449 = vadd.f32 0.0, %v8448
        %v8450 = vpop.f32.mrb[0].mxu0
        %v8451 = vpop.f32.mrb[0].mxu0
        %v8452 = vadd.f32 0.0, %v8451
        %v8453 = vpop.f32.mrb[0].mxu0
        %8454 = vmatprep.mubr.bf16.mxu0 0
        %8455 = vmatmul.mubr.bf16.gmra.mrb[0].mxu0 %v8335
        %v8456 = vpop.f32.mrb[0].mxu0
        %v8457 = vadd.f32 0.0, %v8456
        %v8458 = vpop.f32.mrb[0].mxu0
        %v8459 = vpop.f32.mrb[0].mxu0
        %v8460 = vadd.f32 0.0, %v8459
        %v8461 = vpop.f32.mrb[0].mxu0
        %8462 = vmatprep.mubr.bf16.mxu0 0
        %8463 = vmatmul.mubr.bf16.gmra.mrb[0].mxu0 %v8336
        %v8464 = vpop.f32.mrb[0].mxu0
        %v8465 = vadd.f32 0.0, %v8464
        %v8466 = vpop.f32.mrb[0].mxu0
        %v8467 = vpop.f32.mrb[0].mxu0
        %v8468 = vadd.f32 0.0, %v8467
        %v8469 = vpop.f32.mrb[0].mxu0
        %8470 = vmatprep.mubr.bf16.mxu0 0
        %8471 = vmatmul.mubr.bf16.gmra.mrb[0].mxu0 %v8337
        %v8472 = vpop.f32.mrb[0].mxu0
        %v8473 = vadd.f32 0.0, %v8472
        %v8474 = vpop.f32.mrb[0].mxu0
        %v8475 = vpop.f32.mrb[0].mxu0
        %v8476 = vadd.f32 0.0, %v8475
        %v8477 = vpop.f32.mrb[0].mxu0
        %8478 = vmatprep.mubr.bf16.mxu0 0
        %8479 = vmatmul.mubr.bf16.gmra.mrb[0].mxu0 %v8338
        %v8480 = vpop.f32.mrb[0].mxu0
        %v8481 = vadd.f32 0.0, %v8480
        %v8482 = vpop.f32.mrb[0].mxu0
        %v8483 = vpop.f32.mrb[0].mxu0
        %v8484 = vadd.f32 0.0, %v8483
        %v8485 = vpop.f32.mrb[0].mxu0
        %8486 = vmatprep.mubr.bf16.mxu0 0
        %8487 = vmatmul.mubr.bf16.gmra.mrb[0].mxu0 %v8339
        %v8488 = vpop.f32.mrb[0].mxu0
        %v8489 = vadd.f32 0.0, %v8488
        %v8490 = vpop.f32.mrb[0].mxu0
        %v8491 = vpop.f32.mrb[0].mxu0
        %v8492 = vadd.f32 0.0, %v8491
        %v8493 = vpop.f32.mrb[0].mxu0
        %8494 = vmatprep.mubr.bf16.mxu0 0
        %8495 = vmatmul.mubr.bf16.gmra.mrb[0].mxu0 %v8340
        %v8496 = vpop.f32.mrb[0].mxu0
        %v8497 = vadd.f32 0.0, %v8496
        %v8498 = vpop.f32.mrb[0].mxu0
        %v8499 = vpop.f32.mrb[0].mxu0
        %v8500 = vadd.f32 0.0, %v8499
        %v8501 = vpop.f32.mrb[0].mxu0
        %8502 = vmatprep.mubr.bf16.mxu0 0
        %8503 = vmatmul.mubr.bf16.gmra.mrb[0].mxu0 %v8341
        %v8504 = vpop.f32.mrb[0].mxu0
        %v8505 = vadd.f32 0.0, %v8504
        %v8506 = vpop.f32.mrb[0].mxu0
        %v8507 = vpop.f32.mrb[0].mxu0
        %v8508 = vadd.f32 0.0, %v8507
        %v8509 = vpop.f32.mrb[0].mxu0
        %8510 = vmatprep.mubr.bf16.mxu0 0
        %8511 = vmatmul.mubr.bf16.gmra.mrb[0].mxu0 %v8342
        %v8512 = vpop.f32.mrb[0].mxu0
        %v8513 = vadd.f32 0.0, %v8512
        %v8514 = vpop.f32.mrb[0].mxu0
        %v8515 = vpop.f32.mrb[0].mxu0
        %v8516 = vadd.f32 0.0, %v8515
        %v8517 = vpop.f32.mrb[0].mxu0
        %8518 = vmatprep.mubr.bf16.mxu0 0
        %8519 = vmatmul.mubr.bf16.gmra.mrb[0].mxu0 %v8343
        %v8520 = vpop.f32.mrb[0].mxu0
        %v8521 = vadd.f32 0.0, %v8520
        %v8522 = vpop.f32.mrb[0].mxu0
        %v8523 = vpop.f32.mrb[0].mxu0
        %v8524 = vadd.f32 0.0, %v8523
        %v8525 = vpop.f32.mrb[0].mxu0
        %8526 = vmatprep.mubr.bf16.mxu0 0
        %8527 = vmatmul.mubr.bf16.gmra.mrb[0].mxu0 %v8344
        %v8528 = vpop.f32.mrb[0].mxu0
        %v8529 = vadd.f32 0.0, %v8528
        %v8530 = vpop.f32.mrb[0].mxu0
        %v8531 = vpop.f32.mrb[0].mxu0
        %v8532 = vadd.f32 0.0, %v8531
        %v8533 = vpop.f32.mrb[0].mxu0
        %8534 = vmatprep.mubr.bf16.mxu0 0
        %8535 = vmatmul.mubr.bf16.gmra.mrb[0].mxu0 %v8345
        %v8536 = vpop.f32.mrb[0].mxu0
        %v8537 = vadd.f32 0.0, %v8536
        %v8538 = vpop.f32.mrb[0].mxu0
        %v8539 = vpop.f32.mrb[0].mxu0
        %v8540 = vadd.f32 0.0, %v8539
        %v8541 = vpop.f32.mrb[0].mxu0
        %8542 = vmatprep.mubr.bf16.mxu0 0
        %8543 = vmatmul.mubr.bf16.gmra.mrb[0].mxu0 %v8346
        %v8544 = vpop.f32.mrb[0].mxu0
        %v8545 = vadd.f32 0.0, %v8544
        %v8546 = vpop.f32.mrb[0].mxu0
        %v8547 = vpop.f32.mrb[0].mxu0
        %v8548 = vadd.f32 0.0, %v8547
        %v8549 = vpop.f32.mrb[0].mxu0
        %8550 = vmatprep.mubr.bf16.mxu0 0
        %8551 = vmatmul.mubr.bf16.gmra.mrb[0].mxu0 %v8347
        %v8552 = vpop.f32.mrb[0].mxu0
        %v8553 = vadd.f32 0.0, %v8552
        %v8554 = vpop.f32.mrb[0].mxu0
        %v8555 = vpop.f32.mrb[0].mxu0
        %v8556 = vadd.f32 0.0, %v8555
        %v8557 = vpop.f32.mrb[0].mxu0
        %8558 = vmatprep.mubr.bf16.mxu0 0
        %8559 = vmatmul.mubr.bf16.gmra.mrb[0].mxu0 %v8348
        %v8560 = vpop.f32.mrb[0].mxu0
        %v8561 = vadd.f32 0.0, %v8560
        %v8562 = vpop.f32.mrb[0].mxu0
        %v8563 = vpop.f32.mrb[0].mxu0
        %v8564 = vadd.f32 0.0, %v8563
        %v8565 = vpop.f32.mrb[0].mxu0
        %8566 = vmatprep.mubr.bf16.mxu0 0
        %8567 = vmatmul.mubr.bf16.gmra.mrb[0].mxu0 %v8349
        %v8568 = vpop.f32.mrb[0].mxu0
        %v8569 = vadd.f32 0.0, %v8568
        %v8570 = vpop.f32.mrb[0].mxu0
        %v8571 = vpop.f32.mrb[0].mxu0
        %v8572 = vadd.f32 0.0, %v8571
        %v8573 = vpop.f32.mrb[0].mxu0
        %8574 = vdwg.mxu0
        %v8575 = vadd.f32 %v7821, %v8449
        %v8576 = vadd.f32 %v7822, %v8452
        %v8577 = vadd.f32 %v7823, %v8457
        %v8578 = vadd.f32 %v7824, %v8460
        %v8579 = vadd.f32 %v7825, %v8465
        %v8580 = vadd.f32 %v7826, %v8468
        %v8581 = vadd.f32 %v7827, %v8473
        %v8582 = vadd.f32 %v7828, %v8476
        %v8583 = vadd.f32 %v7829, %v8481
        %v8584 = vadd.f32 %v7830, %v8484
        %v8585 = vadd.f32 %v7831, %v8489
        %v8586 = vadd.f32 %v7832, %v8492
        %v8587 = vadd.f32 %v7833, %v8497
        %v8588 = vadd.f32 %v7834, %v8500
        %v8589 = vadd.f32 %v7835, %v8505
        %v8590 = vadd.f32 %v7836, %v8508
        %v8591 = vadd.f32 %v7837, %v8513
        %v8592 = vadd.f32 %v7838, %v8516
        %v8593 = vadd.f32 %v7839, %v8521
        %v8594 = vadd.f32 %v7840, %v8524
        %v8595 = vadd.f32 %v7841, %v8529
        %v8596 = vadd.f32 %v7842, %v8532
        %v8597 = vadd.f32 %v7843, %v8537
        %v8598 = vadd.f32 %v7844, %v8540
        %v8599 = vadd.f32 %v7845, %v8545
        %v8600 = vadd.f32 %v7846, %v8548
        %v8601 = vadd.f32 %v7847, %v8553
        %v8602 = vadd.f32 %v7848, %v8556
        %v8603 = vadd.f32 %v7849, %v8561
        %v8604 = vadd.f32 %v7850, %v8564
        %v8605 = vadd.f32 %v7851, %v8569
        %v8606 = vadd.f32 %v7852, %v8572
        %v8607 = vld [vmem:[%s7466] sm:$0xe]
        %v8608 = vld [vmem:[%s7466 + $0xc] sm:$0xe]
        %v8609 = vld [vmem:[%s7466 + $0x18] sm:$0xe]
        %v8610 = vld [vmem:[%s7466 + $0x24] sm:$0xe]
        %v8611 = vld [vmem:[%s7466 + $0x30] sm:$0xe]
        %v8612 = vld [vmem:[%s7466 + $0x3c] sm:$0xe]
        %v8613 = vld [vmem:[%s7466 + $0x48] sm:$0xe]
        %v8614 = vld [vmem:[%s7466 + $0x54] sm:$0xe]
        %v8615 = vld [vmem:[%s7466 + $0x60] sm:$0xe]
        %v8616 = vld [vmem:[%s7466 + $0x6c] sm:$0xe]
        %v8617 = vld [vmem:[%s7466 + $0x78] sm:$0xe]
        %v8618 = vld [vmem:[%s7466 + $0x84] sm:$0xe]
        %v8619 = vld [vmem:[%s7466 + $0x90] sm:$0xe]
        %v8620 = vld [vmem:[%s7466 + $0x9c] sm:$0xe]
        %v8621 = vld [vmem:[%s7466 + $0xa8] sm:$0xe]
        %v8622 = vld [vmem:[%s7466 + $0xb4] sm:$0xe]
        %v8671 = vrot.slane %v8607, 5
        %v8672 = vrot.slane %v8671, 4
        %v8673 = vrot.slane %v7854, 5
        %v8674 = vsel %vm5393, %v8672, %v8673
        %v8675 = vrot.slane %v8673, 4
        %v8676 = vrot.slane %v7855, 5
        %v8677 = vsel %vm5393, %v8675, %v8676
        %v8678 = vrot.slane %v8608, 5
        %v8679 = vrot.slane %v8678, 4
        %v8680 = vrot.slane %v7857, 5
        %v8681 = vsel %vm5393, %v8679, %v8680
        %v8682 = vrot.slane %v8680, 4
        %v8683 = vrot.slane %v7858, 5
        %v8684 = vsel %vm5393, %v8682, %v8683
        %v8685 = vrot.slane %v8609, 5
        %v8686 = vrot.slane %v8685, 4
        %v8687 = vrot.slane %v7860, 5
        %v8688 = vsel %vm5393, %v8686, %v8687
        %v8689 = vrot.slane %v8687, 4
        %v8690 = vrot.slane %v7861, 5
        %v8691 = vsel %vm5393, %v8689, %v8690
        %v8692 = vrot.slane %v8610, 5
        %v8693 = vrot.slane %v8692, 4
        %v8694 = vrot.slane %v7863, 5
        %v8695 = vsel %vm5393, %v8693, %v8694
        %v8696 = vrot.slane %v8694, 4
        %v8697 = vrot.slane %v7864, 5
        %v8698 = vsel %vm5393, %v8696, %v8697
        %v8699 = vrot.slane %v8611, 5
        %v8700 = vrot.slane %v8699, 4
        %v8701 = vrot.slane %v7866, 5
        %v8702 = vsel %vm5393, %v8700, %v8701
        %v8703 = vrot.slane %v8701, 4
        %v8704 = vrot.slane %v7867, 5
        %v8705 = vsel %vm5393, %v8703, %v8704
        %v8706 = vrot.slane %v8612, 5
        %v8707 = vrot.slane %v8706, 4
        %v8708 = vrot.slane %v7869, 5
        %v8709 = vsel %vm5393, %v8707, %v8708
        %v8710 = vrot.slane %v8708, 4
        %v8711 = vrot.slane %v7870, 5
        %v8712 = vsel %vm5393, %v8710, %v8711
        %v8713 = vrot.slane %v8613, 5
        %v8714 = vrot.slane %v8713, 4
        %v8715 = vrot.slane %v7872, 5
        %v8716 = vsel %vm5393, %v8714, %v8715
        %v8717 = vrot.slane %v8715, 4
        %v8718 = vrot.slane %v7873, 5
        %v8719 = vsel %vm5393, %v8717, %v8718
        %v8720 = vrot.slane %v8614, 5
        %v8721 = vrot.slane %v8720, 4
        %v8722 = vrot.slane %v7875, 5
        %v8723 = vsel %vm5393, %v8721, %v8722
        %v8724 = vrot.slane %v8722, 4
        %v8725 = vrot.slane %v7876, 5
        %v8726 = vsel %vm5393, %v8724, %v8725
        %v8727 = vrot.slane %v8615, 5
        %v8728 = vrot.slane %v8727, 4
        %v8729 = vrot.slane %v7878, 5
        %v8730 = vsel %vm5393, %v8728, %v8729
        %v8731 = vrot.slane %v8729, 4
        %v8732 = vrot.slane %v7879, 5
        %v8733 = vsel %vm5393, %v8731, %v8732
        %v8734 = vrot.slane %v8616, 5
        %v8735 = vrot.slane %v8734, 4
        %v8736 = vrot.slane %v7881, 5
        %v8737 = vsel %vm5393, %v8735, %v8736
        %v8738 = vrot.slane %v8736, 4
        %v8739 = vrot.slane %v7882, 5
        %v8740 = vsel %vm5393, %v8738, %v8739
        %v8741 = vrot.slane %v8617, 5
        %v8742 = vrot.slane %v8741, 4
        %v8743 = vrot.slane %v7884, 5
        %v8744 = vsel %vm5393, %v8742, %v8743
        %v8745 = vrot.slane %v8743, 4
        %v8746 = vrot.slane %v7885, 5
        %v8747 = vsel %vm5393, %v8745, %v8746
        %v8748 = vrot.slane %v8618, 5
        %v8749 = vrot.slane %v8748, 4
        %v8750 = vrot.slane %v7887, 5
        %v8751 = vsel %vm5393, %v8749, %v8750
        %v8752 = vrot.slane %v8750, 4
        %v8753 = vrot.slane %v7888, 5
        %v8754 = vsel %vm5393, %v8752, %v8753
        %v8755 = vrot.slane %v8619, 5
        %v8756 = vrot.slane %v8755, 4
        %v8757 = vrot.slane %v7890, 5
        %v8758 = vsel %vm5393, %v8756, %v8757
        %v8759 = vrot.slane %v8757, 4
        %v8760 = vrot.slane %v7891, 5
        %v8761 = vsel %vm5393, %v8759, %v8760
        %v8762 = vrot.slane %v8620, 5
        %v8763 = vrot.slane %v8762, 4
        %v8764 = vrot.slane %v7893, 5
        %v8765 = vsel %vm5393, %v8763, %v8764
        %v8766 = vrot.slane %v8764, 4
        %v8767 = vrot.slane %v7894, 5
        %v8768 = vsel %vm5393, %v8766, %v8767
        %v8769 = vrot.slane %v8621, 5
        %v8770 = vrot.slane %v8769, 4
        %v8771 = vrot.slane %v7896, 5
        %v8772 = vsel %vm5393, %v8770, %v8771
        %v8773 = vrot.slane %v8771, 4
        %v8774 = vrot.slane %v7897, 5
        %v8775 = vsel %vm5393, %v8773, %v8774
        %v8776 = vrot.slane %v8622, 5
        %v8777 = vrot.slane %v8776, 4
        %v8778 = vrot.slane %v7899, 5
        %v8779 = vsel %vm5393, %v8777, %v8778
        %v8780 = vrot.slane %v8778, 4
        %v8781 = vrot.slane %v7900, 5
        %v8782 = vsel %vm5393, %v8780, %v8781
        %s8783 = scalar_lea.vmem [#allocation9], 512
        %v8784 = vld [vmem:[%s8783] sm:$0xf]
        %v8785 = vld [vmem:[%s8783 + $0x4] sm:$0xf]
        %v8786 = vld [vmem:[%s8783 + $0x8] sm:$0xf]
        %v8787 = vld [vmem:[%s8783 + $0xc] sm:$0xf]
        %v8788 = vld [vmem:[%s8783 + $0x10] sm:$0xf]
        %v8789 = vld [vmem:[%s8783 + $0x14] sm:$0xf]
        %v8790 = vld [vmem:[%s8783 + $0x18] sm:$0xf]
        %v8791 = vld [vmem:[%s8783 + $0x1c] sm:$0xf]
        %v8792 = vld [vmem:[%s8783 + $0x20] sm:$0xf]
        %v8793 = vld [vmem:[%s8783 + $0x24] sm:$0xf]
        %v8794 = vld [vmem:[%s8783 + $0x28] sm:$0xf]
        %v8795 = vld [vmem:[%s8783 + $0x2c] sm:$0xf]
        %v8796 = vld [vmem:[%s8783 + $0x30] sm:$0xf]
        %v8797 = vld [vmem:[%s8783 + $0x34] sm:$0xf]
        %v8798 = vld [vmem:[%s8783 + $0x38] sm:$0xf]
        %v8799 = vld [vmem:[%s8783 + $0x3c] sm:$0xf]
        %v8800 = vunpack.c.l.b16 %v8674
        %v8801 = vunpack.c.l.b16 %v8677
        %v8802 = vunpack.c.l.b16 %v8681
        %v8803 = vunpack.c.l.b16 %v8684
        %v8804 = vunpack.c.l.b16 %v8688
        %v8805 = vunpack.c.l.b16 %v8691
        %v8806 = vunpack.c.l.b16 %v8695
        %v8807 = vunpack.c.l.b16 %v8698
        %v8808 = vunpack.c.l.b16 %v8702
        %v8809 = vunpack.c.l.b16 %v8705
        %v8810 = vunpack.c.l.b16 %v8709
        %v8811 = vunpack.c.l.b16 %v8712
        %v8812 = vunpack.c.l.b16 %v8716
        %v8813 = vunpack.c.l.b16 %v8719
        %v8814 = vunpack.c.l.b16 %v8723
        %v8815 = vunpack.c.l.b16 %v8726
        %v8816 = vunpack.c.l.b16 %v8730
        %v8817 = vunpack.c.l.b16 %v8733
        %v8818 = vunpack.c.l.b16 %v8737
        %v8819 = vunpack.c.l.b16 %v8740
        %v8820 = vunpack.c.l.b16 %v8744
        %v8821 = vunpack.c.l.b16 %v8747
        %v8822 = vunpack.c.l.b16 %v8751
        %v8823 = vunpack.c.l.b16 %v8754
        %v8824 = vunpack.c.l.b16 %v8758
        %v8825 = vunpack.c.l.b16 %v8761
        %v8826 = vunpack.c.l.b16 %v8765
        %v8827 = vunpack.c.l.b16 %v8768
        %v8828 = vunpack.c.l.b16 %v8772
        %v8829 = vunpack.c.l.b16 %v8775
        %v8830 = vunpack.c.l.b16 %v8779
        %v8831 = vunpack.c.l.b16 %v8782
        %v8832 = vpack.c.b16 %v8801, %v8800
        %v8833 = vpack.c.b16 %v8803, %v8802
        %v8834 = vpack.c.b16 %v8805, %v8804
        %v8835 = vpack.c.b16 %v8807, %v8806
        %v8836 = vpack.c.b16 %v8809, %v8808
        %v8837 = vpack.c.b16 %v8811, %v8810
        %v8838 = vpack.c.b16 %v8813, %v8812
        %v8839 = vpack.c.b16 %v8815, %v8814
        %v8840 = vpack.c.b16 %v8817, %v8816
        %v8841 = vpack.c.b16 %v8819, %v8818
        %v8842 = vpack.c.b16 %v8821, %v8820
        %v8843 = vpack.c.b16 %v8823, %v8822
        %v8844 = vpack.c.b16 %v8825, %v8824
        %v8845 = vpack.c.b16 %v8827, %v8826
        %v8846 = vpack.c.b16 %v8829, %v8828
        %v8847 = vpack.c.b16 %v8831, %v8830
        %v8880 = vunpack.c.l.b16 %v8784
        %v8881 = vunpack.c.l.b16 %v8785
        %v8882 = vunpack.c.l.b16 %v8786
        %v8883 = vunpack.c.l.b16 %v8787
        %v8884 = vunpack.c.l.b16 %v8788
        %v8885 = vunpack.c.l.b16 %v8789
        %v8886 = vunpack.c.l.b16 %v8790
        %v8887 = vunpack.c.l.b16 %v8791
        %v8888 = vunpack.c.l.b16 %v8792
        %v8889 = vunpack.c.l.b16 %v8793
        %v8890 = vunpack.c.l.b16 %v8794
        %v8891 = vunpack.c.l.b16 %v8795
        %v8892 = vunpack.c.l.b16 %v8796
        %v8893 = vunpack.c.l.b16 %v8797
        %v8894 = vunpack.c.l.b16 %v8798
        %v8895 = vunpack.c.l.b16 %v8799
        %v8896 = vpack.c.b16 %v8881, %v8880
        %v8897 = vpack.c.b16 %v8883, %v8882
        %v8898 = vpack.c.b16 %v8885, %v8884
        %v8899 = vpack.c.b16 %v8887, %v8886
        %v8900 = vpack.c.b16 %v8889, %v8888
        %v8901 = vpack.c.b16 %v8891, %v8890
        %v8902 = vpack.c.b16 %v8893, %v8892
        %v8903 = vpack.c.b16 %v8895, %v8894
        %8912 = vmatprep.subr.bf16.mxu0 0
        %8913 = vmatpush1.bf16.msra.mxu0 %v8896
        %8914 = vmatprep.subr.bf16.mxu0 0
        %8915 = vmatpush1.bf16.msra.mxu0 %v8897
        %8916 = vmatprep.subr.bf16.mxu0 0
        %8917 = vmatpush1.bf16.msra.mxu0 %v8898
        %8918 = vmatprep.subr.bf16.mxu0 0
        %8919 = vmatpush1.bf16.msra.mxu0 %v8899
        %8920 = vmatprep.subr.bf16.mxu0 0
        %8921 = vmatpush1.bf16.msra.mxu0 %v8900
        %8922 = vmatprep.subr.bf16.mxu0 0
        %8923 = vmatpush1.bf16.msra.mxu0 %v8901
        %8924 = vmatprep.subr.bf16.mxu0 0
        %8925 = vmatpush1.bf16.msra.mxu0 %v8902
        %8926 = vmatprep.subr.bf16.mxu0 0
        %8927 = vmatpush1.bf16.msra.mxu0 %v8903
        %8928 = vmatprep.subr.bf16.mxu0 0
        %8929 = vmatpush1.bf16.msra.mxu0 0
        %8930 = vmatprep.subr.bf16.mxu0 0
        %8931 = vmatpush1.bf16.msra.mxu0 0
        %8932 = vmatprep.subr.bf16.mxu0 0
        %8933 = vmatpush1.bf16.msra.mxu0 0
        %8934 = vmatprep.subr.bf16.mxu0 0
        %8935 = vmatpush1.bf16.msra.mxu0 0
        %8936 = vmatprep.subr.bf16.mxu0 0
        %8937 = vmatpush1.bf16.msra.mxu0 0
        %8938 = vmatprep.subr.bf16.mxu0 0
        %8939 = vmatpush1.bf16.msra.mxu0 0
        %8940 = vmatprep.subr.bf16.mxu0 0
        %8941 = vmatpush1.bf16.msra.mxu0 0
        %8942 = vmatprep.subr.bf16.mxu0 0
        %8943 = vmatpush1.bf16.msra.mxu0 0
        %8944 = vmatprep.mubr.bf16.mxu0 0
        %8945 = vmatmul.mubr.bf16.gmra.mrb[0].mxu0 %v8832
        %v8946 = vpop.f32.mrb[0].mxu0
        %v8947 = vadd.f32 0.0, %v8946
        %v8948 = vpop.f32.mrb[0].mxu0
        %v8949 = vpop.f32.mrb[0].mxu0
        %v8950 = vadd.f32 0.0, %v8949
        %v8951 = vpop.f32.mrb[0].mxu0
        %8952 = vmatprep.mubr.bf16.mxu0 0
        %8953 = vmatmul.mubr.bf16.gmra.mrb[0].mxu0 %v8833
        %v8954 = vpop.f32.mrb[0].mxu0
        %v8955 = vadd.f32 0.0, %v8954
        %v8956 = vpop.f32.mrb[0].mxu0
        %v8957 = vpop.f32.mrb[0].mxu0
        %v8958 = vadd.f32 0.0, %v8957
        %v8959 = vpop.f32.mrb[0].mxu0
        %8960 = vmatprep.mubr.bf16.mxu0 0
        %8961 = vmatmul.mubr.bf16.gmra.mrb[0].mxu0 %v8834
        %v8962 = vpop.f32.mrb[0].mxu0
        %v8963 = vadd.f32 0.0, %v8962
        %v8964 = vpop.f32.mrb[0].mxu0
        %v8965 = vpop.f32.mrb[0].mxu0
        %v8966 = vadd.f32 0.0, %v8965
        %v8967 = vpop.f32.mrb[0].mxu0
        %8968 = vmatprep.mubr.bf16.mxu0 0
        %8969 = vmatmul.mubr.bf16.gmra.mrb[0].mxu0 %v8835
        %v8970 = vpop.f32.mrb[0].mxu0
        %v8971 = vadd.f32 0.0, %v8970
        %v8972 = vpop.f32.mrb[0].mxu0
        %v8973 = vpop.f32.mrb[0].mxu0
        %v8974 = vadd.f32 0.0, %v8973
        %v8975 = vpop.f32.mrb[0].mxu0
        %8976 = vmatprep.mubr.bf16.mxu0 0
        %8977 = vmatmul.mubr.bf16.gmra.mrb[0].mxu0 %v8836
        %v8978 = vpop.f32.mrb[0].mxu0
        %v8979 = vadd.f32 0.0, %v8978
        %v8980 = vpop.f32.mrb[0].mxu0
        %v8981 = vpop.f32.mrb[0].mxu0
        %v8982 = vadd.f32 0.0, %v8981
        %v8983 = vpop.f32.mrb[0].mxu0
        %8984 = vmatprep.mubr.bf16.mxu0 0
        %8985 = vmatmul.mubr.bf16.gmra.mrb[0].mxu0 %v8837
        %v8986 = vpop.f32.mrb[0].mxu0
        %v8987 = vadd.f32 0.0, %v8986
        %v8988 = vpop.f32.mrb[0].mxu0
        %v8989 = vpop.f32.mrb[0].mxu0
        %v8990 = vadd.f32 0.0, %v8989
        %v8991 = vpop.f32.mrb[0].mxu0
        %8992 = vmatprep.mubr.bf16.mxu0 0
        %8993 = vmatmul.mubr.bf16.gmra.mrb[0].mxu0 %v8838
        %v8994 = vpop.f32.mrb[0].mxu0
        %v8995 = vadd.f32 0.0, %v8994
        %v8996 = vpop.f32.mrb[0].mxu0
        %v8997 = vpop.f32.mrb[0].mxu0
        %v8998 = vadd.f32 0.0, %v8997
        %v8999 = vpop.f32.mrb[0].mxu0
        %9000 = vmatprep.mubr.bf16.mxu0 0
        %9001 = vmatmul.mubr.bf16.gmra.mrb[0].mxu0 %v8839
        %v9002 = vpop.f32.mrb[0].mxu0
        %v9003 = vadd.f32 0.0, %v9002
        %v9004 = vpop.f32.mrb[0].mxu0
        %v9005 = vpop.f32.mrb[0].mxu0
        %v9006 = vadd.f32 0.0, %v9005
        %v9007 = vpop.f32.mrb[0].mxu0
        %9008 = vmatprep.mubr.bf16.mxu0 0
        %9009 = vmatmul.mubr.bf16.gmra.mrb[0].mxu0 %v8840
        %v9010 = vpop.f32.mrb[0].mxu0
        %v9011 = vadd.f32 0.0, %v9010
        %v9012 = vpop.f32.mrb[0].mxu0
        %v9013 = vpop.f32.mrb[0].mxu0
        %v9014 = vadd.f32 0.0, %v9013
        %v9015 = vpop.f32.mrb[0].mxu0
        %9016 = vmatprep.mubr.bf16.mxu0 0
        %9017 = vmatmul.mubr.bf16.gmra.mrb[0].mxu0 %v8841
        %v9018 = vpop.f32.mrb[0].mxu0
        %v9019 = vadd.f32 0.0, %v9018
        %v9020 = vpop.f32.mrb[0].mxu0
        %v9021 = vpop.f32.mrb[0].mxu0
        %v9022 = vadd.f32 0.0, %v9021
        %v9023 = vpop.f32.mrb[0].mxu0
        %9024 = vmatprep.mubr.bf16.mxu0 0
        %9025 = vmatmul.mubr.bf16.gmra.mrb[0].mxu0 %v8842
        %v9026 = vpop.f32.mrb[0].mxu0
        %v9027 = vadd.f32 0.0, %v9026
        %v9028 = vpop.f32.mrb[0].mxu0
        %v9029 = vpop.f32.mrb[0].mxu0
        %v9030 = vadd.f32 0.0, %v9029
        %v9031 = vpop.f32.mrb[0].mxu0
        %9032 = vmatprep.mubr.bf16.mxu0 0
        %9033 = vmatmul.mubr.bf16.gmra.mrb[0].mxu0 %v8843
        %v9034 = vpop.f32.mrb[0].mxu0
        %v9035 = vadd.f32 0.0, %v9034
        %v9036 = vpop.f32.mrb[0].mxu0
        %v9037 = vpop.f32.mrb[0].mxu0
        %v9038 = vadd.f32 0.0, %v9037
        %v9039 = vpop.f32.mrb[0].mxu0
        %9040 = vmatprep.mubr.bf16.mxu0 0
        %9041 = vmatmul.mubr.bf16.gmra.mrb[0].mxu0 %v8844
        %v9042 = vpop.f32.mrb[0].mxu0
        %v9043 = vadd.f32 0.0, %v9042
        %v9044 = vpop.f32.mrb[0].mxu0
        %v9045 = vpop.f32.mrb[0].mxu0
        %v9046 = vadd.f32 0.0, %v9045
        %v9047 = vpop.f32.mrb[0].mxu0
        %9048 = vmatprep.mubr.bf16.mxu0 0
        %9049 = vmatmul.mubr.bf16.gmra.mrb[0].mxu0 %v8845
        %v9050 = vpop.f32.mrb[0].mxu0
        %v9051 = vadd.f32 0.0, %v9050
        %v9052 = vpop.f32.mrb[0].mxu0
        %v9053 = vpop.f32.mrb[0].mxu0
        %v9054 = vadd.f32 0.0, %v9053
        %v9055 = vpop.f32.mrb[0].mxu0
        %9056 = vmatprep.mubr.bf16.mxu0 0
        %9057 = vmatmul.mubr.bf16.gmra.mrb[0].mxu0 %v8846
        %v9058 = vpop.f32.mrb[0].mxu0
        %v9059 = vadd.f32 0.0, %v9058
        %v9060 = vpop.f32.mrb[0].mxu0
        %v9061 = vpop.f32.mrb[0].mxu0
        %v9062 = vadd.f32 0.0, %v9061
        %v9063 = vpop.f32.mrb[0].mxu0
        %9064 = vmatprep.mubr.bf16.mxu0 0
        %9065 = vmatmul.mubr.bf16.gmra.mrb[0].mxu0 %v8847
        %v9066 = vpop.f32.mrb[0].mxu0
        %v9067 = vadd.f32 0.0, %v9066
        %v9068 = vpop.f32.mrb[0].mxu0
        %v9069 = vpop.f32.mrb[0].mxu0
        %v9070 = vadd.f32 0.0, %v9069
        %v9071 = vpop.f32.mrb[0].mxu0
        %9072 = vdwg.mxu0
        %v9073 = vadd.f32 %v8575, %v8947
        %v9074 = vadd.f32 %v8576, %v8950
        %v9075 = vadd.f32 %v8577, %v8955
        %v9076 = vadd.f32 %v8578, %v8958
        %v9077 = vadd.f32 %v8579, %v8963
        %v9078 = vadd.f32 %v8580, %v8966
        %v9079 = vadd.f32 %v8581, %v8971
        %v9080 = vadd.f32 %v8582, %v8974
        %v9081 = vadd.f32 %v8583, %v8979
        %v9082 = vadd.f32 %v8584, %v8982
        %v9083 = vadd.f32 %v8585, %v8987
        %v9084 = vadd.f32 %v8586, %v8990
        %v9085 = vadd.f32 %v8587, %v8995
        %v9086 = vadd.f32 %v8588, %v8998
        %v9087 = vadd.f32 %v8589, %v9003
        %v9088 = vadd.f32 %v8590, %v9006
        %v9089 = vadd.f32 %v8591, %v9011
        %v9090 = vadd.f32 %v8592, %v9014
        %v9091 = vadd.f32 %v8593, %v9019
        %v9092 = vadd.f32 %v8594, %v9022
        %v9093 = vadd.f32 %v8595, %v9027
        %v9094 = vadd.f32 %v8596, %v9030
        %v9095 = vadd.f32 %v8597, %v9035
        %v9096 = vadd.f32 %v8598, %v9038
        %v9097 = vadd.f32 %v8599, %v9043
        %v9098 = vadd.f32 %v8600, %v9046
        %v9099 = vadd.f32 %v8601, %v9051
        %v9100 = vadd.f32 %v8602, %v9054
        %v9101 = vadd.f32 %v8603, %v9059
        %v9102 = vadd.f32 %v8604, %v9062
        %v9103 = vadd.f32 %v8605, %v9067
        %v9104 = vadd.f32 %v8606, %v9070
        %v9105 = vld [vmem:[%s4] sm:$0x1]
        %v9107 = vlaneseq
        %v9108 = vshrl.u32 %v9107, 7
        %v9109 = vsub.s32 0, %v9108
        %v9110 = vrot.slane %v9105, %v9109
        %v9112 = vadd.f32 %v9073, %v9110
        %v9113 = vadd.f32 %v9074, %v9110
        %v9114 = vadd.f32 %v9075, %v9110
        %v9115 = vadd.f32 %v9076, %v9110
        %v9116 = vadd.f32 %v9077, %v9110
        %v9117 = vadd.f32 %v9078, %v9110
        %v9118 = vadd.f32 %v9079, %v9110
        %v9119 = vadd.f32 %v9080, %v9110
        %v9120 = vadd.f32 %v9081, %v9110
        %v9121 = vadd.f32 %v9082, %v9110
        %v9122 = vadd.f32 %v9083, %v9110
        %v9123 = vadd.f32 %v9084, %v9110
        %v9124 = vadd.f32 %v9085, %v9110
        %v9125 = vadd.f32 %v9086, %v9110
        %v9126 = vadd.f32 %v9087, %v9110
        %v9127 = vadd.f32 %v9088, %v9110
        %v9128 = vadd.f32 %v9089, %v9110
        %v9129 = vadd.f32 %v9090, %v9110
        %v9130 = vadd.f32 %v9091, %v9110
        %v9131 = vadd.f32 %v9092, %v9110
        %v9132 = vadd.f32 %v9093, %v9110
        %v9133 = vadd.f32 %v9094, %v9110
        %v9134 = vadd.f32 %v9095, %v9110
        %v9135 = vadd.f32 %v9096, %v9110
        %v9136 = vadd.f32 %v9097, %v9110
        %v9137 = vadd.f32 %v9098, %v9110
        %v9138 = vadd.f32 %v9099, %v9110
        %v9139 = vadd.f32 %v9100, %v9110
        %v9140 = vadd.f32 %v9101, %v9110
        %v9141 = vadd.f32 %v9102, %v9110
        %v9142 = vadd.f32 %v9103, %v9110
        %v9143 = vadd.f32 %v9104, %v9110
        %v9144 = vmax.f32 %v9112, 0.0
        %v9145 = vmax.f32 %v9113, 0.0
        %v9146 = vmax.f32 %v9114, 0.0
        %v9147 = vmax.f32 %v9115, 0.0
        %v9148 = vmax.f32 %v9116, 0.0
        %v9149 = vmax.f32 %v9117, 0.0
        %v9150 = vmax.f32 %v9118, 0.0
        %v9151 = vmax.f32 %v9119, 0.0
        %v9152 = vmax.f32 %v9120, 0.0
        %v9153 = vmax.f32 %v9121, 0.0
        %v9154 = vmax.f32 %v9122, 0.0
        %v9155 = vmax.f32 %v9123, 0.0
        %v9156 = vmax.f32 %v9124, 0.0
        %v9157 = vmax.f32 %v9125, 0.0
        %v9158 = vmax.f32 %v9126, 0.0
        %v9159 = vmax.f32 %v9127, 0.0
        %v9160 = vmax.f32 %v9128, 0.0
        %v9161 = vmax.f32 %v9129, 0.0
        %v9162 = vmax.f32 %v9130, 0.0
        %v9163 = vmax.f32 %v9131, 0.0
        %v9164 = vmax.f32 %v9132, 0.0
        %v9165 = vmax.f32 %v9133, 0.0
        %v9166 = vmax.f32 %v9134, 0.0
        %v9167 = vmax.f32 %v9135, 0.0
        %v9168 = vmax.f32 %v9136, 0.0
        %v9169 = vmax.f32 %v9137, 0.0
        %v9170 = vmax.f32 %v9138, 0.0
        %v9171 = vmax.f32 %v9139, 0.0
        %v9172 = vmax.f32 %v9140, 0.0
        %v9173 = vmax.f32 %v9141, 0.0
        %v9174 = vmax.f32 %v9142, 0.0
        %v9175 = vmax.f32 %v9143, 0.0
        %9176 = vst [vmem:[%s271] sm:$0xff] %v9144
        %9177 = vst [vmem:[%s271 + $0x8] sm:$0xff] %v9145
        %9178 = vst [vmem:[%s271 + $0x10] sm:$0xff] %v9146
        %9179 = vst [vmem:[%s271 + $0x18] sm:$0xff] %v9147
        %9180 = vst [vmem:[%s271 + $0x20] sm:$0xff] %v9148
        %9181 = vst [vmem:[%s271 + $0x28] sm:$0xff] %v9149
        %9182 = vst [vmem:[%s271 + $0x30] sm:$0xff] %v9150
        %9183 = vst [vmem:[%s271 + $0x38] sm:$0xff] %v9151
        %9184 = vst [vmem:[%s271 + $0x40] sm:$0xff] %v9152
        %9185 = vst [vmem:[%s271 + $0x48] sm:$0xff] %v9153
        %9186 = vst [vmem:[%s271 + $0x50] sm:$0xff] %v9154
        %9187 = vst [vmem:[%s271 + $0x58] sm:$0xff] %v9155
        %9188 = vst [vmem:[%s271 + $0x60] sm:$0xff] %v9156
        %9189 = vst [vmem:[%s271 + $0x68] sm:$0xff] %v9157
        %9190 = vst [vmem:[%s271 + $0x70] sm:$0xff] %v9158
        %9191 = vst [vmem:[%s271 + $0x78] sm:$0xff] %v9159
        %9192 = vst [vmem:[%s271 + $0x80] sm:$0xff] %v9160
        %9193 = vst [vmem:[%s271 + $0x88] sm:$0xff] %v9161
        %9194 = vst [vmem:[%s271 + $0x90] sm:$0xff] %v9162
        %9195 = vst [vmem:[%s271 + $0x98] sm:$0xff] %v9163
        %9196 = vst [vmem:[%s271 + $0xa0] sm:$0xff] %v9164
        %9197 = vst [vmem:[%s271 + $0xa8] sm:$0xff] %v9165
        %9198 = vst [vmem:[%s271 + $0xb0] sm:$0xff] %v9166
        %9199 = vst [vmem:[%s271 + $0xb8] sm:$0xff] %v9167
        %9200 = vst [vmem:[%s271 + $0xc0] sm:$0xff] %v9168
        %9201 = vst [vmem:[%s271 + $0xc8] sm:$0xff] %v9169
        %9202 = vst [vmem:[%s271 + $0xd0] sm:$0xff] %v9170
        %9203 = vst [vmem:[%s271 + $0xd8] sm:$0xff] %v9171
        %9204 = vst [vmem:[%s271 + $0xe0] sm:$0xff] %v9172
        %9205 = vst [vmem:[%s271 + $0xe8] sm:$0xff] %v9173
        %9206 = vst [vmem:[%s271 + $0xf0] sm:$0xff] %v9174
        %9207 = vst [vmem:[%s271 + $0xf8] sm:$0xff] %v9175
        %s9208 = sand.u32 %s141, 1
        %s9209 = scalar_lea.sflag [#allocation6], %s9208
        %s9210 = sand.u32 %s141, 1
        %s9211 = smul.addr %s9210, 256
        %s9212 = scalar_lea.vmem [#allocation10], %s9211
        // Predicated region
        $region53: #{tpu_custom_call.1} parent=39 // pred_check
          %p9213 = pneg %p151
        $region54: #{tpu_custom_call.1} parent=39 // pred_check_branch
          %9215 = sbr.rel (%p9213) target = $region56
        $region55: #{tpu_custom_call.1} parent=39 // pred_region
          %s9217 = ssub.s32 4096, 4096
          %9218 = vsyncadd %s9209, %s9217
          %s9219 = smul.addr %s23, 32
          %s9220 = smul.addr %s9219, 128
          %s9221 = scalar_lea.hbm %s5, %s9220
          %s9222 = sshll.u32 %s9212, 4
          %s9223 = int_to_ptr.vmem [resolvable:$true] %s9222
          %9228 = dma.vmem_to_hbm [thread:$0]  %s9223, 4096, %s9221, %s9209, 128, 128, 8
        $region56: #{tpu_custom_call.1} parent=39 // pred_fallthru
          _
      $region40: #{tpu_custom_call.1} parent=5 // pred_fallthru
        _
      %p9229 = scmp.le.s32.totalorder 2, %s18
      // Predicated region
      $region57: #{tpu_custom_call.1} parent=5 // pred_check
        %p9230 = pneg %p9229
      $region58: #{tpu_custom_call.1} parent=5 // pred_check_branch
        %9232 = sbr.rel (%p9230) target = $region60
      $region59: #{tpu_custom_call.1} parent=5 // pred_region
        %s9233 = ssub.s32 %s18, 2
        // Predicated region
        $region61: #{tpu_custom_call.1} parent=59 // pred_check
          %p9234 = pneg %p157
        $region62: #{tpu_custom_call.1} parent=59 // pred_check_branch
          %9236 = sbr.rel (%p9234) target = $region64
        $region63: #{tpu_custom_call.1} parent=59 // pred_region
          %s9237 = sand.u32 %s142, 1
          %s9238 = scalar_lea.sflag [#allocation6], %s9237
          %s9239 = sand.u32 %s142, 1
          %s9240 = smul.addr %s9239, 256
          %s9241 = scalar_lea.vmem [#allocation10], %s9240
          %9242 = dma.done %s9238, 4096
        $region64: #{tpu_custom_call.1} parent=59 // pred_fallthru
          _
      $region60: #{tpu_custom_call.1} parent=5 // pred_fallthru
        _
    $region6: #{tpu_custom_call.1} parent=1 // loop_footer
      %s22 = sadd.s32 1, %s18
    $region7: #{tpu_custom_call.1} parent=1 // loop_footer_branch
      %17 = sbr.rel target = $region3
    $region8: #{tpu_custom_call.1} parent=1 // loop_exit
      _
    %9243 = vsyncpa [#allocation5], 1
    %s9244 = scalar_lea.sflag [#allocation5], 1
    %9245 = vsyncpa %s9244, 1
    %9246 = vsyncpa [#allocation8], 1
    %9247 = vsyncpa [#allocation6], 1
    %s9248 = scalar_lea.sflag [#allocation6], 1
    %9249 = vsyncpa %s9248, 1

</llo_original>
